<compile_context>
chip_gen: v7x
topology: tpu7x:2x2x1
jax: 0.10.0
libtpu: 0.0.40
codegen_flags: <defaults>
</compile_context>

<pallas_src>
import jax
import jax.numpy as jnp
import numpy as np
from jax.experimental import pallas as pl
from jax.experimental.pallas import tpu as pltpu

HI = jax.lax.Precision.HIGHEST  # only used by the pure-JAX reference


# ---------------------------------------------------------------------------
# Fused kernel: Conv1d(k=3,'same') + ReLU + MaxPool1d(3,1,1) + stacked biLSTM
# ---------------------------------------------------------------------------
def _cnn_bilstm_kernel(x_ref, cw_ref, cb_ref, c0_ref, *rest):
    # x_ref : ((T+2)*P, Cin)   time-major rows, zero rows at t=0 and t=T+1, batch padded to P
    # cw_ref: (3*Cin, Cout)    conv weight, im2col layout (tap-major)
    # cb_ref: (1, Cout)
    # c0_ref: (2*num_layers, P, H)  initial cell states (the module's h0 argument)
    # rest  : per layer l -> [wih (I_l, 8H), whh_fwd (H, 4H), whh_bwd (H, 4H), bias (1, 8H)],
    #         then o_ref (T*P, 2H), gx_sc (T*P, 8H), act_sc (T*P, 2H)
    n_dirs, P, H = c0_ref.shape
    num_layers = n_dirs // 2
    w_refs = rest[:4 * num_layers]
    o_ref = rest[4 * num_layers]
    gx_sc = rest[4 * num_layers + 1]
    act_sc = rest[4 * num_layers + 2]

    LP = o_ref.shape[0]
    T = LP // P
    H4 = 4 * H

    # ---- Conv1d(k=3, 'same') + ReLU as one im2col matmul over all (t, b) rows ----
    x = x_ref[...]                                                    # ((T+2)*P, Cin)
    xw = jnp.concatenate([x[0:LP], x[P:LP + P], x[2 * P:LP + 2 * P]], axis=-1)   # (LP, 3Cin)
    y = jnp.dot(xw, cw_ref[...], preferred_element_type=jnp.float32) + cb_ref[...]
    y = jnp.maximum(y, 0.0)                                           # ReLU

    # ---- MaxPool1d(3, stride=1, padding=1): post-ReLU, zero padding == -inf padding ----
    zrow = jnp.zeros((P, y.shape[-1]), jnp.float32)
    yp = jnp.concatenate([zrow, y, zrow], axis=0)                     # ((T+2)*P, Cout)
    act = jnp.maximum(jnp.maximum(yp[0:LP], yp[P:LP + P]), yp[2 * P:LP + 2 * P])  # (LP, Cout)

    # gate-position mask: lanes [2H, 3H) of each 4H gate block use tanh, the rest sigmoid
    lane = jax.lax.broadcasted_iota(jnp.int32, (P, H4), 1)
    g_mask = (lane >= 2 * H) & (lane < 3 * H)

    def cell(h, c, gx_t, whh):
        # gx_t already contains x_t @ W_ih + (b_ih + b_hh); only the recurrent matmul is serial.
        gates = gx_t + jnp.dot(h, whh, preferred_element_type=jnp.float32)   # (P, 4H)
        a = jnp.where(g_mask, jnp.tanh(gates), jax.nn.sigmoid(gates))
        c_n = a[:, H:2 * H] * c + a[:, 0:H] * a[:, 2 * H:3 * H]
        h_n = a[:, 3 * H:H4] * jnp.tanh(c_n)
        return h_n, c_n

    for l in range(num_layers):
        wih = w_refs[4 * l][...]        # (I_l, 8H)  [fwd gates | bwd gates]
        whh_f = w_refs[4 * l + 1][...]  # (H, 4H)
        whh_b = w_refs[4 * l + 2][...]  # (H, 4H)
        bias = w_refs[4 * l + 3][...]   # (1, 8H)

        # Hoisted input projection: all time steps & both directions in one MXU matmul.
        gx_sc[...] = jnp.dot(act, wih, preferred_element_type=jnp.float32) + bias

        dst = o_ref if l == num_layers - 1 else act_sc

        h_f = jnp.zeros((P, H), jnp.float32)      # PyTorch call passes zeros as h0 ...
        h_b = jnp.zeros((P, H), jnp.float32)
        c_f = c0_ref[2 * l]                       # ... and the h0 argument as c0
        c_b = c0_ref[2 * l + 1]

        for s in range(T):                        # static unroll of the recurrence
            rf = s * P
            h_f, c_f = cell(h_f, c_f, gx_sc[rf:rf + P, 0:H4], whh_f)
            dst[rf:rf + P, 0:H] = h_f
            rb = (T - 1 - s) * P
            h_b, c_b = cell(h_b, c_b, gx_sc[rb:rb + P, H4:2 * H4], whh_b)
            dst[rb:rb + P, H:2 * H] = h_b

        if l + 1 < num_layers:
            act = act_sc[...]                     # next layer's input stays in VMEM


# ---------------------------------------------------------------------------
# Wrapper: layout plumbing in JAX, all compute in the fused kernel
# ---------------------------------------------------------------------------
def cnn_lstm_forward(layout, h0, params):
    bs, T = layout.shape[:2]
    cin = int(np.prod(layout.shape[2:]))
    cout = params["conv_w"].shape[-1]
    H = params["lstm"][0][1].shape[0]
    num_layers = len(params["lstm"]) // 2
    P = ((bs + 7) // 8) * 8                       # pad batch to full sublane groups

    x = layout.reshape(bs, T, cin)                # flatten(start_dim=2), channels-last
    x_tm = jnp.transpose(x, (1, 0, 2))            # time-major (T, bs, Cin)
    x_tm = jnp.pad(x_tm, ((1, 1), (0, P - bs), (0, 0)))   # time halo (conv 'same') + batch pad
    x_flat = x_tm.reshape((T + 2) * P, cin)

    c0 = jnp.pad(h0, ((0, 0), (0, P - bs), (0, 0)))       # (2L, P, H)
    conv_w = params["conv_w"].reshape(3 * cin, cout)      # (3, Cin, Cout) -> (3Cin, Cout)
    conv_b = params["conv_b"]

    inputs = [x_flat, conv_w, conv_b, c0]
    for layer in range(num_layers):
        wih_f, whh_f, b_f = params["lstm"][2 * layer]
        wih_b, whh_b, b_b = params["lstm"][2 * layer + 1]
        inputs += [jnp.concatenate([wih_f, wih_b], axis=-1),   # (I, 8H)
                   whh_f, whh_b,
                   jnp.concatenate([b_f, b_b], axis=-1)]       # (1, 8H)

    def full_spec(a):
        nd = a.ndim
        return pl.BlockSpec(a.shape, lambda i, _nd=nd: (0,) * _nd)

    out_flat = pl.pallas_call(
        _cnn_bilstm_kernel,
        out_shape=jax.ShapeDtypeStruct((T * P, 2 * H), jnp.float32),
        grid_spec=pltpu.PrefetchScalarGridSpec(
            num_scalar_prefetch=0,
            grid=(1,),
            in_specs=[full_spec(a) for a in inputs],
            out_specs=pl.BlockSpec((T * P, 2 * H), lambda i: (0, 0)),
            scratch_shapes=[
                pltpu.VMEM((T * P, 8 * H), jnp.float32),   # hoisted gate projections
                pltpu.VMEM((T * P, 2 * H), jnp.float32),   # inter-layer activations
            ],
        ),
        compiler_params=pltpu.CompilerParams(dimension_semantics=("arbitrary",)),
    )(*inputs)

    out = out_flat.reshape(T, P, 2 * H)[:, :bs]    # drop padded batch rows
    return jnp.transpose(out, (1, 0, 2))           # batch_first (bs, T, 2H)


# ---------------------------------------------------------------------------
# Pure-JAX reference (HIGHEST precision) for correctness check
# ---------------------------------------------------------------------------
def ref_forward(layout, h0, params, num_layers):
    bs, T = layout.shape[:2]
    x = layout.reshape(bs, T, -1)
    xp = jnp.pad(x, ((0, 0), (1, 1), (0, 0)))
    w = params["conv_w"]
    y = (jnp.einsum("blc,cd->bld", xp[:, 0:T], w[0], precision=HI)
         + jnp.einsum("blc,cd->bld", xp[:, 1:T + 1], w[1], precision=HI)
         + jnp.einsum("blc,cd->bld", xp[:, 2:T + 2], w[2], precision=HI)
         + params["conv_b"])
    y = jnp.maximum(y, 0.0)
    yp = jnp.pad(y, ((0, 0), (1, 1), (0, 0)), constant_values=-jnp.inf)
    y = jnp.maximum(jnp.maximum(yp[:, 0:T], yp[:, 1:T + 1]), yp[:, 2:T + 2])

    def run_dir(x_seq, wih, whh, b, c0, reverse):
        Tn = x_seq.shape[1]
        H = c0.shape[-1]
        h = jnp.zeros_like(c0)
        c = c0
        outs = [None] * Tn
        order = range(Tn - 1, -1, -1) if reverse else range(Tn)
        for t in order:
            gates = (jnp.dot(x_seq[:, t], wih, precision=HI)
                     + jnp.dot(h, whh, precision=HI) + b)
            i_g = jax.nn.sigmoid(gates[:, 0:H])
            f_g = jax.nn.sigmoid(gates[:, H:2 * H])
            g_g = jnp.tanh(gates[:, 2 * H:3 * H])
            o_g = jax.nn.sigmoid(gates[:, 3 * H:4 * H])
            c = f_g * c + i_g * g_g
            h = o_g * jnp.tanh(c)
            outs[t] = h
        return jnp.stack(outs, axis=1)

    inp = y
    for layer in range(num_layers):
        fwd = run_dir(inp, *params["lstm"][2 * layer], h0[2 * layer], False)
        bwd = run_dir(inp, *params["lstm"][2 * layer + 1], h0[2 * layer + 1], True)
        inp = jnp.concatenate([fwd, bwd], axis=-1)
    return inp


# ---------------------------------------------------------------------------
# Deterministic parameter init (shapes from CNN_LSTM.__init__)
# ---------------------------------------------------------------------------
def init_params(key, in_ch, out_ch, d_model, num_layers):
    scale = 0.1
    n_dirs = 2 * num_layers
    keys = jax.random.split(key, 2 + 3 * n_dirs)
    params = {
        "conv_w": scale * jax.random.normal(keys[0], (3, in_ch, out_ch), jnp.float32),
        "conv_b": scale * jax.random.normal(keys[1], (1, out_ch), jnp.float32),
        "lstm": [],
    }
    for d in range(n_dirs):
        layer = d // 2
        in_size = out_ch if layer == 0 else 2 * d_model
        k0, k1, k2 = keys[2 + 3 * d:5 + 3 * d]
        w_ih = scale * jax.random.normal(k0, (in_size, 4 * d_model), jnp.float32)
        w_hh = scale * jax.random.normal(k1, (d_model, 4 * d_model), jnp.float32)
        bias = scale * jax.random.normal(k2, (1, 4 * d_model), jnp.float32)  # b_ih + b_hh folded
        params["lstm"].append((w_ih, w_hh, bias))
    return params


if __name__ == "__main__":
    bs, max_elem = 2, 16
    in_ch, out_ch, d_model, num_layers = 8, 32, 32, 2   # small shapes consistent with the module

    key = jax.random.PRNGKey(0)
    k_layout, k_h0, k_params = jax.random.split(key, 3)
    layout = jax.random.normal(k_layout, (bs, max_elem, 2, 4), dtype=jnp.float32)
    h0 = 0.1 * jax.random.normal(k_h0, (2 * num_layers, bs, d_model), dtype=jnp.float32)
    params = init_params(k_params, in_ch, out_ch, d_model, num_layers)

    fwd = jax.jit(cnn_lstm_forward)
    out = jax.block_until_ready(fwd(layout, h0, params))
    assert out.shape == (bs, max_elem, 2 * d_model), out.shape

    ref = jax.block_until_ready(ref_forward(layout, h0, params, num_layers))
    np.testing.assert_allclose(np.asarray(out), np.asarray(ref), rtol=2e-2, atol=2e-2)

    print("KERNEL_OK")
</pallas_src>

<mosaic_0001>
module attributes {stable_mosaic.version = 11 : i64} {
  func.func @_cnn_bilstm_kernel(%arg0: i32, %arg1: memref<144x8xf32, #tpu.memory_space<vmem>>, %arg2: memref<24x32xf32, #tpu.memory_space<vmem>>, %arg3: memref<1x32xf32, #tpu.memory_space<vmem>>, %arg4: memref<4x8x32xf32, #tpu.memory_space<vmem>>, %arg5: memref<32x256xf32, #tpu.memory_space<vmem>>, %arg6: memref<32x128xf32, #tpu.memory_space<vmem>>, %arg7: memref<32x128xf32, #tpu.memory_space<vmem>>, %arg8: memref<1x256xf32, #tpu.memory_space<vmem>>, %arg9: memref<64x256xf32, #tpu.memory_space<vmem>>, %arg10: memref<32x128xf32, #tpu.memory_space<vmem>>, %arg11: memref<32x128xf32, #tpu.memory_space<vmem>>, %arg12: memref<1x256xf32, #tpu.memory_space<vmem>>, %arg13: memref<128x64xf32, #tpu.memory_space<vmem>>, %arg14: memref<128x256xf32, #tpu.memory_space<vmem>>, %arg15: memref<128x64xf32, #tpu.memory_space<vmem>>) attributes {dimension_semantics = [#tpu.dimension_semantics<arbitrary>], iteration_bounds = array<i64: 1>, scalar_prefetch = 0 : i64, scratch_operands = 2 : i64, tpu.core_type = #tpu.core_type<tc>, window_params = [{pipeline_mode = #tpu.pipeline_mode<synchronous>, transform_indices = @transform_0, window_bounds = array<i64: 144, 8>}, {pipeline_mode = #tpu.pipeline_mode<synchronous>, transform_indices = @transform_1, window_bounds = array<i64: 24, 32>}, {pipeline_mode = #tpu.pipeline_mode<synchronous>, transform_indices = @transform_2, window_bounds = array<i64: 1, 32>}, {pipeline_mode = #tpu.pipeline_mode<synchronous>, transform_indices = @transform_3, window_bounds = array<i64: 4, 8, 32>}, {pipeline_mode = #tpu.pipeline_mode<synchronous>, transform_indices = @transform_4, window_bounds = array<i64: 32, 256>}, {pipeline_mode = #tpu.pipeline_mode<synchronous>, transform_indices = @transform_5, window_bounds = array<i64: 32, 128>}, {pipeline_mode = #tpu.pipeline_mode<synchronous>, transform_indices = @transform_6, window_bounds = array<i64: 32, 128>}, {pipeline_mode = #tpu.pipeline_mode<synchronous>, transform_indices = @transform_7, window_bounds = array<i64: 1, 256>}, {pipeline_mode = #tpu.pipeline_mode<synchronous>, transform_indices = @transform_8, window_bounds = array<i64: 64, 256>}, {pipeline_mode = #tpu.pipeline_mode<synchronous>, transform_indices = @transform_9, window_bounds = array<i64: 32, 128>}, {pipeline_mode = #tpu.pipeline_mode<synchronous>, transform_indices = @transform_10, window_bounds = array<i64: 32, 128>}, {pipeline_mode = #tpu.pipeline_mode<synchronous>, transform_indices = @transform_11, window_bounds = array<i64: 1, 256>}, {pipeline_mode = #tpu.pipeline_mode<synchronous>, transform_indices = @transform_12, window_bounds = array<i64: 128, 64>}]} {
    %c0 = arith.constant 0 : index
    %c0_0 = arith.constant 0 : index
    %0 = vector.load %arg1[%c0, %c0_0] : memref<144x8xf32, #tpu.memory_space<vmem>>, vector<144x8xf32>
    %1 = vector.extract_strided_slice %0 {offsets = [0, 0], sizes = [128, 8], strides = [1, 1]} : vector<144x8xf32> to vector<128x8xf32>
    %2 = vector.extract_strided_slice %0 {offsets = [8, 0], sizes = [128, 8], strides = [1, 1]} : vector<144x8xf32> to vector<128x8xf32>
    %3 = vector.extract_strided_slice %0 {offsets = [16, 0], sizes = [128, 8], strides = [1, 1]} : vector<144x8xf32> to vector<128x8xf32>
    %4 = tpu.concatenate %1, %2, %3 in 1 : vector<128x8xf32>, vector<128x8xf32>, vector<128x8xf32> -> vector<128x24xf32>
    %c0_1 = arith.constant 0 : index
    %c0_2 = arith.constant 0 : index
    %5 = vector.load %arg2[%c0_1, %c0_2] : memref<24x32xf32, #tpu.memory_space<vmem>>, vector<24x32xf32>
    %cst = arith.constant dense<0.000000e+00> : vector<128x32xf32>
    %6 = tpu.matmul %4, %5, %cst {dimension_numbers = #tpu.dot_dimension_numbers<[1], [0], [0], [1], [0, 0, 1, 1], [], []>} : vector<128x24xf32>, vector<24x32xf32>, vector<128x32xf32> -> vector<128x32xf32>
    %c0_3 = arith.constant 0 : index
    %c0_4 = arith.constant 0 : index
    %7 = vector.load %arg3[%c0_3, %c0_4] : memref<1x32xf32, #tpu.memory_space<vmem>>, vector<1x32xf32>
    %8 = vector.broadcast %7 : vector<1x32xf32> to vector<128x32xf32>
    %9 = arith.addf %6, %8 : vector<128x32xf32>
    %cst_5 = arith.constant 0.000000e+00 : f32
    %10 = vector.broadcast %cst_5 : f32 to vector<128x32xf32>
    %11 = arith.maximumf %9, %10 : vector<128x32xf32>
    %cst_6 = arith.constant 0.000000e+00 : f32
    %12 = vector.broadcast %cst_6 : f32 to vector<8x32xf32>
    %13 = tpu.concatenate %12, %11, %12 in 0 : vector<8x32xf32>, vector<128x32xf32>, vector<8x32xf32> -> vector<144x32xf32>
    %14 = vector.extract_strided_slice %13 {offsets = [0, 0], sizes = [128, 32], strides = [1, 1]} : vector<144x32xf32> to vector<128x32xf32>
    %15 = vector.extract_strided_slice %13 {offsets = [8, 0], sizes = [128, 32], strides = [1, 1]} : vector<144x32xf32> to vector<128x32xf32>
    %16 = arith.maximumf %14, %15 : vector<128x32xf32>
    %17 = vector.extract_strided_slice %13 {offsets = [16, 0], sizes = [128, 32], strides = [1, 1]} : vector<144x32xf32> to vector<128x32xf32>
    %18 = arith.maximumf %16, %17 : vector<128x32xf32>
    %19 = tpu.iota {dimensions = array<i32: 1>} : vector<8x128xi32>
    %c64_i32 = arith.constant 64 : i32
    %20 = vector.broadcast %c64_i32 : i32 to vector<8x128xi32>
    %21 = arith.cmpi sge, %19, %20 : vector<8x128xi32>
    %c96_i32 = arith.constant 96 : i32
    %22 = vector.broadcast %c96_i32 : i32 to vector<8x128xi32>
    %23 = arith.cmpi slt, %19, %22 : vector<8x128xi32>
    %24 = arith.andi %21, %23 : vector<8x128xi1>
    %c0_7 = arith.constant 0 : index
    %c0_8 = arith.constant 0 : index
    %25 = vector.load %arg5[%c0_7, %c0_8] : memref<32x256xf32, #tpu.memory_space<vmem>>, vector<32x256xf32>
    %c0_9 = arith.constant 0 : index
    %c0_10 = arith.constant 0 : index
    %26 = vector.load %arg6[%c0_9, %c0_10] : memref<32x128xf32, #tpu.memory_space<vmem>>, vector<32x128xf32>
    %c0_11 = arith.constant 0 : index
    %c0_12 = arith.constant 0 : index
    %27 = vector.load %arg7[%c0_11, %c0_12] : memref<32x128xf32, #tpu.memory_space<vmem>>, vector<32x128xf32>
    %c0_13 = arith.constant 0 : index
    %c0_14 = arith.constant 0 : index
    %28 = vector.load %arg8[%c0_13, %c0_14] : memref<1x256xf32, #tpu.memory_space<vmem>>, vector<1x256xf32>
    %cst_15 = arith.constant dense<0.000000e+00> : vector<128x256xf32>
    %29 = tpu.matmul %18, %25, %cst_15 {dimension_numbers = #tpu.dot_dimension_numbers<[1], [0], [0], [1], [0, 0, 1, 1], [], []>} : vector<128x32xf32>, vector<32x256xf32>, vector<128x256xf32> -> vector<128x256xf32>
    %30 = vector.broadcast %28 : vector<1x256xf32> to vector<128x256xf32>
    %31 = arith.addf %29, %30 : vector<128x256xf32>
    %c0_16 = arith.constant 0 : index
    %c0_17 = arith.constant 0 : index
    %32 = vector.load %arg14[%c0_16, %c0_17] : memref<128x256xf32, #tpu.memory_space<vmem>>, vector<128x256xf32>
    tpu.vector_store %arg14[%c0_16, %c0_17], %31 {strides = array<i32>} : memref<128x256xf32, #tpu.memory_space<vmem>>, vector<128x256xf32>,
    %cst_18 = arith.constant 0.000000e+00 : f32
    %33 = vector.broadcast %cst_18 : f32 to vector<8x32xf32>
    %cst_19 = arith.constant 0.000000e+00 : f32
    %34 = vector.broadcast %cst_19 : f32 to vector<8x32xf32>
    %c0_20 = arith.constant 0 : index
    %c0_21 = arith.constant 0 : index
    %c0_22 = arith.constant 0 : index
    %35 = vector.load %arg4[%c0_20, %c0_21, %c0_22] : memref<4x8x32xf32, #tpu.memory_space<vmem>>, vector<1x8x32xf32>
    %36 = vector.shape_cast %35 : vector<1x8x32xf32> to vector<8x32xf32>
    %c1 = arith.constant 1 : index
    %c0_23 = arith.constant 0 : index
    %c0_24 = arith.constant 0 : index
    %37 = vector.load %arg4[%c1, %c0_23, %c0_24] : memref<4x8x32xf32, #tpu.memory_space<vmem>>, vector<1x8x32xf32>
    %38 = vector.shape_cast %37 : vector<1x8x32xf32> to vector<8x32xf32>
    %c0_25 = arith.constant 0 : index
    %c0_26 = arith.constant 0 : index
    %39 = vector.load %arg14[%c0_25, %c0_26] : memref<128x256xf32, #tpu.memory_space<vmem>>, vector<8x128xf32>
    %cst_27 = arith.constant dense<0.000000e+00> : vector<8x128xf32>
    %40 = tpu.matmul %33, %26, %cst_27 {dimension_numbers = #tpu.dot_dimension_numbers<[1], [0], [0], [1], [0, 0, 1, 1], [], []>} : vector<8x32xf32>, vector<32x128xf32>, vector<8x128xf32> -> vector<8x128xf32>
    %41 = arith.addf %39, %40 : vector<8x128xf32>
    %42 = math.tanh %41 : vector<8x128xf32>
    %43 = arith.negf %41 : vector<8x128xf32>
    %44 = math.exp %43 : vector<8x128xf32>
    %cst_28 = arith.constant 1.000000e+00 : f32
    %45 = vector.broadcast %cst_28 : f32 to vector<8x128xf32>
    %46 = arith.addf %45, %44 : vector<8x128xf32>
    %47 = arith.divf %45, %46 : vector<8x128xf32>
    %48 = arith.select %24, %42, %47 : vector<8x128xi1>, vector<8x128xf32>
    %49 = vector.extract_strided_slice %48 {offsets = [0, 32], sizes = [8, 32], strides = [1, 1]} : vector<8x128xf32> to vector<8x32xf32>
    %50 = arith.mulf %49, %36 : vector<8x32xf32>
    %51 = vector.extract_strided_slice %48 {offsets = [0, 0], sizes = [8, 32], strides = [1, 1]} : vector<8x128xf32> to vector<8x32xf32>
    %52 = vector.extract_strided_slice %48 {offsets = [0, 64], sizes = [8, 32], strides = [1, 1]} : vector<8x128xf32> to vector<8x32xf32>
    %53 = arith.mulf %51, %52 : vector<8x32xf32>
    %54 = arith.addf %50, %53 : vector<8x32xf32>
    %55 = vector.extract_strided_slice %48 {offsets = [0, 96], sizes = [8, 32], strides = [1, 1]} : vector<8x128xf32> to vector<8x32xf32>
    %56 = math.tanh %54 : vector<8x32xf32>
    %57 = arith.mulf %55, %56 : vector<8x32xf32>
    %c0_29 = arith.constant 0 : index
    %c0_30 = arith.constant 0 : index
    %58 = vector.load %arg15[%c0_29, %c0_30] : memref<128x64xf32, #tpu.memory_space<vmem>>, vector<8x32xf32>
    tpu.vector_store %arg15[%c0_29, %c0_30], %57 {strides = array<i32>} : memref<128x64xf32, #tpu.memory_space<vmem>>, vector<8x32xf32>,
    %c120 = arith.constant 120 : index
    %c128 = arith.constant 128 : index
    %59 = vector.load %arg14[%c120, %c128] : memref<128x256xf32, #tpu.memory_space<vmem>>, vector<8x128xf32>
    %cst_31 = arith.constant dense<0.000000e+00> : vector<8x128xf32>
    %60 = tpu.matmul %34, %27, %cst_31 {dimension_numbers = #tpu.dot_dimension_numbers<[1], [0], [0], [1], [0, 0, 1, 1], [], []>} : vector<8x32xf32>, vector<32x128xf32>, vector<8x128xf32> -> vector<8x128xf32>
    %61 = arith.addf %59, %60 : vector<8x128xf32>
    %62 = math.tanh %61 : vector<8x128xf32>
    %63 = arith.negf %61 : vector<8x128xf32>
    %64 = math.exp %63 : vector<8x128xf32>
    %cst_32 = arith.constant 1.000000e+00 : f32
    %65 = vector.broadcast %cst_32 : f32 to vector<8x128xf32>
    %66 = arith.addf %65, %64 : vector<8x128xf32>
    %67 = arith.divf %65, %66 : vector<8x128xf32>
    %68 = arith.select %24, %62, %67 : vector<8x128xi1>, vector<8x128xf32>
    %69 = vector.extract_strided_slice %68 {offsets = [0, 32], sizes = [8, 32], strides = [1, 1]} : vector<8x128xf32> to vector<8x32xf32>
    %70 = arith.mulf %69, %38 : vector<8x32xf32>
    %71 = vector.extract_strided_slice %68 {offsets = [0, 0], sizes = [8, 32], strides = [1, 1]} : vector<8x128xf32> to vector<8x32xf32>
    %72 = vector.extract_strided_slice %68 {offsets = [0, 64], sizes = [8, 32], strides = [1, 1]} : vector<8x128xf32> to vector<8x32xf32>
    %73 = arith.mulf %71, %72 : vector<8x32xf32>
    %74 = arith.addf %70, %73 : vector<8x32xf32>
    %75 = vector.extract_strided_slice %68 {offsets = [0, 96], sizes = [8, 32], strides = [1, 1]} : vector<8x128xf32> to vector<8x32xf32>
    %76 = math.tanh %74 : vector<8x32xf32>
    %77 = arith.mulf %75, %76 : vector<8x32xf32>
    %c120_33 = arith.constant 120 : index
    %c32 = arith.constant 32 : index
    %78 = vector.load %arg15[%c120_33, %c32] : memref<128x64xf32, #tpu.memory_space<vmem>>, vector<8x32xf32>
    tpu.vector_store %arg15[%c120_33, %c32], %77 {strides = array<i32>} : memref<128x64xf32, #tpu.memory_space<vmem>>, vector<8x32xf32>,
    %c8 = arith.constant 8 : index
    %c0_34 = arith.constant 0 : index
    %79 = vector.load %arg14[%c8, %c0_34] : memref<128x256xf32, #tpu.memory_space<vmem>>, vector<8x128xf32>
    %cst_35 = arith.constant dense<0.000000e+00> : vector<8x128xf32>
    %80 = tpu.matmul %57, %26, %cst_35 {dimension_numbers = #tpu.dot_dimension_numbers<[1], [0], [0], [1], [0, 0, 1, 1], [], []>} : vector<8x32xf32>, vector<32x128xf32>, vector<8x128xf32> -> vector<8x128xf32>
    %81 = arith.addf %79, %80 : vector<8x128xf32>
    %82 = math.tanh %81 : vector<8x128xf32>
    %83 = arith.negf %81 : vector<8x128xf32>
    %84 = math.exp %83 : vector<8x128xf32>
    %cst_36 = arith.constant 1.000000e+00 : f32
    %85 = vector.broadcast %cst_36 : f32 to vector<8x128xf32>
    %86 = arith.addf %85, %84 : vector<8x128xf32>
    %87 = arith.divf %85, %86 : vector<8x128xf32>
    %88 = arith.select %24, %82, %87 : vector<8x128xi1>, vector<8x128xf32>
    %89 = vector.extract_strided_slice %88 {offsets = [0, 32], sizes = [8, 32], strides = [1, 1]} : vector<8x128xf32> to vector<8x32xf32>
    %90 = arith.mulf %89, %54 : vector<8x32xf32>
    %91 = vector.extract_strided_slice %88 {offsets = [0, 0], sizes = [8, 32], strides = [1, 1]} : vector<8x128xf32> to vector<8x32xf32>
    %92 = vector.extract_strided_slice %88 {offsets = [0, 64], sizes = [8, 32], strides = [1, 1]} : vector<8x128xf32> to vector<8x32xf32>
    %93 = arith.mulf %91, %92 : vector<8x32xf32>
    %94 = arith.addf %90, %93 : vector<8x32xf32>
    %95 = vector.extract_strided_slice %88 {offsets = [0, 96], sizes = [8, 32], strides = [1, 1]} : vector<8x128xf32> to vector<8x32xf32>
    %96 = math.tanh %94 : vector<8x32xf32>
    %97 = arith.mulf %95, %96 : vector<8x32xf32>
    %c8_37 = arith.constant 8 : index
    %c0_38 = arith.constant 0 : index
    %98 = vector.load %arg15[%c8_37, %c0_38] : memref<128x64xf32, #tpu.memory_space<vmem>>, vector<8x32xf32>
    tpu.vector_store %arg15[%c8_37, %c0_38], %97 {strides = array<i32>} : memref<128x64xf32, #tpu.memory_space<vmem>>, vector<8x32xf32>,
    %c112 = arith.constant 112 : index
    %c128_39 = arith.constant 128 : index
    %99 = vector.load %arg14[%c112, %c128_39] : memref<128x256xf32, #tpu.memory_space<vmem>>, vector<8x128xf32>
    %cst_40 = arith.constant dense<0.000000e+00> : vector<8x128xf32>
    %100 = tpu.matmul %77, %27, %cst_40 {dimension_numbers = #tpu.dot_dimension_numbers<[1], [0], [0], [1], [0, 0, 1, 1], [], []>} : vector<8x32xf32>, vector<32x128xf32>, vector<8x128xf32> -> vector<8x128xf32>
    %101 = arith.addf %99, %100 : vector<8x128xf32>
    %102 = math.tanh %101 : vector<8x128xf32>
    %103 = arith.negf %101 : vector<8x128xf32>
    %104 = math.exp %103 : vector<8x128xf32>
    %cst_41 = arith.constant 1.000000e+00 : f32
    %105 = vector.broadcast %cst_41 : f32 to vector<8x128xf32>
    %106 = arith.addf %105, %104 : vector<8x128xf32>
    %107 = arith.divf %105, %106 : vector<8x128xf32>
    %108 = arith.select %24, %102, %107 : vector<8x128xi1>, vector<8x128xf32>
    %109 = vector.extract_strided_slice %108 {offsets = [0, 32], sizes = [8, 32], strides = [1, 1]} : vector<8x128xf32> to vector<8x32xf32>
    %110 = arith.mulf %109, %74 : vector<8x32xf32>
    %111 = vector.extract_strided_slice %108 {offsets = [0, 0], sizes = [8, 32], strides = [1, 1]} : vector<8x128xf32> to vector<8x32xf32>
    %112 = vector.extract_strided_slice %108 {offsets = [0, 64], sizes = [8, 32], strides = [1, 1]} : vector<8x128xf32> to vector<8x32xf32>
    %113 = arith.mulf %111, %112 : vector<8x32xf32>
    %114 = arith.addf %110, %113 : vector<8x32xf32>
    %115 = vector.extract_strided_slice %108 {offsets = [0, 96], sizes = [8, 32], strides = [1, 1]} : vector<8x128xf32> to vector<8x32xf32>
    %116 = math.tanh %114 : vector<8x32xf32>
    %117 = arith.mulf %115, %116 : vector<8x32xf32>
    %c112_42 = arith.constant 112 : index
    %c32_43 = arith.constant 32 : index
    %118 = vector.load %arg15[%c112_42, %c32_43] : memref<128x64xf32, #tpu.memory_space<vmem>>, vector<8x32xf32>
    tpu.vector_store %arg15[%c112_42, %c32_43], %117 {strides = array<i32>} : memref<128x64xf32, #tpu.memory_space<vmem>>, vector<8x32xf32>,
    %c16 = arith.constant 16 : index
    %c0_44 = arith.constant 0 : index
    %119 = vector.load %arg14[%c16, %c0_44] : memref<128x256xf32, #tpu.memory_space<vmem>>, vector<8x128xf32>
    %cst_45 = arith.constant dense<0.000000e+00> : vector<8x128xf32>
    %120 = tpu.matmul %97, %26, %cst_45 {dimension_numbers = #tpu.dot_dimension_numbers<[1], [0], [0], [1], [0, 0, 1, 1], [], []>} : vector<8x32xf32>, vector<32x128xf32>, vector<8x128xf32> -> vector<8x128xf32>
    %121 = arith.addf %119, %120 : vector<8x128xf32>
    %122 = math.tanh %121 : vector<8x128xf32>
    %123 = arith.negf %121 : vector<8x128xf32>
    %124 = math.exp %123 : vector<8x128xf32>
    %cst_46 = arith.constant 1.000000e+00 : f32
    %125 = vector.broadcast %cst_46 : f32 to vector<8x128xf32>
    %126 = arith.addf %125, %124 : vector<8x128xf32>
    %127 = arith.divf %125, %126 : vector<8x128xf32>
    %128 = arith.select %24, %122, %127 : vector<8x128xi1>, vector<8x128xf32>
    %129 = vector.extract_strided_slice %128 {offsets = [0, 32], sizes = [8, 32], strides = [1, 1]} : vector<8x128xf32> to vector<8x32xf32>
    %130 = arith.mulf %129, %94 : vector<8x32xf32>
    %131 = vector.extract_strided_slice %128 {offsets = [0, 0], sizes = [8, 32], strides = [1, 1]} : vector<8x128xf32> to vector<8x32xf32>
    %132 = vector.extract_strided_slice %128 {offsets = [0, 64], sizes = [8, 32], strides = [1, 1]} : vector<8x128xf32> to vector<8x32xf32>
    %133 = arith.mulf %131, %132 : vector<8x32xf32>
    %134 = arith.addf %130, %133 : vector<8x32xf32>
    %135 = vector.extract_strided_slice %128 {offsets = [0, 96], sizes = [8, 32], strides = [1, 1]} : vector<8x128xf32> to vector<8x32xf32>
    %136 = math.tanh %134 : vector<8x32xf32>
    %137 = arith.mulf %135, %136 : vector<8x32xf32>
    %c16_47 = arith.constant 16 : index
    %c0_48 = arith.constant 0 : index
    %138 = vector.load %arg15[%c16_47, %c0_48] : memref<128x64xf32, #tpu.memory_space<vmem>>, vector<8x32xf32>
    tpu.vector_store %arg15[%c16_47, %c0_48], %137 {strides = array<i32>} : memref<128x64xf32, #tpu.memory_space<vmem>>, vector<8x32xf32>,
    %c104 = arith.constant 104 : index
    %c128_49 = arith.constant 128 : index
    %139 = vector.load %arg14[%c104, %c128_49] : memref<128x256xf32, #tpu.memory_space<vmem>>, vector<8x128xf32>
    %cst_50 = arith.constant dense<0.000000e+00> : vector<8x128xf32>
    %140 = tpu.matmul %117, %27, %cst_50 {dimension_numbers = #tpu.dot_dimension_numbers<[1], [0], [0], [1], [0, 0, 1, 1], [], []>} : vector<8x32xf32>, vector<32x128xf32>, vector<8x128xf32> -> vector<8x128xf32>
    %141 = arith.addf %139, %140 : vector<8x128xf32>
    %142 = math.tanh %141 : vector<8x128xf32>
    %143 = arith.negf %141 : vector<8x128xf32>
    %144 = math.exp %143 : vector<8x128xf32>
    %cst_51 = arith.constant 1.000000e+00 : f32
    %145 = vector.broadcast %cst_51 : f32 to vector<8x128xf32>
    %146 = arith.addf %145, %144 : vector<8x128xf32>
    %147 = arith.divf %145, %146 : vector<8x128xf32>
    %148 = arith.select %24, %142, %147 : vector<8x128xi1>, vector<8x128xf32>
    %149 = vector.extract_strided_slice %148 {offsets = [0, 32], sizes = [8, 32], strides = [1, 1]} : vector<8x128xf32> to vector<8x32xf32>
    %150 = arith.mulf %149, %114 : vector<8x32xf32>
    %151 = vector.extract_strided_slice %148 {offsets = [0, 0], sizes = [8, 32], strides = [1, 1]} : vector<8x128xf32> to vector<8x32xf32>
    %152 = vector.extract_strided_slice %148 {offsets = [0, 64], sizes = [8, 32], strides = [1, 1]} : vector<8x128xf32> to vector<8x32xf32>
    %153 = arith.mulf %151, %152 : vector<8x32xf32>
    %154 = arith.addf %150, %153 : vector<8x32xf32>
    %155 = vector.extract_strided_slice %148 {offsets = [0, 96], sizes = [8, 32], strides = [1, 1]} : vector<8x128xf32> to vector<8x32xf32>
    %156 = math.tanh %154 : vector<8x32xf32>
    %157 = arith.mulf %155, %156 : vector<8x32xf32>
    %c104_52 = arith.constant 104 : index
    %c32_53 = arith.constant 32 : index
    %158 = vector.load %arg15[%c104_52, %c32_53] : memref<128x64xf32, #tpu.memory_space<vmem>>, vector<8x32xf32>
    tpu.vector_store %arg15[%c104_52, %c32_53], %157 {strides = array<i32>} : memref<128x64xf32, #tpu.memory_space<vmem>>, vector<8x32xf32>,
    %c24 = arith.constant 24 : index
    %c0_54 = arith.constant 0 : index
    %159 = vector.load %arg14[%c24, %c0_54] : memref<128x256xf32, #tpu.memory_space<vmem>>, vector<8x128xf32>
    %cst_55 = arith.constant dense<0.000000e+00> : vector<8x128xf32>
    %160 = tpu.matmul %137, %26, %cst_55 {dimension_numbers = #tpu.dot_dimension_numbers<[1], [0], [0], [1], [0, 0, 1, 1], [], []>} : vector<8x32xf32>, vector<32x128xf32>, vector<8x128xf32> -> vector<8x128xf32>
    %161 = arith.addf %159, %160 : vector<8x128xf32>
    %162 = math.tanh %161 : vector<8x128xf32>
    %163 = arith.negf %161 : vector<8x128xf32>
    %164 = math.exp %163 : vector<8x128xf32>
    %cst_56 = arith.constant 1.000000e+00 : f32
    %165 = vector.broadcast %cst_56 : f32 to vector<8x128xf32>
    %166 = arith.addf %165, %164 : vector<8x128xf32>
    %167 = arith.divf %165, %166 : vector<8x128xf32>
    %168 = arith.select %24, %162, %167 : vector<8x128xi1>, vector<8x128xf32>
    %169 = vector.extract_strided_slice %168 {offsets = [0, 32], sizes = [8, 32], strides = [1, 1]} : vector<8x128xf32> to vector<8x32xf32>
    %170 = arith.mulf %169, %134 : vector<8x32xf32>
    %171 = vector.extract_strided_slice %168 {offsets = [0, 0], sizes = [8, 32], strides = [1, 1]} : vector<8x128xf32> to vector<8x32xf32>
    %172 = vector.extract_strided_slice %168 {offsets = [0, 64], sizes = [8, 32], strides = [1, 1]} : vector<8x128xf32> to vector<8x32xf32>
    %173 = arith.mulf %171, %172 : vector<8x32xf32>
    %174 = arith.addf %170, %173 : vector<8x32xf32>
    %175 = vector.extract_strided_slice %168 {offsets = [0, 96], sizes = [8, 32], strides = [1, 1]} : vector<8x128xf32> to vector<8x32xf32>
    %176 = math.tanh %174 : vector<8x32xf32>
    %177 = arith.mulf %175, %176 : vector<8x32xf32>
    %c24_57 = arith.constant 24 : index
    %c0_58 = arith.constant 0 : index
    %178 = vector.load %arg15[%c24_57, %c0_58] : memref<128x64xf32, #tpu.memory_space<vmem>>, vector<8x32xf32>
    tpu.vector_store %arg15[%c24_57, %c0_58], %177 {strides = array<i32>} : memref<128x64xf32, #tpu.memory_space<vmem>>, vector<8x32xf32>,
    %c96 = arith.constant 96 : index
    %c128_59 = arith.constant 128 : index
    %179 = vector.load %arg14[%c96, %c128_59] : memref<128x256xf32, #tpu.memory_space<vmem>>, vector<8x128xf32>
    %cst_60 = arith.constant dense<0.000000e+00> : vector<8x128xf32>
    %180 = tpu.matmul %157, %27, %cst_60 {dimension_numbers = #tpu.dot_dimension_numbers<[1], [0], [0], [1], [0, 0, 1, 1], [], []>} : vector<8x32xf32>, vector<32x128xf32>, vector<8x128xf32> -> vector<8x128xf32>
    %181 = arith.addf %179, %180 : vector<8x128xf32>
    %182 = math.tanh %181 : vector<8x128xf32>
    %183 = arith.negf %181 : vector<8x128xf32>
    %184 = math.exp %183 : vector<8x128xf32>
    %cst_61 = arith.constant 1.000000e+00 : f32
    %185 = vector.broadcast %cst_61 : f32 to vector<8x128xf32>
    %186 = arith.addf %185, %184 : vector<8x128xf32>
    %187 = arith.divf %185, %186 : vector<8x128xf32>
    %188 = arith.select %24, %182, %187 : vector<8x128xi1>, vector<8x128xf32>
    %189 = vector.extract_strided_slice %188 {offsets = [0, 32], sizes = [8, 32], strides = [1, 1]} : vector<8x128xf32> to vector<8x32xf32>
    %190 = arith.mulf %189, %154 : vector<8x32xf32>
    %191 = vector.extract_strided_slice %188 {offsets = [0, 0], sizes = [8, 32], strides = [1, 1]} : vector<8x128xf32> to vector<8x32xf32>
    %192 = vector.extract_strided_slice %188 {offsets = [0, 64], sizes = [8, 32], strides = [1, 1]} : vector<8x128xf32> to vector<8x32xf32>
    %193 = arith.mulf %191, %192 : vector<8x32xf32>
    %194 = arith.addf %190, %193 : vector<8x32xf32>
    %195 = vector.extract_strided_slice %188 {offsets = [0, 96], sizes = [8, 32], strides = [1, 1]} : vector<8x128xf32> to vector<8x32xf32>
    %196 = math.tanh %194 : vector<8x32xf32>
    %197 = arith.mulf %195, %196 : vector<8x32xf32>
    %c96_62 = arith.constant 96 : index
    %c32_63 = arith.constant 32 : index
    %198 = vector.load %arg15[%c96_62, %c32_63] : memref<128x64xf32, #tpu.memory_space<vmem>>, vector<8x32xf32>
    tpu.vector_store %arg15[%c96_62, %c32_63], %197 {strides = array<i32>} : memref<128x64xf32, #tpu.memory_space<vmem>>, vector<8x32xf32>,
    %c32_64 = arith.constant 32 : index
    %c0_65 = arith.constant 0 : index
    %199 = vector.load %arg14[%c32_64, %c0_65] : memref<128x256xf32, #tpu.memory_space<vmem>>, vector<8x128xf32>
    %cst_66 = arith.constant dense<0.000000e+00> : vector<8x128xf32>
    %200 = tpu.matmul %177, %26, %cst_66 {dimension_numbers = #tpu.dot_dimension_numbers<[1], [0], [0], [1], [0, 0, 1, 1], [], []>} : vector<8x32xf32>, vector<32x128xf32>, vector<8x128xf32> -> vector<8x128xf32>
    %201 = arith.addf %199, %200 : vector<8x128xf32>
    %202 = math.tanh %201 : vector<8x128xf32>
    %203 = arith.negf %201 : vector<8x128xf32>
    %204 = math.exp %203 : vector<8x128xf32>
    %cst_67 = arith.constant 1.000000e+00 : f32
    %205 = vector.broadcast %cst_67 : f32 to vector<8x128xf32>
    %206 = arith.addf %205, %204 : vector<8x128xf32>
    %207 = arith.divf %205, %206 : vector<8x128xf32>
    %208 = arith.select %24, %202, %207 : vector<8x128xi1>, vector<8x128xf32>
    %209 = vector.extract_strided_slice %208 {offsets = [0, 32], sizes = [8, 32], strides = [1, 1]} : vector<8x128xf32> to vector<8x32xf32>
    %210 = arith.mulf %209, %174 : vector<8x32xf32>
    %211 = vector.extract_strided_slice %208 {offsets = [0, 0], sizes = [8, 32], strides = [1, 1]} : vector<8x128xf32> to vector<8x32xf32>
    %212 = vector.extract_strided_slice %208 {offsets = [0, 64], sizes = [8, 32], strides = [1, 1]} : vector<8x128xf32> to vector<8x32xf32>
    %213 = arith.mulf %211, %212 : vector<8x32xf32>
    %214 = arith.addf %210, %213 : vector<8x32xf32>
    %215 = vector.extract_strided_slice %208 {offsets = [0, 96], sizes = [8, 32], strides = [1, 1]} : vector<8x128xf32> to vector<8x32xf32>
    %216 = math.tanh %214 : vector<8x32xf32>
    %217 = arith.mulf %215, %216 : vector<8x32xf32>
    %c32_68 = arith.constant 32 : index
    %c0_69 = arith.constant 0 : index
    %218 = vector.load %arg15[%c32_68, %c0_69] : memref<128x64xf32, #tpu.memory_space<vmem>>, vector<8x32xf32>
    tpu.vector_store %arg15[%c32_68, %c0_69], %217 {strides = array<i32>} : memref<128x64xf32, #tpu.memory_space<vmem>>, vector<8x32xf32>,
    %c88 = arith.constant 88 : index
    %c128_70 = arith.constant 128 : index
    %219 = vector.load %arg14[%c88, %c128_70] : memref<128x256xf32, #tpu.memory_space<vmem>>, vector<8x128xf32>
    %cst_71 = arith.constant dense<0.000000e+00> : vector<8x128xf32>
    %220 = tpu.matmul %197, %27, %cst_71 {dimension_numbers = #tpu.dot_dimension_numbers<[1], [0], [0], [1], [0, 0, 1, 1], [], []>} : vector<8x32xf32>, vector<32x128xf32>, vector<8x128xf32> -> vector<8x128xf32>
    %221 = arith.addf %219, %220 : vector<8x128xf32>
    %222 = math.tanh %221 : vector<8x128xf32>
    %223 = arith.negf %221 : vector<8x128xf32>
    %224 = math.exp %223 : vector<8x128xf32>
    %cst_72 = arith.constant 1.000000e+00 : f32
    %225 = vector.broadcast %cst_72 : f32 to vector<8x128xf32>
    %226 = arith.addf %225, %224 : vector<8x128xf32>
    %227 = arith.divf %225, %226 : vector<8x128xf32>
    %228 = arith.select %24, %222, %227 : vector<8x128xi1>, vector<8x128xf32>
    %229 = vector.extract_strided_slice %228 {offsets = [0, 32], sizes = [8, 32], strides = [1, 1]} : vector<8x128xf32> to vector<8x32xf32>
    %230 = arith.mulf %229, %194 : vector<8x32xf32>
    %231 = vector.extract_strided_slice %228 {offsets = [0, 0], sizes = [8, 32], strides = [1, 1]} : vector<8x128xf32> to vector<8x32xf32>
    %232 = vector.extract_strided_slice %228 {offsets = [0, 64], sizes = [8, 32], strides = [1, 1]} : vector<8x128xf32> to vector<8x32xf32>
    %233 = arith.mulf %231, %232 : vector<8x32xf32>
    %234 = arith.addf %230, %233 : vector<8x32xf32>
    %235 = vector.extract_strided_slice %228 {offsets = [0, 96], sizes = [8, 32], strides = [1, 1]} : vector<8x128xf32> to vector<8x32xf32>
    %236 = math.tanh %234 : vector<8x32xf32>
    %237 = arith.mulf %235, %236 : vector<8x32xf32>
    %c88_73 = arith.constant 88 : index
    %c32_74 = arith.constant 32 : index
    %238 = vector.load %arg15[%c88_73, %c32_74] : memref<128x64xf32, #tpu.memory_space<vmem>>, vector<8x32xf32>
    tpu.vector_store %arg15[%c88_73, %c32_74], %237 {strides = array<i32>} : memref<128x64xf32, #tpu.memory_space<vmem>>, vector<8x32xf32>,
    %c40 = arith.constant 40 : index
    %c0_75 = arith.constant 0 : index
    %239 = vector.load %arg14[%c40, %c0_75] : memref<128x256xf32, #tpu.memory_space<vmem>>, vector<8x128xf32>
    %cst_76 = arith.constant dense<0.000000e+00> : vector<8x128xf32>
    %240 = tpu.matmul %217, %26, %cst_76 {dimension_numbers = #tpu.dot_dimension_numbers<[1], [0], [0], [1], [0, 0, 1, 1], [], []>} : vector<8x32xf32>, vector<32x128xf32>, vector<8x128xf32> -> vector<8x128xf32>
    %241 = arith.addf %239, %240 : vector<8x128xf32>
    %242 = math.tanh %241 : vector<8x128xf32>
    %243 = arith.negf %241 : vector<8x128xf32>
    %244 = math.exp %243 : vector<8x128xf32>
    %cst_77 = arith.constant 1.000000e+00 : f32
    %245 = vector.broadcast %cst_77 : f32 to vector<8x128xf32>
    %246 = arith.addf %245, %244 : vector<8x128xf32>
    %247 = arith.divf %245, %246 : vector<8x128xf32>
    %248 = arith.select %24, %242, %247 : vector<8x128xi1>, vector<8x128xf32>
    %249 = vector.extract_strided_slice %248 {offsets = [0, 32], sizes = [8, 32], strides = [1, 1]} : vector<8x128xf32> to vector<8x32xf32>
    %250 = arith.mulf %249, %214 : vector<8x32xf32>
    %251 = vector.extract_strided_slice %248 {offsets = [0, 0], sizes = [8, 32], strides = [1, 1]} : vector<8x128xf32> to vector<8x32xf32>
    %252 = vector.extract_strided_slice %248 {offsets = [0, 64], sizes = [8, 32], strides = [1, 1]} : vector<8x128xf32> to vector<8x32xf32>
    %253 = arith.mulf %251, %252 : vector<8x32xf32>
    %254 = arith.addf %250, %253 : vector<8x32xf32>
    %255 = vector.extract_strided_slice %248 {offsets = [0, 96], sizes = [8, 32], strides = [1, 1]} : vector<8x128xf32> to vector<8x32xf32>
    %256 = math.tanh %254 : vector<8x32xf32>
    %257 = arith.mulf %255, %256 : vector<8x32xf32>
    %c40_78 = arith.constant 40 : index
    %c0_79 = arith.constant 0 : index
    %258 = vector.load %arg15[%c40_78, %c0_79] : memref<128x64xf32, #tpu.memory_space<vmem>>, vector<8x32xf32>
    tpu.vector_store %arg15[%c40_78, %c0_79], %257 {strides = array<i32>} : memref<128x64xf32, #tpu.memory_space<vmem>>, vector<8x32xf32>,
    %c80 = arith.constant 80 : index
    %c128_80 = arith.constant 128 : index
    %259 = vector.load %arg14[%c80, %c128_80] : memref<128x256xf32, #tpu.memory_space<vmem>>, vector<8x128xf32>
    %cst_81 = arith.constant dense<0.000000e+00> : vector<8x128xf32>
    %260 = tpu.matmul %237, %27, %cst_81 {dimension_numbers = #tpu.dot_dimension_numbers<[1], [0], [0], [1], [0, 0, 1, 1], [], []>} : vector<8x32xf32>, vector<32x128xf32>, vector<8x128xf32> -> vector<8x128xf32>
    %261 = arith.addf %259, %260 : vector<8x128xf32>
    %262 = math.tanh %261 : vector<8x128xf32>
    %263 = arith.negf %261 : vector<8x128xf32>
    %264 = math.exp %263 : vector<8x128xf32>
    %cst_82 = arith.constant 1.000000e+00 : f32
    %265 = vector.broadcast %cst_82 : f32 to vector<8x128xf32>
    %266 = arith.addf %265, %264 : vector<8x128xf32>
    %267 = arith.divf %265, %266 : vector<8x128xf32>
    %268 = arith.select %24, %262, %267 : vector<8x128xi1>, vector<8x128xf32>
    %269 = vector.extract_strided_slice %268 {offsets = [0, 32], sizes = [8, 32], strides = [1, 1]} : vector<8x128xf32> to vector<8x32xf32>
    %270 = arith.mulf %269, %234 : vector<8x32xf32>
    %271 = vector.extract_strided_slice %268 {offsets = [0, 0], sizes = [8, 32], strides = [1, 1]} : vector<8x128xf32> to vector<8x32xf32>
    %272 = vector.extract_strided_slice %268 {offsets = [0, 64], sizes = [8, 32], strides = [1, 1]} : vector<8x128xf32> to vector<8x32xf32>
    %273 = arith.mulf %271, %272 : vector<8x32xf32>
    %274 = arith.addf %270, %273 : vector<8x32xf32>
    %275 = vector.extract_strided_slice %268 {offsets = [0, 96], sizes = [8, 32], strides = [1, 1]} : vector<8x128xf32> to vector<8x32xf32>
    %276 = math.tanh %274 : vector<8x32xf32>
    %277 = arith.mulf %275, %276 : vector<8x32xf32>
    %c80_83 = arith.constant 80 : index
    %c32_84 = arith.constant 32 : index
    %278 = vector.load %arg15[%c80_83, %c32_84] : memref<128x64xf32, #tpu.memory_space<vmem>>, vector<8x32xf32>
    tpu.vector_store %arg15[%c80_83, %c32_84], %277 {strides = array<i32>} : memref<128x64xf32, #tpu.memory_space<vmem>>, vector<8x32xf32>,
    %c48 = arith.constant 48 : index
    %c0_85 = arith.constant 0 : index
    %279 = vector.load %arg14[%c48, %c0_85] : memref<128x256xf32, #tpu.memory_space<vmem>>, vector<8x128xf32>
    %cst_86 = arith.constant dense<0.000000e+00> : vector<8x128xf32>
    %280 = tpu.matmul %257, %26, %cst_86 {dimension_numbers = #tpu.dot_dimension_numbers<[1], [0], [0], [1], [0, 0, 1, 1], [], []>} : vector<8x32xf32>, vector<32x128xf32>, vector<8x128xf32> -> vector<8x128xf32>
    %281 = arith.addf %279, %280 : vector<8x128xf32>
    %282 = math.tanh %281 : vector<8x128xf32>
    %283 = arith.negf %281 : vector<8x128xf32>
    %284 = math.exp %283 : vector<8x128xf32>
    %cst_87 = arith.constant 1.000000e+00 : f32
    %285 = vector.broadcast %cst_87 : f32 to vector<8x128xf32>
    %286 = arith.addf %285, %284 : vector<8x128xf32>
    %287 = arith.divf %285, %286 : vector<8x128xf32>
    %288 = arith.select %24, %282, %287 : vector<8x128xi1>, vector<8x128xf32>
    %289 = vector.extract_strided_slice %288 {offsets = [0, 32], sizes = [8, 32], strides = [1, 1]} : vector<8x128xf32> to vector<8x32xf32>
    %290 = arith.mulf %289, %254 : vector<8x32xf32>
    %291 = vector.extract_strided_slice %288 {offsets = [0, 0], sizes = [8, 32], strides = [1, 1]} : vector<8x128xf32> to vector<8x32xf32>
    %292 = vector.extract_strided_slice %288 {offsets = [0, 64], sizes = [8, 32], strides = [1, 1]} : vector<8x128xf32> to vector<8x32xf32>
    %293 = arith.mulf %291, %292 : vector<8x32xf32>
    %294 = arith.addf %290, %293 : vector<8x32xf32>
    %295 = vector.extract_strided_slice %288 {offsets = [0, 96], sizes = [8, 32], strides = [1, 1]} : vector<8x128xf32> to vector<8x32xf32>
    %296 = math.tanh %294 : vector<8x32xf32>
    %297 = arith.mulf %295, %296 : vector<8x32xf32>
    %c48_88 = arith.constant 48 : index
    %c0_89 = arith.constant 0 : index
    %298 = vector.load %arg15[%c48_88, %c0_89] : memref<128x64xf32, #tpu.memory_space<vmem>>, vector<8x32xf32>
    tpu.vector_store %arg15[%c48_88, %c0_89], %297 {strides = array<i32>} : memref<128x64xf32, #tpu.memory_space<vmem>>, vector<8x32xf32>,
    %c72 = arith.constant 72 : index
    %c128_90 = arith.constant 128 : index
    %299 = vector.load %arg14[%c72, %c128_90] : memref<128x256xf32, #tpu.memory_space<vmem>>, vector<8x128xf32>
    %cst_91 = arith.constant dense<0.000000e+00> : vector<8x128xf32>
    %300 = tpu.matmul %277, %27, %cst_91 {dimension_numbers = #tpu.dot_dimension_numbers<[1], [0], [0], [1], [0, 0, 1, 1], [], []>} : vector<8x32xf32>, vector<32x128xf32>, vector<8x128xf32> -> vector<8x128xf32>
    %301 = arith.addf %299, %300 : vector<8x128xf32>
    %302 = math.tanh %301 : vector<8x128xf32>
    %303 = arith.negf %301 : vector<8x128xf32>
    %304 = math.exp %303 : vector<8x128xf32>
    %cst_92 = arith.constant 1.000000e+00 : f32
    %305 = vector.broadcast %cst_92 : f32 to vector<8x128xf32>
    %306 = arith.addf %305, %304 : vector<8x128xf32>
    %307 = arith.divf %305, %306 : vector<8x128xf32>
    %308 = arith.select %24, %302, %307 : vector<8x128xi1>, vector<8x128xf32>
    %309 = vector.extract_strided_slice %308 {offsets = [0, 32], sizes = [8, 32], strides = [1, 1]} : vector<8x128xf32> to vector<8x32xf32>
    %310 = arith.mulf %309, %274 : vector<8x32xf32>
    %311 = vector.extract_strided_slice %308 {offsets = [0, 0], sizes = [8, 32], strides = [1, 1]} : vector<8x128xf32> to vector<8x32xf32>
    %312 = vector.extract_strided_slice %308 {offsets = [0, 64], sizes = [8, 32], strides = [1, 1]} : vector<8x128xf32> to vector<8x32xf32>
    %313 = arith.mulf %311, %312 : vector<8x32xf32>
    %314 = arith.addf %310, %313 : vector<8x32xf32>
    %315 = vector.extract_strided_slice %308 {offsets = [0, 96], sizes = [8, 32], strides = [1, 1]} : vector<8x128xf32> to vector<8x32xf32>
    %316 = math.tanh %314 : vector<8x32xf32>
    %317 = arith.mulf %315, %316 : vector<8x32xf32>
    %c72_93 = arith.constant 72 : index
    %c32_94 = arith.constant 32 : index
    %318 = vector.load %arg15[%c72_93, %c32_94] : memref<128x64xf32, #tpu.memory_space<vmem>>, vector<8x32xf32>
    tpu.vector_store %arg15[%c72_93, %c32_94], %317 {strides = array<i32>} : memref<128x64xf32, #tpu.memory_space<vmem>>, vector<8x32xf32>,
    %c56 = arith.constant 56 : index
    %c0_95 = arith.constant 0 : index
    %319 = vector.load %arg14[%c56, %c0_95] : memref<128x256xf32, #tpu.memory_space<vmem>>, vector<8x128xf32>
    %cst_96 = arith.constant dense<0.000000e+00> : vector<8x128xf32>
    %320 = tpu.matmul %297, %26, %cst_96 {dimension_numbers = #tpu.dot_dimension_numbers<[1], [0], [0], [1], [0, 0, 1, 1], [], []>} : vector<8x32xf32>, vector<32x128xf32>, vector<8x128xf32> -> vector<8x128xf32>
    %321 = arith.addf %319, %320 : vector<8x128xf32>
    %322 = math.tanh %321 : vector<8x128xf32>
    %323 = arith.negf %321 : vector<8x128xf32>
    %324 = math.exp %323 : vector<8x128xf32>
    %cst_97 = arith.constant 1.000000e+00 : f32
    %325 = vector.broadcast %cst_97 : f32 to vector<8x128xf32>
    %326 = arith.addf %325, %324 : vector<8x128xf32>
    %327 = arith.divf %325, %326 : vector<8x128xf32>
    %328 = arith.select %24, %322, %327 : vector<8x128xi1>, vector<8x128xf32>
    %329 = vector.extract_strided_slice %328 {offsets = [0, 32], sizes = [8, 32], strides = [1, 1]} : vector<8x128xf32> to vector<8x32xf32>
    %330 = arith.mulf %329, %294 : vector<8x32xf32>
    %331 = vector.extract_strided_slice %328 {offsets = [0, 0], sizes = [8, 32], strides = [1, 1]} : vector<8x128xf32> to vector<8x32xf32>
    %332 = vector.extract_strided_slice %328 {offsets = [0, 64], sizes = [8, 32], strides = [1, 1]} : vector<8x128xf32> to vector<8x32xf32>
    %333 = arith.mulf %331, %332 : vector<8x32xf32>
    %334 = arith.addf %330, %333 : vector<8x32xf32>
    %335 = vector.extract_strided_slice %328 {offsets = [0, 96], sizes = [8, 32], strides = [1, 1]} : vector<8x128xf32> to vector<8x32xf32>
    %336 = math.tanh %334 : vector<8x32xf32>
    %337 = arith.mulf %335, %336 : vector<8x32xf32>
    %c56_98 = arith.constant 56 : index
    %c0_99 = arith.constant 0 : index
    %338 = vector.load %arg15[%c56_98, %c0_99] : memref<128x64xf32, #tpu.memory_space<vmem>>, vector<8x32xf32>
    tpu.vector_store %arg15[%c56_98, %c0_99], %337 {strides = array<i32>} : memref<128x64xf32, #tpu.memory_space<vmem>>, vector<8x32xf32>,
    %c64 = arith.constant 64 : index
    %c128_100 = arith.constant 128 : index
    %339 = vector.load %arg14[%c64, %c128_100] : memref<128x256xf32, #tpu.memory_space<vmem>>, vector<8x128xf32>
    %cst_101 = arith.constant dense<0.000000e+00> : vector<8x128xf32>
    %340 = tpu.matmul %317, %27, %cst_101 {dimension_numbers = #tpu.dot_dimension_numbers<[1], [0], [0], [1], [0, 0, 1, 1], [], []>} : vector<8x32xf32>, vector<32x128xf32>, vector<8x128xf32> -> vector<8x128xf32>
    %341 = arith.addf %339, %340 : vector<8x128xf32>
    %342 = math.tanh %341 : vector<8x128xf32>
    %343 = arith.negf %341 : vector<8x128xf32>
    %344 = math.exp %343 : vector<8x128xf32>
    %cst_102 = arith.constant 1.000000e+00 : f32
    %345 = vector.broadcast %cst_102 : f32 to vector<8x128xf32>
    %346 = arith.addf %345, %344 : vector<8x128xf32>
    %347 = arith.divf %345, %346 : vector<8x128xf32>
    %348 = arith.select %24, %342, %347 : vector<8x128xi1>, vector<8x128xf32>
    %349 = vector.extract_strided_slice %348 {offsets = [0, 32], sizes = [8, 32], strides = [1, 1]} : vector<8x128xf32> to vector<8x32xf32>
    %350 = arith.mulf %349, %314 : vector<8x32xf32>
    %351 = vector.extract_strided_slice %348 {offsets = [0, 0], sizes = [8, 32], strides = [1, 1]} : vector<8x128xf32> to vector<8x32xf32>
    %352 = vector.extract_strided_slice %348 {offsets = [0, 64], sizes = [8, 32], strides = [1, 1]} : vector<8x128xf32> to vector<8x32xf32>
    %353 = arith.mulf %351, %352 : vector<8x32xf32>
    %354 = arith.addf %350, %353 : vector<8x32xf32>
    %355 = vector.extract_strided_slice %348 {offsets = [0, 96], sizes = [8, 32], strides = [1, 1]} : vector<8x128xf32> to vector<8x32xf32>
    %356 = math.tanh %354 : vector<8x32xf32>
    %357 = arith.mulf %355, %356 : vector<8x32xf32>
    %c64_103 = arith.constant 64 : index
    %c32_104 = arith.constant 32 : index
    %358 = vector.load %arg15[%c64_103, %c32_104] : memref<128x64xf32, #tpu.memory_space<vmem>>, vector<8x32xf32>
    tpu.vector_store %arg15[%c64_103, %c32_104], %357 {strides = array<i32>} : memref<128x64xf32, #tpu.memory_space<vmem>>, vector<8x32xf32>,
    %c64_105 = arith.constant 64 : index
    %c0_106 = arith.constant 0 : index
    %359 = vector.load %arg14[%c64_105, %c0_106] : memref<128x256xf32, #tpu.memory_space<vmem>>, vector<8x128xf32>
    %cst_107 = arith.constant dense<0.000000e+00> : vector<8x128xf32>
    %360 = tpu.matmul %337, %26, %cst_107 {dimension_numbers = #tpu.dot_dimension_numbers<[1], [0], [0], [1], [0, 0, 1, 1], [], []>} : vector<8x32xf32>, vector<32x128xf32>, vector<8x128xf32> -> vector<8x128xf32>
    %361 = arith.addf %359, %360 : vector<8x128xf32>
    %362 = math.tanh %361 : vector<8x128xf32>
    %363 = arith.negf %361 : vector<8x128xf32>
    %364 = math.exp %363 : vector<8x128xf32>
    %cst_108 = arith.constant 1.000000e+00 : f32
    %365 = vector.broadcast %cst_108 : f32 to vector<8x128xf32>
    %366 = arith.addf %365, %364 : vector<8x128xf32>
    %367 = arith.divf %365, %366 : vector<8x128xf32>
    %368 = arith.select %24, %362, %367 : vector<8x128xi1>, vector<8x128xf32>
    %369 = vector.extract_strided_slice %368 {offsets = [0, 32], sizes = [8, 32], strides = [1, 1]} : vector<8x128xf32> to vector<8x32xf32>
    %370 = arith.mulf %369, %334 : vector<8x32xf32>
    %371 = vector.extract_strided_slice %368 {offsets = [0, 0], sizes = [8, 32], strides = [1, 1]} : vector<8x128xf32> to vector<8x32xf32>
    %372 = vector.extract_strided_slice %368 {offsets = [0, 64], sizes = [8, 32], strides = [1, 1]} : vector<8x128xf32> to vector<8x32xf32>
    %373 = arith.mulf %371, %372 : vector<8x32xf32>
    %374 = arith.addf %370, %373 : vector<8x32xf32>
    %375 = vector.extract_strided_slice %368 {offsets = [0, 96], sizes = [8, 32], strides = [1, 1]} : vector<8x128xf32> to vector<8x32xf32>
    %376 = math.tanh %374 : vector<8x32xf32>
    %377 = arith.mulf %375, %376 : vector<8x32xf32>
    %c64_109 = arith.constant 64 : index
    %c0_110 = arith.constant 0 : index
    %378 = vector.load %arg15[%c64_109, %c0_110] : memref<128x64xf32, #tpu.memory_space<vmem>>, vector<8x32xf32>
    tpu.vector_store %arg15[%c64_109, %c0_110], %377 {strides = array<i32>} : memref<128x64xf32, #tpu.memory_space<vmem>>, vector<8x32xf32>,
    %c56_111 = arith.constant 56 : index
    %c128_112 = arith.constant 128 : index
    %379 = vector.load %arg14[%c56_111, %c128_112] : memref<128x256xf32, #tpu.memory_space<vmem>>, vector<8x128xf32>
    %cst_113 = arith.constant dense<0.000000e+00> : vector<8x128xf32>
    %380 = tpu.matmul %357, %27, %cst_113 {dimension_numbers = #tpu.dot_dimension_numbers<[1], [0], [0], [1], [0, 0, 1, 1], [], []>} : vector<8x32xf32>, vector<32x128xf32>, vector<8x128xf32> -> vector<8x128xf32>
    %381 = arith.addf %379, %380 : vector<8x128xf32>
    %382 = math.tanh %381 : vector<8x128xf32>
    %383 = arith.negf %381 : vector<8x128xf32>
    %384 = math.exp %383 : vector<8x128xf32>
    %cst_114 = arith.constant 1.000000e+00 : f32
    %385 = vector.broadcast %cst_114 : f32 to vector<8x128xf32>
    %386 = arith.addf %385, %384 : vector<8x128xf32>
    %387 = arith.divf %385, %386 : vector<8x128xf32>
    %388 = arith.select %24, %382, %387 : vector<8x128xi1>, vector<8x128xf32>
    %389 = vector.extract_strided_slice %388 {offsets = [0, 32], sizes = [8, 32], strides = [1, 1]} : vector<8x128xf32> to vector<8x32xf32>
    %390 = arith.mulf %389, %354 : vector<8x32xf32>
    %391 = vector.extract_strided_slice %388 {offsets = [0, 0], sizes = [8, 32], strides = [1, 1]} : vector<8x128xf32> to vector<8x32xf32>
    %392 = vector.extract_strided_slice %388 {offsets = [0, 64], sizes = [8, 32], strides = [1, 1]} : vector<8x128xf32> to vector<8x32xf32>
    %393 = arith.mulf %391, %392 : vector<8x32xf32>
    %394 = arith.addf %390, %393 : vector<8x32xf32>
    %395 = vector.extract_strided_slice %388 {offsets = [0, 96], sizes = [8, 32], strides = [1, 1]} : vector<8x128xf32> to vector<8x32xf32>
    %396 = math.tanh %394 : vector<8x32xf32>
    %397 = arith.mulf %395, %396 : vector<8x32xf32>
    %c56_115 = arith.constant 56 : index
    %c32_116 = arith.constant 32 : index
    %398 = vector.load %arg15[%c56_115, %c32_116] : memref<128x64xf32, #tpu.memory_space<vmem>>, vector<8x32xf32>
    tpu.vector_store %arg15[%c56_115, %c32_116], %397 {strides = array<i32>} : memref<128x64xf32, #tpu.memory_space<vmem>>, vector<8x32xf32>,
    %c72_117 = arith.constant 72 : index
    %c0_118 = arith.constant 0 : index
    %399 = vector.load %arg14[%c72_117, %c0_118] : memref<128x256xf32, #tpu.memory_space<vmem>>, vector<8x128xf32>
    %cst_119 = arith.constant dense<0.000000e+00> : vector<8x128xf32>
    %400 = tpu.matmul %377, %26, %cst_119 {dimension_numbers = #tpu.dot_dimension_numbers<[1], [0], [0], [1], [0, 0, 1, 1], [], []>} : vector<8x32xf32>, vector<32x128xf32>, vector<8x128xf32> -> vector<8x128xf32>
    %401 = arith.addf %399, %400 : vector<8x128xf32>
    %402 = math.tanh %401 : vector<8x128xf32>
    %403 = arith.negf %401 : vector<8x128xf32>
    %404 = math.exp %403 : vector<8x128xf32>
    %cst_120 = arith.constant 1.000000e+00 : f32
    %405 = vector.broadcast %cst_120 : f32 to vector<8x128xf32>
    %406 = arith.addf %405, %404 : vector<8x128xf32>
    %407 = arith.divf %405, %406 : vector<8x128xf32>
    %408 = arith.select %24, %402, %407 : vector<8x128xi1>, vector<8x128xf32>
    %409 = vector.extract_strided_slice %408 {offsets = [0, 32], sizes = [8, 32], strides = [1, 1]} : vector<8x128xf32> to vector<8x32xf32>
    %410 = arith.mulf %409, %374 : vector<8x32xf32>
    %411 = vector.extract_strided_slice %408 {offsets = [0, 0], sizes = [8, 32], strides = [1, 1]} : vector<8x128xf32> to vector<8x32xf32>
    %412 = vector.extract_strided_slice %408 {offsets = [0, 64], sizes = [8, 32], strides = [1, 1]} : vector<8x128xf32> to vector<8x32xf32>
    %413 = arith.mulf %411, %412 : vector<8x32xf32>
    %414 = arith.addf %410, %413 : vector<8x32xf32>
    %415 = vector.extract_strided_slice %408 {offsets = [0, 96], sizes = [8, 32], strides = [1, 1]} : vector<8x128xf32> to vector<8x32xf32>
    %416 = math.tanh %414 : vector<8x32xf32>
    %417 = arith.mulf %415, %416 : vector<8x32xf32>
    %c72_121 = arith.constant 72 : index
    %c0_122 = arith.constant 0 : index
    %418 = vector.load %arg15[%c72_121, %c0_122] : memref<128x64xf32, #tpu.memory_space<vmem>>, vector<8x32xf32>
    tpu.vector_store %arg15[%c72_121, %c0_122], %417 {strides = array<i32>} : memref<128x64xf32, #tpu.memory_space<vmem>>, vector<8x32xf32>,
    %c48_123 = arith.constant 48 : index
    %c128_124 = arith.constant 128 : index
    %419 = vector.load %arg14[%c48_123, %c128_124] : memref<128x256xf32, #tpu.memory_space<vmem>>, vector<8x128xf32>
    %cst_125 = arith.constant dense<0.000000e+00> : vector<8x128xf32>
    %420 = tpu.matmul %397, %27, %cst_125 {dimension_numbers = #tpu.dot_dimension_numbers<[1], [0], [0], [1], [0, 0, 1, 1], [], []>} : vector<8x32xf32>, vector<32x128xf32>, vector<8x128xf32> -> vector<8x128xf32>
    %421 = arith.addf %419, %420 : vector<8x128xf32>
    %422 = math.tanh %421 : vector<8x128xf32>
    %423 = arith.negf %421 : vector<8x128xf32>
    %424 = math.exp %423 : vector<8x128xf32>
    %cst_126 = arith.constant 1.000000e+00 : f32
    %425 = vector.broadcast %cst_126 : f32 to vector<8x128xf32>
    %426 = arith.addf %425, %424 : vector<8x128xf32>
    %427 = arith.divf %425, %426 : vector<8x128xf32>
    %428 = arith.select %24, %422, %427 : vector<8x128xi1>, vector<8x128xf32>
    %429 = vector.extract_strided_slice %428 {offsets = [0, 32], sizes = [8, 32], strides = [1, 1]} : vector<8x128xf32> to vector<8x32xf32>
    %430 = arith.mulf %429, %394 : vector<8x32xf32>
    %431 = vector.extract_strided_slice %428 {offsets = [0, 0], sizes = [8, 32], strides = [1, 1]} : vector<8x128xf32> to vector<8x32xf32>
    %432 = vector.extract_strided_slice %428 {offsets = [0, 64], sizes = [8, 32], strides = [1, 1]} : vector<8x128xf32> to vector<8x32xf32>
    %433 = arith.mulf %431, %432 : vector<8x32xf32>
    %434 = arith.addf %430, %433 : vector<8x32xf32>
    %435 = vector.extract_strided_slice %428 {offsets = [0, 96], sizes = [8, 32], strides = [1, 1]} : vector<8x128xf32> to vector<8x32xf32>
    %436 = math.tanh %434 : vector<8x32xf32>
    %437 = arith.mulf %435, %436 : vector<8x32xf32>
    %c48_127 = arith.constant 48 : index
    %c32_128 = arith.constant 32 : index
    %438 = vector.load %arg15[%c48_127, %c32_128] : memref<128x64xf32, #tpu.memory_space<vmem>>, vector<8x32xf32>
    tpu.vector_store %arg15[%c48_127, %c32_128], %437 {strides = array<i32>} : memref<128x64xf32, #tpu.memory_space<vmem>>, vector<8x32xf32>,
    %c80_129 = arith.constant 80 : index
    %c0_130 = arith.constant 0 : index
    %439 = vector.load %arg14[%c80_129, %c0_130] : memref<128x256xf32, #tpu.memory_space<vmem>>, vector<8x128xf32>
    %cst_131 = arith.constant dense<0.000000e+00> : vector<8x128xf32>
    %440 = tpu.matmul %417, %26, %cst_131 {dimension_numbers = #tpu.dot_dimension_numbers<[1], [0], [0], [1], [0, 0, 1, 1], [], []>} : vector<8x32xf32>, vector<32x128xf32>, vector<8x128xf32> -> vector<8x128xf32>
    %441 = arith.addf %439, %440 : vector<8x128xf32>
    %442 = math.tanh %441 : vector<8x128xf32>
    %443 = arith.negf %441 : vector<8x128xf32>
    %444 = math.exp %443 : vector<8x128xf32>
    %cst_132 = arith.constant 1.000000e+00 : f32
    %445 = vector.broadcast %cst_132 : f32 to vector<8x128xf32>
    %446 = arith.addf %445, %444 : vector<8x128xf32>
    %447 = arith.divf %445, %446 : vector<8x128xf32>
    %448 = arith.select %24, %442, %447 : vector<8x128xi1>, vector<8x128xf32>
    %449 = vector.extract_strided_slice %448 {offsets = [0, 32], sizes = [8, 32], strides = [1, 1]} : vector<8x128xf32> to vector<8x32xf32>
    %450 = arith.mulf %449, %414 : vector<8x32xf32>
    %451 = vector.extract_strided_slice %448 {offsets = [0, 0], sizes = [8, 32], strides = [1, 1]} : vector<8x128xf32> to vector<8x32xf32>
    %452 = vector.extract_strided_slice %448 {offsets = [0, 64], sizes = [8, 32], strides = [1, 1]} : vector<8x128xf32> to vector<8x32xf32>
    %453 = arith.mulf %451, %452 : vector<8x32xf32>
    %454 = arith.addf %450, %453 : vector<8x32xf32>
    %455 = vector.extract_strided_slice %448 {offsets = [0, 96], sizes = [8, 32], strides = [1, 1]} : vector<8x128xf32> to vector<8x32xf32>
    %456 = math.tanh %454 : vector<8x32xf32>
    %457 = arith.mulf %455, %456 : vector<8x32xf32>
    %c80_133 = arith.constant 80 : index
    %c0_134 = arith.constant 0 : index
    %458 = vector.load %arg15[%c80_133, %c0_134] : memref<128x64xf32, #tpu.memory_space<vmem>>, vector<8x32xf32>
    tpu.vector_store %arg15[%c80_133, %c0_134], %457 {strides = array<i32>} : memref<128x64xf32, #tpu.memory_space<vmem>>, vector<8x32xf32>,
    %c40_135 = arith.constant 40 : index
    %c128_136 = arith.constant 128 : index
    %459 = vector.load %arg14[%c40_135, %c128_136] : memref<128x256xf32, #tpu.memory_space<vmem>>, vector<8x128xf32>
    %cst_137 = arith.constant dense<0.000000e+00> : vector<8x128xf32>
    %460 = tpu.matmul %437, %27, %cst_137 {dimension_numbers = #tpu.dot_dimension_numbers<[1], [0], [0], [1], [0, 0, 1, 1], [], []>} : vector<8x32xf32>, vector<32x128xf32>, vector<8x128xf32> -> vector<8x128xf32>
    %461 = arith.addf %459, %460 : vector<8x128xf32>
    %462 = math.tanh %461 : vector<8x128xf32>
    %463 = arith.negf %461 : vector<8x128xf32>
    %464 = math.exp %463 : vector<8x128xf32>
    %cst_138 = arith.constant 1.000000e+00 : f32
    %465 = vector.broadcast %cst_138 : f32 to vector<8x128xf32>
    %466 = arith.addf %465, %464 : vector<8x128xf32>
    %467 = arith.divf %465, %466 : vector<8x128xf32>
    %468 = arith.select %24, %462, %467 : vector<8x128xi1>, vector<8x128xf32>
    %469 = vector.extract_strided_slice %468 {offsets = [0, 32], sizes = [8, 32], strides = [1, 1]} : vector<8x128xf32> to vector<8x32xf32>
    %470 = arith.mulf %469, %434 : vector<8x32xf32>
    %471 = vector.extract_strided_slice %468 {offsets = [0, 0], sizes = [8, 32], strides = [1, 1]} : vector<8x128xf32> to vector<8x32xf32>
    %472 = vector.extract_strided_slice %468 {offsets = [0, 64], sizes = [8, 32], strides = [1, 1]} : vector<8x128xf32> to vector<8x32xf32>
    %473 = arith.mulf %471, %472 : vector<8x32xf32>
    %474 = arith.addf %470, %473 : vector<8x32xf32>
    %475 = vector.extract_strided_slice %468 {offsets = [0, 96], sizes = [8, 32], strides = [1, 1]} : vector<8x128xf32> to vector<8x32xf32>
    %476 = math.tanh %474 : vector<8x32xf32>
    %477 = arith.mulf %475, %476 : vector<8x32xf32>
    %c40_139 = arith.constant 40 : index
    %c32_140 = arith.constant 32 : index
    %478 = vector.load %arg15[%c40_139, %c32_140] : memref<128x64xf32, #tpu.memory_space<vmem>>, vector<8x32xf32>
    tpu.vector_store %arg15[%c40_139, %c32_140], %477 {strides = array<i32>} : memref<128x64xf32, #tpu.memory_space<vmem>>, vector<8x32xf32>,
    %c88_141 = arith.constant 88 : index
    %c0_142 = arith.constant 0 : index
    %479 = vector.load %arg14[%c88_141, %c0_142] : memref<128x256xf32, #tpu.memory_space<vmem>>, vector<8x128xf32>
    %cst_143 = arith.constant dense<0.000000e+00> : vector<8x128xf32>
    %480 = tpu.matmul %457, %26, %cst_143 {dimension_numbers = #tpu.dot_dimension_numbers<[1], [0], [0], [1], [0, 0, 1, 1], [], []>} : vector<8x32xf32>, vector<32x128xf32>, vector<8x128xf32> -> vector<8x128xf32>
    %481 = arith.addf %479, %480 : vector<8x128xf32>
    %482 = math.tanh %481 : vector<8x128xf32>
    %483 = arith.negf %481 : vector<8x128xf32>
    %484 = math.exp %483 : vector<8x128xf32>
    %cst_144 = arith.constant 1.000000e+00 : f32
    %485 = vector.broadcast %cst_144 : f32 to vector<8x128xf32>
    %486 = arith.addf %485, %484 : vector<8x128xf32>
    %487 = arith.divf %485, %486 : vector<8x128xf32>
    %488 = arith.select %24, %482, %487 : vector<8x128xi1>, vector<8x128xf32>
    %489 = vector.extract_strided_slice %488 {offsets = [0, 32], sizes = [8, 32], strides = [1, 1]} : vector<8x128xf32> to vector<8x32xf32>
    %490 = arith.mulf %489, %454 : vector<8x32xf32>
    %491 = vector.extract_strided_slice %488 {offsets = [0, 0], sizes = [8, 32], strides = [1, 1]} : vector<8x128xf32> to vector<8x32xf32>
    %492 = vector.extract_strided_slice %488 {offsets = [0, 64], sizes = [8, 32], strides = [1, 1]} : vector<8x128xf32> to vector<8x32xf32>
    %493 = arith.mulf %491, %492 : vector<8x32xf32>
    %494 = arith.addf %490, %493 : vector<8x32xf32>
    %495 = vector.extract_strided_slice %488 {offsets = [0, 96], sizes = [8, 32], strides = [1, 1]} : vector<8x128xf32> to vector<8x32xf32>
    %496 = math.tanh %494 : vector<8x32xf32>
    %497 = arith.mulf %495, %496 : vector<8x32xf32>
    %c88_145 = arith.constant 88 : index
    %c0_146 = arith.constant 0 : index
    %498 = vector.load %arg15[%c88_145, %c0_146] : memref<128x64xf32, #tpu.memory_space<vmem>>, vector<8x32xf32>
    tpu.vector_store %arg15[%c88_145, %c0_146], %497 {strides = array<i32>} : memref<128x64xf32, #tpu.memory_space<vmem>>, vector<8x32xf32>,
    %c32_147 = arith.constant 32 : index
    %c128_148 = arith.constant 128 : index
    %499 = vector.load %arg14[%c32_147, %c128_148] : memref<128x256xf32, #tpu.memory_space<vmem>>, vector<8x128xf32>
    %cst_149 = arith.constant dense<0.000000e+00> : vector<8x128xf32>
    %500 = tpu.matmul %477, %27, %cst_149 {dimension_numbers = #tpu.dot_dimension_numbers<[1], [0], [0], [1], [0, 0, 1, 1], [], []>} : vector<8x32xf32>, vector<32x128xf32>, vector<8x128xf32> -> vector<8x128xf32>
    %501 = arith.addf %499, %500 : vector<8x128xf32>
    %502 = math.tanh %501 : vector<8x128xf32>
    %503 = arith.negf %501 : vector<8x128xf32>
    %504 = math.exp %503 : vector<8x128xf32>
    %cst_150 = arith.constant 1.000000e+00 : f32
    %505 = vector.broadcast %cst_150 : f32 to vector<8x128xf32>
    %506 = arith.addf %505, %504 : vector<8x128xf32>
    %507 = arith.divf %505, %506 : vector<8x128xf32>
    %508 = arith.select %24, %502, %507 : vector<8x128xi1>, vector<8x128xf32>
    %509 = vector.extract_strided_slice %508 {offsets = [0, 32], sizes = [8, 32], strides = [1, 1]} : vector<8x128xf32> to vector<8x32xf32>
    %510 = arith.mulf %509, %474 : vector<8x32xf32>
    %511 = vector.extract_strided_slice %508 {offsets = [0, 0], sizes = [8, 32], strides = [1, 1]} : vector<8x128xf32> to vector<8x32xf32>
    %512 = vector.extract_strided_slice %508 {offsets = [0, 64], sizes = [8, 32], strides = [1, 1]} : vector<8x128xf32> to vector<8x32xf32>
    %513 = arith.mulf %511, %512 : vector<8x32xf32>
    %514 = arith.addf %510, %513 : vector<8x32xf32>
    %515 = vector.extract_strided_slice %508 {offsets = [0, 96], sizes = [8, 32], strides = [1, 1]} : vector<8x128xf32> to vector<8x32xf32>
    %516 = math.tanh %514 : vector<8x32xf32>
    %517 = arith.mulf %515, %516 : vector<8x32xf32>
    %c32_151 = arith.constant 32 : index
    %c32_152 = arith.constant 32 : index
    %518 = vector.load %arg15[%c32_151, %c32_152] : memref<128x64xf32, #tpu.memory_space<vmem>>, vector<8x32xf32>
    tpu.vector_store %arg15[%c32_151, %c32_152], %517 {strides = array<i32>} : memref<128x64xf32, #tpu.memory_space<vmem>>, vector<8x32xf32>,
    %c96_153 = arith.constant 96 : index
    %c0_154 = arith.constant 0 : index
    %519 = vector.load %arg14[%c96_153, %c0_154] : memref<128x256xf32, #tpu.memory_space<vmem>>, vector<8x128xf32>
    %cst_155 = arith.constant dense<0.000000e+00> : vector<8x128xf32>
    %520 = tpu.matmul %497, %26, %cst_155 {dimension_numbers = #tpu.dot_dimension_numbers<[1], [0], [0], [1], [0, 0, 1, 1], [], []>} : vector<8x32xf32>, vector<32x128xf32>, vector<8x128xf32> -> vector<8x128xf32>
    %521 = arith.addf %519, %520 : vector<8x128xf32>
    %522 = math.tanh %521 : vector<8x128xf32>
    %523 = arith.negf %521 : vector<8x128xf32>
    %524 = math.exp %523 : vector<8x128xf32>
    %cst_156 = arith.constant 1.000000e+00 : f32
    %525 = vector.broadcast %cst_156 : f32 to vector<8x128xf32>
    %526 = arith.addf %525, %524 : vector<8x128xf32>
    %527 = arith.divf %525, %526 : vector<8x128xf32>
    %528 = arith.select %24, %522, %527 : vector<8x128xi1>, vector<8x128xf32>
    %529 = vector.extract_strided_slice %528 {offsets = [0, 32], sizes = [8, 32], strides = [1, 1]} : vector<8x128xf32> to vector<8x32xf32>
    %530 = arith.mulf %529, %494 : vector<8x32xf32>
    %531 = vector.extract_strided_slice %528 {offsets = [0, 0], sizes = [8, 32], strides = [1, 1]} : vector<8x128xf32> to vector<8x32xf32>
    %532 = vector.extract_strided_slice %528 {offsets = [0, 64], sizes = [8, 32], strides = [1, 1]} : vector<8x128xf32> to vector<8x32xf32>
    %533 = arith.mulf %531, %532 : vector<8x32xf32>
    %534 = arith.addf %530, %533 : vector<8x32xf32>
    %535 = vector.extract_strided_slice %528 {offsets = [0, 96], sizes = [8, 32], strides = [1, 1]} : vector<8x128xf32> to vector<8x32xf32>
    %536 = math.tanh %534 : vector<8x32xf32>
    %537 = arith.mulf %535, %536 : vector<8x32xf32>
    %c96_157 = arith.constant 96 : index
    %c0_158 = arith.constant 0 : index
    %538 = vector.load %arg15[%c96_157, %c0_158] : memref<128x64xf32, #tpu.memory_space<vmem>>, vector<8x32xf32>
    tpu.vector_store %arg15[%c96_157, %c0_158], %537 {strides = array<i32>} : memref<128x64xf32, #tpu.memory_space<vmem>>, vector<8x32xf32>,
    %c24_159 = arith.constant 24 : index
    %c128_160 = arith.constant 128 : index
    %539 = vector.load %arg14[%c24_159, %c128_160] : memref<128x256xf32, #tpu.memory_space<vmem>>, vector<8x128xf32>
    %cst_161 = arith.constant dense<0.000000e+00> : vector<8x128xf32>
    %540 = tpu.matmul %517, %27, %cst_161 {dimension_numbers = #tpu.dot_dimension_numbers<[1], [0], [0], [1], [0, 0, 1, 1], [], []>} : vector<8x32xf32>, vector<32x128xf32>, vector<8x128xf32> -> vector<8x128xf32>
    %541 = arith.addf %539, %540 : vector<8x128xf32>
    %542 = math.tanh %541 : vector<8x128xf32>
    %543 = arith.negf %541 : vector<8x128xf32>
    %544 = math.exp %543 : vector<8x128xf32>
    %cst_162 = arith.constant 1.000000e+00 : f32
    %545 = vector.broadcast %cst_162 : f32 to vector<8x128xf32>
    %546 = arith.addf %545, %544 : vector<8x128xf32>
    %547 = arith.divf %545, %546 : vector<8x128xf32>
    %548 = arith.select %24, %542, %547 : vector<8x128xi1>, vector<8x128xf32>
    %549 = vector.extract_strided_slice %548 {offsets = [0, 32], sizes = [8, 32], strides = [1, 1]} : vector<8x128xf32> to vector<8x32xf32>
    %550 = arith.mulf %549, %514 : vector<8x32xf32>
    %551 = vector.extract_strided_slice %548 {offsets = [0, 0], sizes = [8, 32], strides = [1, 1]} : vector<8x128xf32> to vector<8x32xf32>
    %552 = vector.extract_strided_slice %548 {offsets = [0, 64], sizes = [8, 32], strides = [1, 1]} : vector<8x128xf32> to vector<8x32xf32>
    %553 = arith.mulf %551, %552 : vector<8x32xf32>
    %554 = arith.addf %550, %553 : vector<8x32xf32>
    %555 = vector.extract_strided_slice %548 {offsets = [0, 96], sizes = [8, 32], strides = [1, 1]} : vector<8x128xf32> to vector<8x32xf32>
    %556 = math.tanh %554 : vector<8x32xf32>
    %557 = arith.mulf %555, %556 : vector<8x32xf32>
    %c24_163 = arith.constant 24 : index
    %c32_164 = arith.constant 32 : index
    %558 = vector.load %arg15[%c24_163, %c32_164] : memref<128x64xf32, #tpu.memory_space<vmem>>, vector<8x32xf32>
    tpu.vector_store %arg15[%c24_163, %c32_164], %557 {strides = array<i32>} : memref<128x64xf32, #tpu.memory_space<vmem>>, vector<8x32xf32>,
    %c104_165 = arith.constant 104 : index
    %c0_166 = arith.constant 0 : index
    %559 = vector.load %arg14[%c104_165, %c0_166] : memref<128x256xf32, #tpu.memory_space<vmem>>, vector<8x128xf32>
    %cst_167 = arith.constant dense<0.000000e+00> : vector<8x128xf32>
    %560 = tpu.matmul %537, %26, %cst_167 {dimension_numbers = #tpu.dot_dimension_numbers<[1], [0], [0], [1], [0, 0, 1, 1], [], []>} : vector<8x32xf32>, vector<32x128xf32>, vector<8x128xf32> -> vector<8x128xf32>
    %561 = arith.addf %559, %560 : vector<8x128xf32>
    %562 = math.tanh %561 : vector<8x128xf32>
    %563 = arith.negf %561 : vector<8x128xf32>
    %564 = math.exp %563 : vector<8x128xf32>
    %cst_168 = arith.constant 1.000000e+00 : f32
    %565 = vector.broadcast %cst_168 : f32 to vector<8x128xf32>
    %566 = arith.addf %565, %564 : vector<8x128xf32>
    %567 = arith.divf %565, %566 : vector<8x128xf32>
    %568 = arith.select %24, %562, %567 : vector<8x128xi1>, vector<8x128xf32>
    %569 = vector.extract_strided_slice %568 {offsets = [0, 32], sizes = [8, 32], strides = [1, 1]} : vector<8x128xf32> to vector<8x32xf32>
    %570 = arith.mulf %569, %534 : vector<8x32xf32>
    %571 = vector.extract_strided_slice %568 {offsets = [0, 0], sizes = [8, 32], strides = [1, 1]} : vector<8x128xf32> to vector<8x32xf32>
    %572 = vector.extract_strided_slice %568 {offsets = [0, 64], sizes = [8, 32], strides = [1, 1]} : vector<8x128xf32> to vector<8x32xf32>
    %573 = arith.mulf %571, %572 : vector<8x32xf32>
    %574 = arith.addf %570, %573 : vector<8x32xf32>
    %575 = vector.extract_strided_slice %568 {offsets = [0, 96], sizes = [8, 32], strides = [1, 1]} : vector<8x128xf32> to vector<8x32xf32>
    %576 = math.tanh %574 : vector<8x32xf32>
    %577 = arith.mulf %575, %576 : vector<8x32xf32>
    %c104_169 = arith.constant 104 : index
    %c0_170 = arith.constant 0 : index
    %578 = vector.load %arg15[%c104_169, %c0_170] : memref<128x64xf32, #tpu.memory_space<vmem>>, vector<8x32xf32>
    tpu.vector_store %arg15[%c104_169, %c0_170], %577 {strides = array<i32>} : memref<128x64xf32, #tpu.memory_space<vmem>>, vector<8x32xf32>,
    %c16_171 = arith.constant 16 : index
    %c128_172 = arith.constant 128 : index
    %579 = vector.load %arg14[%c16_171, %c128_172] : memref<128x256xf32, #tpu.memory_space<vmem>>, vector<8x128xf32>
    %cst_173 = arith.constant dense<0.000000e+00> : vector<8x128xf32>
    %580 = tpu.matmul %557, %27, %cst_173 {dimension_numbers = #tpu.dot_dimension_numbers<[1], [0], [0], [1], [0, 0, 1, 1], [], []>} : vector<8x32xf32>, vector<32x128xf32>, vector<8x128xf32> -> vector<8x128xf32>
    %581 = arith.addf %579, %580 : vector<8x128xf32>
    %582 = math.tanh %581 : vector<8x128xf32>
    %583 = arith.negf %581 : vector<8x128xf32>
    %584 = math.exp %583 : vector<8x128xf32>
    %cst_174 = arith.constant 1.000000e+00 : f32
    %585 = vector.broadcast %cst_174 : f32 to vector<8x128xf32>
    %586 = arith.addf %585, %584 : vector<8x128xf32>
    %587 = arith.divf %585, %586 : vector<8x128xf32>
    %588 = arith.select %24, %582, %587 : vector<8x128xi1>, vector<8x128xf32>
    %589 = vector.extract_strided_slice %588 {offsets = [0, 32], sizes = [8, 32], strides = [1, 1]} : vector<8x128xf32> to vector<8x32xf32>
    %590 = arith.mulf %589, %554 : vector<8x32xf32>
    %591 = vector.extract_strided_slice %588 {offsets = [0, 0], sizes = [8, 32], strides = [1, 1]} : vector<8x128xf32> to vector<8x32xf32>
    %592 = vector.extract_strided_slice %588 {offsets = [0, 64], sizes = [8, 32], strides = [1, 1]} : vector<8x128xf32> to vector<8x32xf32>
    %593 = arith.mulf %591, %592 : vector<8x32xf32>
    %594 = arith.addf %590, %593 : vector<8x32xf32>
    %595 = vector.extract_strided_slice %588 {offsets = [0, 96], sizes = [8, 32], strides = [1, 1]} : vector<8x128xf32> to vector<8x32xf32>
    %596 = math.tanh %594 : vector<8x32xf32>
    %597 = arith.mulf %595, %596 : vector<8x32xf32>
    %c16_175 = arith.constant 16 : index
    %c32_176 = arith.constant 32 : index
    %598 = vector.load %arg15[%c16_175, %c32_176] : memref<128x64xf32, #tpu.memory_space<vmem>>, vector<8x32xf32>
    tpu.vector_store %arg15[%c16_175, %c32_176], %597 {strides = array<i32>} : memref<128x64xf32, #tpu.memory_space<vmem>>, vector<8x32xf32>,
    %c112_177 = arith.constant 112 : index
    %c0_178 = arith.constant 0 : index
    %599 = vector.load %arg14[%c112_177, %c0_178] : memref<128x256xf32, #tpu.memory_space<vmem>>, vector<8x128xf32>
    %cst_179 = arith.constant dense<0.000000e+00> : vector<8x128xf32>
    %600 = tpu.matmul %577, %26, %cst_179 {dimension_numbers = #tpu.dot_dimension_numbers<[1], [0], [0], [1], [0, 0, 1, 1], [], []>} : vector<8x32xf32>, vector<32x128xf32>, vector<8x128xf32> -> vector<8x128xf32>
    %601 = arith.addf %599, %600 : vector<8x128xf32>
    %602 = math.tanh %601 : vector<8x128xf32>
    %603 = arith.negf %601 : vector<8x128xf32>
    %604 = math.exp %603 : vector<8x128xf32>
    %cst_180 = arith.constant 1.000000e+00 : f32
    %605 = vector.broadcast %cst_180 : f32 to vector<8x128xf32>
    %606 = arith.addf %605, %604 : vector<8x128xf32>
    %607 = arith.divf %605, %606 : vector<8x128xf32>
    %608 = arith.select %24, %602, %607 : vector<8x128xi1>, vector<8x128xf32>
    %609 = vector.extract_strided_slice %608 {offsets = [0, 32], sizes = [8, 32], strides = [1, 1]} : vector<8x128xf32> to vector<8x32xf32>
    %610 = arith.mulf %609, %574 : vector<8x32xf32>
    %611 = vector.extract_strided_slice %608 {offsets = [0, 0], sizes = [8, 32], strides = [1, 1]} : vector<8x128xf32> to vector<8x32xf32>
    %612 = vector.extract_strided_slice %608 {offsets = [0, 64], sizes = [8, 32], strides = [1, 1]} : vector<8x128xf32> to vector<8x32xf32>
    %613 = arith.mulf %611, %612 : vector<8x32xf32>
    %614 = arith.addf %610, %613 : vector<8x32xf32>
    %615 = vector.extract_strided_slice %608 {offsets = [0, 96], sizes = [8, 32], strides = [1, 1]} : vector<8x128xf32> to vector<8x32xf32>
    %616 = math.tanh %614 : vector<8x32xf32>
    %617 = arith.mulf %615, %616 : vector<8x32xf32>
    %c112_181 = arith.constant 112 : index
    %c0_182 = arith.constant 0 : index
    %618 = vector.load %arg15[%c112_181, %c0_182] : memref<128x64xf32, #tpu.memory_space<vmem>>, vector<8x32xf32>
    tpu.vector_store %arg15[%c112_181, %c0_182], %617 {strides = array<i32>} : memref<128x64xf32, #tpu.memory_space<vmem>>, vector<8x32xf32>,
    %c8_183 = arith.constant 8 : index
    %c128_184 = arith.constant 128 : index
    %619 = vector.load %arg14[%c8_183, %c128_184] : memref<128x256xf32, #tpu.memory_space<vmem>>, vector<8x128xf32>
    %cst_185 = arith.constant dense<0.000000e+00> : vector<8x128xf32>
    %620 = tpu.matmul %597, %27, %cst_185 {dimension_numbers = #tpu.dot_dimension_numbers<[1], [0], [0], [1], [0, 0, 1, 1], [], []>} : vector<8x32xf32>, vector<32x128xf32>, vector<8x128xf32> -> vector<8x128xf32>
    %621 = arith.addf %619, %620 : vector<8x128xf32>
    %622 = math.tanh %621 : vector<8x128xf32>
    %623 = arith.negf %621 : vector<8x128xf32>
    %624 = math.exp %623 : vector<8x128xf32>
    %cst_186 = arith.constant 1.000000e+00 : f32
    %625 = vector.broadcast %cst_186 : f32 to vector<8x128xf32>
    %626 = arith.addf %625, %624 : vector<8x128xf32>
    %627 = arith.divf %625, %626 : vector<8x128xf32>
    %628 = arith.select %24, %622, %627 : vector<8x128xi1>, vector<8x128xf32>
    %629 = vector.extract_strided_slice %628 {offsets = [0, 32], sizes = [8, 32], strides = [1, 1]} : vector<8x128xf32> to vector<8x32xf32>
    %630 = arith.mulf %629, %594 : vector<8x32xf32>
    %631 = vector.extract_strided_slice %628 {offsets = [0, 0], sizes = [8, 32], strides = [1, 1]} : vector<8x128xf32> to vector<8x32xf32>
    %632 = vector.extract_strided_slice %628 {offsets = [0, 64], sizes = [8, 32], strides = [1, 1]} : vector<8x128xf32> to vector<8x32xf32>
    %633 = arith.mulf %631, %632 : vector<8x32xf32>
    %634 = arith.addf %630, %633 : vector<8x32xf32>
    %635 = vector.extract_strided_slice %628 {offsets = [0, 96], sizes = [8, 32], strides = [1, 1]} : vector<8x128xf32> to vector<8x32xf32>
    %636 = math.tanh %634 : vector<8x32xf32>
    %637 = arith.mulf %635, %636 : vector<8x32xf32>
    %c8_187 = arith.constant 8 : index
    %c32_188 = arith.constant 32 : index
    %638 = vector.load %arg15[%c8_187, %c32_188] : memref<128x64xf32, #tpu.memory_space<vmem>>, vector<8x32xf32>
    tpu.vector_store %arg15[%c8_187, %c32_188], %637 {strides = array<i32>} : memref<128x64xf32, #tpu.memory_space<vmem>>, vector<8x32xf32>,
    %c120_189 = arith.constant 120 : index
    %c0_190 = arith.constant 0 : index
    %639 = vector.load %arg14[%c120_189, %c0_190] : memref<128x256xf32, #tpu.memory_space<vmem>>, vector<8x128xf32>
    %cst_191 = arith.constant dense<0.000000e+00> : vector<8x128xf32>
    %640 = tpu.matmul %617, %26, %cst_191 {dimension_numbers = #tpu.dot_dimension_numbers<[1], [0], [0], [1], [0, 0, 1, 1], [], []>} : vector<8x32xf32>, vector<32x128xf32>, vector<8x128xf32> -> vector<8x128xf32>
    %641 = arith.addf %639, %640 : vector<8x128xf32>
    %642 = math.tanh %641 : vector<8x128xf32>
    %643 = arith.negf %641 : vector<8x128xf32>
    %644 = math.exp %643 : vector<8x128xf32>
    %cst_192 = arith.constant 1.000000e+00 : f32
    %645 = vector.broadcast %cst_192 : f32 to vector<8x128xf32>
    %646 = arith.addf %645, %644 : vector<8x128xf32>
    %647 = arith.divf %645, %646 : vector<8x128xf32>
    %648 = arith.select %24, %642, %647 : vector<8x128xi1>, vector<8x128xf32>
    %649 = vector.extract_strided_slice %648 {offsets = [0, 32], sizes = [8, 32], strides = [1, 1]} : vector<8x128xf32> to vector<8x32xf32>
    %650 = arith.mulf %649, %614 : vector<8x32xf32>
    %651 = vector.extract_strided_slice %648 {offsets = [0, 0], sizes = [8, 32], strides = [1, 1]} : vector<8x128xf32> to vector<8x32xf32>
    %652 = vector.extract_strided_slice %648 {offsets = [0, 64], sizes = [8, 32], strides = [1, 1]} : vector<8x128xf32> to vector<8x32xf32>
    %653 = arith.mulf %651, %652 : vector<8x32xf32>
    %654 = arith.addf %650, %653 : vector<8x32xf32>
    %655 = vector.extract_strided_slice %648 {offsets = [0, 96], sizes = [8, 32], strides = [1, 1]} : vector<8x128xf32> to vector<8x32xf32>
    %656 = math.tanh %654 : vector<8x32xf32>
    %657 = arith.mulf %655, %656 : vector<8x32xf32>
    %c120_193 = arith.constant 120 : index
    %c0_194 = arith.constant 0 : index
    %658 = vector.load %arg15[%c120_193, %c0_194] : memref<128x64xf32, #tpu.memory_space<vmem>>, vector<8x32xf32>
    tpu.vector_store %arg15[%c120_193, %c0_194], %657 {strides = array<i32>} : memref<128x64xf32, #tpu.memory_space<vmem>>, vector<8x32xf32>,
    %c0_195 = arith.constant 0 : index
    %c128_196 = arith.constant 128 : index
    %659 = vector.load %arg14[%c0_195, %c128_196] : memref<128x256xf32, #tpu.memory_space<vmem>>, vector<8x128xf32>
    %cst_197 = arith.constant dense<0.000000e+00> : vector<8x128xf32>
    %660 = tpu.matmul %637, %27, %cst_197 {dimension_numbers = #tpu.dot_dimension_numbers<[1], [0], [0], [1], [0, 0, 1, 1], [], []>} : vector<8x32xf32>, vector<32x128xf32>, vector<8x128xf32> -> vector<8x128xf32>
    %661 = arith.addf %659, %660 : vector<8x128xf32>
    %662 = math.tanh %661 : vector<8x128xf32>
    %663 = arith.negf %661 : vector<8x128xf32>
    %664 = math.exp %663 : vector<8x128xf32>
    %cst_198 = arith.constant 1.000000e+00 : f32
    %665 = vector.broadcast %cst_198 : f32 to vector<8x128xf32>
    %666 = arith.addf %665, %664 : vector<8x128xf32>
    %667 = arith.divf %665, %666 : vector<8x128xf32>
    %668 = arith.select %24, %662, %667 : vector<8x128xi1>, vector<8x128xf32>
    %669 = vector.extract_strided_slice %668 {offsets = [0, 32], sizes = [8, 32], strides = [1, 1]} : vector<8x128xf32> to vector<8x32xf32>
    %670 = arith.mulf %669, %634 : vector<8x32xf32>
    %671 = vector.extract_strided_slice %668 {offsets = [0, 0], sizes = [8, 32], strides = [1, 1]} : vector<8x128xf32> to vector<8x32xf32>
    %672 = vector.extract_strided_slice %668 {offsets = [0, 64], sizes = [8, 32], strides = [1, 1]} : vector<8x128xf32> to vector<8x32xf32>
    %673 = arith.mulf %671, %672 : vector<8x32xf32>
    %674 = arith.addf %670, %673 : vector<8x32xf32>
    %675 = vector.extract_strided_slice %668 {offsets = [0, 96], sizes = [8, 32], strides = [1, 1]} : vector<8x128xf32> to vector<8x32xf32>
    %676 = math.tanh %674 : vector<8x32xf32>
    %677 = arith.mulf %675, %676 : vector<8x32xf32>
    %c0_199 = arith.constant 0 : index
    %c32_200 = arith.constant 32 : index
    %678 = vector.load %arg15[%c0_199, %c32_200] : memref<128x64xf32, #tpu.memory_space<vmem>>, vector<8x32xf32>
    tpu.vector_store %arg15[%c0_199, %c32_200], %677 {strides = array<i32>} : memref<128x64xf32, #tpu.memory_space<vmem>>, vector<8x32xf32>,
    %c0_201 = arith.constant 0 : index
    %c0_202 = arith.constant 0 : index
    %679 = vector.load %arg15[%c0_201, %c0_202] : memref<128x64xf32, #tpu.memory_space<vmem>>, vector<128x64xf32>
    %c0_203 = arith.constant 0 : index
    %c0_204 = arith.constant 0 : index
    %680 = vector.load %arg9[%c0_203, %c0_204] : memref<64x256xf32, #tpu.memory_space<vmem>>, vector<64x256xf32>
    %c0_205 = arith.constant 0 : index
    %c0_206 = arith.constant 0 : index
    %681 = vector.load %arg10[%c0_205, %c0_206] : memref<32x128xf32, #tpu.memory_space<vmem>>, vector<32x128xf32>
    %c0_207 = arith.constant 0 : index
    %c0_208 = arith.constant 0 : index
    %682 = vector.load %arg11[%c0_207, %c0_208] : memref<32x128xf32, #tpu.memory_space<vmem>>, vector<32x128xf32>
    %c0_209 = arith.constant 0 : index
    %c0_210 = arith.constant 0 : index
    %683 = vector.load %arg12[%c0_209, %c0_210] : memref<1x256xf32, #tpu.memory_space<vmem>>, vector<1x256xf32>
    %cst_211 = arith.constant dense<0.000000e+00> : vector<128x256xf32>
    %684 = tpu.matmul %679, %680, %cst_211 {dimension_numbers = #tpu.dot_dimension_numbers<[1], [0], [0], [1], [0, 0, 1, 1], [], []>} : vector<128x64xf32>, vector<64x256xf32>, vector<128x256xf32> -> vector<128x256xf32>
    %685 = vector.broadcast %683 : vector<1x256xf32> to vector<128x256xf32>
    %686 = arith.addf %684, %685 : vector<128x256xf32>
    %c0_212 = arith.constant 0 : index
    %c0_213 = arith.constant 0 : index
    %687 = vector.load %arg14[%c0_212, %c0_213] : memref<128x256xf32, #tpu.memory_space<vmem>>, vector<128x256xf32>
    tpu.vector_store %arg14[%c0_212, %c0_213], %686 {strides = array<i32>} : memref<128x256xf32, #tpu.memory_space<vmem>>, vector<128x256xf32>,
    %cst_214 = arith.constant 0.000000e+00 : f32
    %688 = vector.broadcast %cst_214 : f32 to vector<8x32xf32>
    %cst_215 = arith.constant 0.000000e+00 : f32
    %689 = vector.broadcast %cst_215 : f32 to vector<8x32xf32>
    %c2 = arith.constant 2 : index
    %c0_216 = arith.constant 0 : index
    %c0_217 = arith.constant 0 : index
    %690 = vector.load %arg4[%c2, %c0_216, %c0_217] : memref<4x8x32xf32, #tpu.memory_space<vmem>>, vector<1x8x32xf32>
    %691 = vector.shape_cast %690 : vector<1x8x32xf32> to vector<8x32xf32>
    %c3 = arith.constant 3 : index
    %c0_218 = arith.constant 0 : index
    %c0_219 = arith.constant 0 : index
    %692 = vector.load %arg4[%c3, %c0_218, %c0_219] : memref<4x8x32xf32, #tpu.memory_space<vmem>>, vector<1x8x32xf32>
    %693 = vector.shape_cast %692 : vector<1x8x32xf32> to vector<8x32xf32>
    %c0_220 = arith.constant 0 : index
    %c0_221 = arith.constant 0 : index
    %694 = vector.load %arg14[%c0_220, %c0_221] : memref<128x256xf32, #tpu.memory_space<vmem>>, vector<8x128xf32>
    %cst_222 = arith.constant dense<0.000000e+00> : vector<8x128xf32>
    %695 = tpu.matmul %688, %681, %cst_222 {dimension_numbers = #tpu.dot_dimension_numbers<[1], [0], [0], [1], [0, 0, 1, 1], [], []>} : vector<8x32xf32>, vector<32x128xf32>, vector<8x128xf32> -> vector<8x128xf32>
    %696 = arith.addf %694, %695 : vector<8x128xf32>
    %697 = math.tanh %696 : vector<8x128xf32>
    %698 = arith.negf %696 : vector<8x128xf32>
    %699 = math.exp %698 : vector<8x128xf32>
    %cst_223 = arith.constant 1.000000e+00 : f32
    %700 = vector.broadcast %cst_223 : f32 to vector<8x128xf32>
    %701 = arith.addf %700, %699 : vector<8x128xf32>
    %702 = arith.divf %700, %701 : vector<8x128xf32>
    %703 = arith.select %24, %697, %702 : vector<8x128xi1>, vector<8x128xf32>
    %704 = vector.extract_strided_slice %703 {offsets = [0, 32], sizes = [8, 32], strides = [1, 1]} : vector<8x128xf32> to vector<8x32xf32>
    %705 = arith.mulf %704, %691 : vector<8x32xf32>
    %706 = vector.extract_strided_slice %703 {offsets = [0, 0], sizes = [8, 32], strides = [1, 1]} : vector<8x128xf32> to vector<8x32xf32>
    %707 = vector.extract_strided_slice %703 {offsets = [0, 64], sizes = [8, 32], strides = [1, 1]} : vector<8x128xf32> to vector<8x32xf32>
    %708 = arith.mulf %706, %707 : vector<8x32xf32>
    %709 = arith.addf %705, %708 : vector<8x32xf32>
    %710 = vector.extract_strided_slice %703 {offsets = [0, 96], sizes = [8, 32], strides = [1, 1]} : vector<8x128xf32> to vector<8x32xf32>
    %711 = math.tanh %709 : vector<8x32xf32>
    %712 = arith.mulf %710, %711 : vector<8x32xf32>
    %c0_224 = arith.constant 0 : index
    %c0_225 = arith.constant 0 : index
    %713 = vector.load %arg13[%c0_224, %c0_225] : memref<128x64xf32, #tpu.memory_space<vmem>>, vector<8x32xf32>
    tpu.vector_store %arg13[%c0_224, %c0_225], %712 {strides = array<i32>} : memref<128x64xf32, #tpu.memory_space<vmem>>, vector<8x32xf32>,
    %c120_226 = arith.constant 120 : index
    %c128_227 = arith.constant 128 : index
    %714 = vector.load %arg14[%c120_226, %c128_227] : memref<128x256xf32, #tpu.memory_space<vmem>>, vector<8x128xf32>
    %cst_228 = arith.constant dense<0.000000e+00> : vector<8x128xf32>
    %715 = tpu.matmul %689, %682, %cst_228 {dimension_numbers = #tpu.dot_dimension_numbers<[1], [0], [0], [1], [0, 0, 1, 1], [], []>} : vector<8x32xf32>, vector<32x128xf32>, vector<8x128xf32> -> vector<8x128xf32>
    %716 = arith.addf %714, %715 : vector<8x128xf32>
    %717 = math.tanh %716 : vector<8x128xf32>
    %718 = arith.negf %716 : vector<8x128xf32>
    %719 = math.exp %718 : vector<8x128xf32>
    %cst_229 = arith.constant 1.000000e+00 : f32
    %720 = vector.broadcast %cst_229 : f32 to vector<8x128xf32>
    %721 = arith.addf %720, %719 : vector<8x128xf32>
    %722 = arith.divf %720, %721 : vector<8x128xf32>
    %723 = arith.select %24, %717, %722 : vector<8x128xi1>, vector<8x128xf32>
    %724 = vector.extract_strided_slice %723 {offsets = [0, 32], sizes = [8, 32], strides = [1, 1]} : vector<8x128xf32> to vector<8x32xf32>
    %725 = arith.mulf %724, %693 : vector<8x32xf32>
    %726 = vector.extract_strided_slice %723 {offsets = [0, 0], sizes = [8, 32], strides = [1, 1]} : vector<8x128xf32> to vector<8x32xf32>
    %727 = vector.extract_strided_slice %723 {offsets = [0, 64], sizes = [8, 32], strides = [1, 1]} : vector<8x128xf32> to vector<8x32xf32>
    %728 = arith.mulf %726, %727 : vector<8x32xf32>
    %729 = arith.addf %725, %728 : vector<8x32xf32>
    %730 = vector.extract_strided_slice %723 {offsets = [0, 96], sizes = [8, 32], strides = [1, 1]} : vector<8x128xf32> to vector<8x32xf32>
    %731 = math.tanh %729 : vector<8x32xf32>
    %732 = arith.mulf %730, %731 : vector<8x32xf32>
    %c120_230 = arith.constant 120 : index
    %c32_231 = arith.constant 32 : index
    %733 = vector.load %arg13[%c120_230, %c32_231] : memref<128x64xf32, #tpu.memory_space<vmem>>, vector<8x32xf32>
    tpu.vector_store %arg13[%c120_230, %c32_231], %732 {strides = array<i32>} : memref<128x64xf32, #tpu.memory_space<vmem>>, vector<8x32xf32>,
    %c8_232 = arith.constant 8 : index
    %c0_233 = arith.constant 0 : index
    %734 = vector.load %arg14[%c8_232, %c0_233] : memref<128x256xf32, #tpu.memory_space<vmem>>, vector<8x128xf32>
    %cst_234 = arith.constant dense<0.000000e+00> : vector<8x128xf32>
    %735 = tpu.matmul %712, %681, %cst_234 {dimension_numbers = #tpu.dot_dimension_numbers<[1], [0], [0], [1], [0, 0, 1, 1], [], []>} : vector<8x32xf32>, vector<32x128xf32>, vector<8x128xf32> -> vector<8x128xf32>
    %736 = arith.addf %734, %735 : vector<8x128xf32>
    %737 = math.tanh %736 : vector<8x128xf32>
    %738 = arith.negf %736 : vector<8x128xf32>
    %739 = math.exp %738 : vector<8x128xf32>
    %cst_235 = arith.constant 1.000000e+00 : f32
    %740 = vector.broadcast %cst_235 : f32 to vector<8x128xf32>
    %741 = arith.addf %740, %739 : vector<8x128xf32>
    %742 = arith.divf %740, %741 : vector<8x128xf32>
    %743 = arith.select %24, %737, %742 : vector<8x128xi1>, vector<8x128xf32>
    %744 = vector.extract_strided_slice %743 {offsets = [0, 32], sizes = [8, 32], strides = [1, 1]} : vector<8x128xf32> to vector<8x32xf32>
    %745 = arith.mulf %744, %709 : vector<8x32xf32>
    %746 = vector.extract_strided_slice %743 {offsets = [0, 0], sizes = [8, 32], strides = [1, 1]} : vector<8x128xf32> to vector<8x32xf32>
    %747 = vector.extract_strided_slice %743 {offsets = [0, 64], sizes = [8, 32], strides = [1, 1]} : vector<8x128xf32> to vector<8x32xf32>
    %748 = arith.mulf %746, %747 : vector<8x32xf32>
    %749 = arith.addf %745, %748 : vector<8x32xf32>
    %750 = vector.extract_strided_slice %743 {offsets = [0, 96], sizes = [8, 32], strides = [1, 1]} : vector<8x128xf32> to vector<8x32xf32>
    %751 = math.tanh %749 : vector<8x32xf32>
    %752 = arith.mulf %750, %751 : vector<8x32xf32>
    %c8_236 = arith.constant 8 : index
    %c0_237 = arith.constant 0 : index
    %753 = vector.load %arg13[%c8_236, %c0_237] : memref<128x64xf32, #tpu.memory_space<vmem>>, vector<8x32xf32>
    tpu.vector_store %arg13[%c8_236, %c0_237], %752 {strides = array<i32>} : memref<128x64xf32, #tpu.memory_space<vmem>>, vector<8x32xf32>,
    %c112_238 = arith.constant 112 : index
    %c128_239 = arith.constant 128 : index
    %754 = vector.load %arg14[%c112_238, %c128_239] : memref<128x256xf32, #tpu.memory_space<vmem>>, vector<8x128xf32>
    %cst_240 = arith.constant dense<0.000000e+00> : vector<8x128xf32>
    %755 = tpu.matmul %732, %682, %cst_240 {dimension_numbers = #tpu.dot_dimension_numbers<[1], [0], [0], [1], [0, 0, 1, 1], [], []>} : vector<8x32xf32>, vector<32x128xf32>, vector<8x128xf32> -> vector<8x128xf32>
    %756 = arith.addf %754, %755 : vector<8x128xf32>
    %757 = math.tanh %756 : vector<8x128xf32>
    %758 = arith.negf %756 : vector<8x128xf32>
    %759 = math.exp %758 : vector<8x128xf32>
    %cst_241 = arith.constant 1.000000e+00 : f32
    %760 = vector.broadcast %cst_241 : f32 to vector<8x128xf32>
    %761 = arith.addf %760, %759 : vector<8x128xf32>
    %762 = arith.divf %760, %761 : vector<8x128xf32>
    %763 = arith.select %24, %757, %762 : vector<8x128xi1>, vector<8x128xf32>
    %764 = vector.extract_strided_slice %763 {offsets = [0, 32], sizes = [8, 32], strides = [1, 1]} : vector<8x128xf32> to vector<8x32xf32>
    %765 = arith.mulf %764, %729 : vector<8x32xf32>
    %766 = vector.extract_strided_slice %763 {offsets = [0, 0], sizes = [8, 32], strides = [1, 1]} : vector<8x128xf32> to vector<8x32xf32>
    %767 = vector.extract_strided_slice %763 {offsets = [0, 64], sizes = [8, 32], strides = [1, 1]} : vector<8x128xf32> to vector<8x32xf32>
    %768 = arith.mulf %766, %767 : vector<8x32xf32>
    %769 = arith.addf %765, %768 : vector<8x32xf32>
    %770 = vector.extract_strided_slice %763 {offsets = [0, 96], sizes = [8, 32], strides = [1, 1]} : vector<8x128xf32> to vector<8x32xf32>
    %771 = math.tanh %769 : vector<8x32xf32>
    %772 = arith.mulf %770, %771 : vector<8x32xf32>
    %c112_242 = arith.constant 112 : index
    %c32_243 = arith.constant 32 : index
    %773 = vector.load %arg13[%c112_242, %c32_243] : memref<128x64xf32, #tpu.memory_space<vmem>>, vector<8x32xf32>
    tpu.vector_store %arg13[%c112_242, %c32_243], %772 {strides = array<i32>} : memref<128x64xf32, #tpu.memory_space<vmem>>, vector<8x32xf32>,
    %c16_244 = arith.constant 16 : index
    %c0_245 = arith.constant 0 : index
    %774 = vector.load %arg14[%c16_244, %c0_245] : memref<128x256xf32, #tpu.memory_space<vmem>>, vector<8x128xf32>
    %cst_246 = arith.constant dense<0.000000e+00> : vector<8x128xf32>
    %775 = tpu.matmul %752, %681, %cst_246 {dimension_numbers = #tpu.dot_dimension_numbers<[1], [0], [0], [1], [0, 0, 1, 1], [], []>} : vector<8x32xf32>, vector<32x128xf32>, vector<8x128xf32> -> vector<8x128xf32>
    %776 = arith.addf %774, %775 : vector<8x128xf32>
    %777 = math.tanh %776 : vector<8x128xf32>
    %778 = arith.negf %776 : vector<8x128xf32>
    %779 = math.exp %778 : vector<8x128xf32>
    %cst_247 = arith.constant 1.000000e+00 : f32
    %780 = vector.broadcast %cst_247 : f32 to vector<8x128xf32>
    %781 = arith.addf %780, %779 : vector<8x128xf32>
    %782 = arith.divf %780, %781 : vector<8x128xf32>
    %783 = arith.select %24, %777, %782 : vector<8x128xi1>, vector<8x128xf32>
    %784 = vector.extract_strided_slice %783 {offsets = [0, 32], sizes = [8, 32], strides = [1, 1]} : vector<8x128xf32> to vector<8x32xf32>
    %785 = arith.mulf %784, %749 : vector<8x32xf32>
    %786 = vector.extract_strided_slice %783 {offsets = [0, 0], sizes = [8, 32], strides = [1, 1]} : vector<8x128xf32> to vector<8x32xf32>
    %787 = vector.extract_strided_slice %783 {offsets = [0, 64], sizes = [8, 32], strides = [1, 1]} : vector<8x128xf32> to vector<8x32xf32>
    %788 = arith.mulf %786, %787 : vector<8x32xf32>
    %789 = arith.addf %785, %788 : vector<8x32xf32>
    %790 = vector.extract_strided_slice %783 {offsets = [0, 96], sizes = [8, 32], strides = [1, 1]} : vector<8x128xf32> to vector<8x32xf32>
    %791 = math.tanh %789 : vector<8x32xf32>
    %792 = arith.mulf %790, %791 : vector<8x32xf32>
    %c16_248 = arith.constant 16 : index
    %c0_249 = arith.constant 0 : index
    %793 = vector.load %arg13[%c16_248, %c0_249] : memref<128x64xf32, #tpu.memory_space<vmem>>, vector<8x32xf32>
    tpu.vector_store %arg13[%c16_248, %c0_249], %792 {strides = array<i32>} : memref<128x64xf32, #tpu.memory_space<vmem>>, vector<8x32xf32>,
    %c104_250 = arith.constant 104 : index
    %c128_251 = arith.constant 128 : index
    %794 = vector.load %arg14[%c104_250, %c128_251] : memref<128x256xf32, #tpu.memory_space<vmem>>, vector<8x128xf32>
    %cst_252 = arith.constant dense<0.000000e+00> : vector<8x128xf32>
    %795 = tpu.matmul %772, %682, %cst_252 {dimension_numbers = #tpu.dot_dimension_numbers<[1], [0], [0], [1], [0, 0, 1, 1], [], []>} : vector<8x32xf32>, vector<32x128xf32>, vector<8x128xf32> -> vector<8x128xf32>
    %796 = arith.addf %794, %795 : vector<8x128xf32>
    %797 = math.tanh %796 : vector<8x128xf32>
    %798 = arith.negf %796 : vector<8x128xf32>
    %799 = math.exp %798 : vector<8x128xf32>
    %cst_253 = arith.constant 1.000000e+00 : f32
    %800 = vector.broadcast %cst_253 : f32 to vector<8x128xf32>
    %801 = arith.addf %800, %799 : vector<8x128xf32>
    %802 = arith.divf %800, %801 : vector<8x128xf32>
    %803 = arith.select %24, %797, %802 : vector<8x128xi1>, vector<8x128xf32>
    %804 = vector.extract_strided_slice %803 {offsets = [0, 32], sizes = [8, 32], strides = [1, 1]} : vector<8x128xf32> to vector<8x32xf32>
    %805 = arith.mulf %804, %769 : vector<8x32xf32>
    %806 = vector.extract_strided_slice %803 {offsets = [0, 0], sizes = [8, 32], strides = [1, 1]} : vector<8x128xf32> to vector<8x32xf32>
    %807 = vector.extract_strided_slice %803 {offsets = [0, 64], sizes = [8, 32], strides = [1, 1]} : vector<8x128xf32> to vector<8x32xf32>
    %808 = arith.mulf %806, %807 : vector<8x32xf32>
    %809 = arith.addf %805, %808 : vector<8x32xf32>
    %810 = vector.extract_strided_slice %803 {offsets = [0, 96], sizes = [8, 32], strides = [1, 1]} : vector<8x128xf32> to vector<8x32xf32>
    %811 = math.tanh %809 : vector<8x32xf32>
    %812 = arith.mulf %810, %811 : vector<8x32xf32>
    %c104_254 = arith.constant 104 : index
    %c32_255 = arith.constant 32 : index
    %813 = vector.load %arg13[%c104_254, %c32_255] : memref<128x64xf32, #tpu.memory_space<vmem>>, vector<8x32xf32>
    tpu.vector_store %arg13[%c104_254, %c32_255], %812 {strides = array<i32>} : memref<128x64xf32, #tpu.memory_space<vmem>>, vector<8x32xf32>,
    %c24_256 = arith.constant 24 : index
    %c0_257 = arith.constant 0 : index
    %814 = vector.load %arg14[%c24_256, %c0_257] : memref<128x256xf32, #tpu.memory_space<vmem>>, vector<8x128xf32>
    %cst_258 = arith.constant dense<0.000000e+00> : vector<8x128xf32>
    %815 = tpu.matmul %792, %681, %cst_258 {dimension_numbers = #tpu.dot_dimension_numbers<[1], [0], [0], [1], [0, 0, 1, 1], [], []>} : vector<8x32xf32>, vector<32x128xf32>, vector<8x128xf32> -> vector<8x128xf32>
    %816 = arith.addf %814, %815 : vector<8x128xf32>
    %817 = math.tanh %816 : vector<8x128xf32>
    %818 = arith.negf %816 : vector<8x128xf32>
    %819 = math.exp %818 : vector<8x128xf32>
    %cst_259 = arith.constant 1.000000e+00 : f32
    %820 = vector.broadcast %cst_259 : f32 to vector<8x128xf32>
    %821 = arith.addf %820, %819 : vector<8x128xf32>
    %822 = arith.divf %820, %821 : vector<8x128xf32>
    %823 = arith.select %24, %817, %822 : vector<8x128xi1>, vector<8x128xf32>
    %824 = vector.extract_strided_slice %823 {offsets = [0, 32], sizes = [8, 32], strides = [1, 1]} : vector<8x128xf32> to vector<8x32xf32>
    %825 = arith.mulf %824, %789 : vector<8x32xf32>
    %826 = vector.extract_strided_slice %823 {offsets = [0, 0], sizes = [8, 32], strides = [1, 1]} : vector<8x128xf32> to vector<8x32xf32>
    %827 = vector.extract_strided_slice %823 {offsets = [0, 64], sizes = [8, 32], strides = [1, 1]} : vector<8x128xf32> to vector<8x32xf32>
    %828 = arith.mulf %826, %827 : vector<8x32xf32>
    %829 = arith.addf %825, %828 : vector<8x32xf32>
    %830 = vector.extract_strided_slice %823 {offsets = [0, 96], sizes = [8, 32], strides = [1, 1]} : vector<8x128xf32> to vector<8x32xf32>
    %831 = math.tanh %829 : vector<8x32xf32>
    %832 = arith.mulf %830, %831 : vector<8x32xf32>
    %c24_260 = arith.constant 24 : index
    %c0_261 = arith.constant 0 : index
    %833 = vector.load %arg13[%c24_260, %c0_261] : memref<128x64xf32, #tpu.memory_space<vmem>>, vector<8x32xf32>
    tpu.vector_store %arg13[%c24_260, %c0_261], %832 {strides = array<i32>} : memref<128x64xf32, #tpu.memory_space<vmem>>, vector<8x32xf32>,
    %c96_262 = arith.constant 96 : index
    %c128_263 = arith.constant 128 : index
    %834 = vector.load %arg14[%c96_262, %c128_263] : memref<128x256xf32, #tpu.memory_space<vmem>>, vector<8x128xf32>
    %cst_264 = arith.constant dense<0.000000e+00> : vector<8x128xf32>
    %835 = tpu.matmul %812, %682, %cst_264 {dimension_numbers = #tpu.dot_dimension_numbers<[1], [0], [0], [1], [0, 0, 1, 1], [], []>} : vector<8x32xf32>, vector<32x128xf32>, vector<8x128xf32> -> vector<8x128xf32>
    %836 = arith.addf %834, %835 : vector<8x128xf32>
    %837 = math.tanh %836 : vector<8x128xf32>
    %838 = arith.negf %836 : vector<8x128xf32>
    %839 = math.exp %838 : vector<8x128xf32>
    %cst_265 = arith.constant 1.000000e+00 : f32
    %840 = vector.broadcast %cst_265 : f32 to vector<8x128xf32>
    %841 = arith.addf %840, %839 : vector<8x128xf32>
    %842 = arith.divf %840, %841 : vector<8x128xf32>
    %843 = arith.select %24, %837, %842 : vector<8x128xi1>, vector<8x128xf32>
    %844 = vector.extract_strided_slice %843 {offsets = [0, 32], sizes = [8, 32], strides = [1, 1]} : vector<8x128xf32> to vector<8x32xf32>
    %845 = arith.mulf %844, %809 : vector<8x32xf32>
    %846 = vector.extract_strided_slice %843 {offsets = [0, 0], sizes = [8, 32], strides = [1, 1]} : vector<8x128xf32> to vector<8x32xf32>
    %847 = vector.extract_strided_slice %843 {offsets = [0, 64], sizes = [8, 32], strides = [1, 1]} : vector<8x128xf32> to vector<8x32xf32>
    %848 = arith.mulf %846, %847 : vector<8x32xf32>
    %849 = arith.addf %845, %848 : vector<8x32xf32>
    %850 = vector.extract_strided_slice %843 {offsets = [0, 96], sizes = [8, 32], strides = [1, 1]} : vector<8x128xf32> to vector<8x32xf32>
    %851 = math.tanh %849 : vector<8x32xf32>
    %852 = arith.mulf %850, %851 : vector<8x32xf32>
    %c96_266 = arith.constant 96 : index
    %c32_267 = arith.constant 32 : index
    %853 = vector.load %arg13[%c96_266, %c32_267] : memref<128x64xf32, #tpu.memory_space<vmem>>, vector<8x32xf32>
    tpu.vector_store %arg13[%c96_266, %c32_267], %852 {strides = array<i32>} : memref<128x64xf32, #tpu.memory_space<vmem>>, vector<8x32xf32>,
    %c32_268 = arith.constant 32 : index
    %c0_269 = arith.constant 0 : index
    %854 = vector.load %arg14[%c32_268, %c0_269] : memref<128x256xf32, #tpu.memory_space<vmem>>, vector<8x128xf32>
    %cst_270 = arith.constant dense<0.000000e+00> : vector<8x128xf32>
    %855 = tpu.matmul %832, %681, %cst_270 {dimension_numbers = #tpu.dot_dimension_numbers<[1], [0], [0], [1], [0, 0, 1, 1], [], []>} : vector<8x32xf32>, vector<32x128xf32>, vector<8x128xf32> -> vector<8x128xf32>
    %856 = arith.addf %854, %855 : vector<8x128xf32>
    %857 = math.tanh %856 : vector<8x128xf32>
    %858 = arith.negf %856 : vector<8x128xf32>
    %859 = math.exp %858 : vector<8x128xf32>
    %cst_271 = arith.constant 1.000000e+00 : f32
    %860 = vector.broadcast %cst_271 : f32 to vector<8x128xf32>
    %861 = arith.addf %860, %859 : vector<8x128xf32>
    %862 = arith.divf %860, %861 : vector<8x128xf32>
    %863 = arith.select %24, %857, %862 : vector<8x128xi1>, vector<8x128xf32>
    %864 = vector.extract_strided_slice %863 {offsets = [0, 32], sizes = [8, 32], strides = [1, 1]} : vector<8x128xf32> to vector<8x32xf32>
    %865 = arith.mulf %864, %829 : vector<8x32xf32>
    %866 = vector.extract_strided_slice %863 {offsets = [0, 0], sizes = [8, 32], strides = [1, 1]} : vector<8x128xf32> to vector<8x32xf32>
    %867 = vector.extract_strided_slice %863 {offsets = [0, 64], sizes = [8, 32], strides = [1, 1]} : vector<8x128xf32> to vector<8x32xf32>
    %868 = arith.mulf %866, %867 : vector<8x32xf32>
    %869 = arith.addf %865, %868 : vector<8x32xf32>
    %870 = vector.extract_strided_slice %863 {offsets = [0, 96], sizes = [8, 32], strides = [1, 1]} : vector<8x128xf32> to vector<8x32xf32>
    %871 = math.tanh %869 : vector<8x32xf32>
    %872 = arith.mulf %870, %871 : vector<8x32xf32>
    %c32_272 = arith.constant 32 : index
    %c0_273 = arith.constant 0 : index
    %873 = vector.load %arg13[%c32_272, %c0_273] : memref<128x64xf32, #tpu.memory_space<vmem>>, vector<8x32xf32>
    tpu.vector_store %arg13[%c32_272, %c0_273], %872 {strides = array<i32>} : memref<128x64xf32, #tpu.memory_space<vmem>>, vector<8x32xf32>,
    %c88_274 = arith.constant 88 : index
    %c128_275 = arith.constant 128 : index
    %874 = vector.load %arg14[%c88_274, %c128_275] : memref<128x256xf32, #tpu.memory_space<vmem>>, vector<8x128xf32>
    %cst_276 = arith.constant dense<0.000000e+00> : vector<8x128xf32>
    %875 = tpu.matmul %852, %682, %cst_276 {dimension_numbers = #tpu.dot_dimension_numbers<[1], [0], [0], [1], [0, 0, 1, 1], [], []>} : vector<8x32xf32>, vector<32x128xf32>, vector<8x128xf32> -> vector<8x128xf32>
    %876 = arith.addf %874, %875 : vector<8x128xf32>
    %877 = math.tanh %876 : vector<8x128xf32>
    %878 = arith.negf %876 : vector<8x128xf32>
    %879 = math.exp %878 : vector<8x128xf32>
    %cst_277 = arith.constant 1.000000e+00 : f32
    %880 = vector.broadcast %cst_277 : f32 to vector<8x128xf32>
    %881 = arith.addf %880, %879 : vector<8x128xf32>
    %882 = arith.divf %880, %881 : vector<8x128xf32>
    %883 = arith.select %24, %877, %882 : vector<8x128xi1>, vector<8x128xf32>
    %884 = vector.extract_strided_slice %883 {offsets = [0, 32], sizes = [8, 32], strides = [1, 1]} : vector<8x128xf32> to vector<8x32xf32>
    %885 = arith.mulf %884, %849 : vector<8x32xf32>
    %886 = vector.extract_strided_slice %883 {offsets = [0, 0], sizes = [8, 32], strides = [1, 1]} : vector<8x128xf32> to vector<8x32xf32>
    %887 = vector.extract_strided_slice %883 {offsets = [0, 64], sizes = [8, 32], strides = [1, 1]} : vector<8x128xf32> to vector<8x32xf32>
    %888 = arith.mulf %886, %887 : vector<8x32xf32>
    %889 = arith.addf %885, %888 : vector<8x32xf32>
    %890 = vector.extract_strided_slice %883 {offsets = [0, 96], sizes = [8, 32], strides = [1, 1]} : vector<8x128xf32> to vector<8x32xf32>
    %891 = math.tanh %889 : vector<8x32xf32>
    %892 = arith.mulf %890, %891 : vector<8x32xf32>
    %c88_278 = arith.constant 88 : index
    %c32_279 = arith.constant 32 : index
    %893 = vector.load %arg13[%c88_278, %c32_279] : memref<128x64xf32, #tpu.memory_space<vmem>>, vector<8x32xf32>
    tpu.vector_store %arg13[%c88_278, %c32_279], %892 {strides = array<i32>} : memref<128x64xf32, #tpu.memory_space<vmem>>, vector<8x32xf32>,
    %c40_280 = arith.constant 40 : index
    %c0_281 = arith.constant 0 : index
    %894 = vector.load %arg14[%c40_280, %c0_281] : memref<128x256xf32, #tpu.memory_space<vmem>>, vector<8x128xf32>
    %cst_282 = arith.constant dense<0.000000e+00> : vector<8x128xf32>
    %895 = tpu.matmul %872, %681, %cst_282 {dimension_numbers = #tpu.dot_dimension_numbers<[1], [0], [0], [1], [0, 0, 1, 1], [], []>} : vector<8x32xf32>, vector<32x128xf32>, vector<8x128xf32> -> vector<8x128xf32>
    %896 = arith.addf %894, %895 : vector<8x128xf32>
    %897 = math.tanh %896 : vector<8x128xf32>
    %898 = arith.negf %896 : vector<8x128xf32>
    %899 = math.exp %898 : vector<8x128xf32>
    %cst_283 = arith.constant 1.000000e+00 : f32
    %900 = vector.broadcast %cst_283 : f32 to vector<8x128xf32>
    %901 = arith.addf %900, %899 : vector<8x128xf32>
    %902 = arith.divf %900, %901 : vector<8x128xf32>
    %903 = arith.select %24, %897, %902 : vector<8x128xi1>, vector<8x128xf32>
    %904 = vector.extract_strided_slice %903 {offsets = [0, 32], sizes = [8, 32], strides = [1, 1]} : vector<8x128xf32> to vector<8x32xf32>
    %905 = arith.mulf %904, %869 : vector<8x32xf32>
    %906 = vector.extract_strided_slice %903 {offsets = [0, 0], sizes = [8, 32], strides = [1, 1]} : vector<8x128xf32> to vector<8x32xf32>
    %907 = vector.extract_strided_slice %903 {offsets = [0, 64], sizes = [8, 32], strides = [1, 1]} : vector<8x128xf32> to vector<8x32xf32>
    %908 = arith.mulf %906, %907 : vector<8x32xf32>
    %909 = arith.addf %905, %908 : vector<8x32xf32>
    %910 = vector.extract_strided_slice %903 {offsets = [0, 96], sizes = [8, 32], strides = [1, 1]} : vector<8x128xf32> to vector<8x32xf32>
    %911 = math.tanh %909 : vector<8x32xf32>
    %912 = arith.mulf %910, %911 : vector<8x32xf32>
    %c40_284 = arith.constant 40 : index
    %c0_285 = arith.constant 0 : index
    %913 = vector.load %arg13[%c40_284, %c0_285] : memref<128x64xf32, #tpu.memory_space<vmem>>, vector<8x32xf32>
    tpu.vector_store %arg13[%c40_284, %c0_285], %912 {strides = array<i32>} : memref<128x64xf32, #tpu.memory_space<vmem>>, vector<8x32xf32>,
    %c80_286 = arith.constant 80 : index
    %c128_287 = arith.constant 128 : index
    %914 = vector.load %arg14[%c80_286, %c128_287] : memref<128x256xf32, #tpu.memory_space<vmem>>, vector<8x128xf32>
    %cst_288 = arith.constant dense<0.000000e+00> : vector<8x128xf32>
    %915 = tpu.matmul %892, %682, %cst_288 {dimension_numbers = #tpu.dot_dimension_numbers<[1], [0], [0], [1], [0, 0, 1, 1], [], []>} : vector<8x32xf32>, vector<32x128xf32>, vector<8x128xf32> -> vector<8x128xf32>
    %916 = arith.addf %914, %915 : vector<8x128xf32>
    %917 = math.tanh %916 : vector<8x128xf32>
    %918 = arith.negf %916 : vector<8x128xf32>
    %919 = math.exp %918 : vector<8x128xf32>
    %cst_289 = arith.constant 1.000000e+00 : f32
    %920 = vector.broadcast %cst_289 : f32 to vector<8x128xf32>
    %921 = arith.addf %920, %919 : vector<8x128xf32>
    %922 = arith.divf %920, %921 : vector<8x128xf32>
    %923 = arith.select %24, %917, %922 : vector<8x128xi1>, vector<8x128xf32>
    %924 = vector.extract_strided_slice %923 {offsets = [0, 32], sizes = [8, 32], strides = [1, 1]} : vector<8x128xf32> to vector<8x32xf32>
    %925 = arith.mulf %924, %889 : vector<8x32xf32>
    %926 = vector.extract_strided_slice %923 {offsets = [0, 0], sizes = [8, 32], strides = [1, 1]} : vector<8x128xf32> to vector<8x32xf32>
    %927 = vector.extract_strided_slice %923 {offsets = [0, 64], sizes = [8, 32], strides = [1, 1]} : vector<8x128xf32> to vector<8x32xf32>
    %928 = arith.mulf %926, %927 : vector<8x32xf32>
    %929 = arith.addf %925, %928 : vector<8x32xf32>
    %930 = vector.extract_strided_slice %923 {offsets = [0, 96], sizes = [8, 32], strides = [1, 1]} : vector<8x128xf32> to vector<8x32xf32>
    %931 = math.tanh %929 : vector<8x32xf32>
    %932 = arith.mulf %930, %931 : vector<8x32xf32>
    %c80_290 = arith.constant 80 : index
    %c32_291 = arith.constant 32 : index
    %933 = vector.load %arg13[%c80_290, %c32_291] : memref<128x64xf32, #tpu.memory_space<vmem>>, vector<8x32xf32>
    tpu.vector_store %arg13[%c80_290, %c32_291], %932 {strides = array<i32>} : memref<128x64xf32, #tpu.memory_space<vmem>>, vector<8x32xf32>,
    %c48_292 = arith.constant 48 : index
    %c0_293 = arith.constant 0 : index
    %934 = vector.load %arg14[%c48_292, %c0_293] : memref<128x256xf32, #tpu.memory_space<vmem>>, vector<8x128xf32>
    %cst_294 = arith.constant dense<0.000000e+00> : vector<8x128xf32>
    %935 = tpu.matmul %912, %681, %cst_294 {dimension_numbers = #tpu.dot_dimension_numbers<[1], [0], [0], [1], [0, 0, 1, 1], [], []>} : vector<8x32xf32>, vector<32x128xf32>, vector<8x128xf32> -> vector<8x128xf32>
    %936 = arith.addf %934, %935 : vector<8x128xf32>
    %937 = math.tanh %936 : vector<8x128xf32>
    %938 = arith.negf %936 : vector<8x128xf32>
    %939 = math.exp %938 : vector<8x128xf32>
    %cst_295 = arith.constant 1.000000e+00 : f32
    %940 = vector.broadcast %cst_295 : f32 to vector<8x128xf32>
    %941 = arith.addf %940, %939 : vector<8x128xf32>
    %942 = arith.divf %940, %941 : vector<8x128xf32>
    %943 = arith.select %24, %937, %942 : vector<8x128xi1>, vector<8x128xf32>
    %944 = vector.extract_strided_slice %943 {offsets = [0, 32], sizes = [8, 32], strides = [1, 1]} : vector<8x128xf32> to vector<8x32xf32>
    %945 = arith.mulf %944, %909 : vector<8x32xf32>
    %946 = vector.extract_strided_slice %943 {offsets = [0, 0], sizes = [8, 32], strides = [1, 1]} : vector<8x128xf32> to vector<8x32xf32>
    %947 = vector.extract_strided_slice %943 {offsets = [0, 64], sizes = [8, 32], strides = [1, 1]} : vector<8x128xf32> to vector<8x32xf32>
    %948 = arith.mulf %946, %947 : vector<8x32xf32>
    %949 = arith.addf %945, %948 : vector<8x32xf32>
    %950 = vector.extract_strided_slice %943 {offsets = [0, 96], sizes = [8, 32], strides = [1, 1]} : vector<8x128xf32> to vector<8x32xf32>
    %951 = math.tanh %949 : vector<8x32xf32>
    %952 = arith.mulf %950, %951 : vector<8x32xf32>
    %c48_296 = arith.constant 48 : index
    %c0_297 = arith.constant 0 : index
    %953 = vector.load %arg13[%c48_296, %c0_297] : memref<128x64xf32, #tpu.memory_space<vmem>>, vector<8x32xf32>
    tpu.vector_store %arg13[%c48_296, %c0_297], %952 {strides = array<i32>} : memref<128x64xf32, #tpu.memory_space<vmem>>, vector<8x32xf32>,
    %c72_298 = arith.constant 72 : index
    %c128_299 = arith.constant 128 : index
    %954 = vector.load %arg14[%c72_298, %c128_299] : memref<128x256xf32, #tpu.memory_space<vmem>>, vector<8x128xf32>
    %cst_300 = arith.constant dense<0.000000e+00> : vector<8x128xf32>
    %955 = tpu.matmul %932, %682, %cst_300 {dimension_numbers = #tpu.dot_dimension_numbers<[1], [0], [0], [1], [0, 0, 1, 1], [], []>} : vector<8x32xf32>, vector<32x128xf32>, vector<8x128xf32> -> vector<8x128xf32>
    %956 = arith.addf %954, %955 : vector<8x128xf32>
    %957 = math.tanh %956 : vector<8x128xf32>
    %958 = arith.negf %956 : vector<8x128xf32>
    %959 = math.exp %958 : vector<8x128xf32>
    %cst_301 = arith.constant 1.000000e+00 : f32
    %960 = vector.broadcast %cst_301 : f32 to vector<8x128xf32>
    %961 = arith.addf %960, %959 : vector<8x128xf32>
    %962 = arith.divf %960, %961 : vector<8x128xf32>
    %963 = arith.select %24, %957, %962 : vector<8x128xi1>, vector<8x128xf32>
    %964 = vector.extract_strided_slice %963 {offsets = [0, 32], sizes = [8, 32], strides = [1, 1]} : vector<8x128xf32> to vector<8x32xf32>
    %965 = arith.mulf %964, %929 : vector<8x32xf32>
    %966 = vector.extract_strided_slice %963 {offsets = [0, 0], sizes = [8, 32], strides = [1, 1]} : vector<8x128xf32> to vector<8x32xf32>
    %967 = vector.extract_strided_slice %963 {offsets = [0, 64], sizes = [8, 32], strides = [1, 1]} : vector<8x128xf32> to vector<8x32xf32>
    %968 = arith.mulf %966, %967 : vector<8x32xf32>
    %969 = arith.addf %965, %968 : vector<8x32xf32>
    %970 = vector.extract_strided_slice %963 {offsets = [0, 96], sizes = [8, 32], strides = [1, 1]} : vector<8x128xf32> to vector<8x32xf32>
    %971 = math.tanh %969 : vector<8x32xf32>
    %972 = arith.mulf %970, %971 : vector<8x32xf32>
    %c72_302 = arith.constant 72 : index
    %c32_303 = arith.constant 32 : index
    %973 = vector.load %arg13[%c72_302, %c32_303] : memref<128x64xf32, #tpu.memory_space<vmem>>, vector<8x32xf32>
    tpu.vector_store %arg13[%c72_302, %c32_303], %972 {strides = array<i32>} : memref<128x64xf32, #tpu.memory_space<vmem>>, vector<8x32xf32>,
    %c56_304 = arith.constant 56 : index
    %c0_305 = arith.constant 0 : index
    %974 = vector.load %arg14[%c56_304, %c0_305] : memref<128x256xf32, #tpu.memory_space<vmem>>, vector<8x128xf32>
    %cst_306 = arith.constant dense<0.000000e+00> : vector<8x128xf32>
    %975 = tpu.matmul %952, %681, %cst_306 {dimension_numbers = #tpu.dot_dimension_numbers<[1], [0], [0], [1], [0, 0, 1, 1], [], []>} : vector<8x32xf32>, vector<32x128xf32>, vector<8x128xf32> -> vector<8x128xf32>
    %976 = arith.addf %974, %975 : vector<8x128xf32>
    %977 = math.tanh %976 : vector<8x128xf32>
    %978 = arith.negf %976 : vector<8x128xf32>
    %979 = math.exp %978 : vector<8x128xf32>
    %cst_307 = arith.constant 1.000000e+00 : f32
    %980 = vector.broadcast %cst_307 : f32 to vector<8x128xf32>
    %981 = arith.addf %980, %979 : vector<8x128xf32>
    %982 = arith.divf %980, %981 : vector<8x128xf32>
    %983 = arith.select %24, %977, %982 : vector<8x128xi1>, vector<8x128xf32>
    %984 = vector.extract_strided_slice %983 {offsets = [0, 32], sizes = [8, 32], strides = [1, 1]} : vector<8x128xf32> to vector<8x32xf32>
    %985 = arith.mulf %984, %949 : vector<8x32xf32>
    %986 = vector.extract_strided_slice %983 {offsets = [0, 0], sizes = [8, 32], strides = [1, 1]} : vector<8x128xf32> to vector<8x32xf32>
    %987 = vector.extract_strided_slice %983 {offsets = [0, 64], sizes = [8, 32], strides = [1, 1]} : vector<8x128xf32> to vector<8x32xf32>
    %988 = arith.mulf %986, %987 : vector<8x32xf32>
    %989 = arith.addf %985, %988 : vector<8x32xf32>
    %990 = vector.extract_strided_slice %983 {offsets = [0, 96], sizes = [8, 32], strides = [1, 1]} : vector<8x128xf32> to vector<8x32xf32>
    %991 = math.tanh %989 : vector<8x32xf32>
    %992 = arith.mulf %990, %991 : vector<8x32xf32>
    %c56_308 = arith.constant 56 : index
    %c0_309 = arith.constant 0 : index
    %993 = vector.load %arg13[%c56_308, %c0_309] : memref<128x64xf32, #tpu.memory_space<vmem>>, vector<8x32xf32>
    tpu.vector_store %arg13[%c56_308, %c0_309], %992 {strides = array<i32>} : memref<128x64xf32, #tpu.memory_space<vmem>>, vector<8x32xf32>,
    %c64_310 = arith.constant 64 : index
    %c128_311 = arith.constant 128 : index
    %994 = vector.load %arg14[%c64_310, %c128_311] : memref<128x256xf32, #tpu.memory_space<vmem>>, vector<8x128xf32>
    %cst_312 = arith.constant dense<0.000000e+00> : vector<8x128xf32>
    %995 = tpu.matmul %972, %682, %cst_312 {dimension_numbers = #tpu.dot_dimension_numbers<[1], [0], [0], [1], [0, 0, 1, 1], [], []>} : vector<8x32xf32>, vector<32x128xf32>, vector<8x128xf32> -> vector<8x128xf32>
    %996 = arith.addf %994, %995 : vector<8x128xf32>
    %997 = math.tanh %996 : vector<8x128xf32>
    %998 = arith.negf %996 : vector<8x128xf32>
    %999 = math.exp %998 : vector<8x128xf32>
    %cst_313 = arith.constant 1.000000e+00 : f32
    %1000 = vector.broadcast %cst_313 : f32 to vector<8x128xf32>
    %1001 = arith.addf %1000, %999 : vector<8x128xf32>
    %1002 = arith.divf %1000, %1001 : vector<8x128xf32>
    %1003 = arith.select %24, %997, %1002 : vector<8x128xi1>, vector<8x128xf32>
    %1004 = vector.extract_strided_slice %1003 {offsets = [0, 32], sizes = [8, 32], strides = [1, 1]} : vector<8x128xf32> to vector<8x32xf32>
    %1005 = arith.mulf %1004, %969 : vector<8x32xf32>
    %1006 = vector.extract_strided_slice %1003 {offsets = [0, 0], sizes = [8, 32], strides = [1, 1]} : vector<8x128xf32> to vector<8x32xf32>
    %1007 = vector.extract_strided_slice %1003 {offsets = [0, 64], sizes = [8, 32], strides = [1, 1]} : vector<8x128xf32> to vector<8x32xf32>
    %1008 = arith.mulf %1006, %1007 : vector<8x32xf32>
    %1009 = arith.addf %1005, %1008 : vector<8x32xf32>
    %1010 = vector.extract_strided_slice %1003 {offsets = [0, 96], sizes = [8, 32], strides = [1, 1]} : vector<8x128xf32> to vector<8x32xf32>
    %1011 = math.tanh %1009 : vector<8x32xf32>
    %1012 = arith.mulf %1010, %1011 : vector<8x32xf32>
    %c64_314 = arith.constant 64 : index
    %c32_315 = arith.constant 32 : index
    %1013 = vector.load %arg13[%c64_314, %c32_315] : memref<128x64xf32, #tpu.memory_space<vmem>>, vector<8x32xf32>
    tpu.vector_store %arg13[%c64_314, %c32_315], %1012 {strides = array<i32>} : memref<128x64xf32, #tpu.memory_space<vmem>>, vector<8x32xf32>,
    %c64_316 = arith.constant 64 : index
    %c0_317 = arith.constant 0 : index
    %1014 = vector.load %arg14[%c64_316, %c0_317] : memref<128x256xf32, #tpu.memory_space<vmem>>, vector<8x128xf32>
    %cst_318 = arith.constant dense<0.000000e+00> : vector<8x128xf32>
    %1015 = tpu.matmul %992, %681, %cst_318 {dimension_numbers = #tpu.dot_dimension_numbers<[1], [0], [0], [1], [0, 0, 1, 1], [], []>} : vector<8x32xf32>, vector<32x128xf32>, vector<8x128xf32> -> vector<8x128xf32>
    %1016 = arith.addf %1014, %1015 : vector<8x128xf32>
    %1017 = math.tanh %1016 : vector<8x128xf32>
    %1018 = arith.negf %1016 : vector<8x128xf32>
    %1019 = math.exp %1018 : vector<8x128xf32>
    %cst_319 = arith.constant 1.000000e+00 : f32
    %1020 = vector.broadcast %cst_319 : f32 to vector<8x128xf32>
    %1021 = arith.addf %1020, %1019 : vector<8x128xf32>
    %1022 = arith.divf %1020, %1021 : vector<8x128xf32>
    %1023 = arith.select %24, %1017, %1022 : vector<8x128xi1>, vector<8x128xf32>
    %1024 = vector.extract_strided_slice %1023 {offsets = [0, 32], sizes = [8, 32], strides = [1, 1]} : vector<8x128xf32> to vector<8x32xf32>
    %1025 = arith.mulf %1024, %989 : vector<8x32xf32>
    %1026 = vector.extract_strided_slice %1023 {offsets = [0, 0], sizes = [8, 32], strides = [1, 1]} : vector<8x128xf32> to vector<8x32xf32>
    %1027 = vector.extract_strided_slice %1023 {offsets = [0, 64], sizes = [8, 32], strides = [1, 1]} : vector<8x128xf32> to vector<8x32xf32>
    %1028 = arith.mulf %1026, %1027 : vector<8x32xf32>
    %1029 = arith.addf %1025, %1028 : vector<8x32xf32>
    %1030 = vector.extract_strided_slice %1023 {offsets = [0, 96], sizes = [8, 32], strides = [1, 1]} : vector<8x128xf32> to vector<8x32xf32>
    %1031 = math.tanh %1029 : vector<8x32xf32>
    %1032 = arith.mulf %1030, %1031 : vector<8x32xf32>
    %c64_320 = arith.constant 64 : index
    %c0_321 = arith.constant 0 : index
    %1033 = vector.load %arg13[%c64_320, %c0_321] : memref<128x64xf32, #tpu.memory_space<vmem>>, vector<8x32xf32>
    tpu.vector_store %arg13[%c64_320, %c0_321], %1032 {strides = array<i32>} : memref<128x64xf32, #tpu.memory_space<vmem>>, vector<8x32xf32>,
    %c56_322 = arith.constant 56 : index
    %c128_323 = arith.constant 128 : index
    %1034 = vector.load %arg14[%c56_322, %c128_323] : memref<128x256xf32, #tpu.memory_space<vmem>>, vector<8x128xf32>
    %cst_324 = arith.constant dense<0.000000e+00> : vector<8x128xf32>
    %1035 = tpu.matmul %1012, %682, %cst_324 {dimension_numbers = #tpu.dot_dimension_numbers<[1], [0], [0], [1], [0, 0, 1, 1], [], []>} : vector<8x32xf32>, vector<32x128xf32>, vector<8x128xf32> -> vector<8x128xf32>
    %1036 = arith.addf %1034, %1035 : vector<8x128xf32>
    %1037 = math.tanh %1036 : vector<8x128xf32>
    %1038 = arith.negf %1036 : vector<8x128xf32>
    %1039 = math.exp %1038 : vector<8x128xf32>
    %cst_325 = arith.constant 1.000000e+00 : f32
    %1040 = vector.broadcast %cst_325 : f32 to vector<8x128xf32>
    %1041 = arith.addf %1040, %1039 : vector<8x128xf32>
    %1042 = arith.divf %1040, %1041 : vector<8x128xf32>
    %1043 = arith.select %24, %1037, %1042 : vector<8x128xi1>, vector<8x128xf32>
    %1044 = vector.extract_strided_slice %1043 {offsets = [0, 32], sizes = [8, 32], strides = [1, 1]} : vector<8x128xf32> to vector<8x32xf32>
    %1045 = arith.mulf %1044, %1009 : vector<8x32xf32>
    %1046 = vector.extract_strided_slice %1043 {offsets = [0, 0], sizes = [8, 32], strides = [1, 1]} : vector<8x128xf32> to vector<8x32xf32>
    %1047 = vector.extract_strided_slice %1043 {offsets = [0, 64], sizes = [8, 32], strides = [1, 1]} : vector<8x128xf32> to vector<8x32xf32>
    %1048 = arith.mulf %1046, %1047 : vector<8x32xf32>
    %1049 = arith.addf %1045, %1048 : vector<8x32xf32>
    %1050 = vector.extract_strided_slice %1043 {offsets = [0, 96], sizes = [8, 32], strides = [1, 1]} : vector<8x128xf32> to vector<8x32xf32>
    %1051 = math.tanh %1049 : vector<8x32xf32>
    %1052 = arith.mulf %1050, %1051 : vector<8x32xf32>
    %c56_326 = arith.constant 56 : index
    %c32_327 = arith.constant 32 : index
    %1053 = vector.load %arg13[%c56_326, %c32_327] : memref<128x64xf32, #tpu.memory_space<vmem>>, vector<8x32xf32>
    tpu.vector_store %arg13[%c56_326, %c32_327], %1052 {strides = array<i32>} : memref<128x64xf32, #tpu.memory_space<vmem>>, vector<8x32xf32>,
    %c72_328 = arith.constant 72 : index
    %c0_329 = arith.constant 0 : index
    %1054 = vector.load %arg14[%c72_328, %c0_329] : memref<128x256xf32, #tpu.memory_space<vmem>>, vector<8x128xf32>
    %cst_330 = arith.constant dense<0.000000e+00> : vector<8x128xf32>
    %1055 = tpu.matmul %1032, %681, %cst_330 {dimension_numbers = #tpu.dot_dimension_numbers<[1], [0], [0], [1], [0, 0, 1, 1], [], []>} : vector<8x32xf32>, vector<32x128xf32>, vector<8x128xf32> -> vector<8x128xf32>
    %1056 = arith.addf %1054, %1055 : vector<8x128xf32>
    %1057 = math.tanh %1056 : vector<8x128xf32>
    %1058 = arith.negf %1056 : vector<8x128xf32>
    %1059 = math.exp %1058 : vector<8x128xf32>
    %cst_331 = arith.constant 1.000000e+00 : f32
    %1060 = vector.broadcast %cst_331 : f32 to vector<8x128xf32>
    %1061 = arith.addf %1060, %1059 : vector<8x128xf32>
    %1062 = arith.divf %1060, %1061 : vector<8x128xf32>
    %1063 = arith.select %24, %1057, %1062 : vector<8x128xi1>, vector<8x128xf32>
    %1064 = vector.extract_strided_slice %1063 {offsets = [0, 32], sizes = [8, 32], strides = [1, 1]} : vector<8x128xf32> to vector<8x32xf32>
    %1065 = arith.mulf %1064, %1029 : vector<8x32xf32>
    %1066 = vector.extract_strided_slice %1063 {offsets = [0, 0], sizes = [8, 32], strides = [1, 1]} : vector<8x128xf32> to vector<8x32xf32>
    %1067 = vector.extract_strided_slice %1063 {offsets = [0, 64], sizes = [8, 32], strides = [1, 1]} : vector<8x128xf32> to vector<8x32xf32>
    %1068 = arith.mulf %1066, %1067 : vector<8x32xf32>
    %1069 = arith.addf %1065, %1068 : vector<8x32xf32>
    %1070 = vector.extract_strided_slice %1063 {offsets = [0, 96], sizes = [8, 32], strides = [1, 1]} : vector<8x128xf32> to vector<8x32xf32>
    %1071 = math.tanh %1069 : vector<8x32xf32>
    %1072 = arith.mulf %1070, %1071 : vector<8x32xf32>
    %c72_332 = arith.constant 72 : index
    %c0_333 = arith.constant 0 : index
    %1073 = vector.load %arg13[%c72_332, %c0_333] : memref<128x64xf32, #tpu.memory_space<vmem>>, vector<8x32xf32>
    tpu.vector_store %arg13[%c72_332, %c0_333], %1072 {strides = array<i32>} : memref<128x64xf32, #tpu.memory_space<vmem>>, vector<8x32xf32>,
    %c48_334 = arith.constant 48 : index
    %c128_335 = arith.constant 128 : index
    %1074 = vector.load %arg14[%c48_334, %c128_335] : memref<128x256xf32, #tpu.memory_space<vmem>>, vector<8x128xf32>
    %cst_336 = arith.constant dense<0.000000e+00> : vector<8x128xf32>
    %1075 = tpu.matmul %1052, %682, %cst_336 {dimension_numbers = #tpu.dot_dimension_numbers<[1], [0], [0], [1], [0, 0, 1, 1], [], []>} : vector<8x32xf32>, vector<32x128xf32>, vector<8x128xf32> -> vector<8x128xf32>
    %1076 = arith.addf %1074, %1075 : vector<8x128xf32>
    %1077 = math.tanh %1076 : vector<8x128xf32>
    %1078 = arith.negf %1076 : vector<8x128xf32>
    %1079 = math.exp %1078 : vector<8x128xf32>
    %cst_337 = arith.constant 1.000000e+00 : f32
    %1080 = vector.broadcast %cst_337 : f32 to vector<8x128xf32>
    %1081 = arith.addf %1080, %1079 : vector<8x128xf32>
    %1082 = arith.divf %1080, %1081 : vector<8x128xf32>
    %1083 = arith.select %24, %1077, %1082 : vector<8x128xi1>, vector<8x128xf32>
    %1084 = vector.extract_strided_slice %1083 {offsets = [0, 32], sizes = [8, 32], strides = [1, 1]} : vector<8x128xf32> to vector<8x32xf32>
    %1085 = arith.mulf %1084, %1049 : vector<8x32xf32>
    %1086 = vector.extract_strided_slice %1083 {offsets = [0, 0], sizes = [8, 32], strides = [1, 1]} : vector<8x128xf32> to vector<8x32xf32>
    %1087 = vector.extract_strided_slice %1083 {offsets = [0, 64], sizes = [8, 32], strides = [1, 1]} : vector<8x128xf32> to vector<8x32xf32>
    %1088 = arith.mulf %1086, %1087 : vector<8x32xf32>
    %1089 = arith.addf %1085, %1088 : vector<8x32xf32>
    %1090 = vector.extract_strided_slice %1083 {offsets = [0, 96], sizes = [8, 32], strides = [1, 1]} : vector<8x128xf32> to vector<8x32xf32>
    %1091 = math.tanh %1089 : vector<8x32xf32>
    %1092 = arith.mulf %1090, %1091 : vector<8x32xf32>
    %c48_338 = arith.constant 48 : index
    %c32_339 = arith.constant 32 : index
    %1093 = vector.load %arg13[%c48_338, %c32_339] : memref<128x64xf32, #tpu.memory_space<vmem>>, vector<8x32xf32>
    tpu.vector_store %arg13[%c48_338, %c32_339], %1092 {strides = array<i32>} : memref<128x64xf32, #tpu.memory_space<vmem>>, vector<8x32xf32>,
    %c80_340 = arith.constant 80 : index
    %c0_341 = arith.constant 0 : index
    %1094 = vector.load %arg14[%c80_340, %c0_341] : memref<128x256xf32, #tpu.memory_space<vmem>>, vector<8x128xf32>
    %cst_342 = arith.constant dense<0.000000e+00> : vector<8x128xf32>
    %1095 = tpu.matmul %1072, %681, %cst_342 {dimension_numbers = #tpu.dot_dimension_numbers<[1], [0], [0], [1], [0, 0, 1, 1], [], []>} : vector<8x32xf32>, vector<32x128xf32>, vector<8x128xf32> -> vector<8x128xf32>
    %1096 = arith.addf %1094, %1095 : vector<8x128xf32>
    %1097 = math.tanh %1096 : vector<8x128xf32>
    %1098 = arith.negf %1096 : vector<8x128xf32>
    %1099 = math.exp %1098 : vector<8x128xf32>
    %cst_343 = arith.constant 1.000000e+00 : f32
    %1100 = vector.broadcast %cst_343 : f32 to vector<8x128xf32>
    %1101 = arith.addf %1100, %1099 : vector<8x128xf32>
    %1102 = arith.divf %1100, %1101 : vector<8x128xf32>
    %1103 = arith.select %24, %1097, %1102 : vector<8x128xi1>, vector<8x128xf32>
    %1104 = vector.extract_strided_slice %1103 {offsets = [0, 32], sizes = [8, 32], strides = [1, 1]} : vector<8x128xf32> to vector<8x32xf32>
    %1105 = arith.mulf %1104, %1069 : vector<8x32xf32>
    %1106 = vector.extract_strided_slice %1103 {offsets = [0, 0], sizes = [8, 32], strides = [1, 1]} : vector<8x128xf32> to vector<8x32xf32>
    %1107 = vector.extract_strided_slice %1103 {offsets = [0, 64], sizes = [8, 32], strides = [1, 1]} : vector<8x128xf32> to vector<8x32xf32>
    %1108 = arith.mulf %1106, %1107 : vector<8x32xf32>
    %1109 = arith.addf %1105, %1108 : vector<8x32xf32>
    %1110 = vector.extract_strided_slice %1103 {offsets = [0, 96], sizes = [8, 32], strides = [1, 1]} : vector<8x128xf32> to vector<8x32xf32>
    %1111 = math.tanh %1109 : vector<8x32xf32>
    %1112 = arith.mulf %1110, %1111 : vector<8x32xf32>
    %c80_344 = arith.constant 80 : index
    %c0_345 = arith.constant 0 : index
    %1113 = vector.load %arg13[%c80_344, %c0_345] : memref<128x64xf32, #tpu.memory_space<vmem>>, vector<8x32xf32>
    tpu.vector_store %arg13[%c80_344, %c0_345], %1112 {strides = array<i32>} : memref<128x64xf32, #tpu.memory_space<vmem>>, vector<8x32xf32>,
    %c40_346 = arith.constant 40 : index
    %c128_347 = arith.constant 128 : index
    %1114 = vector.load %arg14[%c40_346, %c128_347] : memref<128x256xf32, #tpu.memory_space<vmem>>, vector<8x128xf32>
    %cst_348 = arith.constant dense<0.000000e+00> : vector<8x128xf32>
    %1115 = tpu.matmul %1092, %682, %cst_348 {dimension_numbers = #tpu.dot_dimension_numbers<[1], [0], [0], [1], [0, 0, 1, 1], [], []>} : vector<8x32xf32>, vector<32x128xf32>, vector<8x128xf32> -> vector<8x128xf32>
    %1116 = arith.addf %1114, %1115 : vector<8x128xf32>
    %1117 = math.tanh %1116 : vector<8x128xf32>
    %1118 = arith.negf %1116 : vector<8x128xf32>
    %1119 = math.exp %1118 : vector<8x128xf32>
    %cst_349 = arith.constant 1.000000e+00 : f32
    %1120 = vector.broadcast %cst_349 : f32 to vector<8x128xf32>
    %1121 = arith.addf %1120, %1119 : vector<8x128xf32>
    %1122 = arith.divf %1120, %1121 : vector<8x128xf32>
    %1123 = arith.select %24, %1117, %1122 : vector<8x128xi1>, vector<8x128xf32>
    %1124 = vector.extract_strided_slice %1123 {offsets = [0, 32], sizes = [8, 32], strides = [1, 1]} : vector<8x128xf32> to vector<8x32xf32>
    %1125 = arith.mulf %1124, %1089 : vector<8x32xf32>
    %1126 = vector.extract_strided_slice %1123 {offsets = [0, 0], sizes = [8, 32], strides = [1, 1]} : vector<8x128xf32> to vector<8x32xf32>
    %1127 = vector.extract_strided_slice %1123 {offsets = [0, 64], sizes = [8, 32], strides = [1, 1]} : vector<8x128xf32> to vector<8x32xf32>
    %1128 = arith.mulf %1126, %1127 : vector<8x32xf32>
    %1129 = arith.addf %1125, %1128 : vector<8x32xf32>
    %1130 = vector.extract_strided_slice %1123 {offsets = [0, 96], sizes = [8, 32], strides = [1, 1]} : vector<8x128xf32> to vector<8x32xf32>
    %1131 = math.tanh %1129 : vector<8x32xf32>
    %1132 = arith.mulf %1130, %1131 : vector<8x32xf32>
    %c40_350 = arith.constant 40 : index
    %c32_351 = arith.constant 32 : index
    %1133 = vector.load %arg13[%c40_350, %c32_351] : memref<128x64xf32, #tpu.memory_space<vmem>>, vector<8x32xf32>
    tpu.vector_store %arg13[%c40_350, %c32_351], %1132 {strides = array<i32>} : memref<128x64xf32, #tpu.memory_space<vmem>>, vector<8x32xf32>,
    %c88_352 = arith.constant 88 : index
    %c0_353 = arith.constant 0 : index
    %1134 = vector.load %arg14[%c88_352, %c0_353] : memref<128x256xf32, #tpu.memory_space<vmem>>, vector<8x128xf32>
    %cst_354 = arith.constant dense<0.000000e+00> : vector<8x128xf32>
    %1135 = tpu.matmul %1112, %681, %cst_354 {dimension_numbers = #tpu.dot_dimension_numbers<[1], [0], [0], [1], [0, 0, 1, 1], [], []>} : vector<8x32xf32>, vector<32x128xf32>, vector<8x128xf32> -> vector<8x128xf32>
    %1136 = arith.addf %1134, %1135 : vector<8x128xf32>
    %1137 = math.tanh %1136 : vector<8x128xf32>
    %1138 = arith.negf %1136 : vector<8x128xf32>
    %1139 = math.exp %1138 : vector<8x128xf32>
    %cst_355 = arith.constant 1.000000e+00 : f32
    %1140 = vector.broadcast %cst_355 : f32 to vector<8x128xf32>
    %1141 = arith.addf %1140, %1139 : vector<8x128xf32>
    %1142 = arith.divf %1140, %1141 : vector<8x128xf32>
    %1143 = arith.select %24, %1137, %1142 : vector<8x128xi1>, vector<8x128xf32>
    %1144 = vector.extract_strided_slice %1143 {offsets = [0, 32], sizes = [8, 32], strides = [1, 1]} : vector<8x128xf32> to vector<8x32xf32>
    %1145 = arith.mulf %1144, %1109 : vector<8x32xf32>
    %1146 = vector.extract_strided_slice %1143 {offsets = [0, 0], sizes = [8, 32], strides = [1, 1]} : vector<8x128xf32> to vector<8x32xf32>
    %1147 = vector.extract_strided_slice %1143 {offsets = [0, 64], sizes = [8, 32], strides = [1, 1]} : vector<8x128xf32> to vector<8x32xf32>
    %1148 = arith.mulf %1146, %1147 : vector<8x32xf32>
    %1149 = arith.addf %1145, %1148 : vector<8x32xf32>
    %1150 = vector.extract_strided_slice %1143 {offsets = [0, 96], sizes = [8, 32], strides = [1, 1]} : vector<8x128xf32> to vector<8x32xf32>
    %1151 = math.tanh %1149 : vector<8x32xf32>
    %1152 = arith.mulf %1150, %1151 : vector<8x32xf32>
    %c88_356 = arith.constant 88 : index
    %c0_357 = arith.constant 0 : index
    %1153 = vector.load %arg13[%c88_356, %c0_357] : memref<128x64xf32, #tpu.memory_space<vmem>>, vector<8x32xf32>
    tpu.vector_store %arg13[%c88_356, %c0_357], %1152 {strides = array<i32>} : memref<128x64xf32, #tpu.memory_space<vmem>>, vector<8x32xf32>,
    %c32_358 = arith.constant 32 : index
    %c128_359 = arith.constant 128 : index
    %1154 = vector.load %arg14[%c32_358, %c128_359] : memref<128x256xf32, #tpu.memory_space<vmem>>, vector<8x128xf32>
    %cst_360 = arith.constant dense<0.000000e+00> : vector<8x128xf32>
    %1155 = tpu.matmul %1132, %682, %cst_360 {dimension_numbers = #tpu.dot_dimension_numbers<[1], [0], [0], [1], [0, 0, 1, 1], [], []>} : vector<8x32xf32>, vector<32x128xf32>, vector<8x128xf32> -> vector<8x128xf32>
    %1156 = arith.addf %1154, %1155 : vector<8x128xf32>
    %1157 = math.tanh %1156 : vector<8x128xf32>
    %1158 = arith.negf %1156 : vector<8x128xf32>
    %1159 = math.exp %1158 : vector<8x128xf32>
    %cst_361 = arith.constant 1.000000e+00 : f32
    %1160 = vector.broadcast %cst_361 : f32 to vector<8x128xf32>
    %1161 = arith.addf %1160, %1159 : vector<8x128xf32>
    %1162 = arith.divf %1160, %1161 : vector<8x128xf32>
    %1163 = arith.select %24, %1157, %1162 : vector<8x128xi1>, vector<8x128xf32>
    %1164 = vector.extract_strided_slice %1163 {offsets = [0, 32], sizes = [8, 32], strides = [1, 1]} : vector<8x128xf32> to vector<8x32xf32>
    %1165 = arith.mulf %1164, %1129 : vector<8x32xf32>
    %1166 = vector.extract_strided_slice %1163 {offsets = [0, 0], sizes = [8, 32], strides = [1, 1]} : vector<8x128xf32> to vector<8x32xf32>
    %1167 = vector.extract_strided_slice %1163 {offsets = [0, 64], sizes = [8, 32], strides = [1, 1]} : vector<8x128xf32> to vector<8x32xf32>
    %1168 = arith.mulf %1166, %1167 : vector<8x32xf32>
    %1169 = arith.addf %1165, %1168 : vector<8x32xf32>
    %1170 = vector.extract_strided_slice %1163 {offsets = [0, 96], sizes = [8, 32], strides = [1, 1]} : vector<8x128xf32> to vector<8x32xf32>
    %1171 = math.tanh %1169 : vector<8x32xf32>
    %1172 = arith.mulf %1170, %1171 : vector<8x32xf32>
    %c32_362 = arith.constant 32 : index
    %c32_363 = arith.constant 32 : index
    %1173 = vector.load %arg13[%c32_362, %c32_363] : memref<128x64xf32, #tpu.memory_space<vmem>>, vector<8x32xf32>
    tpu.vector_store %arg13[%c32_362, %c32_363], %1172 {strides = array<i32>} : memref<128x64xf32, #tpu.memory_space<vmem>>, vector<8x32xf32>,
    %c96_364 = arith.constant 96 : index
    %c0_365 = arith.constant 0 : index
    %1174 = vector.load %arg14[%c96_364, %c0_365] : memref<128x256xf32, #tpu.memory_space<vmem>>, vector<8x128xf32>
    %cst_366 = arith.constant dense<0.000000e+00> : vector<8x128xf32>
    %1175 = tpu.matmul %1152, %681, %cst_366 {dimension_numbers = #tpu.dot_dimension_numbers<[1], [0], [0], [1], [0, 0, 1, 1], [], []>} : vector<8x32xf32>, vector<32x128xf32>, vector<8x128xf32> -> vector<8x128xf32>
    %1176 = arith.addf %1174, %1175 : vector<8x128xf32>
    %1177 = math.tanh %1176 : vector<8x128xf32>
    %1178 = arith.negf %1176 : vector<8x128xf32>
    %1179 = math.exp %1178 : vector<8x128xf32>
    %cst_367 = arith.constant 1.000000e+00 : f32
    %1180 = vector.broadcast %cst_367 : f32 to vector<8x128xf32>
    %1181 = arith.addf %1180, %1179 : vector<8x128xf32>
    %1182 = arith.divf %1180, %1181 : vector<8x128xf32>
    %1183 = arith.select %24, %1177, %1182 : vector<8x128xi1>, vector<8x128xf32>
    %1184 = vector.extract_strided_slice %1183 {offsets = [0, 32], sizes = [8, 32], strides = [1, 1]} : vector<8x128xf32> to vector<8x32xf32>
    %1185 = arith.mulf %1184, %1149 : vector<8x32xf32>
    %1186 = vector.extract_strided_slice %1183 {offsets = [0, 0], sizes = [8, 32], strides = [1, 1]} : vector<8x128xf32> to vector<8x32xf32>
    %1187 = vector.extract_strided_slice %1183 {offsets = [0, 64], sizes = [8, 32], strides = [1, 1]} : vector<8x128xf32> to vector<8x32xf32>
    %1188 = arith.mulf %1186, %1187 : vector<8x32xf32>
    %1189 = arith.addf %1185, %1188 : vector<8x32xf32>
    %1190 = vector.extract_strided_slice %1183 {offsets = [0, 96], sizes = [8, 32], strides = [1, 1]} : vector<8x128xf32> to vector<8x32xf32>
    %1191 = math.tanh %1189 : vector<8x32xf32>
    %1192 = arith.mulf %1190, %1191 : vector<8x32xf32>
    %c96_368 = arith.constant 96 : index
    %c0_369 = arith.constant 0 : index
    %1193 = vector.load %arg13[%c96_368, %c0_369] : memref<128x64xf32, #tpu.memory_space<vmem>>, vector<8x32xf32>
    tpu.vector_store %arg13[%c96_368, %c0_369], %1192 {strides = array<i32>} : memref<128x64xf32, #tpu.memory_space<vmem>>, vector<8x32xf32>,
    %c24_370 = arith.constant 24 : index
    %c128_371 = arith.constant 128 : index
    %1194 = vector.load %arg14[%c24_370, %c128_371] : memref<128x256xf32, #tpu.memory_space<vmem>>, vector<8x128xf32>
    %cst_372 = arith.constant dense<0.000000e+00> : vector<8x128xf32>
    %1195 = tpu.matmul %1172, %682, %cst_372 {dimension_numbers = #tpu.dot_dimension_numbers<[1], [0], [0], [1], [0, 0, 1, 1], [], []>} : vector<8x32xf32>, vector<32x128xf32>, vector<8x128xf32> -> vector<8x128xf32>
    %1196 = arith.addf %1194, %1195 : vector<8x128xf32>
    %1197 = math.tanh %1196 : vector<8x128xf32>
    %1198 = arith.negf %1196 : vector<8x128xf32>
    %1199 = math.exp %1198 : vector<8x128xf32>
    %cst_373 = arith.constant 1.000000e+00 : f32
    %1200 = vector.broadcast %cst_373 : f32 to vector<8x128xf32>
    %1201 = arith.addf %1200, %1199 : vector<8x128xf32>
    %1202 = arith.divf %1200, %1201 : vector<8x128xf32>
    %1203 = arith.select %24, %1197, %1202 : vector<8x128xi1>, vector<8x128xf32>
    %1204 = vector.extract_strided_slice %1203 {offsets = [0, 32], sizes = [8, 32], strides = [1, 1]} : vector<8x128xf32> to vector<8x32xf32>
    %1205 = arith.mulf %1204, %1169 : vector<8x32xf32>
    %1206 = vector.extract_strided_slice %1203 {offsets = [0, 0], sizes = [8, 32], strides = [1, 1]} : vector<8x128xf32> to vector<8x32xf32>
    %1207 = vector.extract_strided_slice %1203 {offsets = [0, 64], sizes = [8, 32], strides = [1, 1]} : vector<8x128xf32> to vector<8x32xf32>
    %1208 = arith.mulf %1206, %1207 : vector<8x32xf32>
    %1209 = arith.addf %1205, %1208 : vector<8x32xf32>
    %1210 = vector.extract_strided_slice %1203 {offsets = [0, 96], sizes = [8, 32], strides = [1, 1]} : vector<8x128xf32> to vector<8x32xf32>
    %1211 = math.tanh %1209 : vector<8x32xf32>
    %1212 = arith.mulf %1210, %1211 : vector<8x32xf32>
    %c24_374 = arith.constant 24 : index
    %c32_375 = arith.constant 32 : index
    %1213 = vector.load %arg13[%c24_374, %c32_375] : memref<128x64xf32, #tpu.memory_space<vmem>>, vector<8x32xf32>
    tpu.vector_store %arg13[%c24_374, %c32_375], %1212 {strides = array<i32>} : memref<128x64xf32, #tpu.memory_space<vmem>>, vector<8x32xf32>,
    %c104_376 = arith.constant 104 : index
    %c0_377 = arith.constant 0 : index
    %1214 = vector.load %arg14[%c104_376, %c0_377] : memref<128x256xf32, #tpu.memory_space<vmem>>, vector<8x128xf32>
    %cst_378 = arith.constant dense<0.000000e+00> : vector<8x128xf32>
    %1215 = tpu.matmul %1192, %681, %cst_378 {dimension_numbers = #tpu.dot_dimension_numbers<[1], [0], [0], [1], [0, 0, 1, 1], [], []>} : vector<8x32xf32>, vector<32x128xf32>, vector<8x128xf32> -> vector<8x128xf32>
    %1216 = arith.addf %1214, %1215 : vector<8x128xf32>
    %1217 = math.tanh %1216 : vector<8x128xf32>
    %1218 = arith.negf %1216 : vector<8x128xf32>
    %1219 = math.exp %1218 : vector<8x128xf32>
    %cst_379 = arith.constant 1.000000e+00 : f32
    %1220 = vector.broadcast %cst_379 : f32 to vector<8x128xf32>
    %1221 = arith.addf %1220, %1219 : vector<8x128xf32>
    %1222 = arith.divf %1220, %1221 : vector<8x128xf32>
    %1223 = arith.select %24, %1217, %1222 : vector<8x128xi1>, vector<8x128xf32>
    %1224 = vector.extract_strided_slice %1223 {offsets = [0, 32], sizes = [8, 32], strides = [1, 1]} : vector<8x128xf32> to vector<8x32xf32>
    %1225 = arith.mulf %1224, %1189 : vector<8x32xf32>
    %1226 = vector.extract_strided_slice %1223 {offsets = [0, 0], sizes = [8, 32], strides = [1, 1]} : vector<8x128xf32> to vector<8x32xf32>
    %1227 = vector.extract_strided_slice %1223 {offsets = [0, 64], sizes = [8, 32], strides = [1, 1]} : vector<8x128xf32> to vector<8x32xf32>
    %1228 = arith.mulf %1226, %1227 : vector<8x32xf32>
    %1229 = arith.addf %1225, %1228 : vector<8x32xf32>
    %1230 = vector.extract_strided_slice %1223 {offsets = [0, 96], sizes = [8, 32], strides = [1, 1]} : vector<8x128xf32> to vector<8x32xf32>
    %1231 = math.tanh %1229 : vector<8x32xf32>
    %1232 = arith.mulf %1230, %1231 : vector<8x32xf32>
    %c104_380 = arith.constant 104 : index
    %c0_381 = arith.constant 0 : index
    %1233 = vector.load %arg13[%c104_380, %c0_381] : memref<128x64xf32, #tpu.memory_space<vmem>>, vector<8x32xf32>
    tpu.vector_store %arg13[%c104_380, %c0_381], %1232 {strides = array<i32>} : memref<128x64xf32, #tpu.memory_space<vmem>>, vector<8x32xf32>,
    %c16_382 = arith.constant 16 : index
    %c128_383 = arith.constant 128 : index
    %1234 = vector.load %arg14[%c16_382, %c128_383] : memref<128x256xf32, #tpu.memory_space<vmem>>, vector<8x128xf32>
    %cst_384 = arith.constant dense<0.000000e+00> : vector<8x128xf32>
    %1235 = tpu.matmul %1212, %682, %cst_384 {dimension_numbers = #tpu.dot_dimension_numbers<[1], [0], [0], [1], [0, 0, 1, 1], [], []>} : vector<8x32xf32>, vector<32x128xf32>, vector<8x128xf32> -> vector<8x128xf32>
    %1236 = arith.addf %1234, %1235 : vector<8x128xf32>
    %1237 = math.tanh %1236 : vector<8x128xf32>
    %1238 = arith.negf %1236 : vector<8x128xf32>
    %1239 = math.exp %1238 : vector<8x128xf32>
    %cst_385 = arith.constant 1.000000e+00 : f32
    %1240 = vector.broadcast %cst_385 : f32 to vector<8x128xf32>
    %1241 = arith.addf %1240, %1239 : vector<8x128xf32>
    %1242 = arith.divf %1240, %1241 : vector<8x128xf32>
    %1243 = arith.select %24, %1237, %1242 : vector<8x128xi1>, vector<8x128xf32>
    %1244 = vector.extract_strided_slice %1243 {offsets = [0, 32], sizes = [8, 32], strides = [1, 1]} : vector<8x128xf32> to vector<8x32xf32>
    %1245 = arith.mulf %1244, %1209 : vector<8x32xf32>
    %1246 = vector.extract_strided_slice %1243 {offsets = [0, 0], sizes = [8, 32], strides = [1, 1]} : vector<8x128xf32> to vector<8x32xf32>
    %1247 = vector.extract_strided_slice %1243 {offsets = [0, 64], sizes = [8, 32], strides = [1, 1]} : vector<8x128xf32> to vector<8x32xf32>
    %1248 = arith.mulf %1246, %1247 : vector<8x32xf32>
    %1249 = arith.addf %1245, %1248 : vector<8x32xf32>
    %1250 = vector.extract_strided_slice %1243 {offsets = [0, 96], sizes = [8, 32], strides = [1, 1]} : vector<8x128xf32> to vector<8x32xf32>
    %1251 = math.tanh %1249 : vector<8x32xf32>
    %1252 = arith.mulf %1250, %1251 : vector<8x32xf32>
    %c16_386 = arith.constant 16 : index
    %c32_387 = arith.constant 32 : index
    %1253 = vector.load %arg13[%c16_386, %c32_387] : memref<128x64xf32, #tpu.memory_space<vmem>>, vector<8x32xf32>
    tpu.vector_store %arg13[%c16_386, %c32_387], %1252 {strides = array<i32>} : memref<128x64xf32, #tpu.memory_space<vmem>>, vector<8x32xf32>,
    %c112_388 = arith.constant 112 : index
    %c0_389 = arith.constant 0 : index
    %1254 = vector.load %arg14[%c112_388, %c0_389] : memref<128x256xf32, #tpu.memory_space<vmem>>, vector<8x128xf32>
    %cst_390 = arith.constant dense<0.000000e+00> : vector<8x128xf32>
    %1255 = tpu.matmul %1232, %681, %cst_390 {dimension_numbers = #tpu.dot_dimension_numbers<[1], [0], [0], [1], [0, 0, 1, 1], [], []>} : vector<8x32xf32>, vector<32x128xf32>, vector<8x128xf32> -> vector<8x128xf32>
    %1256 = arith.addf %1254, %1255 : vector<8x128xf32>
    %1257 = math.tanh %1256 : vector<8x128xf32>
    %1258 = arith.negf %1256 : vector<8x128xf32>
    %1259 = math.exp %1258 : vector<8x128xf32>
    %cst_391 = arith.constant 1.000000e+00 : f32
    %1260 = vector.broadcast %cst_391 : f32 to vector<8x128xf32>
    %1261 = arith.addf %1260, %1259 : vector<8x128xf32>
    %1262 = arith.divf %1260, %1261 : vector<8x128xf32>
    %1263 = arith.select %24, %1257, %1262 : vector<8x128xi1>, vector<8x128xf32>
    %1264 = vector.extract_strided_slice %1263 {offsets = [0, 32], sizes = [8, 32], strides = [1, 1]} : vector<8x128xf32> to vector<8x32xf32>
    %1265 = arith.mulf %1264, %1229 : vector<8x32xf32>
    %1266 = vector.extract_strided_slice %1263 {offsets = [0, 0], sizes = [8, 32], strides = [1, 1]} : vector<8x128xf32> to vector<8x32xf32>
    %1267 = vector.extract_strided_slice %1263 {offsets = [0, 64], sizes = [8, 32], strides = [1, 1]} : vector<8x128xf32> to vector<8x32xf32>
    %1268 = arith.mulf %1266, %1267 : vector<8x32xf32>
    %1269 = arith.addf %1265, %1268 : vector<8x32xf32>
    %1270 = vector.extract_strided_slice %1263 {offsets = [0, 96], sizes = [8, 32], strides = [1, 1]} : vector<8x128xf32> to vector<8x32xf32>
    %1271 = math.tanh %1269 : vector<8x32xf32>
    %1272 = arith.mulf %1270, %1271 : vector<8x32xf32>
    %c112_392 = arith.constant 112 : index
    %c0_393 = arith.constant 0 : index
    %1273 = vector.load %arg13[%c112_392, %c0_393] : memref<128x64xf32, #tpu.memory_space<vmem>>, vector<8x32xf32>
    tpu.vector_store %arg13[%c112_392, %c0_393], %1272 {strides = array<i32>} : memref<128x64xf32, #tpu.memory_space<vmem>>, vector<8x32xf32>,
    %c8_394 = arith.constant 8 : index
    %c128_395 = arith.constant 128 : index
    %1274 = vector.load %arg14[%c8_394, %c128_395] : memref<128x256xf32, #tpu.memory_space<vmem>>, vector<8x128xf32>
    %cst_396 = arith.constant dense<0.000000e+00> : vector<8x128xf32>
    %1275 = tpu.matmul %1252, %682, %cst_396 {dimension_numbers = #tpu.dot_dimension_numbers<[1], [0], [0], [1], [0, 0, 1, 1], [], []>} : vector<8x32xf32>, vector<32x128xf32>, vector<8x128xf32> -> vector<8x128xf32>
    %1276 = arith.addf %1274, %1275 : vector<8x128xf32>
    %1277 = math.tanh %1276 : vector<8x128xf32>
    %1278 = arith.negf %1276 : vector<8x128xf32>
    %1279 = math.exp %1278 : vector<8x128xf32>
    %cst_397 = arith.constant 1.000000e+00 : f32
    %1280 = vector.broadcast %cst_397 : f32 to vector<8x128xf32>
    %1281 = arith.addf %1280, %1279 : vector<8x128xf32>
    %1282 = arith.divf %1280, %1281 : vector<8x128xf32>
    %1283 = arith.select %24, %1277, %1282 : vector<8x128xi1>, vector<8x128xf32>
    %1284 = vector.extract_strided_slice %1283 {offsets = [0, 32], sizes = [8, 32], strides = [1, 1]} : vector<8x128xf32> to vector<8x32xf32>
    %1285 = arith.mulf %1284, %1249 : vector<8x32xf32>
    %1286 = vector.extract_strided_slice %1283 {offsets = [0, 0], sizes = [8, 32], strides = [1, 1]} : vector<8x128xf32> to vector<8x32xf32>
    %1287 = vector.extract_strided_slice %1283 {offsets = [0, 64], sizes = [8, 32], strides = [1, 1]} : vector<8x128xf32> to vector<8x32xf32>
    %1288 = arith.mulf %1286, %1287 : vector<8x32xf32>
    %1289 = arith.addf %1285, %1288 : vector<8x32xf32>
    %1290 = vector.extract_strided_slice %1283 {offsets = [0, 96], sizes = [8, 32], strides = [1, 1]} : vector<8x128xf32> to vector<8x32xf32>
    %1291 = math.tanh %1289 : vector<8x32xf32>
    %1292 = arith.mulf %1290, %1291 : vector<8x32xf32>
    %c8_398 = arith.constant 8 : index
    %c32_399 = arith.constant 32 : index
    %1293 = vector.load %arg13[%c8_398, %c32_399] : memref<128x64xf32, #tpu.memory_space<vmem>>, vector<8x32xf32>
    tpu.vector_store %arg13[%c8_398, %c32_399], %1292 {strides = array<i32>} : memref<128x64xf32, #tpu.memory_space<vmem>>, vector<8x32xf32>,
    %c120_400 = arith.constant 120 : index
    %c0_401 = arith.constant 0 : index
    %1294 = vector.load %arg14[%c120_400, %c0_401] : memref<128x256xf32, #tpu.memory_space<vmem>>, vector<8x128xf32>
    %cst_402 = arith.constant dense<0.000000e+00> : vector<8x128xf32>
    %1295 = tpu.matmul %1272, %681, %cst_402 {dimension_numbers = #tpu.dot_dimension_numbers<[1], [0], [0], [1], [0, 0, 1, 1], [], []>} : vector<8x32xf32>, vector<32x128xf32>, vector<8x128xf32> -> vector<8x128xf32>
    %1296 = arith.addf %1294, %1295 : vector<8x128xf32>
    %1297 = math.tanh %1296 : vector<8x128xf32>
    %1298 = arith.negf %1296 : vector<8x128xf32>
    %1299 = math.exp %1298 : vector<8x128xf32>
    %cst_403 = arith.constant 1.000000e+00 : f32
    %1300 = vector.broadcast %cst_403 : f32 to vector<8x128xf32>
    %1301 = arith.addf %1300, %1299 : vector<8x128xf32>
    %1302 = arith.divf %1300, %1301 : vector<8x128xf32>
    %1303 = arith.select %24, %1297, %1302 : vector<8x128xi1>, vector<8x128xf32>
    %1304 = vector.extract_strided_slice %1303 {offsets = [0, 32], sizes = [8, 32], strides = [1, 1]} : vector<8x128xf32> to vector<8x32xf32>
    %1305 = arith.mulf %1304, %1269 : vector<8x32xf32>
    %1306 = vector.extract_strided_slice %1303 {offsets = [0, 0], sizes = [8, 32], strides = [1, 1]} : vector<8x128xf32> to vector<8x32xf32>
    %1307 = vector.extract_strided_slice %1303 {offsets = [0, 64], sizes = [8, 32], strides = [1, 1]} : vector<8x128xf32> to vector<8x32xf32>
    %1308 = arith.mulf %1306, %1307 : vector<8x32xf32>
    %1309 = arith.addf %1305, %1308 : vector<8x32xf32>
    %1310 = vector.extract_strided_slice %1303 {offsets = [0, 96], sizes = [8, 32], strides = [1, 1]} : vector<8x128xf32> to vector<8x32xf32>
    %1311 = math.tanh %1309 : vector<8x32xf32>
    %1312 = arith.mulf %1310, %1311 : vector<8x32xf32>
    %c120_404 = arith.constant 120 : index
    %c0_405 = arith.constant 0 : index
    %1313 = vector.load %arg13[%c120_404, %c0_405] : memref<128x64xf32, #tpu.memory_space<vmem>>, vector<8x32xf32>
    tpu.vector_store %arg13[%c120_404, %c0_405], %1312 {strides = array<i32>} : memref<128x64xf32, #tpu.memory_space<vmem>>, vector<8x32xf32>,
    %c0_406 = arith.constant 0 : index
    %c128_407 = arith.constant 128 : index
    %1314 = vector.load %arg14[%c0_406, %c128_407] : memref<128x256xf32, #tpu.memory_space<vmem>>, vector<8x128xf32>
    %cst_408 = arith.constant dense<0.000000e+00> : vector<8x128xf32>
    %1315 = tpu.matmul %1292, %682, %cst_408 {dimension_numbers = #tpu.dot_dimension_numbers<[1], [0], [0], [1], [0, 0, 1, 1], [], []>} : vector<8x32xf32>, vector<32x128xf32>, vector<8x128xf32> -> vector<8x128xf32>
    %1316 = arith.addf %1314, %1315 : vector<8x128xf32>
    %1317 = math.tanh %1316 : vector<8x128xf32>
    %1318 = arith.negf %1316 : vector<8x128xf32>
    %1319 = math.exp %1318 : vector<8x128xf32>
    %cst_409 = arith.constant 1.000000e+00 : f32
    %1320 = vector.broadcast %cst_409 : f32 to vector<8x128xf32>
    %1321 = arith.addf %1320, %1319 : vector<8x128xf32>
    %1322 = arith.divf %1320, %1321 : vector<8x128xf32>
    %1323 = arith.select %24, %1317, %1322 : vector<8x128xi1>, vector<8x128xf32>
    %1324 = vector.extract_strided_slice %1323 {offsets = [0, 32], sizes = [8, 32], strides = [1, 1]} : vector<8x128xf32> to vector<8x32xf32>
    %1325 = arith.mulf %1324, %1289 : vector<8x32xf32>
    %1326 = vector.extract_strided_slice %1323 {offsets = [0, 0], sizes = [8, 32], strides = [1, 1]} : vector<8x128xf32> to vector<8x32xf32>
    %1327 = vector.extract_strided_slice %1323 {offsets = [0, 64], sizes = [8, 32], strides = [1, 1]} : vector<8x128xf32> to vector<8x32xf32>
    %1328 = arith.mulf %1326, %1327 : vector<8x32xf32>
    %1329 = arith.addf %1325, %1328 : vector<8x32xf32>
    %1330 = vector.extract_strided_slice %1323 {offsets = [0, 96], sizes = [8, 32], strides = [1, 1]} : vector<8x128xf32> to vector<8x32xf32>
    %1331 = math.tanh %1329 : vector<8x32xf32>
    %1332 = arith.mulf %1330, %1331 : vector<8x32xf32>
    %c0_410 = arith.constant 0 : index
    %c32_411 = arith.constant 32 : index
    %1333 = vector.load %arg13[%c0_410, %c32_411] : memref<128x64xf32, #tpu.memory_space<vmem>>, vector<8x32xf32>
    tpu.vector_store %arg13[%c0_410, %c32_411], %1332 {strides = array<i32>} : memref<128x64xf32, #tpu.memory_space<vmem>>, vector<8x32xf32>,
    return
  }
  func.func @transform_0(%arg0: i32) -> (i32, i32) {
    %c0_i32 = arith.constant 0 : i32
    %c0_i32_0 = arith.constant 0 : i32
    %c0_i32_1 = arith.constant 0 : i32
    return %c0_i32, %c0_i32_0 : i32, i32
  }
  func.func @transform_1(%arg0: i32) -> (i32, i32) {
    %c0_i32 = arith.constant 0 : i32
    %c0_i32_0 = arith.constant 0 : i32
    %c0_i32_1 = arith.constant 0 : i32
    return %c0_i32, %c0_i32_0 : i32, i32
  }
  func.func @transform_2(%arg0: i32) -> (i32, i32) {
    %c0_i32 = arith.constant 0 : i32
    %c0_i32_0 = arith.constant 0 : i32
    %c0_i32_1 = arith.constant 0 : i32
    return %c0_i32, %c0_i32_0 : i32, i32
  }
  func.func @transform_3(%arg0: i32) -> (i32, i32, i32) {
    %c0_i32 = arith.constant 0 : i32
    %c0_i32_0 = arith.constant 0 : i32
    %c0_i32_1 = arith.constant 0 : i32
    %c0_i32_2 = arith.constant 0 : i32
    return %c0_i32, %c0_i32_0, %c0_i32_1 : i32, i32, i32
  }
  func.func @transform_4(%arg0: i32) -> (i32, i32) {
    %c0_i32 = arith.constant 0 : i32
    %c0_i32_0 = arith.constant 0 : i32
    %c0_i32_1 = arith.constant 0 : i32
    return %c0_i32, %c0_i32_0 : i32, i32
  }
  func.func @transform_5(%arg0: i32) -> (i32, i32) {
    %c0_i32 = arith.constant 0 : i32
    %c0_i32_0 = arith.constant 0 : i32
    %c0_i32_1 = arith.constant 0 : i32
    return %c0_i32, %c0_i32_0 : i32, i32
  }
  func.func @transform_6(%arg0: i32) -> (i32, i32) {
    %c0_i32 = arith.constant 0 : i32
    %c0_i32_0 = arith.constant 0 : i32
    %c0_i32_1 = arith.constant 0 : i32
    return %c0_i32, %c0_i32_0 : i32, i32
  }
  func.func @transform_7(%arg0: i32) -> (i32, i32) {
    %c0_i32 = arith.constant 0 : i32
    %c0_i32_0 = arith.constant 0 : i32
    %c0_i32_1 = arith.constant 0 : i32
    return %c0_i32, %c0_i32_0 : i32, i32
  }
  func.func @transform_8(%arg0: i32) -> (i32, i32) {
    %c0_i32 = arith.constant 0 : i32
    %c0_i32_0 = arith.constant 0 : i32
    %c0_i32_1 = arith.constant 0 : i32
    return %c0_i32, %c0_i32_0 : i32, i32
  }
  func.func @transform_9(%arg0: i32) -> (i32, i32) {
    %c0_i32 = arith.constant 0 : i32
    %c0_i32_0 = arith.constant 0 : i32
    %c0_i32_1 = arith.constant 0 : i32
    return %c0_i32, %c0_i32_0 : i32, i32
  }
  func.func @transform_10(%arg0: i32) -> (i32, i32) {
    %c0_i32 = arith.constant 0 : i32
    %c0_i32_0 = arith.constant 0 : i32
    %c0_i32_1 = arith.constant 0 : i32
    return %c0_i32, %c0_i32_0 : i32, i32
  }
  func.func @transform_11(%arg0: i32) -> (i32, i32) {
    %c0_i32 = arith.constant 0 : i32
    %c0_i32_0 = arith.constant 0 : i32
    %c0_i32_1 = arith.constant 0 : i32
    return %c0_i32, %c0_i32_0 : i32, i32
  }
  func.func @transform_12(%arg0: i32) -> (i32, i32) {
    %c0_i32 = arith.constant 0 : i32
    %c0_i32_0 = arith.constant 0 : i32
    %c0_i32_1 = arith.constant 0 : i32
    return %c0_i32, %c0_i32_0 : i32, i32
  }
}

</mosaic_0001>

<llo_original>
// kernel: cnn_lstm_forward.1
$region0: #{cnn_lstm_forward.1}
  #allocation0 [shape = 'u32[]', space=smem, size = 0x4, offset = 0x4, fixed_abs, tag = 'smem constant byte address 0x4 - core index']
  #allocation1 [shape = 'u32[144,128]{1,0:T(1,128)}', space=vmem, size = 0x12000, scoped, tag = 'internal scratch']
  #allocation2 [shape = 'f32[128,256]{1,0:T(8,128)}', space=vmem, size = 0x20000, scoped, tag = 'scratch operand']
  #allocation3 [shape = 'f32[128,64]{1,0:T(8,128)}', space=vmem, size = 0x10000, scoped, tag = 'scratch operand']
  %s0 = inlined_call_operand.vmem [shape: f32[144,8], index: 0, kind: input, shape index: {}]
  %s1 = inlined_call_operand.vmem [shape: f32[24,32], index: 1, kind: input, shape index: {}]
  %s2 = inlined_call_operand.vmem [shape: f32[1,32], index: 2, kind: input, shape index: {}]
  %s3 = inlined_call_operand.vmem [shape: f32[4,8,32], index: 3, kind: input, shape index: {}]
  %s4 = inlined_call_operand.vmem [shape: f32[32,256], index: 4, kind: input, shape index: {}]
  %s5 = inlined_call_operand.vmem [shape: f32[32,128], index: 5, kind: input, shape index: {}]
  %s6 = inlined_call_operand.vmem [shape: f32[32,128], index: 6, kind: input, shape index: {}]
  %s7 = inlined_call_operand.vmem [shape: f32[1,256], index: 7, kind: input, shape index: {}]
  %s8 = inlined_call_operand.vmem [shape: f32[64,256], index: 8, kind: input, shape index: {}]
  %s9 = inlined_call_operand.vmem [shape: f32[32,128], index: 9, kind: input, shape index: {}]
  %s10 = inlined_call_operand.vmem [shape: f32[32,128], index: 10, kind: input, shape index: {}]
  %s11 = inlined_call_operand.vmem [shape: f32[1,256], index: 11, kind: input, shape index: {}]
  %s12 = inlined_call_operand.vmem [shape: f32[128,64], index: 12, kind: output, shape index: {}]
  %s13 = sld [smem:[#allocation0]]
  $region58: #{cnn_lstm_forward.1} parent=0
    _
  %s15 = ssub.s32 1, %s13
  %s16 = scalar_select 0, %s15, %s13
  // Predicated region
  $region2: #{cnn_lstm_forward.1} parent=0 // pred_check
    _
  $region3: #{cnn_lstm_forward.1} parent=0 // pred_check_branch
    %18 = sbr.rel (0) target = $region5
  $region4: #{cnn_lstm_forward.1} parent=0 // pred_region
    _
  $region5: #{cnn_lstm_forward.1} parent=0 // pred_fallthru
    _
  // Predicated region
  $region6: #{cnn_lstm_forward.1} parent=0 // pred_check
    _
  $region7: #{cnn_lstm_forward.1} parent=0 // pred_check_branch
    %20 = sbr.rel (0) target = $region9
  $region8: #{cnn_lstm_forward.1} parent=0 // pred_region
    _
  $region9: #{cnn_lstm_forward.1} parent=0 // pred_fallthru
    _
  // Predicated region
  $region10: #{cnn_lstm_forward.1} parent=0 // pred_check
    _
  $region11: #{cnn_lstm_forward.1} parent=0 // pred_check_branch
    %22 = sbr.rel (0) target = $region13
  $region12: #{cnn_lstm_forward.1} parent=0 // pred_region
    _
  $region13: #{cnn_lstm_forward.1} parent=0 // pred_fallthru
    _
  // Predicated region
  $region14: #{cnn_lstm_forward.1} parent=0 // pred_check
    _
  $region15: #{cnn_lstm_forward.1} parent=0 // pred_check_branch
    %24 = sbr.rel (0) target = $region17
  $region16: #{cnn_lstm_forward.1} parent=0 // pred_region
    _
  $region17: #{cnn_lstm_forward.1} parent=0 // pred_fallthru
    _
  // Predicated region
  $region18: #{cnn_lstm_forward.1} parent=0 // pred_check
    _
  $region19: #{cnn_lstm_forward.1} parent=0 // pred_check_branch
    %26 = sbr.rel (0) target = $region21
  $region20: #{cnn_lstm_forward.1} parent=0 // pred_region
    _
  $region21: #{cnn_lstm_forward.1} parent=0 // pred_fallthru
    _
  // Predicated region
  $region22: #{cnn_lstm_forward.1} parent=0 // pred_check
    _
  $region23: #{cnn_lstm_forward.1} parent=0 // pred_check_branch
    %28 = sbr.rel (0) target = $region25
  $region24: #{cnn_lstm_forward.1} parent=0 // pred_region
    _
  $region25: #{cnn_lstm_forward.1} parent=0 // pred_fallthru
    _
  // Predicated region
  $region26: #{cnn_lstm_forward.1} parent=0 // pred_check
    _
  $region27: #{cnn_lstm_forward.1} parent=0 // pred_check_branch
    %30 = sbr.rel (0) target = $region29
  $region28: #{cnn_lstm_forward.1} parent=0 // pred_region
    _
  $region29: #{cnn_lstm_forward.1} parent=0 // pred_fallthru
    _
  // Predicated region
  $region30: #{cnn_lstm_forward.1} parent=0 // pred_check
    _
  $region31: #{cnn_lstm_forward.1} parent=0 // pred_check_branch
    %32 = sbr.rel (0) target = $region33
  $region32: #{cnn_lstm_forward.1} parent=0 // pred_region
    _
  $region33: #{cnn_lstm_forward.1} parent=0 // pred_fallthru
    _
  // Predicated region
  $region34: #{cnn_lstm_forward.1} parent=0 // pred_check
    _
  $region35: #{cnn_lstm_forward.1} parent=0 // pred_check_branch
    %34 = sbr.rel (0) target = $region37
  $region36: #{cnn_lstm_forward.1} parent=0 // pred_region
    _
  $region37: #{cnn_lstm_forward.1} parent=0 // pred_fallthru
    _
  // Predicated region
  $region38: #{cnn_lstm_forward.1} parent=0 // pred_check
    _
  $region39: #{cnn_lstm_forward.1} parent=0 // pred_check_branch
    %36 = sbr.rel (0) target = $region41
  $region40: #{cnn_lstm_forward.1} parent=0 // pred_region
    _
  $region41: #{cnn_lstm_forward.1} parent=0 // pred_fallthru
    _
  // Predicated region
  $region42: #{cnn_lstm_forward.1} parent=0 // pred_check
    _
  $region43: #{cnn_lstm_forward.1} parent=0 // pred_check_branch
    %38 = sbr.rel (0) target = $region45
  $region44: #{cnn_lstm_forward.1} parent=0 // pred_region
    _
  $region45: #{cnn_lstm_forward.1} parent=0 // pred_fallthru
    _
  // Predicated region
  $region46: #{cnn_lstm_forward.1} parent=0 // pred_check
    _
  $region47: #{cnn_lstm_forward.1} parent=0 // pred_check_branch
    %40 = sbr.rel (0) target = $region49
  $region48: #{cnn_lstm_forward.1} parent=0 // pred_region
    _
  $region49: #{cnn_lstm_forward.1} parent=0 // pred_fallthru
    _
  %v41 = vld [vmem:[%s0] sm:$0xff]
  %v42 = vld [vmem:[%s0 + $0x8] sm:$0xff]
  %v43 = vld [vmem:[%s0 + $0x10] sm:$0xff]
  %v44 = vld [vmem:[%s0 + $0x18] sm:$0xff]
  %v45 = vld [vmem:[%s0 + $0x20] sm:$0xff]
  %v46 = vld [vmem:[%s0 + $0x28] sm:$0xff]
  %v47 = vld [vmem:[%s0 + $0x30] sm:$0xff]
  %v48 = vld [vmem:[%s0 + $0x38] sm:$0xff]
  %v49 = vld [vmem:[%s0 + $0x40] sm:$0xff]
  %v50 = vld [vmem:[%s0 + $0x48] sm:$0xff]
  %v51 = vld [vmem:[%s0 + $0x50] sm:$0xff]
  %v52 = vld [vmem:[%s0 + $0x58] sm:$0xff]
  %v53 = vld [vmem:[%s0 + $0x60] sm:$0xff]
  %v54 = vld [vmem:[%s0 + $0x68] sm:$0xff]
  %v55 = vld [vmem:[%s0 + $0x70] sm:$0xff]
  %v56 = vld [vmem:[%s0 + $0x78] sm:$0xff]
  %v57 = vld [vmem:[%s0 + $0x80] sm:$0xff]
  %v58 = vld [vmem:[%s0 + $0x88] sm:$0xff]
  %75 = vrot.lane.b32.xlu0 %v42, 8
  %v76 = vpop.permute.xlu0 %75
  %77 = vrot.lane.b32.xlu0 %v43, 8
  %v78 = vpop.permute.xlu0 %77
  %79 = vrot.lane.b32.xlu0 %v44, 8
  %v80 = vpop.permute.xlu0 %79
  %81 = vrot.lane.b32.xlu0 %v45, 8
  %v82 = vpop.permute.xlu0 %81
  %83 = vrot.lane.b32.xlu0 %v46, 8
  %v84 = vpop.permute.xlu0 %83
  %85 = vrot.lane.b32.xlu0 %v47, 8
  %v86 = vpop.permute.xlu0 %85
  %87 = vrot.lane.b32.xlu0 %v48, 8
  %v88 = vpop.permute.xlu0 %87
  %89 = vrot.lane.b32.xlu0 %v49, 8
  %v90 = vpop.permute.xlu0 %89
  %91 = vrot.lane.b32.xlu0 %v50, 8
  %v92 = vpop.permute.xlu0 %91
  %93 = vrot.lane.b32.xlu0 %v51, 8
  %v94 = vpop.permute.xlu0 %93
  %95 = vrot.lane.b32.xlu0 %v52, 8
  %v96 = vpop.permute.xlu0 %95
  %97 = vrot.lane.b32.xlu0 %v53, 8
  %v98 = vpop.permute.xlu0 %97
  %99 = vrot.lane.b32.xlu0 %v54, 8
  %v100 = vpop.permute.xlu0 %99
  %101 = vrot.lane.b32.xlu0 %v55, 8
  %v102 = vpop.permute.xlu0 %101
  %103 = vrot.lane.b32.xlu0 %v56, 8
  %v104 = vpop.permute.xlu0 %103
  %105 = vrot.lane.b32.xlu0 %v57, 8
  %v106 = vpop.permute.xlu0 %105
  %124 = vrot.lane.b32.xlu0 %v43, 16
  %v125 = vpop.permute.xlu0 %124
  %126 = vrot.lane.b32.xlu0 %v44, 16
  %v127 = vpop.permute.xlu0 %126
  %128 = vrot.lane.b32.xlu0 %v45, 16
  %v129 = vpop.permute.xlu0 %128
  %130 = vrot.lane.b32.xlu0 %v46, 16
  %v131 = vpop.permute.xlu0 %130
  %132 = vrot.lane.b32.xlu0 %v47, 16
  %v133 = vpop.permute.xlu0 %132
  %134 = vrot.lane.b32.xlu0 %v48, 16
  %v135 = vpop.permute.xlu0 %134
  %136 = vrot.lane.b32.xlu0 %v49, 16
  %v137 = vpop.permute.xlu0 %136
  %138 = vrot.lane.b32.xlu0 %v50, 16
  %v139 = vpop.permute.xlu0 %138
  %140 = vrot.lane.b32.xlu0 %v51, 16
  %v141 = vpop.permute.xlu0 %140
  %142 = vrot.lane.b32.xlu0 %v52, 16
  %v143 = vpop.permute.xlu0 %142
  %144 = vrot.lane.b32.xlu0 %v53, 16
  %v145 = vpop.permute.xlu0 %144
  %146 = vrot.lane.b32.xlu0 %v54, 16
  %v147 = vpop.permute.xlu0 %146
  %148 = vrot.lane.b32.xlu0 %v55, 16
  %v149 = vpop.permute.xlu0 %148
  %150 = vrot.lane.b32.xlu0 %v56, 16
  %v151 = vpop.permute.xlu0 %150
  %152 = vrot.lane.b32.xlu0 %v57, 16
  %v153 = vpop.permute.xlu0 %152
  %154 = vrot.lane.b32.xlu0 %v58, 16
  %v155 = vpop.permute.xlu0 %154
  %vm172 = vcmask 64512
  %v173 = vsel %vm172, %v41, %v76
  %v174 = vsel %vm172, %v42, %v78
  %v175 = vsel %vm172, %v43, %v80
  %v176 = vsel %vm172, %v44, %v82
  %v177 = vsel %vm172, %v45, %v84
  %v178 = vsel %vm172, %v46, %v86
  %v179 = vsel %vm172, %v47, %v88
  %v180 = vsel %vm172, %v48, %v90
  %v181 = vsel %vm172, %v49, %v92
  %v182 = vsel %vm172, %v50, %v94
  %v183 = vsel %vm172, %v51, %v96
  %v184 = vsel %vm172, %v52, %v98
  %v185 = vsel %vm172, %v53, %v100
  %v186 = vsel %vm172, %v54, %v102
  %v187 = vsel %vm172, %v55, %v104
  %v188 = vsel %vm172, %v56, %v106
  %vm189 = vcmask 130048
  %v190 = vsel %vm189, %v173, %v125
  %v191 = vsel %vm189, %v174, %v127
  %v192 = vsel %vm189, %v175, %v129
  %v193 = vsel %vm189, %v176, %v131
  %v194 = vsel %vm189, %v177, %v133
  %v195 = vsel %vm189, %v178, %v135
  %v196 = vsel %vm189, %v179, %v137
  %v197 = vsel %vm189, %v180, %v139
  %v198 = vsel %vm189, %v181, %v141
  %v199 = vsel %vm189, %v182, %v143
  %v200 = vsel %vm189, %v183, %v145
  %v201 = vsel %vm189, %v184, %v147
  %v202 = vsel %vm189, %v185, %v149
  %v203 = vsel %vm189, %v186, %v151
  %v204 = vsel %vm189, %v187, %v153
  %v205 = vsel %vm189, %v188, %v155
  %v206 = vld [vmem:[%s1] sm:$0xff]
  %v207 = vld [vmem:[%s1 + $0x8] sm:$0xff]
  %v208 = vld [vmem:[%s1 + $0x10] sm:$0xff]
  %v209 = vld [vmem:[%s2] sm:$0x1]
  %v211 = vlaneseq
  %v212 = vshrl.u32 %v211, 7
  %v213 = vsub.s32 0, %v212
  %v214 = vrot.slane %v209, %v213
  %vm216 = vcmask 195584
  %v218 = vsel %vm216, %v190, 0
  %v221 = vsel %vm216, %v191, 0
  %v224 = vsel %vm216, %v192, 0
  %v227 = vsel %vm216, %v193, 0
  %v230 = vsel %vm216, %v194, 0
  %v233 = vsel %vm216, %v195, 0
  %v236 = vsel %vm216, %v196, 0
  %v239 = vsel %vm216, %v197, 0
  %v242 = vsel %vm216, %v198, 0
  %v245 = vsel %vm216, %v199, 0
  %v248 = vsel %vm216, %v200, 0
  %v251 = vsel %vm216, %v201, 0
  %v254 = vsel %vm216, %v202, 0
  %v257 = vsel %vm216, %v203, 0
  %v260 = vsel %vm216, %v204, 0
  %v263 = vsel %vm216, %v205, 0
  %265 = vmatprep.subr.mxu0 0.0
  %266 = vmatpush1.msra.mxu0 %v206
  %267 = vmatprep.subr.mxu0 0.0
  %268 = vmatpush1.msra.mxu0 %v207
  %269 = vmatprep.subr.mxu0 0.0
  %270 = vmatpush1.msra.mxu0 %v208
  %271 = vmatprep.subr.mxu0 0.0
  %272 = vmatpush1.msra.mxu0 0.0
  %273 = vmatprep.subr.mxu0 0.0
  %274 = vmatpush1.msra.mxu0 0.0
  %275 = vmatprep.subr.mxu0 0.0
  %276 = vmatpush1.msra.mxu0 0.0
  %277 = vmatprep.subr.mxu0 0.0
  %278 = vmatpush1.msra.mxu0 0.0
  %279 = vmatprep.subr.mxu0 0.0
  %280 = vmatpush1.msra.mxu0 0.0
  %281 = vmatprep.subr.mxu0 0.0
  %282 = vmatpush1.msra.mxu0 0.0
  %283 = vmatprep.subr.mxu0 0.0
  %284 = vmatpush1.msra.mxu0 0.0
  %285 = vmatprep.subr.mxu0 0.0
  %286 = vmatpush1.msra.mxu0 0.0
  %287 = vmatprep.subr.mxu0 0.0
  %288 = vmatpush1.msra.mxu0 0.0
  %289 = vmatprep.subr.mxu0 0.0
  %290 = vmatpush1.msra.mxu0 0.0
  %291 = vmatprep.subr.mxu0 0.0
  %292 = vmatpush1.msra.mxu0 0.0
  %293 = vmatprep.subr.mxu0 0.0
  %294 = vmatpush1.msra.mxu0 0.0
  %295 = vmatprep.subr.mxu0 0.0
  %296 = vmatpush1.msra.mxu0 0.0
  %297 = vmatprep.subr.mxu0 0.0
  %298 = vmatpush1.msra.mxu0 0.0
  %299 = vmatprep.subr.mxu0 0.0
  %300 = vmatpush1.msra.mxu0 0.0
  %301 = vmatprep.subr.mxu0 0.0
  %302 = vmatpush1.msra.mxu0 0.0
  %303 = vmatprep.subr.mxu0 0.0
  %304 = vmatpush1.msra.mxu0 0.0
  %305 = vmatprep.subr.mxu0 0.0
  %306 = vmatpush1.msra.mxu0 0.0
  %307 = vmatprep.subr.mxu0 0.0
  %308 = vmatpush1.msra.mxu0 0.0
  %309 = vmatprep.subr.mxu0 0.0
  %310 = vmatpush1.msra.mxu0 0.0
  %311 = vmatprep.subr.mxu0 0.0
  %312 = vmatpush1.msra.mxu0 0.0
  %313 = vmatprep.subr.mxu0 0.0
  %314 = vmatpush1.msra.mxu0 0.0
  %315 = vmatprep.subr.mxu0 0.0
  %316 = vmatpush1.msra.mxu0 0.0
  %317 = vmatprep.subr.mxu0 0.0
  %318 = vmatpush1.msra.mxu0 0.0
  %319 = vmatprep.subr.mxu0 0.0
  %320 = vmatpush1.msra.mxu0 0.0
  %321 = vmatprep.subr.mxu0 0.0
  %322 = vmatpush1.msra.mxu0 0.0
  %323 = vmatprep.subr.mxu0 0.0
  %324 = vmatpush1.msra.mxu0 0.0
  %325 = vmatprep.subr.mxu0 0.0
  %326 = vmatpush1.msra.mxu0 0.0
  %327 = vmatprep.subr.mxu0 0.0
  %328 = vmatpush1.msra.mxu0 0.0
  %329 = vmatprep.mubr.f32.mxu0 0.0
  %330 = vmatmul.mubr.f32.gmra.mrb[0].mxu0 %v218
  %v331 = vpop.f32.mrb[0].mxu0
  %v332 = vadd.f32 %v214, %v331
  %v333 = vpop.f32.mrb[0].mxu0
  %334 = vmatprep.mubr.f32.mxu0 0.0
  %335 = vmatmul.mubr.f32.gmra.mrb[0].mxu0 %v221
  %v336 = vpop.f32.mrb[0].mxu0
  %v337 = vadd.f32 %v214, %v336
  %v338 = vpop.f32.mrb[0].mxu0
  %339 = vmatprep.mubr.f32.mxu0 0.0
  %340 = vmatmul.mubr.f32.gmra.mrb[0].mxu0 %v224
  %v341 = vpop.f32.mrb[0].mxu0
  %v342 = vadd.f32 %v214, %v341
  %v343 = vpop.f32.mrb[0].mxu0
  %344 = vmatprep.mubr.f32.mxu0 0.0
  %345 = vmatmul.mubr.f32.gmra.mrb[0].mxu0 %v227
  %v346 = vpop.f32.mrb[0].mxu0
  %v347 = vadd.f32 %v214, %v346
  %v348 = vpop.f32.mrb[0].mxu0
  %349 = vmatprep.mubr.f32.mxu0 0.0
  %350 = vmatmul.mubr.f32.gmra.mrb[0].mxu0 %v230
  %v351 = vpop.f32.mrb[0].mxu0
  %v352 = vadd.f32 %v214, %v351
  %v353 = vpop.f32.mrb[0].mxu0
  %354 = vmatprep.mubr.f32.mxu0 0.0
  %355 = vmatmul.mubr.f32.gmra.mrb[0].mxu0 %v233
  %v356 = vpop.f32.mrb[0].mxu0
  %v357 = vadd.f32 %v214, %v356
  %v358 = vpop.f32.mrb[0].mxu0
  %359 = vmatprep.mubr.f32.mxu0 0.0
  %360 = vmatmul.mubr.f32.gmra.mrb[0].mxu0 %v236
  %v361 = vpop.f32.mrb[0].mxu0
  %v362 = vadd.f32 %v214, %v361
  %v363 = vpop.f32.mrb[0].mxu0
  %364 = vmatprep.mubr.f32.mxu0 0.0
  %365 = vmatmul.mubr.f32.gmra.mrb[0].mxu0 %v239
  %v366 = vpop.f32.mrb[0].mxu0
  %v367 = vadd.f32 %v214, %v366
  %v368 = vpop.f32.mrb[0].mxu0
  %369 = vmatprep.mubr.f32.mxu0 0.0
  %370 = vmatmul.mubr.f32.gmra.mrb[0].mxu0 %v242
  %v371 = vpop.f32.mrb[0].mxu0
  %v372 = vadd.f32 %v214, %v371
  %v373 = vpop.f32.mrb[0].mxu0
  %374 = vmatprep.mubr.f32.mxu0 0.0
  %375 = vmatmul.mubr.f32.gmra.mrb[0].mxu0 %v245
  %v376 = vpop.f32.mrb[0].mxu0
  %v377 = vadd.f32 %v214, %v376
  %v378 = vpop.f32.mrb[0].mxu0
  %379 = vmatprep.mubr.f32.mxu0 0.0
  %380 = vmatmul.mubr.f32.gmra.mrb[0].mxu0 %v248
  %v381 = vpop.f32.mrb[0].mxu0
  %v382 = vadd.f32 %v214, %v381
  %v383 = vpop.f32.mrb[0].mxu0
  %384 = vmatprep.mubr.f32.mxu0 0.0
  %385 = vmatmul.mubr.f32.gmra.mrb[0].mxu0 %v251
  %v386 = vpop.f32.mrb[0].mxu0
  %v387 = vadd.f32 %v214, %v386
  %v388 = vpop.f32.mrb[0].mxu0
  %389 = vmatprep.mubr.f32.mxu0 0.0
  %390 = vmatmul.mubr.f32.gmra.mrb[0].mxu0 %v254
  %v391 = vpop.f32.mrb[0].mxu0
  %v392 = vadd.f32 %v214, %v391
  %v393 = vpop.f32.mrb[0].mxu0
  %394 = vmatprep.mubr.f32.mxu0 0.0
  %395 = vmatmul.mubr.f32.gmra.mrb[0].mxu0 %v257
  %v396 = vpop.f32.mrb[0].mxu0
  %v397 = vadd.f32 %v214, %v396
  %v398 = vpop.f32.mrb[0].mxu0
  %399 = vmatprep.mubr.f32.mxu0 0.0
  %400 = vmatmul.mubr.f32.gmra.mrb[0].mxu0 %v260
  %v401 = vpop.f32.mrb[0].mxu0
  %v402 = vadd.f32 %v214, %v401
  %v403 = vpop.f32.mrb[0].mxu0
  %404 = vmatprep.mubr.f32.mxu0 0.0
  %405 = vmatmul.mubr.f32.gmra.mrb[0].mxu0 %v263
  %v406 = vpop.f32.mrb[0].mxu0
  %v407 = vadd.f32 %v214, %v406
  %v408 = vpop.f32.mrb[0].mxu0
  %409 = vdwg.mxu0
  %v410 = vmax.f32 %v332, 0.0
  %v411 = vmax.f32 %v337, 0.0
  %v412 = vmax.f32 %v342, 0.0
  %v413 = vmax.f32 %v347, 0.0
  %v414 = vmax.f32 %v352, 0.0
  %v415 = vmax.f32 %v357, 0.0
  %v416 = vmax.f32 %v362, 0.0
  %v417 = vmax.f32 %v367, 0.0
  %v418 = vmax.f32 %v372, 0.0
  %v419 = vmax.f32 %v377, 0.0
  %v420 = vmax.f32 %v382, 0.0
  %v421 = vmax.f32 %v387, 0.0
  %v422 = vmax.f32 %v392, 0.0
  %v423 = vmax.f32 %v397, 0.0
  %v424 = vmax.f32 %v402, 0.0
  %v425 = vmax.f32 %v407, 0.0
  %v426 = vmax.f32 %v410, 0.0
  %v427 = vmax.f32 %v410, %v411
  %v428 = vmax.f32 %v411, %v412
  %v429 = vmax.f32 %v412, %v413
  %v430 = vmax.f32 %v413, %v414
  %v431 = vmax.f32 %v414, %v415
  %v432 = vmax.f32 %v415, %v416
  %v433 = vmax.f32 %v416, %v417
  %v434 = vmax.f32 %v417, %v418
  %v435 = vmax.f32 %v418, %v419
  %v436 = vmax.f32 %v419, %v420
  %v437 = vmax.f32 %v420, %v421
  %v438 = vmax.f32 %v421, %v422
  %v439 = vmax.f32 %v422, %v423
  %v440 = vmax.f32 %v423, %v424
  %v441 = vmax.f32 %v424, %v425
  %v442 = vmax.f32 %v426, %v411
  %v443 = vmax.f32 %v427, %v412
  %v444 = vmax.f32 %v428, %v413
  %v445 = vmax.f32 %v429, %v414
  %v446 = vmax.f32 %v430, %v415
  %v447 = vmax.f32 %v431, %v416
  %v448 = vmax.f32 %v432, %v417
  %v449 = vmax.f32 %v433, %v418
  %v450 = vmax.f32 %v434, %v419
  %v451 = vmax.f32 %v435, %v420
  %v452 = vmax.f32 %v436, %v421
  %v453 = vmax.f32 %v437, %v422
  %v454 = vmax.f32 %v438, %v423
  %v455 = vmax.f32 %v439, %v424
  %v456 = vmax.f32 %v440, %v425
  %v457 = vmax.f32 %v441, 0.0
  %v458 = vlaneseq
  %v459 = vand.u32 %v458, 127
  %vm460 = vcmp.ge.s32.totalorder %v459, 64
  %vm461 = vcmp.lt.s32.totalorder %v459, 96
  %vm462 = vmand %vm460, %vm461
  %v463 = vld [vmem:[%s4] sm:$0xff]
  %v464 = vld [vmem:[%s4 + $0x8] sm:$0xff]
  %v465 = vld [vmem:[%s4 + $0x10] sm:$0xff]
  %v466 = vld [vmem:[%s4 + $0x18] sm:$0xff]
  %v467 = vld [vmem:[%s4 + $0x20] sm:$0xff]
  %v468 = vld [vmem:[%s4 + $0x28] sm:$0xff]
  %v469 = vld [vmem:[%s4 + $0x30] sm:$0xff]
  %v470 = vld [vmem:[%s4 + $0x38] sm:$0xff]
  %v471 = vld [vmem:[%s5] sm:$0xff]
  %v472 = vld [vmem:[%s5 + $0x8] sm:$0xff]
  %v473 = vld [vmem:[%s5 + $0x10] sm:$0xff]
  %v474 = vld [vmem:[%s5 + $0x18] sm:$0xff]
  %v475 = vld [vmem:[%s6] sm:$0xff]
  %v476 = vld [vmem:[%s6 + $0x8] sm:$0xff]
  %v477 = vld [vmem:[%s6 + $0x10] sm:$0xff]
  %v478 = vld [vmem:[%s6 + $0x18] sm:$0xff]
  %v479 = vld [vmem:[%s7] sm:$0x3]
  %v481 = vlaneseq
  %v482 = vshrl.u32 %v481, 7
  %v483 = vsub.s32 0, %v482
  %v484 = vrot.slane %v479, %v483
  %v485 = vlaneseq
  %v486 = vshrl.u32 %v485, 7
  %v487 = vsub.s32 1, %v486
  %v488 = vrot.slane %v479, %v487
  %vm491 = vcmask 261120
  %v493 = vsel %vm491, %v442, 0
  %v496 = vsel %vm491, %v443, 0
  %v499 = vsel %vm491, %v444, 0
  %v502 = vsel %vm491, %v445, 0
  %v505 = vsel %vm491, %v446, 0
  %v508 = vsel %vm491, %v447, 0
  %v511 = vsel %vm491, %v448, 0
  %v514 = vsel %vm491, %v449, 0
  %v517 = vsel %vm491, %v450, 0
  %v520 = vsel %vm491, %v451, 0
  %v523 = vsel %vm491, %v452, 0
  %v526 = vsel %vm491, %v453, 0
  %v529 = vsel %vm491, %v454, 0
  %v532 = vsel %vm491, %v455, 0
  %v535 = vsel %vm491, %v456, 0
  %v538 = vsel %vm491, %v457, 0
  %540 = vmatprep.subr.mxu0 %v464
  %541 = vmatpush1.msra.mxu0 %v463
  %542 = vmatprep.subr.mxu0 %v466
  %543 = vmatpush1.msra.mxu0 %v465
  %544 = vmatprep.subr.mxu0 %v468
  %545 = vmatpush1.msra.mxu0 %v467
  %546 = vmatprep.subr.mxu0 %v470
  %547 = vmatpush1.msra.mxu0 %v469
  %548 = vmatprep.subr.mxu0 0.0
  %549 = vmatpush1.msra.mxu0 0.0
  %550 = vmatprep.subr.mxu0 0.0
  %551 = vmatpush1.msra.mxu0 0.0
  %552 = vmatprep.subr.mxu0 0.0
  %553 = vmatpush1.msra.mxu0 0.0
  %554 = vmatprep.subr.mxu0 0.0
  %555 = vmatpush1.msra.mxu0 0.0
  %556 = vmatprep.subr.mxu0 0.0
  %557 = vmatpush1.msra.mxu0 0.0
  %558 = vmatprep.subr.mxu0 0.0
  %559 = vmatpush1.msra.mxu0 0.0
  %560 = vmatprep.subr.mxu0 0.0
  %561 = vmatpush1.msra.mxu0 0.0
  %562 = vmatprep.subr.mxu0 0.0
  %563 = vmatpush1.msra.mxu0 0.0
  %564 = vmatprep.subr.mxu0 0.0
  %565 = vmatpush1.msra.mxu0 0.0
  %566 = vmatprep.subr.mxu0 0.0
  %567 = vmatpush1.msra.mxu0 0.0
  %568 = vmatprep.subr.mxu0 0.0
  %569 = vmatpush1.msra.mxu0 0.0
  %570 = vmatprep.subr.mxu0 0.0
  %571 = vmatpush1.msra.mxu0 0.0
  %572 = vmatprep.subr.mxu0 0.0
  %573 = vmatpush1.msra.mxu0 0.0
  %574 = vmatprep.subr.mxu0 0.0
  %575 = vmatpush1.msra.mxu0 0.0
  %576 = vmatprep.subr.mxu0 0.0
  %577 = vmatpush1.msra.mxu0 0.0
  %578 = vmatprep.subr.mxu0 0.0
  %579 = vmatpush1.msra.mxu0 0.0
  %580 = vmatprep.subr.mxu0 0.0
  %581 = vmatpush1.msra.mxu0 0.0
  %582 = vmatprep.subr.mxu0 0.0
  %583 = vmatpush1.msra.mxu0 0.0
  %584 = vmatprep.subr.mxu0 0.0
  %585 = vmatpush1.msra.mxu0 0.0
  %586 = vmatprep.subr.mxu0 0.0
  %587 = vmatpush1.msra.mxu0 0.0
  %588 = vmatprep.subr.mxu0 0.0
  %589 = vmatpush1.msra.mxu0 0.0
  %590 = vmatprep.subr.mxu0 0.0
  %591 = vmatpush1.msra.mxu0 0.0
  %592 = vmatprep.subr.mxu0 0.0
  %593 = vmatpush1.msra.mxu0 0.0
  %594 = vmatprep.subr.mxu0 0.0
  %595 = vmatpush1.msra.mxu0 0.0
  %596 = vmatprep.subr.mxu0 0.0
  %597 = vmatpush1.msra.mxu0 0.0
  %598 = vmatprep.subr.mxu0 0.0
  %599 = vmatpush1.msra.mxu0 0.0
  %600 = vmatprep.subr.mxu0 0.0
  %601 = vmatpush1.msra.mxu0 0.0
  %602 = vmatprep.subr.mxu0 0.0
  %603 = vmatpush1.msra.mxu0 0.0
  %604 = vmatprep.mubr.f32.mxu0 0.0
  %605 = vmatmul.mubr.f32.gmra.mrb[0].mxu0 %v493
  %v606 = vpop.f32.mrb[0].mxu0
  %v607 = vadd.f32 %v484, %v606
  %v608 = vpop.f32.mrb[0].mxu0
  %v609 = vadd.f32 %v488, %v608
  %610 = vmatprep.mubr.f32.mxu0 0.0
  %611 = vmatmul.mubr.f32.gmra.mrb[0].mxu0 %v496
  %v612 = vpop.f32.mrb[0].mxu0
  %v613 = vadd.f32 %v484, %v612
  %v614 = vpop.f32.mrb[0].mxu0
  %v615 = vadd.f32 %v488, %v614
  %616 = vmatprep.mubr.f32.mxu0 0.0
  %617 = vmatmul.mubr.f32.gmra.mrb[0].mxu0 %v499
  %v618 = vpop.f32.mrb[0].mxu0
  %v619 = vadd.f32 %v484, %v618
  %v620 = vpop.f32.mrb[0].mxu0
  %v621 = vadd.f32 %v488, %v620
  %622 = vmatprep.mubr.f32.mxu0 0.0
  %623 = vmatmul.mubr.f32.gmra.mrb[0].mxu0 %v502
  %v624 = vpop.f32.mrb[0].mxu0
  %v625 = vadd.f32 %v484, %v624
  %v626 = vpop.f32.mrb[0].mxu0
  %v627 = vadd.f32 %v488, %v626
  %628 = vmatprep.mubr.f32.mxu0 0.0
  %629 = vmatmul.mubr.f32.gmra.mrb[0].mxu0 %v505
  %v630 = vpop.f32.mrb[0].mxu0
  %v631 = vadd.f32 %v484, %v630
  %v632 = vpop.f32.mrb[0].mxu0
  %v633 = vadd.f32 %v488, %v632
  %634 = vmatprep.mubr.f32.mxu0 0.0
  %635 = vmatmul.mubr.f32.gmra.mrb[0].mxu0 %v508
  %v636 = vpop.f32.mrb[0].mxu0
  %v637 = vadd.f32 %v484, %v636
  %v638 = vpop.f32.mrb[0].mxu0
  %v639 = vadd.f32 %v488, %v638
  %640 = vmatprep.mubr.f32.mxu0 0.0
  %641 = vmatmul.mubr.f32.gmra.mrb[0].mxu0 %v511
  %v642 = vpop.f32.mrb[0].mxu0
  %v643 = vadd.f32 %v484, %v642
  %v644 = vpop.f32.mrb[0].mxu0
  %v645 = vadd.f32 %v488, %v644
  %646 = vmatprep.mubr.f32.mxu0 0.0
  %647 = vmatmul.mubr.f32.gmra.mrb[0].mxu0 %v514
  %v648 = vpop.f32.mrb[0].mxu0
  %v649 = vadd.f32 %v484, %v648
  %v650 = vpop.f32.mrb[0].mxu0
  %v651 = vadd.f32 %v488, %v650
  %652 = vmatprep.mubr.f32.mxu0 0.0
  %653 = vmatmul.mubr.f32.gmra.mrb[0].mxu0 %v517
  %v654 = vpop.f32.mrb[0].mxu0
  %v655 = vadd.f32 %v484, %v654
  %v656 = vpop.f32.mrb[0].mxu0
  %v657 = vadd.f32 %v488, %v656
  %658 = vmatprep.mubr.f32.mxu0 0.0
  %659 = vmatmul.mubr.f32.gmra.mrb[0].mxu0 %v520
  %v660 = vpop.f32.mrb[0].mxu0
  %v661 = vadd.f32 %v484, %v660
  %v662 = vpop.f32.mrb[0].mxu0
  %v663 = vadd.f32 %v488, %v662
  %664 = vmatprep.mubr.f32.mxu0 0.0
  %665 = vmatmul.mubr.f32.gmra.mrb[0].mxu0 %v523
  %v666 = vpop.f32.mrb[0].mxu0
  %v667 = vadd.f32 %v484, %v666
  %v668 = vpop.f32.mrb[0].mxu0
  %v669 = vadd.f32 %v488, %v668
  %670 = vmatprep.mubr.f32.mxu0 0.0
  %671 = vmatmul.mubr.f32.gmra.mrb[0].mxu0 %v526
  %v672 = vpop.f32.mrb[0].mxu0
  %v673 = vadd.f32 %v484, %v672
  %v674 = vpop.f32.mrb[0].mxu0
  %v675 = vadd.f32 %v488, %v674
  %676 = vmatprep.mubr.f32.mxu0 0.0
  %677 = vmatmul.mubr.f32.gmra.mrb[0].mxu0 %v529
  %v678 = vpop.f32.mrb[0].mxu0
  %v679 = vadd.f32 %v484, %v678
  %v680 = vpop.f32.mrb[0].mxu0
  %v681 = vadd.f32 %v488, %v680
  %682 = vmatprep.mubr.f32.mxu0 0.0
  %683 = vmatmul.mubr.f32.gmra.mrb[0].mxu0 %v532
  %v684 = vpop.f32.mrb[0].mxu0
  %v685 = vadd.f32 %v484, %v684
  %v686 = vpop.f32.mrb[0].mxu0
  %v687 = vadd.f32 %v488, %v686
  %688 = vmatprep.mubr.f32.mxu0 0.0
  %689 = vmatmul.mubr.f32.gmra.mrb[0].mxu0 %v535
  %v690 = vpop.f32.mrb[0].mxu0
  %v691 = vadd.f32 %v484, %v690
  %v692 = vpop.f32.mrb[0].mxu0
  %v693 = vadd.f32 %v488, %v692
  %694 = vmatprep.mubr.f32.mxu0 0.0
  %695 = vmatmul.mubr.f32.gmra.mrb[0].mxu0 %v538
  %v696 = vpop.f32.mrb[0].mxu0
  %v697 = vadd.f32 %v484, %v696
  %v698 = vpop.f32.mrb[0].mxu0
  %v699 = vadd.f32 %v488, %v698
  %700 = vdwg.mxu0
  %701 = vst [vmem:[#allocation2] sm:$0xff] %v607
  %702 = vst [vmem:[#allocation2 + $0x8] sm:$0xff] %v609
  %703 = vst [vmem:[#allocation2 + $0x10] sm:$0xff] %v613
  %704 = vst [vmem:[#allocation2 + $0x18] sm:$0xff] %v615
  %705 = vst [vmem:[#allocation2 + $0x20] sm:$0xff] %v619
  %706 = vst [vmem:[#allocation2 + $0x28] sm:$0xff] %v621
  %707 = vst [vmem:[#allocation2 + $0x30] sm:$0xff] %v625
  %708 = vst [vmem:[#allocation2 + $0x38] sm:$0xff] %v627
  %709 = vst [vmem:[#allocation2 + $0x40] sm:$0xff] %v631
  %710 = vst [vmem:[#allocation2 + $0x48] sm:$0xff] %v633
  %711 = vst [vmem:[#allocation2 + $0x50] sm:$0xff] %v637
  %712 = vst [vmem:[#allocation2 + $0x58] sm:$0xff] %v639
  %713 = vst [vmem:[#allocation2 + $0x60] sm:$0xff] %v643
  %714 = vst [vmem:[#allocation2 + $0x68] sm:$0xff] %v645
  %715 = vst [vmem:[#allocation2 + $0x70] sm:$0xff] %v649
  %716 = vst [vmem:[#allocation2 + $0x78] sm:$0xff] %v651
  %717 = vst [vmem:[#allocation2 + $0x80] sm:$0xff] %v655
  %718 = vst [vmem:[#allocation2 + $0x88] sm:$0xff] %v657
  %719 = vst [vmem:[#allocation2 + $0x90] sm:$0xff] %v661
  %720 = vst [vmem:[#allocation2 + $0x98] sm:$0xff] %v663
  %721 = vst [vmem:[#allocation2 + $0xa0] sm:$0xff] %v667
  %722 = vst [vmem:[#allocation2 + $0xa8] sm:$0xff] %v669
  %723 = vst [vmem:[#allocation2 + $0xb0] sm:$0xff] %v673
  %724 = vst [vmem:[#allocation2 + $0xb8] sm:$0xff] %v675
  %725 = vst [vmem:[#allocation2 + $0xc0] sm:$0xff] %v679
  %726 = vst [vmem:[#allocation2 + $0xc8] sm:$0xff] %v681
  %727 = vst [vmem:[#allocation2 + $0xd0] sm:$0xff] %v685
  %728 = vst [vmem:[#allocation2 + $0xd8] sm:$0xff] %v687
  %729 = vst [vmem:[#allocation2 + $0xe0] sm:$0xff] %v691
  %730 = vst [vmem:[#allocation2 + $0xe8] sm:$0xff] %v693
  %731 = vst [vmem:[#allocation2 + $0xf0] sm:$0xff] %v697
  %732 = vst [vmem:[#allocation2 + $0xf8] sm:$0xff] %v699
  %v733 = vld [vmem:[%s3] sm:$0xff]
  %s734 = scalar_lea.vmem %s3, 8
  %v735 = vld [vmem:[%s734] sm:$0xff]
  %v736 = vld [vmem:[#allocation2] sm:$0xff]
  %v738 = vsel %vm491, 0.0, 0
  %740 = vmatprep.subr.mxu0 0.0
  %741 = vmatpush1.msra.mxu0 %v471
  %742 = vmatprep.subr.mxu0 0.0
  %743 = vmatpush1.msra.mxu0 %v472
  %744 = vmatprep.subr.mxu0 0.0
  %745 = vmatpush1.msra.mxu0 %v473
  %746 = vmatprep.subr.mxu0 0.0
  %747 = vmatpush1.msra.mxu0 %v474
  %748 = vmatprep.subr.mxu0 0.0
  %749 = vmatpush1.msra.mxu0 0.0
  %750 = vmatprep.subr.mxu0 0.0
  %751 = vmatpush1.msra.mxu0 0.0
  %752 = vmatprep.subr.mxu0 0.0
  %753 = vmatpush1.msra.mxu0 0.0
  %754 = vmatprep.subr.mxu0 0.0
  %755 = vmatpush1.msra.mxu0 0.0
  %756 = vmatprep.subr.mxu0 0.0
  %757 = vmatpush1.msra.mxu0 0.0
  %758 = vmatprep.subr.mxu0 0.0
  %759 = vmatpush1.msra.mxu0 0.0
  %760 = vmatprep.subr.mxu0 0.0
  %761 = vmatpush1.msra.mxu0 0.0
  %762 = vmatprep.subr.mxu0 0.0
  %763 = vmatpush1.msra.mxu0 0.0
  %764 = vmatprep.subr.mxu0 0.0
  %765 = vmatpush1.msra.mxu0 0.0
  %766 = vmatprep.subr.mxu0 0.0
  %767 = vmatpush1.msra.mxu0 0.0
  %768 = vmatprep.subr.mxu0 0.0
  %769 = vmatpush1.msra.mxu0 0.0
  %770 = vmatprep.subr.mxu0 0.0
  %771 = vmatpush1.msra.mxu0 0.0
  %772 = vmatprep.subr.mxu0 0.0
  %773 = vmatpush1.msra.mxu0 0.0
  %774 = vmatprep.subr.mxu0 0.0
  %775 = vmatpush1.msra.mxu0 0.0
  %776 = vmatprep.subr.mxu0 0.0
  %777 = vmatpush1.msra.mxu0 0.0
  %778 = vmatprep.subr.mxu0 0.0
  %779 = vmatpush1.msra.mxu0 0.0
  %780 = vmatprep.subr.mxu0 0.0
  %781 = vmatpush1.msra.mxu0 0.0
  %782 = vmatprep.subr.mxu0 0.0
  %783 = vmatpush1.msra.mxu0 0.0
  %784 = vmatprep.subr.mxu0 0.0
  %785 = vmatpush1.msra.mxu0 0.0
  %786 = vmatprep.subr.mxu0 0.0
  %787 = vmatpush1.msra.mxu0 0.0
  %788 = vmatprep.subr.mxu0 0.0
  %789 = vmatpush1.msra.mxu0 0.0
  %790 = vmatprep.subr.mxu0 0.0
  %791 = vmatpush1.msra.mxu0 0.0
  %792 = vmatprep.subr.mxu0 0.0
  %793 = vmatpush1.msra.mxu0 0.0
  %794 = vmatprep.subr.mxu0 0.0
  %795 = vmatpush1.msra.mxu0 0.0
  %796 = vmatprep.subr.mxu0 0.0
  %797 = vmatpush1.msra.mxu0 0.0
  %798 = vmatprep.subr.mxu0 0.0
  %799 = vmatpush1.msra.mxu0 0.0
  %800 = vmatprep.subr.mxu0 0.0
  %801 = vmatpush1.msra.mxu0 0.0
  %802 = vmatprep.subr.mxu0 0.0
  %803 = vmatpush1.msra.mxu0 0.0
  %804 = vmatprep.mubr.f32.mxu0 0.0
  %805 = vmatmul.mubr.f32.gmra.mrb[0].mxu0 %v738
  %v806 = vpop.f32.mrb[0].mxu0
  %v807 = vadd.f32 0.0, %v806
  %v808 = vpop.f32.mrb[0].mxu0
  %809 = vdwg.mxu0
  %v810 = vadd.f32 %v736, %v807
  %v811 = vtanh.pop %v810
  %v812 = vxor.u32 %v810, 2147483648
  %v813 = vmul.f32 %v812, 1.442695
  %v814 = vpow.pop %v813
  %v815 = vadd.f32 %v814, 1.0
  %v816 = vrcp.pop %v815
  %v817 = vmul.f32 1.0, %v816
  %v818 = vsel %vm462, %v811, %v817
  %820 = vrot.lane.b32.xlu0 %v733, 32
  %v821 = vpop.permute.xlu0 %820
  %v823 = vmul.f32 %v818, %v821
  %825 = vrot.lane.b32.xlu0 %v818, 64
  %v826 = vpop.permute.xlu0 %825
  %v828 = vmul.f32 %v818, %v826
  %830 = vrot.lane.b32.xlu0 %v828, 32
  %v831 = vpop.permute.xlu0 %830
  %v833 = vadd.f32 %v823, %v831
  %v834 = vtanh.pop %v833
  %836 = vrot.lane.b32.xlu0 %v834, 64
  %v837 = vpop.permute.xlu0 %836
  %v839 = vmul.f32 %v818, %v837
  %841 = vrot.lane.b32.xlu0 %v839, 32
  %v842 = vpop.permute.xlu0 %841
  %844 = vst.msk [vmem:[#allocation3] sm:$0xff] %vm491, %v842
  %v845 = vld [vmem:[#allocation2 + $0xf8] sm:$0xff]
  %846 = vmatprep.subr.mxu0 0.0
  %847 = vmatpush1.msra.mxu0 %v475
  %848 = vmatprep.subr.mxu0 0.0
  %849 = vmatpush1.msra.mxu0 %v476
  %850 = vmatprep.subr.mxu0 0.0
  %851 = vmatpush1.msra.mxu0 %v477
  %852 = vmatprep.subr.mxu0 0.0
  %853 = vmatpush1.msra.mxu0 %v478
  %854 = vmatprep.subr.mxu0 0.0
  %855 = vmatpush1.msra.mxu0 0.0
  %856 = vmatprep.subr.mxu0 0.0
  %857 = vmatpush1.msra.mxu0 0.0
  %858 = vmatprep.subr.mxu0 0.0
  %859 = vmatpush1.msra.mxu0 0.0
  %860 = vmatprep.subr.mxu0 0.0
  %861 = vmatpush1.msra.mxu0 0.0
  %862 = vmatprep.subr.mxu0 0.0
  %863 = vmatpush1.msra.mxu0 0.0
  %864 = vmatprep.subr.mxu0 0.0
  %865 = vmatpush1.msra.mxu0 0.0
  %866 = vmatprep.subr.mxu0 0.0
  %867 = vmatpush1.msra.mxu0 0.0
  %868 = vmatprep.subr.mxu0 0.0
  %869 = vmatpush1.msra.mxu0 0.0
  %870 = vmatprep.subr.mxu0 0.0
  %871 = vmatpush1.msra.mxu0 0.0
  %872 = vmatprep.subr.mxu0 0.0
  %873 = vmatpush1.msra.mxu0 0.0
  %874 = vmatprep.subr.mxu0 0.0
  %875 = vmatpush1.msra.mxu0 0.0
  %876 = vmatprep.subr.mxu0 0.0
  %877 = vmatpush1.msra.mxu0 0.0
  %878 = vmatprep.subr.mxu0 0.0
  %879 = vmatpush1.msra.mxu0 0.0
  %880 = vmatprep.subr.mxu0 0.0
  %881 = vmatpush1.msra.mxu0 0.0
  %882 = vmatprep.subr.mxu0 0.0
  %883 = vmatpush1.msra.mxu0 0.0
  %884 = vmatprep.subr.mxu0 0.0
  %885 = vmatpush1.msra.mxu0 0.0
  %886 = vmatprep.subr.mxu0 0.0
  %887 = vmatpush1.msra.mxu0 0.0
  %888 = vmatprep.subr.mxu0 0.0
  %889 = vmatpush1.msra.mxu0 0.0
  %890 = vmatprep.subr.mxu0 0.0
  %891 = vmatpush1.msra.mxu0 0.0
  %892 = vmatprep.subr.mxu0 0.0
  %893 = vmatpush1.msra.mxu0 0.0
  %894 = vmatprep.subr.mxu0 0.0
  %895 = vmatpush1.msra.mxu0 0.0
  %896 = vmatprep.subr.mxu0 0.0
  %897 = vmatpush1.msra.mxu0 0.0
  %898 = vmatprep.subr.mxu0 0.0
  %899 = vmatpush1.msra.mxu0 0.0
  %900 = vmatprep.subr.mxu0 0.0
  %901 = vmatpush1.msra.mxu0 0.0
  %902 = vmatprep.subr.mxu0 0.0
  %903 = vmatpush1.msra.mxu0 0.0
  %904 = vmatprep.subr.mxu0 0.0
  %905 = vmatpush1.msra.mxu0 0.0
  %906 = vmatprep.subr.mxu0 0.0
  %907 = vmatpush1.msra.mxu0 0.0
  %908 = vmatprep.subr.mxu0 0.0
  %909 = vmatpush1.msra.mxu0 0.0
  %910 = vmatprep.mubr.f32.mxu0 0.0
  %911 = vmatmul.mubr.f32.gmra.mrb[0].mxu0 %v738
  %v912 = vpop.f32.mrb[0].mxu0
  %v913 = vadd.f32 0.0, %v912
  %v914 = vpop.f32.mrb[0].mxu0
  %915 = vdwg.mxu0
  %v916 = vadd.f32 %v845, %v913
  %v917 = vtanh.pop %v916
  %v918 = vxor.u32 %v916, 2147483648
  %v919 = vmul.f32 %v918, 1.442695
  %v920 = vpow.pop %v919
  %v921 = vadd.f32 %v920, 1.0
  %v922 = vrcp.pop %v921
  %v923 = vmul.f32 1.0, %v922
  %v924 = vsel %vm462, %v917, %v923
  %926 = vrot.lane.b32.xlu0 %v735, 32
  %v927 = vpop.permute.xlu0 %926
  %v929 = vmul.f32 %v924, %v927
  %931 = vrot.lane.b32.xlu0 %v924, 64
  %v932 = vpop.permute.xlu0 %931
  %v934 = vmul.f32 %v924, %v932
  %936 = vrot.lane.b32.xlu0 %v934, 32
  %v937 = vpop.permute.xlu0 %936
  %v939 = vadd.f32 %v929, %v937
  %v940 = vtanh.pop %v939
  %942 = vrot.lane.b32.xlu0 %v940, 64
  %v943 = vpop.permute.xlu0 %942
  %v945 = vmul.f32 %v924, %v943
  %947 = vrot.lane.b32.xlu0 %v945, 64
  %v948 = vpop.permute.xlu0 %947
  %vm950 = vcmask 523520
  %951 = vst.msk [vmem:[#allocation3 + $0x78] sm:$0xff] %vm950, %v948
  %v952 = vld [vmem:[#allocation2 + $0x10] sm:$0xff]
  %v953 = vsel %vm491, %v842, 0
  %955 = vmatprep.subr.mxu0 0.0
  %956 = vmatpush1.msra.mxu0 %v471
  %957 = vmatprep.subr.mxu0 0.0
  %958 = vmatpush1.msra.mxu0 %v472
  %959 = vmatprep.subr.mxu0 0.0
  %960 = vmatpush1.msra.mxu0 %v473
  %961 = vmatprep.subr.mxu0 0.0
  %962 = vmatpush1.msra.mxu0 %v474
  %963 = vmatprep.subr.mxu0 0.0
  %964 = vmatpush1.msra.mxu0 0.0
  %965 = vmatprep.subr.mxu0 0.0
  %966 = vmatpush1.msra.mxu0 0.0
  %967 = vmatprep.subr.mxu0 0.0
  %968 = vmatpush1.msra.mxu0 0.0
  %969 = vmatprep.subr.mxu0 0.0
  %970 = vmatpush1.msra.mxu0 0.0
  %971 = vmatprep.subr.mxu0 0.0
  %972 = vmatpush1.msra.mxu0 0.0
  %973 = vmatprep.subr.mxu0 0.0
  %974 = vmatpush1.msra.mxu0 0.0
  %975 = vmatprep.subr.mxu0 0.0
  %976 = vmatpush1.msra.mxu0 0.0
  %977 = vmatprep.subr.mxu0 0.0
  %978 = vmatpush1.msra.mxu0 0.0
  %979 = vmatprep.subr.mxu0 0.0
  %980 = vmatpush1.msra.mxu0 0.0
  %981 = vmatprep.subr.mxu0 0.0
  %982 = vmatpush1.msra.mxu0 0.0
  %983 = vmatprep.subr.mxu0 0.0
  %984 = vmatpush1.msra.mxu0 0.0
  %985 = vmatprep.subr.mxu0 0.0
  %986 = vmatpush1.msra.mxu0 0.0
  %987 = vmatprep.subr.mxu0 0.0
  %988 = vmatpush1.msra.mxu0 0.0
  %989 = vmatprep.subr.mxu0 0.0
  %990 = vmatpush1.msra.mxu0 0.0
  %991 = vmatprep.subr.mxu0 0.0
  %992 = vmatpush1.msra.mxu0 0.0
  %993 = vmatprep.subr.mxu0 0.0
  %994 = vmatpush1.msra.mxu0 0.0
  %995 = vmatprep.subr.mxu0 0.0
  %996 = vmatpush1.msra.mxu0 0.0
  %997 = vmatprep.subr.mxu0 0.0
  %998 = vmatpush1.msra.mxu0 0.0
  %999 = vmatprep.subr.mxu0 0.0
  %1000 = vmatpush1.msra.mxu0 0.0
  %1001 = vmatprep.subr.mxu0 0.0
  %1002 = vmatpush1.msra.mxu0 0.0
  %1003 = vmatprep.subr.mxu0 0.0
  %1004 = vmatpush1.msra.mxu0 0.0
  %1005 = vmatprep.subr.mxu0 0.0
  %1006 = vmatpush1.msra.mxu0 0.0
  %1007 = vmatprep.subr.mxu0 0.0
  %1008 = vmatpush1.msra.mxu0 0.0
  %1009 = vmatprep.subr.mxu0 0.0
  %1010 = vmatpush1.msra.mxu0 0.0
  %1011 = vmatprep.subr.mxu0 0.0
  %1012 = vmatpush1.msra.mxu0 0.0
  %1013 = vmatprep.subr.mxu0 0.0
  %1014 = vmatpush1.msra.mxu0 0.0
  %1015 = vmatprep.subr.mxu0 0.0
  %1016 = vmatpush1.msra.mxu0 0.0
  %1017 = vmatprep.subr.mxu0 0.0
  %1018 = vmatpush1.msra.mxu0 0.0
  %1019 = vmatprep.mubr.f32.mxu0 0.0
  %1020 = vmatmul.mubr.f32.gmra.mrb[0].mxu0 %v953
  %v1021 = vpop.f32.mrb[0].mxu0
  %v1022 = vadd.f32 0.0, %v1021
  %v1023 = vpop.f32.mrb[0].mxu0
  %1024 = vdwg.mxu0
  %v1025 = vadd.f32 %v952, %v1022
  %v1026 = vtanh.pop %v1025
  %v1027 = vxor.u32 %v1025, 2147483648
  %v1028 = vmul.f32 %v1027, 1.442695
  %v1029 = vpow.pop %v1028
  %v1030 = vadd.f32 %v1029, 1.0
  %v1031 = vrcp.pop %v1030
  %v1032 = vmul.f32 1.0, %v1031
  %v1033 = vsel %vm462, %v1026, %v1032
  %v1034 = vmul.f32 %v1033, %v833
  %1036 = vrot.lane.b32.xlu0 %v1033, 64
  %v1037 = vpop.permute.xlu0 %1036
  %v1039 = vmul.f32 %v1033, %v1037
  %1041 = vrot.lane.b32.xlu0 %v1039, 32
  %v1042 = vpop.permute.xlu0 %1041
  %v1044 = vadd.f32 %v1034, %v1042
  %v1045 = vtanh.pop %v1044
  %1047 = vrot.lane.b32.xlu0 %v1045, 64
  %v1048 = vpop.permute.xlu0 %1047
  %v1050 = vmul.f32 %v1033, %v1048
  %1052 = vrot.lane.b32.xlu0 %v1050, 32
  %v1053 = vpop.permute.xlu0 %1052
  %1055 = vst.msk [vmem:[#allocation3 + $0x8] sm:$0xff] %vm491, %v1053
  %v1056 = vld [vmem:[#allocation2 + $0xe8] sm:$0xff]
  %1057 = vrot.lane.b32.xlu0 %v945, 32
  %v1058 = vpop.permute.xlu0 %1057
  %v1059 = vsel %vm491, %v1058, 0
  %1061 = vmatprep.subr.mxu0 0.0
  %1062 = vmatpush1.msra.mxu0 %v475
  %1063 = vmatprep.subr.mxu0 0.0
  %1064 = vmatpush1.msra.mxu0 %v476
  %1065 = vmatprep.subr.mxu0 0.0
  %1066 = vmatpush1.msra.mxu0 %v477
  %1067 = vmatprep.subr.mxu0 0.0
  %1068 = vmatpush1.msra.mxu0 %v478
  %1069 = vmatprep.subr.mxu0 0.0
  %1070 = vmatpush1.msra.mxu0 0.0
  %1071 = vmatprep.subr.mxu0 0.0
  %1072 = vmatpush1.msra.mxu0 0.0
  %1073 = vmatprep.subr.mxu0 0.0
  %1074 = vmatpush1.msra.mxu0 0.0
  %1075 = vmatprep.subr.mxu0 0.0
  %1076 = vmatpush1.msra.mxu0 0.0
  %1077 = vmatprep.subr.mxu0 0.0
  %1078 = vmatpush1.msra.mxu0 0.0
  %1079 = vmatprep.subr.mxu0 0.0
  %1080 = vmatpush1.msra.mxu0 0.0
  %1081 = vmatprep.subr.mxu0 0.0
  %1082 = vmatpush1.msra.mxu0 0.0
  %1083 = vmatprep.subr.mxu0 0.0
  %1084 = vmatpush1.msra.mxu0 0.0
  %1085 = vmatprep.subr.mxu0 0.0
  %1086 = vmatpush1.msra.mxu0 0.0
  %1087 = vmatprep.subr.mxu0 0.0
  %1088 = vmatpush1.msra.mxu0 0.0
  %1089 = vmatprep.subr.mxu0 0.0
  %1090 = vmatpush1.msra.mxu0 0.0
  %1091 = vmatprep.subr.mxu0 0.0
  %1092 = vmatpush1.msra.mxu0 0.0
  %1093 = vmatprep.subr.mxu0 0.0
  %1094 = vmatpush1.msra.mxu0 0.0
  %1095 = vmatprep.subr.mxu0 0.0
  %1096 = vmatpush1.msra.mxu0 0.0
  %1097 = vmatprep.subr.mxu0 0.0
  %1098 = vmatpush1.msra.mxu0 0.0
  %1099 = vmatprep.subr.mxu0 0.0
  %1100 = vmatpush1.msra.mxu0 0.0
  %1101 = vmatprep.subr.mxu0 0.0
  %1102 = vmatpush1.msra.mxu0 0.0
  %1103 = vmatprep.subr.mxu0 0.0
  %1104 = vmatpush1.msra.mxu0 0.0
  %1105 = vmatprep.subr.mxu0 0.0
  %1106 = vmatpush1.msra.mxu0 0.0
  %1107 = vmatprep.subr.mxu0 0.0
  %1108 = vmatpush1.msra.mxu0 0.0
  %1109 = vmatprep.subr.mxu0 0.0
  %1110 = vmatpush1.msra.mxu0 0.0
  %1111 = vmatprep.subr.mxu0 0.0
  %1112 = vmatpush1.msra.mxu0 0.0
  %1113 = vmatprep.subr.mxu0 0.0
  %1114 = vmatpush1.msra.mxu0 0.0
  %1115 = vmatprep.subr.mxu0 0.0
  %1116 = vmatpush1.msra.mxu0 0.0
  %1117 = vmatprep.subr.mxu0 0.0
  %1118 = vmatpush1.msra.mxu0 0.0
  %1119 = vmatprep.subr.mxu0 0.0
  %1120 = vmatpush1.msra.mxu0 0.0
  %1121 = vmatprep.subr.mxu0 0.0
  %1122 = vmatpush1.msra.mxu0 0.0
  %1123 = vmatprep.subr.mxu0 0.0
  %1124 = vmatpush1.msra.mxu0 0.0
  %1125 = vmatprep.mubr.f32.mxu0 0.0
  %1126 = vmatmul.mubr.f32.gmra.mrb[0].mxu0 %v1059
  %v1127 = vpop.f32.mrb[0].mxu0
  %v1128 = vadd.f32 0.0, %v1127
  %v1129 = vpop.f32.mrb[0].mxu0
  %1130 = vdwg.mxu0
  %v1131 = vadd.f32 %v1056, %v1128
  %v1132 = vtanh.pop %v1131
  %v1133 = vxor.u32 %v1131, 2147483648
  %v1134 = vmul.f32 %v1133, 1.442695
  %v1135 = vpow.pop %v1134
  %v1136 = vadd.f32 %v1135, 1.0
  %v1137 = vrcp.pop %v1136
  %v1138 = vmul.f32 1.0, %v1137
  %v1139 = vsel %vm462, %v1132, %v1138
  %v1140 = vmul.f32 %v1139, %v939
  %1142 = vrot.lane.b32.xlu0 %v1139, 64
  %v1143 = vpop.permute.xlu0 %1142
  %v1145 = vmul.f32 %v1139, %v1143
  %1147 = vrot.lane.b32.xlu0 %v1145, 32
  %v1148 = vpop.permute.xlu0 %1147
  %v1150 = vadd.f32 %v1140, %v1148
  %v1151 = vtanh.pop %v1150
  %1153 = vrot.lane.b32.xlu0 %v1151, 64
  %v1154 = vpop.permute.xlu0 %1153
  %v1156 = vmul.f32 %v1139, %v1154
  %1158 = vrot.lane.b32.xlu0 %v1156, 64
  %v1159 = vpop.permute.xlu0 %1158
  %1161 = vst.msk [vmem:[#allocation3 + $0x70] sm:$0xff] %vm950, %v1159
  %v1162 = vld [vmem:[#allocation2 + $0x20] sm:$0xff]
  %v1163 = vsel %vm491, %v1053, 0
  %1165 = vmatprep.subr.mxu0 0.0
  %1166 = vmatpush1.msra.mxu0 %v471
  %1167 = vmatprep.subr.mxu0 0.0
  %1168 = vmatpush1.msra.mxu0 %v472
  %1169 = vmatprep.subr.mxu0 0.0
  %1170 = vmatpush1.msra.mxu0 %v473
  %1171 = vmatprep.subr.mxu0 0.0
  %1172 = vmatpush1.msra.mxu0 %v474
  %1173 = vmatprep.subr.mxu0 0.0
  %1174 = vmatpush1.msra.mxu0 0.0
  %1175 = vmatprep.subr.mxu0 0.0
  %1176 = vmatpush1.msra.mxu0 0.0
  %1177 = vmatprep.subr.mxu0 0.0
  %1178 = vmatpush1.msra.mxu0 0.0
  %1179 = vmatprep.subr.mxu0 0.0
  %1180 = vmatpush1.msra.mxu0 0.0
  %1181 = vmatprep.subr.mxu0 0.0
  %1182 = vmatpush1.msra.mxu0 0.0
  %1183 = vmatprep.subr.mxu0 0.0
  %1184 = vmatpush1.msra.mxu0 0.0
  %1185 = vmatprep.subr.mxu0 0.0
  %1186 = vmatpush1.msra.mxu0 0.0
  %1187 = vmatprep.subr.mxu0 0.0
  %1188 = vmatpush1.msra.mxu0 0.0
  %1189 = vmatprep.subr.mxu0 0.0
  %1190 = vmatpush1.msra.mxu0 0.0
  %1191 = vmatprep.subr.mxu0 0.0
  %1192 = vmatpush1.msra.mxu0 0.0
  %1193 = vmatprep.subr.mxu0 0.0
  %1194 = vmatpush1.msra.mxu0 0.0
  %1195 = vmatprep.subr.mxu0 0.0
  %1196 = vmatpush1.msra.mxu0 0.0
  %1197 = vmatprep.subr.mxu0 0.0
  %1198 = vmatpush1.msra.mxu0 0.0
  %1199 = vmatprep.subr.mxu0 0.0
  %1200 = vmatpush1.msra.mxu0 0.0
  %1201 = vmatprep.subr.mxu0 0.0
  %1202 = vmatpush1.msra.mxu0 0.0
  %1203 = vmatprep.subr.mxu0 0.0
  %1204 = vmatpush1.msra.mxu0 0.0
  %1205 = vmatprep.subr.mxu0 0.0
  %1206 = vmatpush1.msra.mxu0 0.0
  %1207 = vmatprep.subr.mxu0 0.0
  %1208 = vmatpush1.msra.mxu0 0.0
  %1209 = vmatprep.subr.mxu0 0.0
  %1210 = vmatpush1.msra.mxu0 0.0
  %1211 = vmatprep.subr.mxu0 0.0
  %1212 = vmatpush1.msra.mxu0 0.0
  %1213 = vmatprep.subr.mxu0 0.0
  %1214 = vmatpush1.msra.mxu0 0.0
  %1215 = vmatprep.subr.mxu0 0.0
  %1216 = vmatpush1.msra.mxu0 0.0
  %1217 = vmatprep.subr.mxu0 0.0
  %1218 = vmatpush1.msra.mxu0 0.0
  %1219 = vmatprep.subr.mxu0 0.0
  %1220 = vmatpush1.msra.mxu0 0.0
  %1221 = vmatprep.subr.mxu0 0.0
  %1222 = vmatpush1.msra.mxu0 0.0
  %1223 = vmatprep.subr.mxu0 0.0
  %1224 = vmatpush1.msra.mxu0 0.0
  %1225 = vmatprep.subr.mxu0 0.0
  %1226 = vmatpush1.msra.mxu0 0.0
  %1227 = vmatprep.subr.mxu0 0.0
  %1228 = vmatpush1.msra.mxu0 0.0
  %1229 = vmatprep.mubr.f32.mxu0 0.0
  %1230 = vmatmul.mubr.f32.gmra.mrb[0].mxu0 %v1163
  %v1231 = vpop.f32.mrb[0].mxu0
  %v1232 = vadd.f32 0.0, %v1231
  %v1233 = vpop.f32.mrb[0].mxu0
  %1234 = vdwg.mxu0
  %v1235 = vadd.f32 %v1162, %v1232
  %v1236 = vtanh.pop %v1235
  %v1237 = vxor.u32 %v1235, 2147483648
  %v1238 = vmul.f32 %v1237, 1.442695
  %v1239 = vpow.pop %v1238
  %v1240 = vadd.f32 %v1239, 1.0
  %v1241 = vrcp.pop %v1240
  %v1242 = vmul.f32 1.0, %v1241
  %v1243 = vsel %vm462, %v1236, %v1242
  %v1244 = vmul.f32 %v1243, %v1044
  %1246 = vrot.lane.b32.xlu0 %v1243, 64
  %v1247 = vpop.permute.xlu0 %1246
  %v1249 = vmul.f32 %v1243, %v1247
  %1251 = vrot.lane.b32.xlu0 %v1249, 32
  %v1252 = vpop.permute.xlu0 %1251
  %v1254 = vadd.f32 %v1244, %v1252
  %v1255 = vtanh.pop %v1254
  %1257 = vrot.lane.b32.xlu0 %v1255, 64
  %v1258 = vpop.permute.xlu0 %1257
  %v1260 = vmul.f32 %v1243, %v1258
  %1262 = vrot.lane.b32.xlu0 %v1260, 32
  %v1263 = vpop.permute.xlu0 %1262
  %1265 = vst.msk [vmem:[#allocation3 + $0x10] sm:$0xff] %vm491, %v1263
  %v1266 = vld [vmem:[#allocation2 + $0xd8] sm:$0xff]
  %1267 = vrot.lane.b32.xlu0 %v1156, 32
  %v1268 = vpop.permute.xlu0 %1267
  %v1269 = vsel %vm491, %v1268, 0
  %1271 = vmatprep.subr.mxu0 0.0
  %1272 = vmatpush1.msra.mxu0 %v475
  %1273 = vmatprep.subr.mxu0 0.0
  %1274 = vmatpush1.msra.mxu0 %v476
  %1275 = vmatprep.subr.mxu0 0.0
  %1276 = vmatpush1.msra.mxu0 %v477
  %1277 = vmatprep.subr.mxu0 0.0
  %1278 = vmatpush1.msra.mxu0 %v478
  %1279 = vmatprep.subr.mxu0 0.0
  %1280 = vmatpush1.msra.mxu0 0.0
  %1281 = vmatprep.subr.mxu0 0.0
  %1282 = vmatpush1.msra.mxu0 0.0
  %1283 = vmatprep.subr.mxu0 0.0
  %1284 = vmatpush1.msra.mxu0 0.0
  %1285 = vmatprep.subr.mxu0 0.0
  %1286 = vmatpush1.msra.mxu0 0.0
  %1287 = vmatprep.subr.mxu0 0.0
  %1288 = vmatpush1.msra.mxu0 0.0
  %1289 = vmatprep.subr.mxu0 0.0
  %1290 = vmatpush1.msra.mxu0 0.0
  %1291 = vmatprep.subr.mxu0 0.0
  %1292 = vmatpush1.msra.mxu0 0.0
  %1293 = vmatprep.subr.mxu0 0.0
  %1294 = vmatpush1.msra.mxu0 0.0
  %1295 = vmatprep.subr.mxu0 0.0
  %1296 = vmatpush1.msra.mxu0 0.0
  %1297 = vmatprep.subr.mxu0 0.0
  %1298 = vmatpush1.msra.mxu0 0.0
  %1299 = vmatprep.subr.mxu0 0.0
  %1300 = vmatpush1.msra.mxu0 0.0
  %1301 = vmatprep.subr.mxu0 0.0
  %1302 = vmatpush1.msra.mxu0 0.0
  %1303 = vmatprep.subr.mxu0 0.0
  %1304 = vmatpush1.msra.mxu0 0.0
  %1305 = vmatprep.subr.mxu0 0.0
  %1306 = vmatpush1.msra.mxu0 0.0
  %1307 = vmatprep.subr.mxu0 0.0
  %1308 = vmatpush1.msra.mxu0 0.0
  %1309 = vmatprep.subr.mxu0 0.0
  %1310 = vmatpush1.msra.mxu0 0.0
  %1311 = vmatprep.subr.mxu0 0.0
  %1312 = vmatpush1.msra.mxu0 0.0
  %1313 = vmatprep.subr.mxu0 0.0
  %1314 = vmatpush1.msra.mxu0 0.0
  %1315 = vmatprep.subr.mxu0 0.0
  %1316 = vmatpush1.msra.mxu0 0.0
  %1317 = vmatprep.subr.mxu0 0.0
  %1318 = vmatpush1.msra.mxu0 0.0
  %1319 = vmatprep.subr.mxu0 0.0
  %1320 = vmatpush1.msra.mxu0 0.0
  %1321 = vmatprep.subr.mxu0 0.0
  %1322 = vmatpush1.msra.mxu0 0.0
  %1323 = vmatprep.subr.mxu0 0.0
  %1324 = vmatpush1.msra.mxu0 0.0
  %1325 = vmatprep.subr.mxu0 0.0
  %1326 = vmatpush1.msra.mxu0 0.0
  %1327 = vmatprep.subr.mxu0 0.0
  %1328 = vmatpush1.msra.mxu0 0.0
  %1329 = vmatprep.subr.mxu0 0.0
  %1330 = vmatpush1.msra.mxu0 0.0
  %1331 = vmatprep.subr.mxu0 0.0
  %1332 = vmatpush1.msra.mxu0 0.0
  %1333 = vmatprep.subr.mxu0 0.0
  %1334 = vmatpush1.msra.mxu0 0.0
  %1335 = vmatprep.mubr.f32.mxu0 0.0
  %1336 = vmatmul.mubr.f32.gmra.mrb[0].mxu0 %v1269
  %v1337 = vpop.f32.mrb[0].mxu0
  %v1338 = vadd.f32 0.0, %v1337
  %v1339 = vpop.f32.mrb[0].mxu0
  %1340 = vdwg.mxu0
  %v1341 = vadd.f32 %v1266, %v1338
  %v1342 = vtanh.pop %v1341
  %v1343 = vxor.u32 %v1341, 2147483648
  %v1344 = vmul.f32 %v1343, 1.442695
  %v1345 = vpow.pop %v1344
  %v1346 = vadd.f32 %v1345, 1.0
  %v1347 = vrcp.pop %v1346
  %v1348 = vmul.f32 1.0, %v1347
  %v1349 = vsel %vm462, %v1342, %v1348
  %v1350 = vmul.f32 %v1349, %v1150
  %1352 = vrot.lane.b32.xlu0 %v1349, 64
  %v1353 = vpop.permute.xlu0 %1352
  %v1355 = vmul.f32 %v1349, %v1353
  %1357 = vrot.lane.b32.xlu0 %v1355, 32
  %v1358 = vpop.permute.xlu0 %1357
  %v1360 = vadd.f32 %v1350, %v1358
  %v1361 = vtanh.pop %v1360
  %1363 = vrot.lane.b32.xlu0 %v1361, 64
  %v1364 = vpop.permute.xlu0 %1363
  %v1366 = vmul.f32 %v1349, %v1364
  %1368 = vrot.lane.b32.xlu0 %v1366, 64
  %v1369 = vpop.permute.xlu0 %1368
  %1371 = vst.msk [vmem:[#allocation3 + $0x68] sm:$0xff] %vm950, %v1369
  %v1372 = vld [vmem:[#allocation2 + $0x30] sm:$0xff]
  %v1373 = vsel %vm491, %v1263, 0
  %1375 = vmatprep.subr.mxu0 0.0
  %1376 = vmatpush1.msra.mxu0 %v471
  %1377 = vmatprep.subr.mxu0 0.0
  %1378 = vmatpush1.msra.mxu0 %v472
  %1379 = vmatprep.subr.mxu0 0.0
  %1380 = vmatpush1.msra.mxu0 %v473
  %1381 = vmatprep.subr.mxu0 0.0
  %1382 = vmatpush1.msra.mxu0 %v474
  %1383 = vmatprep.subr.mxu0 0.0
  %1384 = vmatpush1.msra.mxu0 0.0
  %1385 = vmatprep.subr.mxu0 0.0
  %1386 = vmatpush1.msra.mxu0 0.0
  %1387 = vmatprep.subr.mxu0 0.0
  %1388 = vmatpush1.msra.mxu0 0.0
  %1389 = vmatprep.subr.mxu0 0.0
  %1390 = vmatpush1.msra.mxu0 0.0
  %1391 = vmatprep.subr.mxu0 0.0
  %1392 = vmatpush1.msra.mxu0 0.0
  %1393 = vmatprep.subr.mxu0 0.0
  %1394 = vmatpush1.msra.mxu0 0.0
  %1395 = vmatprep.subr.mxu0 0.0
  %1396 = vmatpush1.msra.mxu0 0.0
  %1397 = vmatprep.subr.mxu0 0.0
  %1398 = vmatpush1.msra.mxu0 0.0
  %1399 = vmatprep.subr.mxu0 0.0
  %1400 = vmatpush1.msra.mxu0 0.0
  %1401 = vmatprep.subr.mxu0 0.0
  %1402 = vmatpush1.msra.mxu0 0.0
  %1403 = vmatprep.subr.mxu0 0.0
  %1404 = vmatpush1.msra.mxu0 0.0
  %1405 = vmatprep.subr.mxu0 0.0
  %1406 = vmatpush1.msra.mxu0 0.0
  %1407 = vmatprep.subr.mxu0 0.0
  %1408 = vmatpush1.msra.mxu0 0.0
  %1409 = vmatprep.subr.mxu0 0.0
  %1410 = vmatpush1.msra.mxu0 0.0
  %1411 = vmatprep.subr.mxu0 0.0
  %1412 = vmatpush1.msra.mxu0 0.0
  %1413 = vmatprep.subr.mxu0 0.0
  %1414 = vmatpush1.msra.mxu0 0.0
  %1415 = vmatprep.subr.mxu0 0.0
  %1416 = vmatpush1.msra.mxu0 0.0
  %1417 = vmatprep.subr.mxu0 0.0
  %1418 = vmatpush1.msra.mxu0 0.0
  %1419 = vmatprep.subr.mxu0 0.0
  %1420 = vmatpush1.msra.mxu0 0.0
  %1421 = vmatprep.subr.mxu0 0.0
  %1422 = vmatpush1.msra.mxu0 0.0
  %1423 = vmatprep.subr.mxu0 0.0
  %1424 = vmatpush1.msra.mxu0 0.0
  %1425 = vmatprep.subr.mxu0 0.0
  %1426 = vmatpush1.msra.mxu0 0.0
  %1427 = vmatprep.subr.mxu0 0.0
  %1428 = vmatpush1.msra.mxu0 0.0
  %1429 = vmatprep.subr.mxu0 0.0
  %1430 = vmatpush1.msra.mxu0 0.0
  %1431 = vmatprep.subr.mxu0 0.0
  %1432 = vmatpush1.msra.mxu0 0.0
  %1433 = vmatprep.subr.mxu0 0.0
  %1434 = vmatpush1.msra.mxu0 0.0
  %1435 = vmatprep.subr.mxu0 0.0
  %1436 = vmatpush1.msra.mxu0 0.0
  %1437 = vmatprep.subr.mxu0 0.0
  %1438 = vmatpush1.msra.mxu0 0.0
  %1439 = vmatprep.mubr.f32.mxu0 0.0
  %1440 = vmatmul.mubr.f32.gmra.mrb[0].mxu0 %v1373
  %v1441 = vpop.f32.mrb[0].mxu0
  %v1442 = vadd.f32 0.0, %v1441
  %v1443 = vpop.f32.mrb[0].mxu0
  %1444 = vdwg.mxu0
  %v1445 = vadd.f32 %v1372, %v1442
  %v1446 = vtanh.pop %v1445
  %v1447 = vxor.u32 %v1445, 2147483648
  %v1448 = vmul.f32 %v1447, 1.442695
  %v1449 = vpow.pop %v1448
  %v1450 = vadd.f32 %v1449, 1.0
  %v1451 = vrcp.pop %v1450
  %v1452 = vmul.f32 1.0, %v1451
  %v1453 = vsel %vm462, %v1446, %v1452
  %v1454 = vmul.f32 %v1453, %v1254
  %1456 = vrot.lane.b32.xlu0 %v1453, 64
  %v1457 = vpop.permute.xlu0 %1456
  %v1459 = vmul.f32 %v1453, %v1457
  %1461 = vrot.lane.b32.xlu0 %v1459, 32
  %v1462 = vpop.permute.xlu0 %1461
  %v1464 = vadd.f32 %v1454, %v1462
  %v1465 = vtanh.pop %v1464
  %1467 = vrot.lane.b32.xlu0 %v1465, 64
  %v1468 = vpop.permute.xlu0 %1467
  %v1470 = vmul.f32 %v1453, %v1468
  %1472 = vrot.lane.b32.xlu0 %v1470, 32
  %v1473 = vpop.permute.xlu0 %1472
  %1475 = vst.msk [vmem:[#allocation3 + $0x18] sm:$0xff] %vm491, %v1473
  %v1476 = vld [vmem:[#allocation2 + $0xc8] sm:$0xff]
  %1477 = vrot.lane.b32.xlu0 %v1366, 32
  %v1478 = vpop.permute.xlu0 %1477
  %v1479 = vsel %vm491, %v1478, 0
  %1481 = vmatprep.subr.mxu0 0.0
  %1482 = vmatpush1.msra.mxu0 %v475
  %1483 = vmatprep.subr.mxu0 0.0
  %1484 = vmatpush1.msra.mxu0 %v476
  %1485 = vmatprep.subr.mxu0 0.0
  %1486 = vmatpush1.msra.mxu0 %v477
  %1487 = vmatprep.subr.mxu0 0.0
  %1488 = vmatpush1.msra.mxu0 %v478
  %1489 = vmatprep.subr.mxu0 0.0
  %1490 = vmatpush1.msra.mxu0 0.0
  %1491 = vmatprep.subr.mxu0 0.0
  %1492 = vmatpush1.msra.mxu0 0.0
  %1493 = vmatprep.subr.mxu0 0.0
  %1494 = vmatpush1.msra.mxu0 0.0
  %1495 = vmatprep.subr.mxu0 0.0
  %1496 = vmatpush1.msra.mxu0 0.0
  %1497 = vmatprep.subr.mxu0 0.0
  %1498 = vmatpush1.msra.mxu0 0.0
  %1499 = vmatprep.subr.mxu0 0.0
  %1500 = vmatpush1.msra.mxu0 0.0
  %1501 = vmatprep.subr.mxu0 0.0
  %1502 = vmatpush1.msra.mxu0 0.0
  %1503 = vmatprep.subr.mxu0 0.0
  %1504 = vmatpush1.msra.mxu0 0.0
  %1505 = vmatprep.subr.mxu0 0.0
  %1506 = vmatpush1.msra.mxu0 0.0
  %1507 = vmatprep.subr.mxu0 0.0
  %1508 = vmatpush1.msra.mxu0 0.0
  %1509 = vmatprep.subr.mxu0 0.0
  %1510 = vmatpush1.msra.mxu0 0.0
  %1511 = vmatprep.subr.mxu0 0.0
  %1512 = vmatpush1.msra.mxu0 0.0
  %1513 = vmatprep.subr.mxu0 0.0
  %1514 = vmatpush1.msra.mxu0 0.0
  %1515 = vmatprep.subr.mxu0 0.0
  %1516 = vmatpush1.msra.mxu0 0.0
  %1517 = vmatprep.subr.mxu0 0.0
  %1518 = vmatpush1.msra.mxu0 0.0
  %1519 = vmatprep.subr.mxu0 0.0
  %1520 = vmatpush1.msra.mxu0 0.0
  %1521 = vmatprep.subr.mxu0 0.0
  %1522 = vmatpush1.msra.mxu0 0.0
  %1523 = vmatprep.subr.mxu0 0.0
  %1524 = vmatpush1.msra.mxu0 0.0
  %1525 = vmatprep.subr.mxu0 0.0
  %1526 = vmatpush1.msra.mxu0 0.0
  %1527 = vmatprep.subr.mxu0 0.0
  %1528 = vmatpush1.msra.mxu0 0.0
  %1529 = vmatprep.subr.mxu0 0.0
  %1530 = vmatpush1.msra.mxu0 0.0
  %1531 = vmatprep.subr.mxu0 0.0
  %1532 = vmatpush1.msra.mxu0 0.0
  %1533 = vmatprep.subr.mxu0 0.0
  %1534 = vmatpush1.msra.mxu0 0.0
  %1535 = vmatprep.subr.mxu0 0.0
  %1536 = vmatpush1.msra.mxu0 0.0
  %1537 = vmatprep.subr.mxu0 0.0
  %1538 = vmatpush1.msra.mxu0 0.0
  %1539 = vmatprep.subr.mxu0 0.0
  %1540 = vmatpush1.msra.mxu0 0.0
  %1541 = vmatprep.subr.mxu0 0.0
  %1542 = vmatpush1.msra.mxu0 0.0
  %1543 = vmatprep.subr.mxu0 0.0
  %1544 = vmatpush1.msra.mxu0 0.0
  %1545 = vmatprep.mubr.f32.mxu0 0.0
  %1546 = vmatmul.mubr.f32.gmra.mrb[0].mxu0 %v1479
  %v1547 = vpop.f32.mrb[0].mxu0
  %v1548 = vadd.f32 0.0, %v1547
  %v1549 = vpop.f32.mrb[0].mxu0
  %1550 = vdwg.mxu0
  %v1551 = vadd.f32 %v1476, %v1548
  %v1552 = vtanh.pop %v1551
  %v1553 = vxor.u32 %v1551, 2147483648
  %v1554 = vmul.f32 %v1553, 1.442695
  %v1555 = vpow.pop %v1554
  %v1556 = vadd.f32 %v1555, 1.0
  %v1557 = vrcp.pop %v1556
  %v1558 = vmul.f32 1.0, %v1557
  %v1559 = vsel %vm462, %v1552, %v1558
  %v1560 = vmul.f32 %v1559, %v1360
  %1562 = vrot.lane.b32.xlu0 %v1559, 64
  %v1563 = vpop.permute.xlu0 %1562
  %v1565 = vmul.f32 %v1559, %v1563
  %1567 = vrot.lane.b32.xlu0 %v1565, 32
  %v1568 = vpop.permute.xlu0 %1567
  %v1570 = vadd.f32 %v1560, %v1568
  %v1571 = vtanh.pop %v1570
  %1573 = vrot.lane.b32.xlu0 %v1571, 64
  %v1574 = vpop.permute.xlu0 %1573
  %v1576 = vmul.f32 %v1559, %v1574
  %1578 = vrot.lane.b32.xlu0 %v1576, 64
  %v1579 = vpop.permute.xlu0 %1578
  %1581 = vst.msk [vmem:[#allocation3 + $0x60] sm:$0xff] %vm950, %v1579
  %v1582 = vld [vmem:[#allocation2 + $0x40] sm:$0xff]
  %v1583 = vsel %vm491, %v1473, 0
  %1585 = vmatprep.subr.mxu0 0.0
  %1586 = vmatpush1.msra.mxu0 %v471
  %1587 = vmatprep.subr.mxu0 0.0
  %1588 = vmatpush1.msra.mxu0 %v472
  %1589 = vmatprep.subr.mxu0 0.0
  %1590 = vmatpush1.msra.mxu0 %v473
  %1591 = vmatprep.subr.mxu0 0.0
  %1592 = vmatpush1.msra.mxu0 %v474
  %1593 = vmatprep.subr.mxu0 0.0
  %1594 = vmatpush1.msra.mxu0 0.0
  %1595 = vmatprep.subr.mxu0 0.0
  %1596 = vmatpush1.msra.mxu0 0.0
  %1597 = vmatprep.subr.mxu0 0.0
  %1598 = vmatpush1.msra.mxu0 0.0
  %1599 = vmatprep.subr.mxu0 0.0
  %1600 = vmatpush1.msra.mxu0 0.0
  %1601 = vmatprep.subr.mxu0 0.0
  %1602 = vmatpush1.msra.mxu0 0.0
  %1603 = vmatprep.subr.mxu0 0.0
  %1604 = vmatpush1.msra.mxu0 0.0
  %1605 = vmatprep.subr.mxu0 0.0
  %1606 = vmatpush1.msra.mxu0 0.0
  %1607 = vmatprep.subr.mxu0 0.0
  %1608 = vmatpush1.msra.mxu0 0.0
  %1609 = vmatprep.subr.mxu0 0.0
  %1610 = vmatpush1.msra.mxu0 0.0
  %1611 = vmatprep.subr.mxu0 0.0
  %1612 = vmatpush1.msra.mxu0 0.0
  %1613 = vmatprep.subr.mxu0 0.0
  %1614 = vmatpush1.msra.mxu0 0.0
  %1615 = vmatprep.subr.mxu0 0.0
  %1616 = vmatpush1.msra.mxu0 0.0
  %1617 = vmatprep.subr.mxu0 0.0
  %1618 = vmatpush1.msra.mxu0 0.0
  %1619 = vmatprep.subr.mxu0 0.0
  %1620 = vmatpush1.msra.mxu0 0.0
  %1621 = vmatprep.subr.mxu0 0.0
  %1622 = vmatpush1.msra.mxu0 0.0
  %1623 = vmatprep.subr.mxu0 0.0
  %1624 = vmatpush1.msra.mxu0 0.0
  %1625 = vmatprep.subr.mxu0 0.0
  %1626 = vmatpush1.msra.mxu0 0.0
  %1627 = vmatprep.subr.mxu0 0.0
  %1628 = vmatpush1.msra.mxu0 0.0
  %1629 = vmatprep.subr.mxu0 0.0
  %1630 = vmatpush1.msra.mxu0 0.0
  %1631 = vmatprep.subr.mxu0 0.0
  %1632 = vmatpush1.msra.mxu0 0.0
  %1633 = vmatprep.subr.mxu0 0.0
  %1634 = vmatpush1.msra.mxu0 0.0
  %1635 = vmatprep.subr.mxu0 0.0
  %1636 = vmatpush1.msra.mxu0 0.0
  %1637 = vmatprep.subr.mxu0 0.0
  %1638 = vmatpush1.msra.mxu0 0.0
  %1639 = vmatprep.subr.mxu0 0.0
  %1640 = vmatpush1.msra.mxu0 0.0
  %1641 = vmatprep.subr.mxu0 0.0
  %1642 = vmatpush1.msra.mxu0 0.0
  %1643 = vmatprep.subr.mxu0 0.0
  %1644 = vmatpush1.msra.mxu0 0.0
  %1645 = vmatprep.subr.mxu0 0.0
  %1646 = vmatpush1.msra.mxu0 0.0
  %1647 = vmatprep.subr.mxu0 0.0
  %1648 = vmatpush1.msra.mxu0 0.0
  %1649 = vmatprep.mubr.f32.mxu0 0.0
  %1650 = vmatmul.mubr.f32.gmra.mrb[0].mxu0 %v1583
  %v1651 = vpop.f32.mrb[0].mxu0
  %v1652 = vadd.f32 0.0, %v1651
  %v1653 = vpop.f32.mrb[0].mxu0
  %1654 = vdwg.mxu0
  %v1655 = vadd.f32 %v1582, %v1652
  %v1656 = vtanh.pop %v1655
  %v1657 = vxor.u32 %v1655, 2147483648
  %v1658 = vmul.f32 %v1657, 1.442695
  %v1659 = vpow.pop %v1658
  %v1660 = vadd.f32 %v1659, 1.0
  %v1661 = vrcp.pop %v1660
  %v1662 = vmul.f32 1.0, %v1661
  %v1663 = vsel %vm462, %v1656, %v1662
  %v1664 = vmul.f32 %v1663, %v1464
  %1666 = vrot.lane.b32.xlu0 %v1663, 64
  %v1667 = vpop.permute.xlu0 %1666
  %v1669 = vmul.f32 %v1663, %v1667
  %1671 = vrot.lane.b32.xlu0 %v1669, 32
  %v1672 = vpop.permute.xlu0 %1671
  %v1674 = vadd.f32 %v1664, %v1672
  %v1675 = vtanh.pop %v1674
  %1677 = vrot.lane.b32.xlu0 %v1675, 64
  %v1678 = vpop.permute.xlu0 %1677
  %v1680 = vmul.f32 %v1663, %v1678
  %1682 = vrot.lane.b32.xlu0 %v1680, 32
  %v1683 = vpop.permute.xlu0 %1682
  %1685 = vst.msk [vmem:[#allocation3 + $0x20] sm:$0xff] %vm491, %v1683
  %v1686 = vld [vmem:[#allocation2 + $0xb8] sm:$0xff]
  %1687 = vrot.lane.b32.xlu0 %v1576, 32
  %v1688 = vpop.permute.xlu0 %1687
  %v1689 = vsel %vm491, %v1688, 0
  %1691 = vmatprep.subr.mxu0 0.0
  %1692 = vmatpush1.msra.mxu0 %v475
  %1693 = vmatprep.subr.mxu0 0.0
  %1694 = vmatpush1.msra.mxu0 %v476
  %1695 = vmatprep.subr.mxu0 0.0
  %1696 = vmatpush1.msra.mxu0 %v477
  %1697 = vmatprep.subr.mxu0 0.0
  %1698 = vmatpush1.msra.mxu0 %v478
  %1699 = vmatprep.subr.mxu0 0.0
  %1700 = vmatpush1.msra.mxu0 0.0
  %1701 = vmatprep.subr.mxu0 0.0
  %1702 = vmatpush1.msra.mxu0 0.0
  %1703 = vmatprep.subr.mxu0 0.0
  %1704 = vmatpush1.msra.mxu0 0.0
  %1705 = vmatprep.subr.mxu0 0.0
  %1706 = vmatpush1.msra.mxu0 0.0
  %1707 = vmatprep.subr.mxu0 0.0
  %1708 = vmatpush1.msra.mxu0 0.0
  %1709 = vmatprep.subr.mxu0 0.0
  %1710 = vmatpush1.msra.mxu0 0.0
  %1711 = vmatprep.subr.mxu0 0.0
  %1712 = vmatpush1.msra.mxu0 0.0
  %1713 = vmatprep.subr.mxu0 0.0
  %1714 = vmatpush1.msra.mxu0 0.0
  %1715 = vmatprep.subr.mxu0 0.0
  %1716 = vmatpush1.msra.mxu0 0.0
  %1717 = vmatprep.subr.mxu0 0.0
  %1718 = vmatpush1.msra.mxu0 0.0
  %1719 = vmatprep.subr.mxu0 0.0
  %1720 = vmatpush1.msra.mxu0 0.0
  %1721 = vmatprep.subr.mxu0 0.0
  %1722 = vmatpush1.msra.mxu0 0.0
  %1723 = vmatprep.subr.mxu0 0.0
  %1724 = vmatpush1.msra.mxu0 0.0
  %1725 = vmatprep.subr.mxu0 0.0
  %1726 = vmatpush1.msra.mxu0 0.0
  %1727 = vmatprep.subr.mxu0 0.0
  %1728 = vmatpush1.msra.mxu0 0.0
  %1729 = vmatprep.subr.mxu0 0.0
  %1730 = vmatpush1.msra.mxu0 0.0
  %1731 = vmatprep.subr.mxu0 0.0
  %1732 = vmatpush1.msra.mxu0 0.0
  %1733 = vmatprep.subr.mxu0 0.0
  %1734 = vmatpush1.msra.mxu0 0.0
  %1735 = vmatprep.subr.mxu0 0.0
  %1736 = vmatpush1.msra.mxu0 0.0
  %1737 = vmatprep.subr.mxu0 0.0
  %1738 = vmatpush1.msra.mxu0 0.0
  %1739 = vmatprep.subr.mxu0 0.0
  %1740 = vmatpush1.msra.mxu0 0.0
  %1741 = vmatprep.subr.mxu0 0.0
  %1742 = vmatpush1.msra.mxu0 0.0
  %1743 = vmatprep.subr.mxu0 0.0
  %1744 = vmatpush1.msra.mxu0 0.0
  %1745 = vmatprep.subr.mxu0 0.0
  %1746 = vmatpush1.msra.mxu0 0.0
  %1747 = vmatprep.subr.mxu0 0.0
  %1748 = vmatpush1.msra.mxu0 0.0
  %1749 = vmatprep.subr.mxu0 0.0
  %1750 = vmatpush1.msra.mxu0 0.0
  %1751 = vmatprep.subr.mxu0 0.0
  %1752 = vmatpush1.msra.mxu0 0.0
  %1753 = vmatprep.subr.mxu0 0.0
  %1754 = vmatpush1.msra.mxu0 0.0
  %1755 = vmatprep.mubr.f32.mxu0 0.0
  %1756 = vmatmul.mubr.f32.gmra.mrb[0].mxu0 %v1689
  %v1757 = vpop.f32.mrb[0].mxu0
  %v1758 = vadd.f32 0.0, %v1757
  %v1759 = vpop.f32.mrb[0].mxu0
  %1760 = vdwg.mxu0
  %v1761 = vadd.f32 %v1686, %v1758
  %v1762 = vtanh.pop %v1761
  %v1763 = vxor.u32 %v1761, 2147483648
  %v1764 = vmul.f32 %v1763, 1.442695
  %v1765 = vpow.pop %v1764
  %v1766 = vadd.f32 %v1765, 1.0
  %v1767 = vrcp.pop %v1766
  %v1768 = vmul.f32 1.0, %v1767
  %v1769 = vsel %vm462, %v1762, %v1768
  %v1770 = vmul.f32 %v1769, %v1570
  %1772 = vrot.lane.b32.xlu0 %v1769, 64
  %v1773 = vpop.permute.xlu0 %1772
  %v1775 = vmul.f32 %v1769, %v1773
  %1777 = vrot.lane.b32.xlu0 %v1775, 32
  %v1778 = vpop.permute.xlu0 %1777
  %v1780 = vadd.f32 %v1770, %v1778
  %v1781 = vtanh.pop %v1780
  %1783 = vrot.lane.b32.xlu0 %v1781, 64
  %v1784 = vpop.permute.xlu0 %1783
  %v1786 = vmul.f32 %v1769, %v1784
  %1788 = vrot.lane.b32.xlu0 %v1786, 64
  %v1789 = vpop.permute.xlu0 %1788
  %1791 = vst.msk [vmem:[#allocation3 + $0x58] sm:$0xff] %vm950, %v1789
  %v1792 = vld [vmem:[#allocation2 + $0x50] sm:$0xff]
  %v1793 = vsel %vm491, %v1683, 0
  %1795 = vmatprep.subr.mxu0 0.0
  %1796 = vmatpush1.msra.mxu0 %v471
  %1797 = vmatprep.subr.mxu0 0.0
  %1798 = vmatpush1.msra.mxu0 %v472
  %1799 = vmatprep.subr.mxu0 0.0
  %1800 = vmatpush1.msra.mxu0 %v473
  %1801 = vmatprep.subr.mxu0 0.0
  %1802 = vmatpush1.msra.mxu0 %v474
  %1803 = vmatprep.subr.mxu0 0.0
  %1804 = vmatpush1.msra.mxu0 0.0
  %1805 = vmatprep.subr.mxu0 0.0
  %1806 = vmatpush1.msra.mxu0 0.0
  %1807 = vmatprep.subr.mxu0 0.0
  %1808 = vmatpush1.msra.mxu0 0.0
  %1809 = vmatprep.subr.mxu0 0.0
  %1810 = vmatpush1.msra.mxu0 0.0
  %1811 = vmatprep.subr.mxu0 0.0
  %1812 = vmatpush1.msra.mxu0 0.0
  %1813 = vmatprep.subr.mxu0 0.0
  %1814 = vmatpush1.msra.mxu0 0.0
  %1815 = vmatprep.subr.mxu0 0.0
  %1816 = vmatpush1.msra.mxu0 0.0
  %1817 = vmatprep.subr.mxu0 0.0
  %1818 = vmatpush1.msra.mxu0 0.0
  %1819 = vmatprep.subr.mxu0 0.0
  %1820 = vmatpush1.msra.mxu0 0.0
  %1821 = vmatprep.subr.mxu0 0.0
  %1822 = vmatpush1.msra.mxu0 0.0
  %1823 = vmatprep.subr.mxu0 0.0
  %1824 = vmatpush1.msra.mxu0 0.0
  %1825 = vmatprep.subr.mxu0 0.0
  %1826 = vmatpush1.msra.mxu0 0.0
  %1827 = vmatprep.subr.mxu0 0.0
  %1828 = vmatpush1.msra.mxu0 0.0
  %1829 = vmatprep.subr.mxu0 0.0
  %1830 = vmatpush1.msra.mxu0 0.0
  %1831 = vmatprep.subr.mxu0 0.0
  %1832 = vmatpush1.msra.mxu0 0.0
  %1833 = vmatprep.subr.mxu0 0.0
  %1834 = vmatpush1.msra.mxu0 0.0
  %1835 = vmatprep.subr.mxu0 0.0
  %1836 = vmatpush1.msra.mxu0 0.0
  %1837 = vmatprep.subr.mxu0 0.0
  %1838 = vmatpush1.msra.mxu0 0.0
  %1839 = vmatprep.subr.mxu0 0.0
  %1840 = vmatpush1.msra.mxu0 0.0
  %1841 = vmatprep.subr.mxu0 0.0
  %1842 = vmatpush1.msra.mxu0 0.0
  %1843 = vmatprep.subr.mxu0 0.0
  %1844 = vmatpush1.msra.mxu0 0.0
  %1845 = vmatprep.subr.mxu0 0.0
  %1846 = vmatpush1.msra.mxu0 0.0
  %1847 = vmatprep.subr.mxu0 0.0
  %1848 = vmatpush1.msra.mxu0 0.0
  %1849 = vmatprep.subr.mxu0 0.0
  %1850 = vmatpush1.msra.mxu0 0.0
  %1851 = vmatprep.subr.mxu0 0.0
  %1852 = vmatpush1.msra.mxu0 0.0
  %1853 = vmatprep.subr.mxu0 0.0
  %1854 = vmatpush1.msra.mxu0 0.0
  %1855 = vmatprep.subr.mxu0 0.0
  %1856 = vmatpush1.msra.mxu0 0.0
  %1857 = vmatprep.subr.mxu0 0.0
  %1858 = vmatpush1.msra.mxu0 0.0
  %1859 = vmatprep.mubr.f32.mxu0 0.0
  %1860 = vmatmul.mubr.f32.gmra.mrb[0].mxu0 %v1793
  %v1861 = vpop.f32.mrb[0].mxu0
  %v1862 = vadd.f32 0.0, %v1861
  %v1863 = vpop.f32.mrb[0].mxu0
  %1864 = vdwg.mxu0
  %v1865 = vadd.f32 %v1792, %v1862
  %v1866 = vtanh.pop %v1865
  %v1867 = vxor.u32 %v1865, 2147483648
  %v1868 = vmul.f32 %v1867, 1.442695
  %v1869 = vpow.pop %v1868
  %v1870 = vadd.f32 %v1869, 1.0
  %v1871 = vrcp.pop %v1870
  %v1872 = vmul.f32 1.0, %v1871
  %v1873 = vsel %vm462, %v1866, %v1872
  %v1874 = vmul.f32 %v1873, %v1674
  %1876 = vrot.lane.b32.xlu0 %v1873, 64
  %v1877 = vpop.permute.xlu0 %1876
  %v1879 = vmul.f32 %v1873, %v1877
  %1881 = vrot.lane.b32.xlu0 %v1879, 32
  %v1882 = vpop.permute.xlu0 %1881
  %v1884 = vadd.f32 %v1874, %v1882
  %v1885 = vtanh.pop %v1884
  %1887 = vrot.lane.b32.xlu0 %v1885, 64
  %v1888 = vpop.permute.xlu0 %1887
  %v1890 = vmul.f32 %v1873, %v1888
  %1892 = vrot.lane.b32.xlu0 %v1890, 32
  %v1893 = vpop.permute.xlu0 %1892
  %1895 = vst.msk [vmem:[#allocation3 + $0x28] sm:$0xff] %vm491, %v1893
  %v1896 = vld [vmem:[#allocation2 + $0xa8] sm:$0xff]
  %1897 = vrot.lane.b32.xlu0 %v1786, 32
  %v1898 = vpop.permute.xlu0 %1897
  %v1899 = vsel %vm491, %v1898, 0
  %1901 = vmatprep.subr.mxu0 0.0
  %1902 = vmatpush1.msra.mxu0 %v475
  %1903 = vmatprep.subr.mxu0 0.0
  %1904 = vmatpush1.msra.mxu0 %v476
  %1905 = vmatprep.subr.mxu0 0.0
  %1906 = vmatpush1.msra.mxu0 %v477
  %1907 = vmatprep.subr.mxu0 0.0
  %1908 = vmatpush1.msra.mxu0 %v478
  %1909 = vmatprep.subr.mxu0 0.0
  %1910 = vmatpush1.msra.mxu0 0.0
  %1911 = vmatprep.subr.mxu0 0.0
  %1912 = vmatpush1.msra.mxu0 0.0
  %1913 = vmatprep.subr.mxu0 0.0
  %1914 = vmatpush1.msra.mxu0 0.0
  %1915 = vmatprep.subr.mxu0 0.0
  %1916 = vmatpush1.msra.mxu0 0.0
  %1917 = vmatprep.subr.mxu0 0.0
  %1918 = vmatpush1.msra.mxu0 0.0
  %1919 = vmatprep.subr.mxu0 0.0
  %1920 = vmatpush1.msra.mxu0 0.0
  %1921 = vmatprep.subr.mxu0 0.0
  %1922 = vmatpush1.msra.mxu0 0.0
  %1923 = vmatprep.subr.mxu0 0.0
  %1924 = vmatpush1.msra.mxu0 0.0
  %1925 = vmatprep.subr.mxu0 0.0
  %1926 = vmatpush1.msra.mxu0 0.0
  %1927 = vmatprep.subr.mxu0 0.0
  %1928 = vmatpush1.msra.mxu0 0.0
  %1929 = vmatprep.subr.mxu0 0.0
  %1930 = vmatpush1.msra.mxu0 0.0
  %1931 = vmatprep.subr.mxu0 0.0
  %1932 = vmatpush1.msra.mxu0 0.0
  %1933 = vmatprep.subr.mxu0 0.0
  %1934 = vmatpush1.msra.mxu0 0.0
  %1935 = vmatprep.subr.mxu0 0.0
  %1936 = vmatpush1.msra.mxu0 0.0
  %1937 = vmatprep.subr.mxu0 0.0
  %1938 = vmatpush1.msra.mxu0 0.0
  %1939 = vmatprep.subr.mxu0 0.0
  %1940 = vmatpush1.msra.mxu0 0.0
  %1941 = vmatprep.subr.mxu0 0.0
  %1942 = vmatpush1.msra.mxu0 0.0
  %1943 = vmatprep.subr.mxu0 0.0
  %1944 = vmatpush1.msra.mxu0 0.0
  %1945 = vmatprep.subr.mxu0 0.0
  %1946 = vmatpush1.msra.mxu0 0.0
  %1947 = vmatprep.subr.mxu0 0.0
  %1948 = vmatpush1.msra.mxu0 0.0
  %1949 = vmatprep.subr.mxu0 0.0
  %1950 = vmatpush1.msra.mxu0 0.0
  %1951 = vmatprep.subr.mxu0 0.0
  %1952 = vmatpush1.msra.mxu0 0.0
  %1953 = vmatprep.subr.mxu0 0.0
  %1954 = vmatpush1.msra.mxu0 0.0
  %1955 = vmatprep.subr.mxu0 0.0
  %1956 = vmatpush1.msra.mxu0 0.0
  %1957 = vmatprep.subr.mxu0 0.0
  %1958 = vmatpush1.msra.mxu0 0.0
  %1959 = vmatprep.subr.mxu0 0.0
  %1960 = vmatpush1.msra.mxu0 0.0
  %1961 = vmatprep.subr.mxu0 0.0
  %1962 = vmatpush1.msra.mxu0 0.0
  %1963 = vmatprep.subr.mxu0 0.0
  %1964 = vmatpush1.msra.mxu0 0.0
  %1965 = vmatprep.mubr.f32.mxu0 0.0
  %1966 = vmatmul.mubr.f32.gmra.mrb[0].mxu0 %v1899
  %v1967 = vpop.f32.mrb[0].mxu0
  %v1968 = vadd.f32 0.0, %v1967
  %v1969 = vpop.f32.mrb[0].mxu0
  %1970 = vdwg.mxu0
  %v1971 = vadd.f32 %v1896, %v1968
  %v1972 = vtanh.pop %v1971
  %v1973 = vxor.u32 %v1971, 2147483648
  %v1974 = vmul.f32 %v1973, 1.442695
  %v1975 = vpow.pop %v1974
  %v1976 = vadd.f32 %v1975, 1.0
  %v1977 = vrcp.pop %v1976
  %v1978 = vmul.f32 1.0, %v1977
  %v1979 = vsel %vm462, %v1972, %v1978
  %v1980 = vmul.f32 %v1979, %v1780
  %1982 = vrot.lane.b32.xlu0 %v1979, 64
  %v1983 = vpop.permute.xlu0 %1982
  %v1985 = vmul.f32 %v1979, %v1983
  %1987 = vrot.lane.b32.xlu0 %v1985, 32
  %v1988 = vpop.permute.xlu0 %1987
  %v1990 = vadd.f32 %v1980, %v1988
  %v1991 = vtanh.pop %v1990
  %1993 = vrot.lane.b32.xlu0 %v1991, 64
  %v1994 = vpop.permute.xlu0 %1993
  %v1996 = vmul.f32 %v1979, %v1994
  %1998 = vrot.lane.b32.xlu0 %v1996, 64
  %v1999 = vpop.permute.xlu0 %1998
  %2001 = vst.msk [vmem:[#allocation3 + $0x50] sm:$0xff] %vm950, %v1999
  %v2002 = vld [vmem:[#allocation2 + $0x60] sm:$0xff]
  %v2003 = vsel %vm491, %v1893, 0
  %2005 = vmatprep.subr.mxu0 0.0
  %2006 = vmatpush1.msra.mxu0 %v471
  %2007 = vmatprep.subr.mxu0 0.0
  %2008 = vmatpush1.msra.mxu0 %v472
  %2009 = vmatprep.subr.mxu0 0.0
  %2010 = vmatpush1.msra.mxu0 %v473
  %2011 = vmatprep.subr.mxu0 0.0
  %2012 = vmatpush1.msra.mxu0 %v474
  %2013 = vmatprep.subr.mxu0 0.0
  %2014 = vmatpush1.msra.mxu0 0.0
  %2015 = vmatprep.subr.mxu0 0.0
  %2016 = vmatpush1.msra.mxu0 0.0
  %2017 = vmatprep.subr.mxu0 0.0
  %2018 = vmatpush1.msra.mxu0 0.0
  %2019 = vmatprep.subr.mxu0 0.0
  %2020 = vmatpush1.msra.mxu0 0.0
  %2021 = vmatprep.subr.mxu0 0.0
  %2022 = vmatpush1.msra.mxu0 0.0
  %2023 = vmatprep.subr.mxu0 0.0
  %2024 = vmatpush1.msra.mxu0 0.0
  %2025 = vmatprep.subr.mxu0 0.0
  %2026 = vmatpush1.msra.mxu0 0.0
  %2027 = vmatprep.subr.mxu0 0.0
  %2028 = vmatpush1.msra.mxu0 0.0
  %2029 = vmatprep.subr.mxu0 0.0
  %2030 = vmatpush1.msra.mxu0 0.0
  %2031 = vmatprep.subr.mxu0 0.0
  %2032 = vmatpush1.msra.mxu0 0.0
  %2033 = vmatprep.subr.mxu0 0.0
  %2034 = vmatpush1.msra.mxu0 0.0
  %2035 = vmatprep.subr.mxu0 0.0
  %2036 = vmatpush1.msra.mxu0 0.0
  %2037 = vmatprep.subr.mxu0 0.0
  %2038 = vmatpush1.msra.mxu0 0.0
  %2039 = vmatprep.subr.mxu0 0.0
  %2040 = vmatpush1.msra.mxu0 0.0
  %2041 = vmatprep.subr.mxu0 0.0
  %2042 = vmatpush1.msra.mxu0 0.0
  %2043 = vmatprep.subr.mxu0 0.0
  %2044 = vmatpush1.msra.mxu0 0.0
  %2045 = vmatprep.subr.mxu0 0.0
  %2046 = vmatpush1.msra.mxu0 0.0
  %2047 = vmatprep.subr.mxu0 0.0
  %2048 = vmatpush1.msra.mxu0 0.0
  %2049 = vmatprep.subr.mxu0 0.0
  %2050 = vmatpush1.msra.mxu0 0.0
  %2051 = vmatprep.subr.mxu0 0.0
  %2052 = vmatpush1.msra.mxu0 0.0
  %2053 = vmatprep.subr.mxu0 0.0
  %2054 = vmatpush1.msra.mxu0 0.0
  %2055 = vmatprep.subr.mxu0 0.0
  %2056 = vmatpush1.msra.mxu0 0.0
  %2057 = vmatprep.subr.mxu0 0.0
  %2058 = vmatpush1.msra.mxu0 0.0
  %2059 = vmatprep.subr.mxu0 0.0
  %2060 = vmatpush1.msra.mxu0 0.0
  %2061 = vmatprep.subr.mxu0 0.0
  %2062 = vmatpush1.msra.mxu0 0.0
  %2063 = vmatprep.subr.mxu0 0.0
  %2064 = vmatpush1.msra.mxu0 0.0
  %2065 = vmatprep.subr.mxu0 0.0
  %2066 = vmatpush1.msra.mxu0 0.0
  %2067 = vmatprep.subr.mxu0 0.0
  %2068 = vmatpush1.msra.mxu0 0.0
  %2069 = vmatprep.mubr.f32.mxu0 0.0
  %2070 = vmatmul.mubr.f32.gmra.mrb[0].mxu0 %v2003
  %v2071 = vpop.f32.mrb[0].mxu0
  %v2072 = vadd.f32 0.0, %v2071
  %v2073 = vpop.f32.mrb[0].mxu0
  %2074 = vdwg.mxu0
  %v2075 = vadd.f32 %v2002, %v2072
  %v2076 = vtanh.pop %v2075
  %v2077 = vxor.u32 %v2075, 2147483648
  %v2078 = vmul.f32 %v2077, 1.442695
  %v2079 = vpow.pop %v2078
  %v2080 = vadd.f32 %v2079, 1.0
  %v2081 = vrcp.pop %v2080
  %v2082 = vmul.f32 1.0, %v2081
  %v2083 = vsel %vm462, %v2076, %v2082
  %v2084 = vmul.f32 %v2083, %v1884
  %2086 = vrot.lane.b32.xlu0 %v2083, 64
  %v2087 = vpop.permute.xlu0 %2086
  %v2089 = vmul.f32 %v2083, %v2087
  %2091 = vrot.lane.b32.xlu0 %v2089, 32
  %v2092 = vpop.permute.xlu0 %2091
  %v2094 = vadd.f32 %v2084, %v2092
  %v2095 = vtanh.pop %v2094
  %2097 = vrot.lane.b32.xlu0 %v2095, 64
  %v2098 = vpop.permute.xlu0 %2097
  %v2100 = vmul.f32 %v2083, %v2098
  %2102 = vrot.lane.b32.xlu0 %v2100, 32
  %v2103 = vpop.permute.xlu0 %2102
  %2105 = vst.msk [vmem:[#allocation3 + $0x30] sm:$0xff] %vm491, %v2103
  %v2106 = vld [vmem:[#allocation2 + $0x98] sm:$0xff]
  %2107 = vrot.lane.b32.xlu0 %v1996, 32
  %v2108 = vpop.permute.xlu0 %2107
  %v2109 = vsel %vm491, %v2108, 0
  %2111 = vmatprep.subr.mxu0 0.0
  %2112 = vmatpush1.msra.mxu0 %v475
  %2113 = vmatprep.subr.mxu0 0.0
  %2114 = vmatpush1.msra.mxu0 %v476
  %2115 = vmatprep.subr.mxu0 0.0
  %2116 = vmatpush1.msra.mxu0 %v477
  %2117 = vmatprep.subr.mxu0 0.0
  %2118 = vmatpush1.msra.mxu0 %v478
  %2119 = vmatprep.subr.mxu0 0.0
  %2120 = vmatpush1.msra.mxu0 0.0
  %2121 = vmatprep.subr.mxu0 0.0
  %2122 = vmatpush1.msra.mxu0 0.0
  %2123 = vmatprep.subr.mxu0 0.0
  %2124 = vmatpush1.msra.mxu0 0.0
  %2125 = vmatprep.subr.mxu0 0.0
  %2126 = vmatpush1.msra.mxu0 0.0
  %2127 = vmatprep.subr.mxu0 0.0
  %2128 = vmatpush1.msra.mxu0 0.0
  %2129 = vmatprep.subr.mxu0 0.0
  %2130 = vmatpush1.msra.mxu0 0.0
  %2131 = vmatprep.subr.mxu0 0.0
  %2132 = vmatpush1.msra.mxu0 0.0
  %2133 = vmatprep.subr.mxu0 0.0
  %2134 = vmatpush1.msra.mxu0 0.0
  %2135 = vmatprep.subr.mxu0 0.0
  %2136 = vmatpush1.msra.mxu0 0.0
  %2137 = vmatprep.subr.mxu0 0.0
  %2138 = vmatpush1.msra.mxu0 0.0
  %2139 = vmatprep.subr.mxu0 0.0
  %2140 = vmatpush1.msra.mxu0 0.0
  %2141 = vmatprep.subr.mxu0 0.0
  %2142 = vmatpush1.msra.mxu0 0.0
  %2143 = vmatprep.subr.mxu0 0.0
  %2144 = vmatpush1.msra.mxu0 0.0
  %2145 = vmatprep.subr.mxu0 0.0
  %2146 = vmatpush1.msra.mxu0 0.0
  %2147 = vmatprep.subr.mxu0 0.0
  %2148 = vmatpush1.msra.mxu0 0.0
  %2149 = vmatprep.subr.mxu0 0.0
  %2150 = vmatpush1.msra.mxu0 0.0
  %2151 = vmatprep.subr.mxu0 0.0
  %2152 = vmatpush1.msra.mxu0 0.0
  %2153 = vmatprep.subr.mxu0 0.0
  %2154 = vmatpush1.msra.mxu0 0.0
  %2155 = vmatprep.subr.mxu0 0.0
  %2156 = vmatpush1.msra.mxu0 0.0
  %2157 = vmatprep.subr.mxu0 0.0
  %2158 = vmatpush1.msra.mxu0 0.0
  %2159 = vmatprep.subr.mxu0 0.0
  %2160 = vmatpush1.msra.mxu0 0.0
  %2161 = vmatprep.subr.mxu0 0.0
  %2162 = vmatpush1.msra.mxu0 0.0
  %2163 = vmatprep.subr.mxu0 0.0
  %2164 = vmatpush1.msra.mxu0 0.0
  %2165 = vmatprep.subr.mxu0 0.0
  %2166 = vmatpush1.msra.mxu0 0.0
  %2167 = vmatprep.subr.mxu0 0.0
  %2168 = vmatpush1.msra.mxu0 0.0
  %2169 = vmatprep.subr.mxu0 0.0
  %2170 = vmatpush1.msra.mxu0 0.0
  %2171 = vmatprep.subr.mxu0 0.0
  %2172 = vmatpush1.msra.mxu0 0.0
  %2173 = vmatprep.subr.mxu0 0.0
  %2174 = vmatpush1.msra.mxu0 0.0
  %2175 = vmatprep.mubr.f32.mxu0 0.0
  %2176 = vmatmul.mubr.f32.gmra.mrb[0].mxu0 %v2109
  %v2177 = vpop.f32.mrb[0].mxu0
  %v2178 = vadd.f32 0.0, %v2177
  %v2179 = vpop.f32.mrb[0].mxu0
  %2180 = vdwg.mxu0
  %v2181 = vadd.f32 %v2106, %v2178
  %v2182 = vtanh.pop %v2181
  %v2183 = vxor.u32 %v2181, 2147483648
  %v2184 = vmul.f32 %v2183, 1.442695
  %v2185 = vpow.pop %v2184
  %v2186 = vadd.f32 %v2185, 1.0
  %v2187 = vrcp.pop %v2186
  %v2188 = vmul.f32 1.0, %v2187
  %v2189 = vsel %vm462, %v2182, %v2188
  %v2190 = vmul.f32 %v2189, %v1990
  %2192 = vrot.lane.b32.xlu0 %v2189, 64
  %v2193 = vpop.permute.xlu0 %2192
  %v2195 = vmul.f32 %v2189, %v2193
  %2197 = vrot.lane.b32.xlu0 %v2195, 32
  %v2198 = vpop.permute.xlu0 %2197
  %v2200 = vadd.f32 %v2190, %v2198
  %v2201 = vtanh.pop %v2200
  %2203 = vrot.lane.b32.xlu0 %v2201, 64
  %v2204 = vpop.permute.xlu0 %2203
  %v2206 = vmul.f32 %v2189, %v2204
  %2208 = vrot.lane.b32.xlu0 %v2206, 64
  %v2209 = vpop.permute.xlu0 %2208
  %2211 = vst.msk [vmem:[#allocation3 + $0x48] sm:$0xff] %vm950, %v2209
  %v2212 = vld [vmem:[#allocation2 + $0x70] sm:$0xff]
  %v2213 = vsel %vm491, %v2103, 0
  %2215 = vmatprep.subr.mxu0 0.0
  %2216 = vmatpush1.msra.mxu0 %v471
  %2217 = vmatprep.subr.mxu0 0.0
  %2218 = vmatpush1.msra.mxu0 %v472
  %2219 = vmatprep.subr.mxu0 0.0
  %2220 = vmatpush1.msra.mxu0 %v473
  %2221 = vmatprep.subr.mxu0 0.0
  %2222 = vmatpush1.msra.mxu0 %v474
  %2223 = vmatprep.subr.mxu0 0.0
  %2224 = vmatpush1.msra.mxu0 0.0
  %2225 = vmatprep.subr.mxu0 0.0
  %2226 = vmatpush1.msra.mxu0 0.0
  %2227 = vmatprep.subr.mxu0 0.0
  %2228 = vmatpush1.msra.mxu0 0.0
  %2229 = vmatprep.subr.mxu0 0.0
  %2230 = vmatpush1.msra.mxu0 0.0
  %2231 = vmatprep.subr.mxu0 0.0
  %2232 = vmatpush1.msra.mxu0 0.0
  %2233 = vmatprep.subr.mxu0 0.0
  %2234 = vmatpush1.msra.mxu0 0.0
  %2235 = vmatprep.subr.mxu0 0.0
  %2236 = vmatpush1.msra.mxu0 0.0
  %2237 = vmatprep.subr.mxu0 0.0
  %2238 = vmatpush1.msra.mxu0 0.0
  %2239 = vmatprep.subr.mxu0 0.0
  %2240 = vmatpush1.msra.mxu0 0.0
  %2241 = vmatprep.subr.mxu0 0.0
  %2242 = vmatpush1.msra.mxu0 0.0
  %2243 = vmatprep.subr.mxu0 0.0
  %2244 = vmatpush1.msra.mxu0 0.0
  %2245 = vmatprep.subr.mxu0 0.0
  %2246 = vmatpush1.msra.mxu0 0.0
  %2247 = vmatprep.subr.mxu0 0.0
  %2248 = vmatpush1.msra.mxu0 0.0
  %2249 = vmatprep.subr.mxu0 0.0
  %2250 = vmatpush1.msra.mxu0 0.0
  %2251 = vmatprep.subr.mxu0 0.0
  %2252 = vmatpush1.msra.mxu0 0.0
  %2253 = vmatprep.subr.mxu0 0.0
  %2254 = vmatpush1.msra.mxu0 0.0
  %2255 = vmatprep.subr.mxu0 0.0
  %2256 = vmatpush1.msra.mxu0 0.0
  %2257 = vmatprep.subr.mxu0 0.0
  %2258 = vmatpush1.msra.mxu0 0.0
  %2259 = vmatprep.subr.mxu0 0.0
  %2260 = vmatpush1.msra.mxu0 0.0
  %2261 = vmatprep.subr.mxu0 0.0
  %2262 = vmatpush1.msra.mxu0 0.0
  %2263 = vmatprep.subr.mxu0 0.0
  %2264 = vmatpush1.msra.mxu0 0.0
  %2265 = vmatprep.subr.mxu0 0.0
  %2266 = vmatpush1.msra.mxu0 0.0
  %2267 = vmatprep.subr.mxu0 0.0
  %2268 = vmatpush1.msra.mxu0 0.0
  %2269 = vmatprep.subr.mxu0 0.0
  %2270 = vmatpush1.msra.mxu0 0.0
  %2271 = vmatprep.subr.mxu0 0.0
  %2272 = vmatpush1.msra.mxu0 0.0
  %2273 = vmatprep.subr.mxu0 0.0
  %2274 = vmatpush1.msra.mxu0 0.0
  %2275 = vmatprep.subr.mxu0 0.0
  %2276 = vmatpush1.msra.mxu0 0.0
  %2277 = vmatprep.subr.mxu0 0.0
  %2278 = vmatpush1.msra.mxu0 0.0
  %2279 = vmatprep.mubr.f32.mxu0 0.0
  %2280 = vmatmul.mubr.f32.gmra.mrb[0].mxu0 %v2213
  %v2281 = vpop.f32.mrb[0].mxu0
  %v2282 = vadd.f32 0.0, %v2281
  %v2283 = vpop.f32.mrb[0].mxu0
  %2284 = vdwg.mxu0
  %v2285 = vadd.f32 %v2212, %v2282
  %v2286 = vtanh.pop %v2285
  %v2287 = vxor.u32 %v2285, 2147483648
  %v2288 = vmul.f32 %v2287, 1.442695
  %v2289 = vpow.pop %v2288
  %v2290 = vadd.f32 %v2289, 1.0
  %v2291 = vrcp.pop %v2290
  %v2292 = vmul.f32 1.0, %v2291
  %v2293 = vsel %vm462, %v2286, %v2292
  %v2294 = vmul.f32 %v2293, %v2094
  %2296 = vrot.lane.b32.xlu0 %v2293, 64
  %v2297 = vpop.permute.xlu0 %2296
  %v2299 = vmul.f32 %v2293, %v2297
  %2301 = vrot.lane.b32.xlu0 %v2299, 32
  %v2302 = vpop.permute.xlu0 %2301
  %v2304 = vadd.f32 %v2294, %v2302
  %v2305 = vtanh.pop %v2304
  %2307 = vrot.lane.b32.xlu0 %v2305, 64
  %v2308 = vpop.permute.xlu0 %2307
  %v2310 = vmul.f32 %v2293, %v2308
  %2312 = vrot.lane.b32.xlu0 %v2310, 32
  %v2313 = vpop.permute.xlu0 %2312
  %2315 = vst.msk [vmem:[#allocation3 + $0x38] sm:$0xff] %vm491, %v2313
  %v2316 = vld [vmem:[#allocation2 + $0x88] sm:$0xff]
  %2317 = vrot.lane.b32.xlu0 %v2206, 32
  %v2318 = vpop.permute.xlu0 %2317
  %v2319 = vsel %vm491, %v2318, 0
  %2321 = vmatprep.subr.mxu0 0.0
  %2322 = vmatpush1.msra.mxu0 %v475
  %2323 = vmatprep.subr.mxu0 0.0
  %2324 = vmatpush1.msra.mxu0 %v476
  %2325 = vmatprep.subr.mxu0 0.0
  %2326 = vmatpush1.msra.mxu0 %v477
  %2327 = vmatprep.subr.mxu0 0.0
  %2328 = vmatpush1.msra.mxu0 %v478
  %2329 = vmatprep.subr.mxu0 0.0
  %2330 = vmatpush1.msra.mxu0 0.0
  %2331 = vmatprep.subr.mxu0 0.0
  %2332 = vmatpush1.msra.mxu0 0.0
  %2333 = vmatprep.subr.mxu0 0.0
  %2334 = vmatpush1.msra.mxu0 0.0
  %2335 = vmatprep.subr.mxu0 0.0
  %2336 = vmatpush1.msra.mxu0 0.0
  %2337 = vmatprep.subr.mxu0 0.0
  %2338 = vmatpush1.msra.mxu0 0.0
  %2339 = vmatprep.subr.mxu0 0.0
  %2340 = vmatpush1.msra.mxu0 0.0
  %2341 = vmatprep.subr.mxu0 0.0
  %2342 = vmatpush1.msra.mxu0 0.0
  %2343 = vmatprep.subr.mxu0 0.0
  %2344 = vmatpush1.msra.mxu0 0.0
  %2345 = vmatprep.subr.mxu0 0.0
  %2346 = vmatpush1.msra.mxu0 0.0
  %2347 = vmatprep.subr.mxu0 0.0
  %2348 = vmatpush1.msra.mxu0 0.0
  %2349 = vmatprep.subr.mxu0 0.0
  %2350 = vmatpush1.msra.mxu0 0.0
  %2351 = vmatprep.subr.mxu0 0.0
  %2352 = vmatpush1.msra.mxu0 0.0
  %2353 = vmatprep.subr.mxu0 0.0
  %2354 = vmatpush1.msra.mxu0 0.0
  %2355 = vmatprep.subr.mxu0 0.0
  %2356 = vmatpush1.msra.mxu0 0.0
  %2357 = vmatprep.subr.mxu0 0.0
  %2358 = vmatpush1.msra.mxu0 0.0
  %2359 = vmatprep.subr.mxu0 0.0
  %2360 = vmatpush1.msra.mxu0 0.0
  %2361 = vmatprep.subr.mxu0 0.0
  %2362 = vmatpush1.msra.mxu0 0.0
  %2363 = vmatprep.subr.mxu0 0.0
  %2364 = vmatpush1.msra.mxu0 0.0
  %2365 = vmatprep.subr.mxu0 0.0
  %2366 = vmatpush1.msra.mxu0 0.0
  %2367 = vmatprep.subr.mxu0 0.0
  %2368 = vmatpush1.msra.mxu0 0.0
  %2369 = vmatprep.subr.mxu0 0.0
  %2370 = vmatpush1.msra.mxu0 0.0
  %2371 = vmatprep.subr.mxu0 0.0
  %2372 = vmatpush1.msra.mxu0 0.0
  %2373 = vmatprep.subr.mxu0 0.0
  %2374 = vmatpush1.msra.mxu0 0.0
  %2375 = vmatprep.subr.mxu0 0.0
  %2376 = vmatpush1.msra.mxu0 0.0
  %2377 = vmatprep.subr.mxu0 0.0
  %2378 = vmatpush1.msra.mxu0 0.0
  %2379 = vmatprep.subr.mxu0 0.0
  %2380 = vmatpush1.msra.mxu0 0.0
  %2381 = vmatprep.subr.mxu0 0.0
  %2382 = vmatpush1.msra.mxu0 0.0
  %2383 = vmatprep.subr.mxu0 0.0
  %2384 = vmatpush1.msra.mxu0 0.0
  %2385 = vmatprep.mubr.f32.mxu0 0.0
  %2386 = vmatmul.mubr.f32.gmra.mrb[0].mxu0 %v2319
  %v2387 = vpop.f32.mrb[0].mxu0
  %v2388 = vadd.f32 0.0, %v2387
  %v2389 = vpop.f32.mrb[0].mxu0
  %2390 = vdwg.mxu0
  %v2391 = vadd.f32 %v2316, %v2388
  %v2392 = vtanh.pop %v2391
  %v2393 = vxor.u32 %v2391, 2147483648
  %v2394 = vmul.f32 %v2393, 1.442695
  %v2395 = vpow.pop %v2394
  %v2396 = vadd.f32 %v2395, 1.0
  %v2397 = vrcp.pop %v2396
  %v2398 = vmul.f32 1.0, %v2397
  %v2399 = vsel %vm462, %v2392, %v2398
  %v2400 = vmul.f32 %v2399, %v2200
  %2402 = vrot.lane.b32.xlu0 %v2399, 64
  %v2403 = vpop.permute.xlu0 %2402
  %v2405 = vmul.f32 %v2399, %v2403
  %2407 = vrot.lane.b32.xlu0 %v2405, 32
  %v2408 = vpop.permute.xlu0 %2407
  %v2410 = vadd.f32 %v2400, %v2408
  %v2411 = vtanh.pop %v2410
  %2413 = vrot.lane.b32.xlu0 %v2411, 64
  %v2414 = vpop.permute.xlu0 %2413
  %v2416 = vmul.f32 %v2399, %v2414
  %2418 = vrot.lane.b32.xlu0 %v2416, 64
  %v2419 = vpop.permute.xlu0 %2418
  %2421 = vst.msk [vmem:[#allocation3 + $0x40] sm:$0xff] %vm950, %v2419
  %v2422 = vld [vmem:[#allocation2 + $0x80] sm:$0xff]
  %v2423 = vsel %vm491, %v2313, 0
  %2425 = vmatprep.subr.mxu0 0.0
  %2426 = vmatpush1.msra.mxu0 %v471
  %2427 = vmatprep.subr.mxu0 0.0
  %2428 = vmatpush1.msra.mxu0 %v472
  %2429 = vmatprep.subr.mxu0 0.0
  %2430 = vmatpush1.msra.mxu0 %v473
  %2431 = vmatprep.subr.mxu0 0.0
  %2432 = vmatpush1.msra.mxu0 %v474
  %2433 = vmatprep.subr.mxu0 0.0
  %2434 = vmatpush1.msra.mxu0 0.0
  %2435 = vmatprep.subr.mxu0 0.0
  %2436 = vmatpush1.msra.mxu0 0.0
  %2437 = vmatprep.subr.mxu0 0.0
  %2438 = vmatpush1.msra.mxu0 0.0
  %2439 = vmatprep.subr.mxu0 0.0
  %2440 = vmatpush1.msra.mxu0 0.0
  %2441 = vmatprep.subr.mxu0 0.0
  %2442 = vmatpush1.msra.mxu0 0.0
  %2443 = vmatprep.subr.mxu0 0.0
  %2444 = vmatpush1.msra.mxu0 0.0
  %2445 = vmatprep.subr.mxu0 0.0
  %2446 = vmatpush1.msra.mxu0 0.0
  %2447 = vmatprep.subr.mxu0 0.0
  %2448 = vmatpush1.msra.mxu0 0.0
  %2449 = vmatprep.subr.mxu0 0.0
  %2450 = vmatpush1.msra.mxu0 0.0
  %2451 = vmatprep.subr.mxu0 0.0
  %2452 = vmatpush1.msra.mxu0 0.0
  %2453 = vmatprep.subr.mxu0 0.0
  %2454 = vmatpush1.msra.mxu0 0.0
  %2455 = vmatprep.subr.mxu0 0.0
  %2456 = vmatpush1.msra.mxu0 0.0
  %2457 = vmatprep.subr.mxu0 0.0
  %2458 = vmatpush1.msra.mxu0 0.0
  %2459 = vmatprep.subr.mxu0 0.0
  %2460 = vmatpush1.msra.mxu0 0.0
  %2461 = vmatprep.subr.mxu0 0.0
  %2462 = vmatpush1.msra.mxu0 0.0
  %2463 = vmatprep.subr.mxu0 0.0
  %2464 = vmatpush1.msra.mxu0 0.0
  %2465 = vmatprep.subr.mxu0 0.0
  %2466 = vmatpush1.msra.mxu0 0.0
  %2467 = vmatprep.subr.mxu0 0.0
  %2468 = vmatpush1.msra.mxu0 0.0
  %2469 = vmatprep.subr.mxu0 0.0
  %2470 = vmatpush1.msra.mxu0 0.0
  %2471 = vmatprep.subr.mxu0 0.0
  %2472 = vmatpush1.msra.mxu0 0.0
  %2473 = vmatprep.subr.mxu0 0.0
  %2474 = vmatpush1.msra.mxu0 0.0
  %2475 = vmatprep.subr.mxu0 0.0
  %2476 = vmatpush1.msra.mxu0 0.0
  %2477 = vmatprep.subr.mxu0 0.0
  %2478 = vmatpush1.msra.mxu0 0.0
  %2479 = vmatprep.subr.mxu0 0.0
  %2480 = vmatpush1.msra.mxu0 0.0
  %2481 = vmatprep.subr.mxu0 0.0
  %2482 = vmatpush1.msra.mxu0 0.0
  %2483 = vmatprep.subr.mxu0 0.0
  %2484 = vmatpush1.msra.mxu0 0.0
  %2485 = vmatprep.subr.mxu0 0.0
  %2486 = vmatpush1.msra.mxu0 0.0
  %2487 = vmatprep.subr.mxu0 0.0
  %2488 = vmatpush1.msra.mxu0 0.0
  %2489 = vmatprep.mubr.f32.mxu0 0.0
  %2490 = vmatmul.mubr.f32.gmra.mrb[0].mxu0 %v2423
  %v2491 = vpop.f32.mrb[0].mxu0
  %v2492 = vadd.f32 0.0, %v2491
  %v2493 = vpop.f32.mrb[0].mxu0
  %2494 = vdwg.mxu0
  %v2495 = vadd.f32 %v2422, %v2492
  %v2496 = vtanh.pop %v2495
  %v2497 = vxor.u32 %v2495, 2147483648
  %v2498 = vmul.f32 %v2497, 1.442695
  %v2499 = vpow.pop %v2498
  %v2500 = vadd.f32 %v2499, 1.0
  %v2501 = vrcp.pop %v2500
  %v2502 = vmul.f32 1.0, %v2501
  %v2503 = vsel %vm462, %v2496, %v2502
  %v2504 = vmul.f32 %v2503, %v2304
  %2506 = vrot.lane.b32.xlu0 %v2503, 64
  %v2507 = vpop.permute.xlu0 %2506
  %v2509 = vmul.f32 %v2503, %v2507
  %2511 = vrot.lane.b32.xlu0 %v2509, 32
  %v2512 = vpop.permute.xlu0 %2511
  %v2514 = vadd.f32 %v2504, %v2512
  %v2515 = vtanh.pop %v2514
  %2517 = vrot.lane.b32.xlu0 %v2515, 64
  %v2518 = vpop.permute.xlu0 %2517
  %v2520 = vmul.f32 %v2503, %v2518
  %2522 = vrot.lane.b32.xlu0 %v2520, 32
  %v2523 = vpop.permute.xlu0 %2522
  %2525 = vst.msk [vmem:[#allocation3 + $0x40] sm:$0xff] %vm491, %v2523
  %v2526 = vld [vmem:[#allocation2 + $0x78] sm:$0xff]
  %2527 = vrot.lane.b32.xlu0 %v2416, 32
  %v2528 = vpop.permute.xlu0 %2527
  %v2529 = vsel %vm491, %v2528, 0
  %2531 = vmatprep.subr.mxu0 0.0
  %2532 = vmatpush1.msra.mxu0 %v475
  %2533 = vmatprep.subr.mxu0 0.0
  %2534 = vmatpush1.msra.mxu0 %v476
  %2535 = vmatprep.subr.mxu0 0.0
  %2536 = vmatpush1.msra.mxu0 %v477
  %2537 = vmatprep.subr.mxu0 0.0
  %2538 = vmatpush1.msra.mxu0 %v478
  %2539 = vmatprep.subr.mxu0 0.0
  %2540 = vmatpush1.msra.mxu0 0.0
  %2541 = vmatprep.subr.mxu0 0.0
  %2542 = vmatpush1.msra.mxu0 0.0
  %2543 = vmatprep.subr.mxu0 0.0
  %2544 = vmatpush1.msra.mxu0 0.0
  %2545 = vmatprep.subr.mxu0 0.0
  %2546 = vmatpush1.msra.mxu0 0.0
  %2547 = vmatprep.subr.mxu0 0.0
  %2548 = vmatpush1.msra.mxu0 0.0
  %2549 = vmatprep.subr.mxu0 0.0
  %2550 = vmatpush1.msra.mxu0 0.0
  %2551 = vmatprep.subr.mxu0 0.0
  %2552 = vmatpush1.msra.mxu0 0.0
  %2553 = vmatprep.subr.mxu0 0.0
  %2554 = vmatpush1.msra.mxu0 0.0
  %2555 = vmatprep.subr.mxu0 0.0
  %2556 = vmatpush1.msra.mxu0 0.0
  %2557 = vmatprep.subr.mxu0 0.0
  %2558 = vmatpush1.msra.mxu0 0.0
  %2559 = vmatprep.subr.mxu0 0.0
  %2560 = vmatpush1.msra.mxu0 0.0
  %2561 = vmatprep.subr.mxu0 0.0
  %2562 = vmatpush1.msra.mxu0 0.0
  %2563 = vmatprep.subr.mxu0 0.0
  %2564 = vmatpush1.msra.mxu0 0.0
  %2565 = vmatprep.subr.mxu0 0.0
  %2566 = vmatpush1.msra.mxu0 0.0
  %2567 = vmatprep.subr.mxu0 0.0
  %2568 = vmatpush1.msra.mxu0 0.0
  %2569 = vmatprep.subr.mxu0 0.0
  %2570 = vmatpush1.msra.mxu0 0.0
  %2571 = vmatprep.subr.mxu0 0.0
  %2572 = vmatpush1.msra.mxu0 0.0
  %2573 = vmatprep.subr.mxu0 0.0
  %2574 = vmatpush1.msra.mxu0 0.0
  %2575 = vmatprep.subr.mxu0 0.0
  %2576 = vmatpush1.msra.mxu0 0.0
  %2577 = vmatprep.subr.mxu0 0.0
  %2578 = vmatpush1.msra.mxu0 0.0
  %2579 = vmatprep.subr.mxu0 0.0
  %2580 = vmatpush1.msra.mxu0 0.0
  %2581 = vmatprep.subr.mxu0 0.0
  %2582 = vmatpush1.msra.mxu0 0.0
  %2583 = vmatprep.subr.mxu0 0.0
  %2584 = vmatpush1.msra.mxu0 0.0
  %2585 = vmatprep.subr.mxu0 0.0
  %2586 = vmatpush1.msra.mxu0 0.0
  %2587 = vmatprep.subr.mxu0 0.0
  %2588 = vmatpush1.msra.mxu0 0.0
  %2589 = vmatprep.subr.mxu0 0.0
  %2590 = vmatpush1.msra.mxu0 0.0
  %2591 = vmatprep.subr.mxu0 0.0
  %2592 = vmatpush1.msra.mxu0 0.0
  %2593 = vmatprep.subr.mxu0 0.0
  %2594 = vmatpush1.msra.mxu0 0.0
  %2595 = vmatprep.mubr.f32.mxu0 0.0
  %2596 = vmatmul.mubr.f32.gmra.mrb[0].mxu0 %v2529
  %v2597 = vpop.f32.mrb[0].mxu0
  %v2598 = vadd.f32 0.0, %v2597
  %v2599 = vpop.f32.mrb[0].mxu0
  %2600 = vdwg.mxu0
  %v2601 = vadd.f32 %v2526, %v2598
  %v2602 = vtanh.pop %v2601
  %v2603 = vxor.u32 %v2601, 2147483648
  %v2604 = vmul.f32 %v2603, 1.442695
  %v2605 = vpow.pop %v2604
  %v2606 = vadd.f32 %v2605, 1.0
  %v2607 = vrcp.pop %v2606
  %v2608 = vmul.f32 1.0, %v2607
  %v2609 = vsel %vm462, %v2602, %v2608
  %v2610 = vmul.f32 %v2609, %v2410
  %2612 = vrot.lane.b32.xlu0 %v2609, 64
  %v2613 = vpop.permute.xlu0 %2612
  %v2615 = vmul.f32 %v2609, %v2613
  %2617 = vrot.lane.b32.xlu0 %v2615, 32
  %v2618 = vpop.permute.xlu0 %2617
  %v2620 = vadd.f32 %v2610, %v2618
  %v2621 = vtanh.pop %v2620
  %2623 = vrot.lane.b32.xlu0 %v2621, 64
  %v2624 = vpop.permute.xlu0 %2623
  %v2626 = vmul.f32 %v2609, %v2624
  %2628 = vrot.lane.b32.xlu0 %v2626, 64
  %v2629 = vpop.permute.xlu0 %2628
  %2631 = vst.msk [vmem:[#allocation3 + $0x38] sm:$0xff] %vm950, %v2629
  %v2632 = vld [vmem:[#allocation2 + $0x90] sm:$0xff]
  %v2633 = vsel %vm491, %v2523, 0
  %2635 = vmatprep.subr.mxu0 0.0
  %2636 = vmatpush1.msra.mxu0 %v471
  %2637 = vmatprep.subr.mxu0 0.0
  %2638 = vmatpush1.msra.mxu0 %v472
  %2639 = vmatprep.subr.mxu0 0.0
  %2640 = vmatpush1.msra.mxu0 %v473
  %2641 = vmatprep.subr.mxu0 0.0
  %2642 = vmatpush1.msra.mxu0 %v474
  %2643 = vmatprep.subr.mxu0 0.0
  %2644 = vmatpush1.msra.mxu0 0.0
  %2645 = vmatprep.subr.mxu0 0.0
  %2646 = vmatpush1.msra.mxu0 0.0
  %2647 = vmatprep.subr.mxu0 0.0
  %2648 = vmatpush1.msra.mxu0 0.0
  %2649 = vmatprep.subr.mxu0 0.0
  %2650 = vmatpush1.msra.mxu0 0.0
  %2651 = vmatprep.subr.mxu0 0.0
  %2652 = vmatpush1.msra.mxu0 0.0
  %2653 = vmatprep.subr.mxu0 0.0
  %2654 = vmatpush1.msra.mxu0 0.0
  %2655 = vmatprep.subr.mxu0 0.0
  %2656 = vmatpush1.msra.mxu0 0.0
  %2657 = vmatprep.subr.mxu0 0.0
  %2658 = vmatpush1.msra.mxu0 0.0
  %2659 = vmatprep.subr.mxu0 0.0
  %2660 = vmatpush1.msra.mxu0 0.0
  %2661 = vmatprep.subr.mxu0 0.0
  %2662 = vmatpush1.msra.mxu0 0.0
  %2663 = vmatprep.subr.mxu0 0.0
  %2664 = vmatpush1.msra.mxu0 0.0
  %2665 = vmatprep.subr.mxu0 0.0
  %2666 = vmatpush1.msra.mxu0 0.0
  %2667 = vmatprep.subr.mxu0 0.0
  %2668 = vmatpush1.msra.mxu0 0.0
  %2669 = vmatprep.subr.mxu0 0.0
  %2670 = vmatpush1.msra.mxu0 0.0
  %2671 = vmatprep.subr.mxu0 0.0
  %2672 = vmatpush1.msra.mxu0 0.0
  %2673 = vmatprep.subr.mxu0 0.0
  %2674 = vmatpush1.msra.mxu0 0.0
  %2675 = vmatprep.subr.mxu0 0.0
  %2676 = vmatpush1.msra.mxu0 0.0
  %2677 = vmatprep.subr.mxu0 0.0
  %2678 = vmatpush1.msra.mxu0 0.0
  %2679 = vmatprep.subr.mxu0 0.0
  %2680 = vmatpush1.msra.mxu0 0.0
  %2681 = vmatprep.subr.mxu0 0.0
  %2682 = vmatpush1.msra.mxu0 0.0
  %2683 = vmatprep.subr.mxu0 0.0
  %2684 = vmatpush1.msra.mxu0 0.0
  %2685 = vmatprep.subr.mxu0 0.0
  %2686 = vmatpush1.msra.mxu0 0.0
  %2687 = vmatprep.subr.mxu0 0.0
  %2688 = vmatpush1.msra.mxu0 0.0
  %2689 = vmatprep.subr.mxu0 0.0
  %2690 = vmatpush1.msra.mxu0 0.0
  %2691 = vmatprep.subr.mxu0 0.0
  %2692 = vmatpush1.msra.mxu0 0.0
  %2693 = vmatprep.subr.mxu0 0.0
  %2694 = vmatpush1.msra.mxu0 0.0
  %2695 = vmatprep.subr.mxu0 0.0
  %2696 = vmatpush1.msra.mxu0 0.0
  %2697 = vmatprep.subr.mxu0 0.0
  %2698 = vmatpush1.msra.mxu0 0.0
  %2699 = vmatprep.mubr.f32.mxu0 0.0
  %2700 = vmatmul.mubr.f32.gmra.mrb[0].mxu0 %v2633
  %v2701 = vpop.f32.mrb[0].mxu0
  %v2702 = vadd.f32 0.0, %v2701
  %v2703 = vpop.f32.mrb[0].mxu0
  %2704 = vdwg.mxu0
  %v2705 = vadd.f32 %v2632, %v2702
  %v2706 = vtanh.pop %v2705
  %v2707 = vxor.u32 %v2705, 2147483648
  %v2708 = vmul.f32 %v2707, 1.442695
  %v2709 = vpow.pop %v2708
  %v2710 = vadd.f32 %v2709, 1.0
  %v2711 = vrcp.pop %v2710
  %v2712 = vmul.f32 1.0, %v2711
  %v2713 = vsel %vm462, %v2706, %v2712
  %v2714 = vmul.f32 %v2713, %v2514
  %2716 = vrot.lane.b32.xlu0 %v2713, 64
  %v2717 = vpop.permute.xlu0 %2716
  %v2719 = vmul.f32 %v2713, %v2717
  %2721 = vrot.lane.b32.xlu0 %v2719, 32
  %v2722 = vpop.permute.xlu0 %2721
  %v2724 = vadd.f32 %v2714, %v2722
  %v2725 = vtanh.pop %v2724
  %2727 = vrot.lane.b32.xlu0 %v2725, 64
  %v2728 = vpop.permute.xlu0 %2727
  %v2730 = vmul.f32 %v2713, %v2728
  %2732 = vrot.lane.b32.xlu0 %v2730, 32
  %v2733 = vpop.permute.xlu0 %2732
  %2735 = vst.msk [vmem:[#allocation3 + $0x48] sm:$0xff] %vm491, %v2733
  %v2736 = vld [vmem:[#allocation2 + $0x68] sm:$0xff]
  %2737 = vrot.lane.b32.xlu0 %v2626, 32
  %v2738 = vpop.permute.xlu0 %2737
  %v2739 = vsel %vm491, %v2738, 0
  %2741 = vmatprep.subr.mxu0 0.0
  %2742 = vmatpush1.msra.mxu0 %v475
  %2743 = vmatprep.subr.mxu0 0.0
  %2744 = vmatpush1.msra.mxu0 %v476
  %2745 = vmatprep.subr.mxu0 0.0
  %2746 = vmatpush1.msra.mxu0 %v477
  %2747 = vmatprep.subr.mxu0 0.0
  %2748 = vmatpush1.msra.mxu0 %v478
  %2749 = vmatprep.subr.mxu0 0.0
  %2750 = vmatpush1.msra.mxu0 0.0
  %2751 = vmatprep.subr.mxu0 0.0
  %2752 = vmatpush1.msra.mxu0 0.0
  %2753 = vmatprep.subr.mxu0 0.0
  %2754 = vmatpush1.msra.mxu0 0.0
  %2755 = vmatprep.subr.mxu0 0.0
  %2756 = vmatpush1.msra.mxu0 0.0
  %2757 = vmatprep.subr.mxu0 0.0
  %2758 = vmatpush1.msra.mxu0 0.0
  %2759 = vmatprep.subr.mxu0 0.0
  %2760 = vmatpush1.msra.mxu0 0.0
  %2761 = vmatprep.subr.mxu0 0.0
  %2762 = vmatpush1.msra.mxu0 0.0
  %2763 = vmatprep.subr.mxu0 0.0
  %2764 = vmatpush1.msra.mxu0 0.0
  %2765 = vmatprep.subr.mxu0 0.0
  %2766 = vmatpush1.msra.mxu0 0.0
  %2767 = vmatprep.subr.mxu0 0.0
  %2768 = vmatpush1.msra.mxu0 0.0
  %2769 = vmatprep.subr.mxu0 0.0
  %2770 = vmatpush1.msra.mxu0 0.0
  %2771 = vmatprep.subr.mxu0 0.0
  %2772 = vmatpush1.msra.mxu0 0.0
  %2773 = vmatprep.subr.mxu0 0.0
  %2774 = vmatpush1.msra.mxu0 0.0
  %2775 = vmatprep.subr.mxu0 0.0
  %2776 = vmatpush1.msra.mxu0 0.0
  %2777 = vmatprep.subr.mxu0 0.0
  %2778 = vmatpush1.msra.mxu0 0.0
  %2779 = vmatprep.subr.mxu0 0.0
  %2780 = vmatpush1.msra.mxu0 0.0
  %2781 = vmatprep.subr.mxu0 0.0
  %2782 = vmatpush1.msra.mxu0 0.0
  %2783 = vmatprep.subr.mxu0 0.0
  %2784 = vmatpush1.msra.mxu0 0.0
  %2785 = vmatprep.subr.mxu0 0.0
  %2786 = vmatpush1.msra.mxu0 0.0
  %2787 = vmatprep.subr.mxu0 0.0
  %2788 = vmatpush1.msra.mxu0 0.0
  %2789 = vmatprep.subr.mxu0 0.0
  %2790 = vmatpush1.msra.mxu0 0.0
  %2791 = vmatprep.subr.mxu0 0.0
  %2792 = vmatpush1.msra.mxu0 0.0
  %2793 = vmatprep.subr.mxu0 0.0
  %2794 = vmatpush1.msra.mxu0 0.0
  %2795 = vmatprep.subr.mxu0 0.0
  %2796 = vmatpush1.msra.mxu0 0.0
  %2797 = vmatprep.subr.mxu0 0.0
  %2798 = vmatpush1.msra.mxu0 0.0
  %2799 = vmatprep.subr.mxu0 0.0
  %2800 = vmatpush1.msra.mxu0 0.0
  %2801 = vmatprep.subr.mxu0 0.0
  %2802 = vmatpush1.msra.mxu0 0.0
  %2803 = vmatprep.subr.mxu0 0.0
  %2804 = vmatpush1.msra.mxu0 0.0
  %2805 = vmatprep.mubr.f32.mxu0 0.0
  %2806 = vmatmul.mubr.f32.gmra.mrb[0].mxu0 %v2739
  %v2807 = vpop.f32.mrb[0].mxu0
  %v2808 = vadd.f32 0.0, %v2807
  %v2809 = vpop.f32.mrb[0].mxu0
  %2810 = vdwg.mxu0
  %v2811 = vadd.f32 %v2736, %v2808
  %v2812 = vtanh.pop %v2811
  %v2813 = vxor.u32 %v2811, 2147483648
  %v2814 = vmul.f32 %v2813, 1.442695
  %v2815 = vpow.pop %v2814
  %v2816 = vadd.f32 %v2815, 1.0
  %v2817 = vrcp.pop %v2816
  %v2818 = vmul.f32 1.0, %v2817
  %v2819 = vsel %vm462, %v2812, %v2818
  %v2820 = vmul.f32 %v2819, %v2620
  %2822 = vrot.lane.b32.xlu0 %v2819, 64
  %v2823 = vpop.permute.xlu0 %2822
  %v2825 = vmul.f32 %v2819, %v2823
  %2827 = vrot.lane.b32.xlu0 %v2825, 32
  %v2828 = vpop.permute.xlu0 %2827
  %v2830 = vadd.f32 %v2820, %v2828
  %v2831 = vtanh.pop %v2830
  %2833 = vrot.lane.b32.xlu0 %v2831, 64
  %v2834 = vpop.permute.xlu0 %2833
  %v2836 = vmul.f32 %v2819, %v2834
  %2838 = vrot.lane.b32.xlu0 %v2836, 64
  %v2839 = vpop.permute.xlu0 %2838
  %2841 = vst.msk [vmem:[#allocation3 + $0x30] sm:$0xff] %vm950, %v2839
  %v2842 = vld [vmem:[#allocation2 + $0xa0] sm:$0xff]
  %v2843 = vsel %vm491, %v2733, 0
  %2845 = vmatprep.subr.mxu0 0.0
  %2846 = vmatpush1.msra.mxu0 %v471
  %2847 = vmatprep.subr.mxu0 0.0
  %2848 = vmatpush1.msra.mxu0 %v472
  %2849 = vmatprep.subr.mxu0 0.0
  %2850 = vmatpush1.msra.mxu0 %v473
  %2851 = vmatprep.subr.mxu0 0.0
  %2852 = vmatpush1.msra.mxu0 %v474
  %2853 = vmatprep.subr.mxu0 0.0
  %2854 = vmatpush1.msra.mxu0 0.0
  %2855 = vmatprep.subr.mxu0 0.0
  %2856 = vmatpush1.msra.mxu0 0.0
  %2857 = vmatprep.subr.mxu0 0.0
  %2858 = vmatpush1.msra.mxu0 0.0
  %2859 = vmatprep.subr.mxu0 0.0
  %2860 = vmatpush1.msra.mxu0 0.0
  %2861 = vmatprep.subr.mxu0 0.0
  %2862 = vmatpush1.msra.mxu0 0.0
  %2863 = vmatprep.subr.mxu0 0.0
  %2864 = vmatpush1.msra.mxu0 0.0
  %2865 = vmatprep.subr.mxu0 0.0
  %2866 = vmatpush1.msra.mxu0 0.0
  %2867 = vmatprep.subr.mxu0 0.0
  %2868 = vmatpush1.msra.mxu0 0.0
  %2869 = vmatprep.subr.mxu0 0.0
  %2870 = vmatpush1.msra.mxu0 0.0
  %2871 = vmatprep.subr.mxu0 0.0
  %2872 = vmatpush1.msra.mxu0 0.0
  %2873 = vmatprep.subr.mxu0 0.0
  %2874 = vmatpush1.msra.mxu0 0.0
  %2875 = vmatprep.subr.mxu0 0.0
  %2876 = vmatpush1.msra.mxu0 0.0
  %2877 = vmatprep.subr.mxu0 0.0
  %2878 = vmatpush1.msra.mxu0 0.0
  %2879 = vmatprep.subr.mxu0 0.0
  %2880 = vmatpush1.msra.mxu0 0.0
  %2881 = vmatprep.subr.mxu0 0.0
  %2882 = vmatpush1.msra.mxu0 0.0
  %2883 = vmatprep.subr.mxu0 0.0
  %2884 = vmatpush1.msra.mxu0 0.0
  %2885 = vmatprep.subr.mxu0 0.0
  %2886 = vmatpush1.msra.mxu0 0.0
  %2887 = vmatprep.subr.mxu0 0.0
  %2888 = vmatpush1.msra.mxu0 0.0
  %2889 = vmatprep.subr.mxu0 0.0
  %2890 = vmatpush1.msra.mxu0 0.0
  %2891 = vmatprep.subr.mxu0 0.0
  %2892 = vmatpush1.msra.mxu0 0.0
  %2893 = vmatprep.subr.mxu0 0.0
  %2894 = vmatpush1.msra.mxu0 0.0
  %2895 = vmatprep.subr.mxu0 0.0
  %2896 = vmatpush1.msra.mxu0 0.0
  %2897 = vmatprep.subr.mxu0 0.0
  %2898 = vmatpush1.msra.mxu0 0.0
  %2899 = vmatprep.subr.mxu0 0.0
  %2900 = vmatpush1.msra.mxu0 0.0
  %2901 = vmatprep.subr.mxu0 0.0
  %2902 = vmatpush1.msra.mxu0 0.0
  %2903 = vmatprep.subr.mxu0 0.0
  %2904 = vmatpush1.msra.mxu0 0.0
  %2905 = vmatprep.subr.mxu0 0.0
  %2906 = vmatpush1.msra.mxu0 0.0
  %2907 = vmatprep.subr.mxu0 0.0
  %2908 = vmatpush1.msra.mxu0 0.0
  %2909 = vmatprep.mubr.f32.mxu0 0.0
  %2910 = vmatmul.mubr.f32.gmra.mrb[0].mxu0 %v2843
  %v2911 = vpop.f32.mrb[0].mxu0
  %v2912 = vadd.f32 0.0, %v2911
  %v2913 = vpop.f32.mrb[0].mxu0
  %2914 = vdwg.mxu0
  %v2915 = vadd.f32 %v2842, %v2912
  %v2916 = vtanh.pop %v2915
  %v2917 = vxor.u32 %v2915, 2147483648
  %v2918 = vmul.f32 %v2917, 1.442695
  %v2919 = vpow.pop %v2918
  %v2920 = vadd.f32 %v2919, 1.0
  %v2921 = vrcp.pop %v2920
  %v2922 = vmul.f32 1.0, %v2921
  %v2923 = vsel %vm462, %v2916, %v2922
  %v2924 = vmul.f32 %v2923, %v2724
  %2926 = vrot.lane.b32.xlu0 %v2923, 64
  %v2927 = vpop.permute.xlu0 %2926
  %v2929 = vmul.f32 %v2923, %v2927
  %2931 = vrot.lane.b32.xlu0 %v2929, 32
  %v2932 = vpop.permute.xlu0 %2931
  %v2934 = vadd.f32 %v2924, %v2932
  %v2935 = vtanh.pop %v2934
  %2937 = vrot.lane.b32.xlu0 %v2935, 64
  %v2938 = vpop.permute.xlu0 %2937
  %v2940 = vmul.f32 %v2923, %v2938
  %2942 = vrot.lane.b32.xlu0 %v2940, 32
  %v2943 = vpop.permute.xlu0 %2942
  %2945 = vst.msk [vmem:[#allocation3 + $0x50] sm:$0xff] %vm491, %v2943
  %v2946 = vld [vmem:[#allocation2 + $0x58] sm:$0xff]
  %2947 = vrot.lane.b32.xlu0 %v2836, 32
  %v2948 = vpop.permute.xlu0 %2947
  %v2949 = vsel %vm491, %v2948, 0
  %2951 = vmatprep.subr.mxu0 0.0
  %2952 = vmatpush1.msra.mxu0 %v475
  %2953 = vmatprep.subr.mxu0 0.0
  %2954 = vmatpush1.msra.mxu0 %v476
  %2955 = vmatprep.subr.mxu0 0.0
  %2956 = vmatpush1.msra.mxu0 %v477
  %2957 = vmatprep.subr.mxu0 0.0
  %2958 = vmatpush1.msra.mxu0 %v478
  %2959 = vmatprep.subr.mxu0 0.0
  %2960 = vmatpush1.msra.mxu0 0.0
  %2961 = vmatprep.subr.mxu0 0.0
  %2962 = vmatpush1.msra.mxu0 0.0
  %2963 = vmatprep.subr.mxu0 0.0
  %2964 = vmatpush1.msra.mxu0 0.0
  %2965 = vmatprep.subr.mxu0 0.0
  %2966 = vmatpush1.msra.mxu0 0.0
  %2967 = vmatprep.subr.mxu0 0.0
  %2968 = vmatpush1.msra.mxu0 0.0
  %2969 = vmatprep.subr.mxu0 0.0
  %2970 = vmatpush1.msra.mxu0 0.0
  %2971 = vmatprep.subr.mxu0 0.0
  %2972 = vmatpush1.msra.mxu0 0.0
  %2973 = vmatprep.subr.mxu0 0.0
  %2974 = vmatpush1.msra.mxu0 0.0
  %2975 = vmatprep.subr.mxu0 0.0
  %2976 = vmatpush1.msra.mxu0 0.0
  %2977 = vmatprep.subr.mxu0 0.0
  %2978 = vmatpush1.msra.mxu0 0.0
  %2979 = vmatprep.subr.mxu0 0.0
  %2980 = vmatpush1.msra.mxu0 0.0
  %2981 = vmatprep.subr.mxu0 0.0
  %2982 = vmatpush1.msra.mxu0 0.0
  %2983 = vmatprep.subr.mxu0 0.0
  %2984 = vmatpush1.msra.mxu0 0.0
  %2985 = vmatprep.subr.mxu0 0.0
  %2986 = vmatpush1.msra.mxu0 0.0
  %2987 = vmatprep.subr.mxu0 0.0
  %2988 = vmatpush1.msra.mxu0 0.0
  %2989 = vmatprep.subr.mxu0 0.0
  %2990 = vmatpush1.msra.mxu0 0.0
  %2991 = vmatprep.subr.mxu0 0.0
  %2992 = vmatpush1.msra.mxu0 0.0
  %2993 = vmatprep.subr.mxu0 0.0
  %2994 = vmatpush1.msra.mxu0 0.0
  %2995 = vmatprep.subr.mxu0 0.0
  %2996 = vmatpush1.msra.mxu0 0.0
  %2997 = vmatprep.subr.mxu0 0.0
  %2998 = vmatpush1.msra.mxu0 0.0
  %2999 = vmatprep.subr.mxu0 0.0
  %3000 = vmatpush1.msra.mxu0 0.0
  %3001 = vmatprep.subr.mxu0 0.0
  %3002 = vmatpush1.msra.mxu0 0.0
  %3003 = vmatprep.subr.mxu0 0.0
  %3004 = vmatpush1.msra.mxu0 0.0
  %3005 = vmatprep.subr.mxu0 0.0
  %3006 = vmatpush1.msra.mxu0 0.0
  %3007 = vmatprep.subr.mxu0 0.0
  %3008 = vmatpush1.msra.mxu0 0.0
  %3009 = vmatprep.subr.mxu0 0.0
  %3010 = vmatpush1.msra.mxu0 0.0
  %3011 = vmatprep.subr.mxu0 0.0
  %3012 = vmatpush1.msra.mxu0 0.0
  %3013 = vmatprep.subr.mxu0 0.0
  %3014 = vmatpush1.msra.mxu0 0.0
  %3015 = vmatprep.mubr.f32.mxu0 0.0
  %3016 = vmatmul.mubr.f32.gmra.mrb[0].mxu0 %v2949
  %v3017 = vpop.f32.mrb[0].mxu0
  %v3018 = vadd.f32 0.0, %v3017
  %v3019 = vpop.f32.mrb[0].mxu0
  %3020 = vdwg.mxu0
  %v3021 = vadd.f32 %v2946, %v3018
  %v3022 = vtanh.pop %v3021
  %v3023 = vxor.u32 %v3021, 2147483648
  %v3024 = vmul.f32 %v3023, 1.442695
  %v3025 = vpow.pop %v3024
  %v3026 = vadd.f32 %v3025, 1.0
  %v3027 = vrcp.pop %v3026
  %v3028 = vmul.f32 1.0, %v3027
  %v3029 = vsel %vm462, %v3022, %v3028
  %v3030 = vmul.f32 %v3029, %v2830
  %3032 = vrot.lane.b32.xlu0 %v3029, 64
  %v3033 = vpop.permute.xlu0 %3032
  %v3035 = vmul.f32 %v3029, %v3033
  %3037 = vrot.lane.b32.xlu0 %v3035, 32
  %v3038 = vpop.permute.xlu0 %3037
  %v3040 = vadd.f32 %v3030, %v3038
  %v3041 = vtanh.pop %v3040
  %3043 = vrot.lane.b32.xlu0 %v3041, 64
  %v3044 = vpop.permute.xlu0 %3043
  %v3046 = vmul.f32 %v3029, %v3044
  %3048 = vrot.lane.b32.xlu0 %v3046, 64
  %v3049 = vpop.permute.xlu0 %3048
  %3051 = vst.msk [vmem:[#allocation3 + $0x28] sm:$0xff] %vm950, %v3049
  %v3052 = vld [vmem:[#allocation2 + $0xb0] sm:$0xff]
  %v3053 = vsel %vm491, %v2943, 0
  %3055 = vmatprep.subr.mxu0 0.0
  %3056 = vmatpush1.msra.mxu0 %v471
  %3057 = vmatprep.subr.mxu0 0.0
  %3058 = vmatpush1.msra.mxu0 %v472
  %3059 = vmatprep.subr.mxu0 0.0
  %3060 = vmatpush1.msra.mxu0 %v473
  %3061 = vmatprep.subr.mxu0 0.0
  %3062 = vmatpush1.msra.mxu0 %v474
  %3063 = vmatprep.subr.mxu0 0.0
  %3064 = vmatpush1.msra.mxu0 0.0
  %3065 = vmatprep.subr.mxu0 0.0
  %3066 = vmatpush1.msra.mxu0 0.0
  %3067 = vmatprep.subr.mxu0 0.0
  %3068 = vmatpush1.msra.mxu0 0.0
  %3069 = vmatprep.subr.mxu0 0.0
  %3070 = vmatpush1.msra.mxu0 0.0
  %3071 = vmatprep.subr.mxu0 0.0
  %3072 = vmatpush1.msra.mxu0 0.0
  %3073 = vmatprep.subr.mxu0 0.0
  %3074 = vmatpush1.msra.mxu0 0.0
  %3075 = vmatprep.subr.mxu0 0.0
  %3076 = vmatpush1.msra.mxu0 0.0
  %3077 = vmatprep.subr.mxu0 0.0
  %3078 = vmatpush1.msra.mxu0 0.0
  %3079 = vmatprep.subr.mxu0 0.0
  %3080 = vmatpush1.msra.mxu0 0.0
  %3081 = vmatprep.subr.mxu0 0.0
  %3082 = vmatpush1.msra.mxu0 0.0
  %3083 = vmatprep.subr.mxu0 0.0
  %3084 = vmatpush1.msra.mxu0 0.0
  %3085 = vmatprep.subr.mxu0 0.0
  %3086 = vmatpush1.msra.mxu0 0.0
  %3087 = vmatprep.subr.mxu0 0.0
  %3088 = vmatpush1.msra.mxu0 0.0
  %3089 = vmatprep.subr.mxu0 0.0
  %3090 = vmatpush1.msra.mxu0 0.0
  %3091 = vmatprep.subr.mxu0 0.0
  %3092 = vmatpush1.msra.mxu0 0.0
  %3093 = vmatprep.subr.mxu0 0.0
  %3094 = vmatpush1.msra.mxu0 0.0
  %3095 = vmatprep.subr.mxu0 0.0
  %3096 = vmatpush1.msra.mxu0 0.0
  %3097 = vmatprep.subr.mxu0 0.0
  %3098 = vmatpush1.msra.mxu0 0.0
  %3099 = vmatprep.subr.mxu0 0.0
  %3100 = vmatpush1.msra.mxu0 0.0
  %3101 = vmatprep.subr.mxu0 0.0
  %3102 = vmatpush1.msra.mxu0 0.0
  %3103 = vmatprep.subr.mxu0 0.0
  %3104 = vmatpush1.msra.mxu0 0.0
  %3105 = vmatprep.subr.mxu0 0.0
  %3106 = vmatpush1.msra.mxu0 0.0
  %3107 = vmatprep.subr.mxu0 0.0
  %3108 = vmatpush1.msra.mxu0 0.0
  %3109 = vmatprep.subr.mxu0 0.0
  %3110 = vmatpush1.msra.mxu0 0.0
  %3111 = vmatprep.subr.mxu0 0.0
  %3112 = vmatpush1.msra.mxu0 0.0
  %3113 = vmatprep.subr.mxu0 0.0
  %3114 = vmatpush1.msra.mxu0 0.0
  %3115 = vmatprep.subr.mxu0 0.0
  %3116 = vmatpush1.msra.mxu0 0.0
  %3117 = vmatprep.subr.mxu0 0.0
  %3118 = vmatpush1.msra.mxu0 0.0
  %3119 = vmatprep.mubr.f32.mxu0 0.0
  %3120 = vmatmul.mubr.f32.gmra.mrb[0].mxu0 %v3053
  %v3121 = vpop.f32.mrb[0].mxu0
  %v3122 = vadd.f32 0.0, %v3121
  %v3123 = vpop.f32.mrb[0].mxu0
  %3124 = vdwg.mxu0
  %v3125 = vadd.f32 %v3052, %v3122
  %v3126 = vtanh.pop %v3125
  %v3127 = vxor.u32 %v3125, 2147483648
  %v3128 = vmul.f32 %v3127, 1.442695
  %v3129 = vpow.pop %v3128
  %v3130 = vadd.f32 %v3129, 1.0
  %v3131 = vrcp.pop %v3130
  %v3132 = vmul.f32 1.0, %v3131
  %v3133 = vsel %vm462, %v3126, %v3132
  %v3134 = vmul.f32 %v3133, %v2934
  %3136 = vrot.lane.b32.xlu0 %v3133, 64
  %v3137 = vpop.permute.xlu0 %3136
  %v3139 = vmul.f32 %v3133, %v3137
  %3141 = vrot.lane.b32.xlu0 %v3139, 32
  %v3142 = vpop.permute.xlu0 %3141
  %v3144 = vadd.f32 %v3134, %v3142
  %v3145 = vtanh.pop %v3144
  %3147 = vrot.lane.b32.xlu0 %v3145, 64
  %v3148 = vpop.permute.xlu0 %3147
  %v3150 = vmul.f32 %v3133, %v3148
  %3152 = vrot.lane.b32.xlu0 %v3150, 32
  %v3153 = vpop.permute.xlu0 %3152
  %3155 = vst.msk [vmem:[#allocation3 + $0x58] sm:$0xff] %vm491, %v3153
  %v3156 = vld [vmem:[#allocation2 + $0x48] sm:$0xff]
  %3157 = vrot.lane.b32.xlu0 %v3046, 32
  %v3158 = vpop.permute.xlu0 %3157
  %v3159 = vsel %vm491, %v3158, 0
  %3161 = vmatprep.subr.mxu0 0.0
  %3162 = vmatpush1.msra.mxu0 %v475
  %3163 = vmatprep.subr.mxu0 0.0
  %3164 = vmatpush1.msra.mxu0 %v476
  %3165 = vmatprep.subr.mxu0 0.0
  %3166 = vmatpush1.msra.mxu0 %v477
  %3167 = vmatprep.subr.mxu0 0.0
  %3168 = vmatpush1.msra.mxu0 %v478
  %3169 = vmatprep.subr.mxu0 0.0
  %3170 = vmatpush1.msra.mxu0 0.0
  %3171 = vmatprep.subr.mxu0 0.0
  %3172 = vmatpush1.msra.mxu0 0.0
  %3173 = vmatprep.subr.mxu0 0.0
  %3174 = vmatpush1.msra.mxu0 0.0
  %3175 = vmatprep.subr.mxu0 0.0
  %3176 = vmatpush1.msra.mxu0 0.0
  %3177 = vmatprep.subr.mxu0 0.0
  %3178 = vmatpush1.msra.mxu0 0.0
  %3179 = vmatprep.subr.mxu0 0.0
  %3180 = vmatpush1.msra.mxu0 0.0
  %3181 = vmatprep.subr.mxu0 0.0
  %3182 = vmatpush1.msra.mxu0 0.0
  %3183 = vmatprep.subr.mxu0 0.0
  %3184 = vmatpush1.msra.mxu0 0.0
  %3185 = vmatprep.subr.mxu0 0.0
  %3186 = vmatpush1.msra.mxu0 0.0
  %3187 = vmatprep.subr.mxu0 0.0
  %3188 = vmatpush1.msra.mxu0 0.0
  %3189 = vmatprep.subr.mxu0 0.0
  %3190 = vmatpush1.msra.mxu0 0.0
  %3191 = vmatprep.subr.mxu0 0.0
  %3192 = vmatpush1.msra.mxu0 0.0
  %3193 = vmatprep.subr.mxu0 0.0
  %3194 = vmatpush1.msra.mxu0 0.0
  %3195 = vmatprep.subr.mxu0 0.0
  %3196 = vmatpush1.msra.mxu0 0.0
  %3197 = vmatprep.subr.mxu0 0.0
  %3198 = vmatpush1.msra.mxu0 0.0
  %3199 = vmatprep.subr.mxu0 0.0
  %3200 = vmatpush1.msra.mxu0 0.0
  %3201 = vmatprep.subr.mxu0 0.0
  %3202 = vmatpush1.msra.mxu0 0.0
  %3203 = vmatprep.subr.mxu0 0.0
  %3204 = vmatpush1.msra.mxu0 0.0
  %3205 = vmatprep.subr.mxu0 0.0
  %3206 = vmatpush1.msra.mxu0 0.0
  %3207 = vmatprep.subr.mxu0 0.0
  %3208 = vmatpush1.msra.mxu0 0.0
  %3209 = vmatprep.subr.mxu0 0.0
  %3210 = vmatpush1.msra.mxu0 0.0
  %3211 = vmatprep.subr.mxu0 0.0
  %3212 = vmatpush1.msra.mxu0 0.0
  %3213 = vmatprep.subr.mxu0 0.0
  %3214 = vmatpush1.msra.mxu0 0.0
  %3215 = vmatprep.subr.mxu0 0.0
  %3216 = vmatpush1.msra.mxu0 0.0
  %3217 = vmatprep.subr.mxu0 0.0
  %3218 = vmatpush1.msra.mxu0 0.0
  %3219 = vmatprep.subr.mxu0 0.0
  %3220 = vmatpush1.msra.mxu0 0.0
  %3221 = vmatprep.subr.mxu0 0.0
  %3222 = vmatpush1.msra.mxu0 0.0
  %3223 = vmatprep.subr.mxu0 0.0
  %3224 = vmatpush1.msra.mxu0 0.0
  %3225 = vmatprep.mubr.f32.mxu0 0.0
  %3226 = vmatmul.mubr.f32.gmra.mrb[0].mxu0 %v3159
  %v3227 = vpop.f32.mrb[0].mxu0
  %v3228 = vadd.f32 0.0, %v3227
  %v3229 = vpop.f32.mrb[0].mxu0
  %3230 = vdwg.mxu0
  %v3231 = vadd.f32 %v3156, %v3228
  %v3232 = vtanh.pop %v3231
  %v3233 = vxor.u32 %v3231, 2147483648
  %v3234 = vmul.f32 %v3233, 1.442695
  %v3235 = vpow.pop %v3234
  %v3236 = vadd.f32 %v3235, 1.0
  %v3237 = vrcp.pop %v3236
  %v3238 = vmul.f32 1.0, %v3237
  %v3239 = vsel %vm462, %v3232, %v3238
  %v3240 = vmul.f32 %v3239, %v3040
  %3242 = vrot.lane.b32.xlu0 %v3239, 64
  %v3243 = vpop.permute.xlu0 %3242
  %v3245 = vmul.f32 %v3239, %v3243
  %3247 = vrot.lane.b32.xlu0 %v3245, 32
  %v3248 = vpop.permute.xlu0 %3247
  %v3250 = vadd.f32 %v3240, %v3248
  %v3251 = vtanh.pop %v3250
  %3253 = vrot.lane.b32.xlu0 %v3251, 64
  %v3254 = vpop.permute.xlu0 %3253
  %v3256 = vmul.f32 %v3239, %v3254
  %3258 = vrot.lane.b32.xlu0 %v3256, 64
  %v3259 = vpop.permute.xlu0 %3258
  %3261 = vst.msk [vmem:[#allocation3 + $0x20] sm:$0xff] %vm950, %v3259
  %v3262 = vld [vmem:[#allocation2 + $0xc0] sm:$0xff]
  %v3263 = vsel %vm491, %v3153, 0
  %3265 = vmatprep.subr.mxu0 0.0
  %3266 = vmatpush1.msra.mxu0 %v471
  %3267 = vmatprep.subr.mxu0 0.0
  %3268 = vmatpush1.msra.mxu0 %v472
  %3269 = vmatprep.subr.mxu0 0.0
  %3270 = vmatpush1.msra.mxu0 %v473
  %3271 = vmatprep.subr.mxu0 0.0
  %3272 = vmatpush1.msra.mxu0 %v474
  %3273 = vmatprep.subr.mxu0 0.0
  %3274 = vmatpush1.msra.mxu0 0.0
  %3275 = vmatprep.subr.mxu0 0.0
  %3276 = vmatpush1.msra.mxu0 0.0
  %3277 = vmatprep.subr.mxu0 0.0
  %3278 = vmatpush1.msra.mxu0 0.0
  %3279 = vmatprep.subr.mxu0 0.0
  %3280 = vmatpush1.msra.mxu0 0.0
  %3281 = vmatprep.subr.mxu0 0.0
  %3282 = vmatpush1.msra.mxu0 0.0
  %3283 = vmatprep.subr.mxu0 0.0
  %3284 = vmatpush1.msra.mxu0 0.0
  %3285 = vmatprep.subr.mxu0 0.0
  %3286 = vmatpush1.msra.mxu0 0.0
  %3287 = vmatprep.subr.mxu0 0.0
  %3288 = vmatpush1.msra.mxu0 0.0
  %3289 = vmatprep.subr.mxu0 0.0
  %3290 = vmatpush1.msra.mxu0 0.0
  %3291 = vmatprep.subr.mxu0 0.0
  %3292 = vmatpush1.msra.mxu0 0.0
  %3293 = vmatprep.subr.mxu0 0.0
  %3294 = vmatpush1.msra.mxu0 0.0
  %3295 = vmatprep.subr.mxu0 0.0
  %3296 = vmatpush1.msra.mxu0 0.0
  %3297 = vmatprep.subr.mxu0 0.0
  %3298 = vmatpush1.msra.mxu0 0.0
  %3299 = vmatprep.subr.mxu0 0.0
  %3300 = vmatpush1.msra.mxu0 0.0
  %3301 = vmatprep.subr.mxu0 0.0
  %3302 = vmatpush1.msra.mxu0 0.0
  %3303 = vmatprep.subr.mxu0 0.0
  %3304 = vmatpush1.msra.mxu0 0.0
  %3305 = vmatprep.subr.mxu0 0.0
  %3306 = vmatpush1.msra.mxu0 0.0
  %3307 = vmatprep.subr.mxu0 0.0
  %3308 = vmatpush1.msra.mxu0 0.0
  %3309 = vmatprep.subr.mxu0 0.0
  %3310 = vmatpush1.msra.mxu0 0.0
  %3311 = vmatprep.subr.mxu0 0.0
  %3312 = vmatpush1.msra.mxu0 0.0
  %3313 = vmatprep.subr.mxu0 0.0
  %3314 = vmatpush1.msra.mxu0 0.0
  %3315 = vmatprep.subr.mxu0 0.0
  %3316 = vmatpush1.msra.mxu0 0.0
  %3317 = vmatprep.subr.mxu0 0.0
  %3318 = vmatpush1.msra.mxu0 0.0
  %3319 = vmatprep.subr.mxu0 0.0
  %3320 = vmatpush1.msra.mxu0 0.0
  %3321 = vmatprep.subr.mxu0 0.0
  %3322 = vmatpush1.msra.mxu0 0.0
  %3323 = vmatprep.subr.mxu0 0.0
  %3324 = vmatpush1.msra.mxu0 0.0
  %3325 = vmatprep.subr.mxu0 0.0
  %3326 = vmatpush1.msra.mxu0 0.0
  %3327 = vmatprep.subr.mxu0 0.0
  %3328 = vmatpush1.msra.mxu0 0.0
  %3329 = vmatprep.mubr.f32.mxu0 0.0
  %3330 = vmatmul.mubr.f32.gmra.mrb[0].mxu0 %v3263
  %v3331 = vpop.f32.mrb[0].mxu0
  %v3332 = vadd.f32 0.0, %v3331
  %v3333 = vpop.f32.mrb[0].mxu0
  %3334 = vdwg.mxu0
  %v3335 = vadd.f32 %v3262, %v3332
  %v3336 = vtanh.pop %v3335
  %v3337 = vxor.u32 %v3335, 2147483648
  %v3338 = vmul.f32 %v3337, 1.442695
  %v3339 = vpow.pop %v3338
  %v3340 = vadd.f32 %v3339, 1.0
  %v3341 = vrcp.pop %v3340
  %v3342 = vmul.f32 1.0, %v3341
  %v3343 = vsel %vm462, %v3336, %v3342
  %v3344 = vmul.f32 %v3343, %v3144
  %3346 = vrot.lane.b32.xlu0 %v3343, 64
  %v3347 = vpop.permute.xlu0 %3346
  %v3349 = vmul.f32 %v3343, %v3347
  %3351 = vrot.lane.b32.xlu0 %v3349, 32
  %v3352 = vpop.permute.xlu0 %3351
  %v3354 = vadd.f32 %v3344, %v3352
  %v3355 = vtanh.pop %v3354
  %3357 = vrot.lane.b32.xlu0 %v3355, 64
  %v3358 = vpop.permute.xlu0 %3357
  %v3360 = vmul.f32 %v3343, %v3358
  %3362 = vrot.lane.b32.xlu0 %v3360, 32
  %v3363 = vpop.permute.xlu0 %3362
  %3365 = vst.msk [vmem:[#allocation3 + $0x60] sm:$0xff] %vm491, %v3363
  %v3366 = vld [vmem:[#allocation2 + $0x38] sm:$0xff]
  %3367 = vrot.lane.b32.xlu0 %v3256, 32
  %v3368 = vpop.permute.xlu0 %3367
  %v3369 = vsel %vm491, %v3368, 0
  %3371 = vmatprep.subr.mxu0 0.0
  %3372 = vmatpush1.msra.mxu0 %v475
  %3373 = vmatprep.subr.mxu0 0.0
  %3374 = vmatpush1.msra.mxu0 %v476
  %3375 = vmatprep.subr.mxu0 0.0
  %3376 = vmatpush1.msra.mxu0 %v477
  %3377 = vmatprep.subr.mxu0 0.0
  %3378 = vmatpush1.msra.mxu0 %v478
  %3379 = vmatprep.subr.mxu0 0.0
  %3380 = vmatpush1.msra.mxu0 0.0
  %3381 = vmatprep.subr.mxu0 0.0
  %3382 = vmatpush1.msra.mxu0 0.0
  %3383 = vmatprep.subr.mxu0 0.0
  %3384 = vmatpush1.msra.mxu0 0.0
  %3385 = vmatprep.subr.mxu0 0.0
  %3386 = vmatpush1.msra.mxu0 0.0
  %3387 = vmatprep.subr.mxu0 0.0
  %3388 = vmatpush1.msra.mxu0 0.0
  %3389 = vmatprep.subr.mxu0 0.0
  %3390 = vmatpush1.msra.mxu0 0.0
  %3391 = vmatprep.subr.mxu0 0.0
  %3392 = vmatpush1.msra.mxu0 0.0
  %3393 = vmatprep.subr.mxu0 0.0
  %3394 = vmatpush1.msra.mxu0 0.0
  %3395 = vmatprep.subr.mxu0 0.0
  %3396 = vmatpush1.msra.mxu0 0.0
  %3397 = vmatprep.subr.mxu0 0.0
  %3398 = vmatpush1.msra.mxu0 0.0
  %3399 = vmatprep.subr.mxu0 0.0
  %3400 = vmatpush1.msra.mxu0 0.0
  %3401 = vmatprep.subr.mxu0 0.0
  %3402 = vmatpush1.msra.mxu0 0.0
  %3403 = vmatprep.subr.mxu0 0.0
  %3404 = vmatpush1.msra.mxu0 0.0
  %3405 = vmatprep.subr.mxu0 0.0
  %3406 = vmatpush1.msra.mxu0 0.0
  %3407 = vmatprep.subr.mxu0 0.0
  %3408 = vmatpush1.msra.mxu0 0.0
  %3409 = vmatprep.subr.mxu0 0.0
  %3410 = vmatpush1.msra.mxu0 0.0
  %3411 = vmatprep.subr.mxu0 0.0
  %3412 = vmatpush1.msra.mxu0 0.0
  %3413 = vmatprep.subr.mxu0 0.0
  %3414 = vmatpush1.msra.mxu0 0.0
  %3415 = vmatprep.subr.mxu0 0.0
  %3416 = vmatpush1.msra.mxu0 0.0
  %3417 = vmatprep.subr.mxu0 0.0
  %3418 = vmatpush1.msra.mxu0 0.0
  %3419 = vmatprep.subr.mxu0 0.0
  %3420 = vmatpush1.msra.mxu0 0.0
  %3421 = vmatprep.subr.mxu0 0.0
  %3422 = vmatpush1.msra.mxu0 0.0
  %3423 = vmatprep.subr.mxu0 0.0
  %3424 = vmatpush1.msra.mxu0 0.0
  %3425 = vmatprep.subr.mxu0 0.0
  %3426 = vmatpush1.msra.mxu0 0.0
  %3427 = vmatprep.subr.mxu0 0.0
  %3428 = vmatpush1.msra.mxu0 0.0
  %3429 = vmatprep.subr.mxu0 0.0
  %3430 = vmatpush1.msra.mxu0 0.0
  %3431 = vmatprep.subr.mxu0 0.0
  %3432 = vmatpush1.msra.mxu0 0.0
  %3433 = vmatprep.subr.mxu0 0.0
  %3434 = vmatpush1.msra.mxu0 0.0
  %3435 = vmatprep.mubr.f32.mxu0 0.0
  %3436 = vmatmul.mubr.f32.gmra.mrb[0].mxu0 %v3369
  %v3437 = vpop.f32.mrb[0].mxu0
  %v3438 = vadd.f32 0.0, %v3437
  %v3439 = vpop.f32.mrb[0].mxu0
  %3440 = vdwg.mxu0
  %v3441 = vadd.f32 %v3366, %v3438
  %v3442 = vtanh.pop %v3441
  %v3443 = vxor.u32 %v3441, 2147483648
  %v3444 = vmul.f32 %v3443, 1.442695
  %v3445 = vpow.pop %v3444
  %v3446 = vadd.f32 %v3445, 1.0
  %v3447 = vrcp.pop %v3446
  %v3448 = vmul.f32 1.0, %v3447
  %v3449 = vsel %vm462, %v3442, %v3448
  %v3450 = vmul.f32 %v3449, %v3250
  %3452 = vrot.lane.b32.xlu0 %v3449, 64
  %v3453 = vpop.permute.xlu0 %3452
  %v3455 = vmul.f32 %v3449, %v3453
  %3457 = vrot.lane.b32.xlu0 %v3455, 32
  %v3458 = vpop.permute.xlu0 %3457
  %v3460 = vadd.f32 %v3450, %v3458
  %v3461 = vtanh.pop %v3460
  %3463 = vrot.lane.b32.xlu0 %v3461, 64
  %v3464 = vpop.permute.xlu0 %3463
  %v3466 = vmul.f32 %v3449, %v3464
  %3468 = vrot.lane.b32.xlu0 %v3466, 64
  %v3469 = vpop.permute.xlu0 %3468
  %3471 = vst.msk [vmem:[#allocation3 + $0x18] sm:$0xff] %vm950, %v3469
  %v3472 = vld [vmem:[#allocation2 + $0xd0] sm:$0xff]
  %v3473 = vsel %vm491, %v3363, 0
  %3475 = vmatprep.subr.mxu0 0.0
  %3476 = vmatpush1.msra.mxu0 %v471
  %3477 = vmatprep.subr.mxu0 0.0
  %3478 = vmatpush1.msra.mxu0 %v472
  %3479 = vmatprep.subr.mxu0 0.0
  %3480 = vmatpush1.msra.mxu0 %v473
  %3481 = vmatprep.subr.mxu0 0.0
  %3482 = vmatpush1.msra.mxu0 %v474
  %3483 = vmatprep.subr.mxu0 0.0
  %3484 = vmatpush1.msra.mxu0 0.0
  %3485 = vmatprep.subr.mxu0 0.0
  %3486 = vmatpush1.msra.mxu0 0.0
  %3487 = vmatprep.subr.mxu0 0.0
  %3488 = vmatpush1.msra.mxu0 0.0
  %3489 = vmatprep.subr.mxu0 0.0
  %3490 = vmatpush1.msra.mxu0 0.0
  %3491 = vmatprep.subr.mxu0 0.0
  %3492 = vmatpush1.msra.mxu0 0.0
  %3493 = vmatprep.subr.mxu0 0.0
  %3494 = vmatpush1.msra.mxu0 0.0
  %3495 = vmatprep.subr.mxu0 0.0
  %3496 = vmatpush1.msra.mxu0 0.0
  %3497 = vmatprep.subr.mxu0 0.0
  %3498 = vmatpush1.msra.mxu0 0.0
  %3499 = vmatprep.subr.mxu0 0.0
  %3500 = vmatpush1.msra.mxu0 0.0
  %3501 = vmatprep.subr.mxu0 0.0
  %3502 = vmatpush1.msra.mxu0 0.0
  %3503 = vmatprep.subr.mxu0 0.0
  %3504 = vmatpush1.msra.mxu0 0.0
  %3505 = vmatprep.subr.mxu0 0.0
  %3506 = vmatpush1.msra.mxu0 0.0
  %3507 = vmatprep.subr.mxu0 0.0
  %3508 = vmatpush1.msra.mxu0 0.0
  %3509 = vmatprep.subr.mxu0 0.0
  %3510 = vmatpush1.msra.mxu0 0.0
  %3511 = vmatprep.subr.mxu0 0.0
  %3512 = vmatpush1.msra.mxu0 0.0
  %3513 = vmatprep.subr.mxu0 0.0
  %3514 = vmatpush1.msra.mxu0 0.0
  %3515 = vmatprep.subr.mxu0 0.0
  %3516 = vmatpush1.msra.mxu0 0.0
  %3517 = vmatprep.subr.mxu0 0.0
  %3518 = vmatpush1.msra.mxu0 0.0
  %3519 = vmatprep.subr.mxu0 0.0
  %3520 = vmatpush1.msra.mxu0 0.0
  %3521 = vmatprep.subr.mxu0 0.0
  %3522 = vmatpush1.msra.mxu0 0.0
  %3523 = vmatprep.subr.mxu0 0.0
  %3524 = vmatpush1.msra.mxu0 0.0
  %3525 = vmatprep.subr.mxu0 0.0
  %3526 = vmatpush1.msra.mxu0 0.0
  %3527 = vmatprep.subr.mxu0 0.0
  %3528 = vmatpush1.msra.mxu0 0.0
  %3529 = vmatprep.subr.mxu0 0.0
  %3530 = vmatpush1.msra.mxu0 0.0
  %3531 = vmatprep.subr.mxu0 0.0
  %3532 = vmatpush1.msra.mxu0 0.0
  %3533 = vmatprep.subr.mxu0 0.0
  %3534 = vmatpush1.msra.mxu0 0.0
  %3535 = vmatprep.subr.mxu0 0.0
  %3536 = vmatpush1.msra.mxu0 0.0
  %3537 = vmatprep.subr.mxu0 0.0
  %3538 = vmatpush1.msra.mxu0 0.0
  %3539 = vmatprep.mubr.f32.mxu0 0.0
  %3540 = vmatmul.mubr.f32.gmra.mrb[0].mxu0 %v3473
  %v3541 = vpop.f32.mrb[0].mxu0
  %v3542 = vadd.f32 0.0, %v3541
  %v3543 = vpop.f32.mrb[0].mxu0
  %3544 = vdwg.mxu0
  %v3545 = vadd.f32 %v3472, %v3542
  %v3546 = vtanh.pop %v3545
  %v3547 = vxor.u32 %v3545, 2147483648
  %v3548 = vmul.f32 %v3547, 1.442695
  %v3549 = vpow.pop %v3548
  %v3550 = vadd.f32 %v3549, 1.0
  %v3551 = vrcp.pop %v3550
  %v3552 = vmul.f32 1.0, %v3551
  %v3553 = vsel %vm462, %v3546, %v3552
  %v3554 = vmul.f32 %v3553, %v3354
  %3556 = vrot.lane.b32.xlu0 %v3553, 64
  %v3557 = vpop.permute.xlu0 %3556
  %v3559 = vmul.f32 %v3553, %v3557
  %3561 = vrot.lane.b32.xlu0 %v3559, 32
  %v3562 = vpop.permute.xlu0 %3561
  %v3564 = vadd.f32 %v3554, %v3562
  %v3565 = vtanh.pop %v3564
  %3567 = vrot.lane.b32.xlu0 %v3565, 64
  %v3568 = vpop.permute.xlu0 %3567
  %v3570 = vmul.f32 %v3553, %v3568
  %3572 = vrot.lane.b32.xlu0 %v3570, 32
  %v3573 = vpop.permute.xlu0 %3572
  %3575 = vst.msk [vmem:[#allocation3 + $0x68] sm:$0xff] %vm491, %v3573
  %v3576 = vld [vmem:[#allocation2 + $0x28] sm:$0xff]
  %3577 = vrot.lane.b32.xlu0 %v3466, 32
  %v3578 = vpop.permute.xlu0 %3577
  %v3579 = vsel %vm491, %v3578, 0
  %3581 = vmatprep.subr.mxu0 0.0
  %3582 = vmatpush1.msra.mxu0 %v475
  %3583 = vmatprep.subr.mxu0 0.0
  %3584 = vmatpush1.msra.mxu0 %v476
  %3585 = vmatprep.subr.mxu0 0.0
  %3586 = vmatpush1.msra.mxu0 %v477
  %3587 = vmatprep.subr.mxu0 0.0
  %3588 = vmatpush1.msra.mxu0 %v478
  %3589 = vmatprep.subr.mxu0 0.0
  %3590 = vmatpush1.msra.mxu0 0.0
  %3591 = vmatprep.subr.mxu0 0.0
  %3592 = vmatpush1.msra.mxu0 0.0
  %3593 = vmatprep.subr.mxu0 0.0
  %3594 = vmatpush1.msra.mxu0 0.0
  %3595 = vmatprep.subr.mxu0 0.0
  %3596 = vmatpush1.msra.mxu0 0.0
  %3597 = vmatprep.subr.mxu0 0.0
  %3598 = vmatpush1.msra.mxu0 0.0
  %3599 = vmatprep.subr.mxu0 0.0
  %3600 = vmatpush1.msra.mxu0 0.0
  %3601 = vmatprep.subr.mxu0 0.0
  %3602 = vmatpush1.msra.mxu0 0.0
  %3603 = vmatprep.subr.mxu0 0.0
  %3604 = vmatpush1.msra.mxu0 0.0
  %3605 = vmatprep.subr.mxu0 0.0
  %3606 = vmatpush1.msra.mxu0 0.0
  %3607 = vmatprep.subr.mxu0 0.0
  %3608 = vmatpush1.msra.mxu0 0.0
  %3609 = vmatprep.subr.mxu0 0.0
  %3610 = vmatpush1.msra.mxu0 0.0
  %3611 = vmatprep.subr.mxu0 0.0
  %3612 = vmatpush1.msra.mxu0 0.0
  %3613 = vmatprep.subr.mxu0 0.0
  %3614 = vmatpush1.msra.mxu0 0.0
  %3615 = vmatprep.subr.mxu0 0.0
  %3616 = vmatpush1.msra.mxu0 0.0
  %3617 = vmatprep.subr.mxu0 0.0
  %3618 = vmatpush1.msra.mxu0 0.0
  %3619 = vmatprep.subr.mxu0 0.0
  %3620 = vmatpush1.msra.mxu0 0.0
  %3621 = vmatprep.subr.mxu0 0.0
  %3622 = vmatpush1.msra.mxu0 0.0
  %3623 = vmatprep.subr.mxu0 0.0
  %3624 = vmatpush1.msra.mxu0 0.0
  %3625 = vmatprep.subr.mxu0 0.0
  %3626 = vmatpush1.msra.mxu0 0.0
  %3627 = vmatprep.subr.mxu0 0.0
  %3628 = vmatpush1.msra.mxu0 0.0
  %3629 = vmatprep.subr.mxu0 0.0
  %3630 = vmatpush1.msra.mxu0 0.0
  %3631 = vmatprep.subr.mxu0 0.0
  %3632 = vmatpush1.msra.mxu0 0.0
  %3633 = vmatprep.subr.mxu0 0.0
  %3634 = vmatpush1.msra.mxu0 0.0
  %3635 = vmatprep.subr.mxu0 0.0
  %3636 = vmatpush1.msra.mxu0 0.0
  %3637 = vmatprep.subr.mxu0 0.0
  %3638 = vmatpush1.msra.mxu0 0.0
  %3639 = vmatprep.subr.mxu0 0.0
  %3640 = vmatpush1.msra.mxu0 0.0
  %3641 = vmatprep.subr.mxu0 0.0
  %3642 = vmatpush1.msra.mxu0 0.0
  %3643 = vmatprep.subr.mxu0 0.0
  %3644 = vmatpush1.msra.mxu0 0.0
  %3645 = vmatprep.mubr.f32.mxu0 0.0
  %3646 = vmatmul.mubr.f32.gmra.mrb[0].mxu0 %v3579
  %v3647 = vpop.f32.mrb[0].mxu0
  %v3648 = vadd.f32 0.0, %v3647
  %v3649 = vpop.f32.mrb[0].mxu0
  %3650 = vdwg.mxu0
  %v3651 = vadd.f32 %v3576, %v3648
  %v3652 = vtanh.pop %v3651
  %v3653 = vxor.u32 %v3651, 2147483648
  %v3654 = vmul.f32 %v3653, 1.442695
  %v3655 = vpow.pop %v3654
  %v3656 = vadd.f32 %v3655, 1.0
  %v3657 = vrcp.pop %v3656
  %v3658 = vmul.f32 1.0, %v3657
  %v3659 = vsel %vm462, %v3652, %v3658
  %v3660 = vmul.f32 %v3659, %v3460
  %3662 = vrot.lane.b32.xlu0 %v3659, 64
  %v3663 = vpop.permute.xlu0 %3662
  %v3665 = vmul.f32 %v3659, %v3663
  %3667 = vrot.lane.b32.xlu0 %v3665, 32
  %v3668 = vpop.permute.xlu0 %3667
  %v3670 = vadd.f32 %v3660, %v3668
  %v3671 = vtanh.pop %v3670
  %3673 = vrot.lane.b32.xlu0 %v3671, 64
  %v3674 = vpop.permute.xlu0 %3673
  %v3676 = vmul.f32 %v3659, %v3674
  %3678 = vrot.lane.b32.xlu0 %v3676, 64
  %v3679 = vpop.permute.xlu0 %3678
  %3681 = vst.msk [vmem:[#allocation3 + $0x10] sm:$0xff] %vm950, %v3679
  %v3682 = vld [vmem:[#allocation2 + $0xe0] sm:$0xff]
  %v3683 = vsel %vm491, %v3573, 0
  %3685 = vmatprep.subr.mxu0 0.0
  %3686 = vmatpush1.msra.mxu0 %v471
  %3687 = vmatprep.subr.mxu0 0.0
  %3688 = vmatpush1.msra.mxu0 %v472
  %3689 = vmatprep.subr.mxu0 0.0
  %3690 = vmatpush1.msra.mxu0 %v473
  %3691 = vmatprep.subr.mxu0 0.0
  %3692 = vmatpush1.msra.mxu0 %v474
  %3693 = vmatprep.subr.mxu0 0.0
  %3694 = vmatpush1.msra.mxu0 0.0
  %3695 = vmatprep.subr.mxu0 0.0
  %3696 = vmatpush1.msra.mxu0 0.0
  %3697 = vmatprep.subr.mxu0 0.0
  %3698 = vmatpush1.msra.mxu0 0.0
  %3699 = vmatprep.subr.mxu0 0.0
  %3700 = vmatpush1.msra.mxu0 0.0
  %3701 = vmatprep.subr.mxu0 0.0
  %3702 = vmatpush1.msra.mxu0 0.0
  %3703 = vmatprep.subr.mxu0 0.0
  %3704 = vmatpush1.msra.mxu0 0.0
  %3705 = vmatprep.subr.mxu0 0.0
  %3706 = vmatpush1.msra.mxu0 0.0
  %3707 = vmatprep.subr.mxu0 0.0
  %3708 = vmatpush1.msra.mxu0 0.0
  %3709 = vmatprep.subr.mxu0 0.0
  %3710 = vmatpush1.msra.mxu0 0.0
  %3711 = vmatprep.subr.mxu0 0.0
  %3712 = vmatpush1.msra.mxu0 0.0
  %3713 = vmatprep.subr.mxu0 0.0
  %3714 = vmatpush1.msra.mxu0 0.0
  %3715 = vmatprep.subr.mxu0 0.0
  %3716 = vmatpush1.msra.mxu0 0.0
  %3717 = vmatprep.subr.mxu0 0.0
  %3718 = vmatpush1.msra.mxu0 0.0
  %3719 = vmatprep.subr.mxu0 0.0
  %3720 = vmatpush1.msra.mxu0 0.0
  %3721 = vmatprep.subr.mxu0 0.0
  %3722 = vmatpush1.msra.mxu0 0.0
  %3723 = vmatprep.subr.mxu0 0.0
  %3724 = vmatpush1.msra.mxu0 0.0
  %3725 = vmatprep.subr.mxu0 0.0
  %3726 = vmatpush1.msra.mxu0 0.0
  %3727 = vmatprep.subr.mxu0 0.0
  %3728 = vmatpush1.msra.mxu0 0.0
  %3729 = vmatprep.subr.mxu0 0.0
  %3730 = vmatpush1.msra.mxu0 0.0
  %3731 = vmatprep.subr.mxu0 0.0
  %3732 = vmatpush1.msra.mxu0 0.0
  %3733 = vmatprep.subr.mxu0 0.0
  %3734 = vmatpush1.msra.mxu0 0.0
  %3735 = vmatprep.subr.mxu0 0.0
  %3736 = vmatpush1.msra.mxu0 0.0
  %3737 = vmatprep.subr.mxu0 0.0
  %3738 = vmatpush1.msra.mxu0 0.0
  %3739 = vmatprep.subr.mxu0 0.0
  %3740 = vmatpush1.msra.mxu0 0.0
  %3741 = vmatprep.subr.mxu0 0.0
  %3742 = vmatpush1.msra.mxu0 0.0
  %3743 = vmatprep.subr.mxu0 0.0
  %3744 = vmatpush1.msra.mxu0 0.0
  %3745 = vmatprep.subr.mxu0 0.0
  %3746 = vmatpush1.msra.mxu0 0.0
  %3747 = vmatprep.subr.mxu0 0.0
  %3748 = vmatpush1.msra.mxu0 0.0
  %3749 = vmatprep.mubr.f32.mxu0 0.0
  %3750 = vmatmul.mubr.f32.gmra.mrb[0].mxu0 %v3683
  %v3751 = vpop.f32.mrb[0].mxu0
  %v3752 = vadd.f32 0.0, %v3751
  %v3753 = vpop.f32.mrb[0].mxu0
  %3754 = vdwg.mxu0
  %v3755 = vadd.f32 %v3682, %v3752
  %v3756 = vtanh.pop %v3755
  %v3757 = vxor.u32 %v3755, 2147483648
  %v3758 = vmul.f32 %v3757, 1.442695
  %v3759 = vpow.pop %v3758
  %v3760 = vadd.f32 %v3759, 1.0
  %v3761 = vrcp.pop %v3760
  %v3762 = vmul.f32 1.0, %v3761
  %v3763 = vsel %vm462, %v3756, %v3762
  %v3764 = vmul.f32 %v3763, %v3564
  %3766 = vrot.lane.b32.xlu0 %v3763, 64
  %v3767 = vpop.permute.xlu0 %3766
  %v3769 = vmul.f32 %v3763, %v3767
  %3771 = vrot.lane.b32.xlu0 %v3769, 32
  %v3772 = vpop.permute.xlu0 %3771
  %v3774 = vadd.f32 %v3764, %v3772
  %v3775 = vtanh.pop %v3774
  %3777 = vrot.lane.b32.xlu0 %v3775, 64
  %v3778 = vpop.permute.xlu0 %3777
  %v3780 = vmul.f32 %v3763, %v3778
  %3782 = vrot.lane.b32.xlu0 %v3780, 32
  %v3783 = vpop.permute.xlu0 %3782
  %3785 = vst.msk [vmem:[#allocation3 + $0x70] sm:$0xff] %vm491, %v3783
  %v3786 = vld [vmem:[#allocation2 + $0x18] sm:$0xff]
  %3787 = vrot.lane.b32.xlu0 %v3676, 32
  %v3788 = vpop.permute.xlu0 %3787
  %v3789 = vsel %vm491, %v3788, 0
  %3791 = vmatprep.subr.mxu0 0.0
  %3792 = vmatpush1.msra.mxu0 %v475
  %3793 = vmatprep.subr.mxu0 0.0
  %3794 = vmatpush1.msra.mxu0 %v476
  %3795 = vmatprep.subr.mxu0 0.0
  %3796 = vmatpush1.msra.mxu0 %v477
  %3797 = vmatprep.subr.mxu0 0.0
  %3798 = vmatpush1.msra.mxu0 %v478
  %3799 = vmatprep.subr.mxu0 0.0
  %3800 = vmatpush1.msra.mxu0 0.0
  %3801 = vmatprep.subr.mxu0 0.0
  %3802 = vmatpush1.msra.mxu0 0.0
  %3803 = vmatprep.subr.mxu0 0.0
  %3804 = vmatpush1.msra.mxu0 0.0
  %3805 = vmatprep.subr.mxu0 0.0
  %3806 = vmatpush1.msra.mxu0 0.0
  %3807 = vmatprep.subr.mxu0 0.0
  %3808 = vmatpush1.msra.mxu0 0.0
  %3809 = vmatprep.subr.mxu0 0.0
  %3810 = vmatpush1.msra.mxu0 0.0
  %3811 = vmatprep.subr.mxu0 0.0
  %3812 = vmatpush1.msra.mxu0 0.0
  %3813 = vmatprep.subr.mxu0 0.0
  %3814 = vmatpush1.msra.mxu0 0.0
  %3815 = vmatprep.subr.mxu0 0.0
  %3816 = vmatpush1.msra.mxu0 0.0
  %3817 = vmatprep.subr.mxu0 0.0
  %3818 = vmatpush1.msra.mxu0 0.0
  %3819 = vmatprep.subr.mxu0 0.0
  %3820 = vmatpush1.msra.mxu0 0.0
  %3821 = vmatprep.subr.mxu0 0.0
  %3822 = vmatpush1.msra.mxu0 0.0
  %3823 = vmatprep.subr.mxu0 0.0
  %3824 = vmatpush1.msra.mxu0 0.0
  %3825 = vmatprep.subr.mxu0 0.0
  %3826 = vmatpush1.msra.mxu0 0.0
  %3827 = vmatprep.subr.mxu0 0.0
  %3828 = vmatpush1.msra.mxu0 0.0
  %3829 = vmatprep.subr.mxu0 0.0
  %3830 = vmatpush1.msra.mxu0 0.0
  %3831 = vmatprep.subr.mxu0 0.0
  %3832 = vmatpush1.msra.mxu0 0.0
  %3833 = vmatprep.subr.mxu0 0.0
  %3834 = vmatpush1.msra.mxu0 0.0
  %3835 = vmatprep.subr.mxu0 0.0
  %3836 = vmatpush1.msra.mxu0 0.0
  %3837 = vmatprep.subr.mxu0 0.0
  %3838 = vmatpush1.msra.mxu0 0.0
  %3839 = vmatprep.subr.mxu0 0.0
  %3840 = vmatpush1.msra.mxu0 0.0
  %3841 = vmatprep.subr.mxu0 0.0
  %3842 = vmatpush1.msra.mxu0 0.0
  %3843 = vmatprep.subr.mxu0 0.0
  %3844 = vmatpush1.msra.mxu0 0.0
  %3845 = vmatprep.subr.mxu0 0.0
  %3846 = vmatpush1.msra.mxu0 0.0
  %3847 = vmatprep.subr.mxu0 0.0
  %3848 = vmatpush1.msra.mxu0 0.0
  %3849 = vmatprep.subr.mxu0 0.0
  %3850 = vmatpush1.msra.mxu0 0.0
  %3851 = vmatprep.subr.mxu0 0.0
  %3852 = vmatpush1.msra.mxu0 0.0
  %3853 = vmatprep.subr.mxu0 0.0
  %3854 = vmatpush1.msra.mxu0 0.0
  %3855 = vmatprep.mubr.f32.mxu0 0.0
  %3856 = vmatmul.mubr.f32.gmra.mrb[0].mxu0 %v3789
  %v3857 = vpop.f32.mrb[0].mxu0
  %v3858 = vadd.f32 0.0, %v3857
  %v3859 = vpop.f32.mrb[0].mxu0
  %3860 = vdwg.mxu0
  %v3861 = vadd.f32 %v3786, %v3858
  %v3862 = vtanh.pop %v3861
  %v3863 = vxor.u32 %v3861, 2147483648
  %v3864 = vmul.f32 %v3863, 1.442695
  %v3865 = vpow.pop %v3864
  %v3866 = vadd.f32 %v3865, 1.0
  %v3867 = vrcp.pop %v3866
  %v3868 = vmul.f32 1.0, %v3867
  %v3869 = vsel %vm462, %v3862, %v3868
  %v3870 = vmul.f32 %v3869, %v3670
  %3872 = vrot.lane.b32.xlu0 %v3869, 64
  %v3873 = vpop.permute.xlu0 %3872
  %v3875 = vmul.f32 %v3869, %v3873
  %3877 = vrot.lane.b32.xlu0 %v3875, 32
  %v3878 = vpop.permute.xlu0 %3877
  %v3880 = vadd.f32 %v3870, %v3878
  %v3881 = vtanh.pop %v3880
  %3883 = vrot.lane.b32.xlu0 %v3881, 64
  %v3884 = vpop.permute.xlu0 %3883
  %v3886 = vmul.f32 %v3869, %v3884
  %3888 = vrot.lane.b32.xlu0 %v3886, 64
  %v3889 = vpop.permute.xlu0 %3888
  %3891 = vst.msk [vmem:[#allocation3 + $0x8] sm:$0xff] %vm950, %v3889
  %v3892 = vld [vmem:[#allocation2 + $0xf0] sm:$0xff]
  %v3893 = vsel %vm491, %v3783, 0
  %3895 = vmatprep.subr.mxu0 0.0
  %3896 = vmatpush1.msra.mxu0 %v471
  %3897 = vmatprep.subr.mxu0 0.0
  %3898 = vmatpush1.msra.mxu0 %v472
  %3899 = vmatprep.subr.mxu0 0.0
  %3900 = vmatpush1.msra.mxu0 %v473
  %3901 = vmatprep.subr.mxu0 0.0
  %3902 = vmatpush1.msra.mxu0 %v474
  %3903 = vmatprep.subr.mxu0 0.0
  %3904 = vmatpush1.msra.mxu0 0.0
  %3905 = vmatprep.subr.mxu0 0.0
  %3906 = vmatpush1.msra.mxu0 0.0
  %3907 = vmatprep.subr.mxu0 0.0
  %3908 = vmatpush1.msra.mxu0 0.0
  %3909 = vmatprep.subr.mxu0 0.0
  %3910 = vmatpush1.msra.mxu0 0.0
  %3911 = vmatprep.subr.mxu0 0.0
  %3912 = vmatpush1.msra.mxu0 0.0
  %3913 = vmatprep.subr.mxu0 0.0
  %3914 = vmatpush1.msra.mxu0 0.0
  %3915 = vmatprep.subr.mxu0 0.0
  %3916 = vmatpush1.msra.mxu0 0.0
  %3917 = vmatprep.subr.mxu0 0.0
  %3918 = vmatpush1.msra.mxu0 0.0
  %3919 = vmatprep.subr.mxu0 0.0
  %3920 = vmatpush1.msra.mxu0 0.0
  %3921 = vmatprep.subr.mxu0 0.0
  %3922 = vmatpush1.msra.mxu0 0.0
  %3923 = vmatprep.subr.mxu0 0.0
  %3924 = vmatpush1.msra.mxu0 0.0
  %3925 = vmatprep.subr.mxu0 0.0
  %3926 = vmatpush1.msra.mxu0 0.0
  %3927 = vmatprep.subr.mxu0 0.0
  %3928 = vmatpush1.msra.mxu0 0.0
  %3929 = vmatprep.subr.mxu0 0.0
  %3930 = vmatpush1.msra.mxu0 0.0
  %3931 = vmatprep.subr.mxu0 0.0
  %3932 = vmatpush1.msra.mxu0 0.0
  %3933 = vmatprep.subr.mxu0 0.0
  %3934 = vmatpush1.msra.mxu0 0.0
  %3935 = vmatprep.subr.mxu0 0.0
  %3936 = vmatpush1.msra.mxu0 0.0
  %3937 = vmatprep.subr.mxu0 0.0
  %3938 = vmatpush1.msra.mxu0 0.0
  %3939 = vmatprep.subr.mxu0 0.0
  %3940 = vmatpush1.msra.mxu0 0.0
  %3941 = vmatprep.subr.mxu0 0.0
  %3942 = vmatpush1.msra.mxu0 0.0
  %3943 = vmatprep.subr.mxu0 0.0
  %3944 = vmatpush1.msra.mxu0 0.0
  %3945 = vmatprep.subr.mxu0 0.0
  %3946 = vmatpush1.msra.mxu0 0.0
  %3947 = vmatprep.subr.mxu0 0.0
  %3948 = vmatpush1.msra.mxu0 0.0
  %3949 = vmatprep.subr.mxu0 0.0
  %3950 = vmatpush1.msra.mxu0 0.0
  %3951 = vmatprep.subr.mxu0 0.0
  %3952 = vmatpush1.msra.mxu0 0.0
  %3953 = vmatprep.subr.mxu0 0.0
  %3954 = vmatpush1.msra.mxu0 0.0
  %3955 = vmatprep.subr.mxu0 0.0
  %3956 = vmatpush1.msra.mxu0 0.0
  %3957 = vmatprep.subr.mxu0 0.0
  %3958 = vmatpush1.msra.mxu0 0.0
  %3959 = vmatprep.mubr.f32.mxu0 0.0
  %3960 = vmatmul.mubr.f32.gmra.mrb[0].mxu0 %v3893
  %v3961 = vpop.f32.mrb[0].mxu0
  %v3962 = vadd.f32 0.0, %v3961
  %v3963 = vpop.f32.mrb[0].mxu0
  %3964 = vdwg.mxu0
  %v3965 = vadd.f32 %v3892, %v3962
  %v3966 = vtanh.pop %v3965
  %v3967 = vxor.u32 %v3965, 2147483648
  %v3968 = vmul.f32 %v3967, 1.442695
  %v3969 = vpow.pop %v3968
  %v3970 = vadd.f32 %v3969, 1.0
  %v3971 = vrcp.pop %v3970
  %v3972 = vmul.f32 1.0, %v3971
  %v3973 = vsel %vm462, %v3966, %v3972
  %v3974 = vmul.f32 %v3973, %v3774
  %3976 = vrot.lane.b32.xlu0 %v3973, 64
  %v3977 = vpop.permute.xlu0 %3976
  %v3979 = vmul.f32 %v3973, %v3977
  %3981 = vrot.lane.b32.xlu0 %v3979, 32
  %v3982 = vpop.permute.xlu0 %3981
  %v3984 = vadd.f32 %v3974, %v3982
  %v3985 = vtanh.pop %v3984
  %3987 = vrot.lane.b32.xlu0 %v3985, 64
  %v3988 = vpop.permute.xlu0 %3987
  %v3990 = vmul.f32 %v3973, %v3988
  %3992 = vrot.lane.b32.xlu0 %v3990, 32
  %v3993 = vpop.permute.xlu0 %3992
  %3995 = vst.msk [vmem:[#allocation3 + $0x78] sm:$0xff] %vm491, %v3993
  %v3996 = vld [vmem:[#allocation2 + $0x8] sm:$0xff]
  %3997 = vrot.lane.b32.xlu0 %v3886, 32
  %v3998 = vpop.permute.xlu0 %3997
  %v3999 = vsel %vm491, %v3998, 0
  %4001 = vmatprep.subr.mxu0 0.0
  %4002 = vmatpush1.msra.mxu0 %v475
  %4003 = vmatprep.subr.mxu0 0.0
  %4004 = vmatpush1.msra.mxu0 %v476
  %4005 = vmatprep.subr.mxu0 0.0
  %4006 = vmatpush1.msra.mxu0 %v477
  %4007 = vmatprep.subr.mxu0 0.0
  %4008 = vmatpush1.msra.mxu0 %v478
  %4009 = vmatprep.subr.mxu0 0.0
  %4010 = vmatpush1.msra.mxu0 0.0
  %4011 = vmatprep.subr.mxu0 0.0
  %4012 = vmatpush1.msra.mxu0 0.0
  %4013 = vmatprep.subr.mxu0 0.0
  %4014 = vmatpush1.msra.mxu0 0.0
  %4015 = vmatprep.subr.mxu0 0.0
  %4016 = vmatpush1.msra.mxu0 0.0
  %4017 = vmatprep.subr.mxu0 0.0
  %4018 = vmatpush1.msra.mxu0 0.0
  %4019 = vmatprep.subr.mxu0 0.0
  %4020 = vmatpush1.msra.mxu0 0.0
  %4021 = vmatprep.subr.mxu0 0.0
  %4022 = vmatpush1.msra.mxu0 0.0
  %4023 = vmatprep.subr.mxu0 0.0
  %4024 = vmatpush1.msra.mxu0 0.0
  %4025 = vmatprep.subr.mxu0 0.0
  %4026 = vmatpush1.msra.mxu0 0.0
  %4027 = vmatprep.subr.mxu0 0.0
  %4028 = vmatpush1.msra.mxu0 0.0
  %4029 = vmatprep.subr.mxu0 0.0
  %4030 = vmatpush1.msra.mxu0 0.0
  %4031 = vmatprep.subr.mxu0 0.0
  %4032 = vmatpush1.msra.mxu0 0.0
  %4033 = vmatprep.subr.mxu0 0.0
  %4034 = vmatpush1.msra.mxu0 0.0
  %4035 = vmatprep.subr.mxu0 0.0
  %4036 = vmatpush1.msra.mxu0 0.0
  %4037 = vmatprep.subr.mxu0 0.0
  %4038 = vmatpush1.msra.mxu0 0.0
  %4039 = vmatprep.subr.mxu0 0.0
  %4040 = vmatpush1.msra.mxu0 0.0
  %4041 = vmatprep.subr.mxu0 0.0
  %4042 = vmatpush1.msra.mxu0 0.0
  %4043 = vmatprep.subr.mxu0 0.0
  %4044 = vmatpush1.msra.mxu0 0.0
  %4045 = vmatprep.subr.mxu0 0.0
  %4046 = vmatpush1.msra.mxu0 0.0
  %4047 = vmatprep.subr.mxu0 0.0
  %4048 = vmatpush1.msra.mxu0 0.0
  %4049 = vmatprep.subr.mxu0 0.0
  %4050 = vmatpush1.msra.mxu0 0.0
  %4051 = vmatprep.subr.mxu0 0.0
  %4052 = vmatpush1.msra.mxu0 0.0
  %4053 = vmatprep.subr.mxu0 0.0
  %4054 = vmatpush1.msra.mxu0 0.0
  %4055 = vmatprep.subr.mxu0 0.0
  %4056 = vmatpush1.msra.mxu0 0.0
  %4057 = vmatprep.subr.mxu0 0.0
  %4058 = vmatpush1.msra.mxu0 0.0
  %4059 = vmatprep.subr.mxu0 0.0
  %4060 = vmatpush1.msra.mxu0 0.0
  %4061 = vmatprep.subr.mxu0 0.0
  %4062 = vmatpush1.msra.mxu0 0.0
  %4063 = vmatprep.subr.mxu0 0.0
  %4064 = vmatpush1.msra.mxu0 0.0
  %4065 = vmatprep.mubr.f32.mxu0 0.0
  %4066 = vmatmul.mubr.f32.gmra.mrb[0].mxu0 %v3999
  %v4067 = vpop.f32.mrb[0].mxu0
  %v4068 = vadd.f32 0.0, %v4067
  %v4069 = vpop.f32.mrb[0].mxu0
  %4070 = vdwg.mxu0
  %v4071 = vadd.f32 %v3996, %v4068
  %v4072 = vtanh.pop %v4071
  %v4073 = vxor.u32 %v4071, 2147483648
  %v4074 = vmul.f32 %v4073, 1.442695
  %v4075 = vpow.pop %v4074
  %v4076 = vadd.f32 %v4075, 1.0
  %v4077 = vrcp.pop %v4076
  %v4078 = vmul.f32 1.0, %v4077
  %v4079 = vsel %vm462, %v4072, %v4078
  %v4080 = vmul.f32 %v4079, %v3880
  %4082 = vrot.lane.b32.xlu0 %v4079, 64
  %v4083 = vpop.permute.xlu0 %4082
  %v4085 = vmul.f32 %v4079, %v4083
  %4087 = vrot.lane.b32.xlu0 %v4085, 32
  %v4088 = vpop.permute.xlu0 %4087
  %v4090 = vadd.f32 %v4080, %v4088
  %v4091 = vtanh.pop %v4090
  %4093 = vrot.lane.b32.xlu0 %v4091, 64
  %v4094 = vpop.permute.xlu0 %4093
  %v4096 = vmul.f32 %v4079, %v4094
  %4098 = vrot.lane.b32.xlu0 %v4096, 64
  %v4099 = vpop.permute.xlu0 %4098
  %4101 = vst.msk [vmem:[#allocation3] sm:$0xff] %vm950, %v4099
  %v4102 = vld [vmem:[#allocation3] sm:$0xff]
  %v4103 = vld [vmem:[#allocation3 + $0x8] sm:$0xff]
  %v4104 = vld [vmem:[#allocation3 + $0x10] sm:$0xff]
  %v4105 = vld [vmem:[#allocation3 + $0x18] sm:$0xff]
  %v4106 = vld [vmem:[#allocation3 + $0x20] sm:$0xff]
  %v4107 = vld [vmem:[#allocation3 + $0x28] sm:$0xff]
  %v4108 = vld [vmem:[#allocation3 + $0x30] sm:$0xff]
  %v4109 = vld [vmem:[#allocation3 + $0x38] sm:$0xff]
  %v4110 = vld [vmem:[#allocation3 + $0x40] sm:$0xff]
  %v4111 = vld [vmem:[#allocation3 + $0x48] sm:$0xff]
  %v4112 = vld [vmem:[#allocation3 + $0x50] sm:$0xff]
  %v4113 = vld [vmem:[#allocation3 + $0x58] sm:$0xff]
  %v4114 = vld [vmem:[#allocation3 + $0x60] sm:$0xff]
  %v4115 = vld [vmem:[#allocation3 + $0x68] sm:$0xff]
  %v4116 = vld [vmem:[#allocation3 + $0x70] sm:$0xff]
  %v4117 = vld [vmem:[#allocation3 + $0x78] sm:$0xff]
  %v4118 = vld [vmem:[%s8] sm:$0xff]
  %v4119 = vld [vmem:[%s8 + $0x8] sm:$0xff]
  %v4120 = vld [vmem:[%s8 + $0x10] sm:$0xff]
  %v4121 = vld [vmem:[%s8 + $0x18] sm:$0xff]
  %v4122 = vld [vmem:[%s8 + $0x20] sm:$0xff]
  %v4123 = vld [vmem:[%s8 + $0x28] sm:$0xff]
  %v4124 = vld [vmem:[%s8 + $0x30] sm:$0xff]
  %v4125 = vld [vmem:[%s8 + $0x38] sm:$0xff]
  %v4126 = vld [vmem:[%s8 + $0x40] sm:$0xff]
  %v4127 = vld [vmem:[%s8 + $0x48] sm:$0xff]
  %v4128 = vld [vmem:[%s8 + $0x50] sm:$0xff]
  %v4129 = vld [vmem:[%s8 + $0x58] sm:$0xff]
  %v4130 = vld [vmem:[%s8 + $0x60] sm:$0xff]
  %v4131 = vld [vmem:[%s8 + $0x68] sm:$0xff]
  %v4132 = vld [vmem:[%s8 + $0x70] sm:$0xff]
  %v4133 = vld [vmem:[%s8 + $0x78] sm:$0xff]
  %v4134 = vld [vmem:[%s9] sm:$0xff]
  %v4135 = vld [vmem:[%s9 + $0x8] sm:$0xff]
  %v4136 = vld [vmem:[%s9 + $0x10] sm:$0xff]
  %v4137 = vld [vmem:[%s9 + $0x18] sm:$0xff]
  %v4138 = vld [vmem:[%s10] sm:$0xff]
  %v4139 = vld [vmem:[%s10 + $0x8] sm:$0xff]
  %v4140 = vld [vmem:[%s10 + $0x10] sm:$0xff]
  %v4141 = vld [vmem:[%s10 + $0x18] sm:$0xff]
  %v4142 = vld [vmem:[%s11] sm:$0x3]
  %v4144 = vlaneseq
  %v4145 = vshrl.u32 %v4144, 7
  %v4146 = vsub.s32 0, %v4145
  %v4147 = vrot.slane %v4142, %v4146
  %v4148 = vlaneseq
  %v4149 = vshrl.u32 %v4148, 7
  %v4150 = vsub.s32 1, %v4149
  %v4151 = vrot.slane %v4142, %v4150
  %vm4154 = vcmask 523264
  %v4156 = vsel %vm4154, %v4102, 0
  %v4159 = vsel %vm4154, %v4103, 0
  %v4162 = vsel %vm4154, %v4104, 0
  %v4165 = vsel %vm4154, %v4105, 0
  %v4168 = vsel %vm4154, %v4106, 0
  %v4171 = vsel %vm4154, %v4107, 0
  %v4174 = vsel %vm4154, %v4108, 0
  %v4177 = vsel %vm4154, %v4109, 0
  %v4180 = vsel %vm4154, %v4110, 0
  %v4183 = vsel %vm4154, %v4111, 0
  %v4186 = vsel %vm4154, %v4112, 0
  %v4189 = vsel %vm4154, %v4113, 0
  %v4192 = vsel %vm4154, %v4114, 0
  %v4195 = vsel %vm4154, %v4115, 0
  %v4198 = vsel %vm4154, %v4116, 0
  %v4201 = vsel %vm4154, %v4117, 0
  %4203 = vmatprep.subr.mxu0 %v4119
  %4204 = vmatpush1.msra.mxu0 %v4118
  %4205 = vmatprep.subr.mxu0 %v4121
  %4206 = vmatpush1.msra.mxu0 %v4120
  %4207 = vmatprep.subr.mxu0 %v4123
  %4208 = vmatpush1.msra.mxu0 %v4122
  %4209 = vmatprep.subr.mxu0 %v4125
  %4210 = vmatpush1.msra.mxu0 %v4124
  %4211 = vmatprep.subr.mxu0 %v4127
  %4212 = vmatpush1.msra.mxu0 %v4126
  %4213 = vmatprep.subr.mxu0 %v4129
  %4214 = vmatpush1.msra.mxu0 %v4128
  %4215 = vmatprep.subr.mxu0 %v4131
  %4216 = vmatpush1.msra.mxu0 %v4130
  %4217 = vmatprep.subr.mxu0 %v4133
  %4218 = vmatpush1.msra.mxu0 %v4132
  %4219 = vmatprep.subr.mxu0 0.0
  %4220 = vmatpush1.msra.mxu0 0.0
  %4221 = vmatprep.subr.mxu0 0.0
  %4222 = vmatpush1.msra.mxu0 0.0
  %4223 = vmatprep.subr.mxu0 0.0
  %4224 = vmatpush1.msra.mxu0 0.0
  %4225 = vmatprep.subr.mxu0 0.0
  %4226 = vmatpush1.msra.mxu0 0.0
  %4227 = vmatprep.subr.mxu0 0.0
  %4228 = vmatpush1.msra.mxu0 0.0
  %4229 = vmatprep.subr.mxu0 0.0
  %4230 = vmatpush1.msra.mxu0 0.0
  %4231 = vmatprep.subr.mxu0 0.0
  %4232 = vmatpush1.msra.mxu0 0.0
  %4233 = vmatprep.subr.mxu0 0.0
  %4234 = vmatpush1.msra.mxu0 0.0
  %4235 = vmatprep.subr.mxu0 0.0
  %4236 = vmatpush1.msra.mxu0 0.0
  %4237 = vmatprep.subr.mxu0 0.0
  %4238 = vmatpush1.msra.mxu0 0.0
  %4239 = vmatprep.subr.mxu0 0.0
  %4240 = vmatpush1.msra.mxu0 0.0
  %4241 = vmatprep.subr.mxu0 0.0
  %4242 = vmatpush1.msra.mxu0 0.0
  %4243 = vmatprep.subr.mxu0 0.0
  %4244 = vmatpush1.msra.mxu0 0.0
  %4245 = vmatprep.subr.mxu0 0.0
  %4246 = vmatpush1.msra.mxu0 0.0
  %4247 = vmatprep.subr.mxu0 0.0
  %4248 = vmatpush1.msra.mxu0 0.0
  %4249 = vmatprep.subr.mxu0 0.0
  %4250 = vmatpush1.msra.mxu0 0.0
  %4251 = vmatprep.subr.mxu0 0.0
  %4252 = vmatpush1.msra.mxu0 0.0
  %4253 = vmatprep.subr.mxu0 0.0
  %4254 = vmatpush1.msra.mxu0 0.0
  %4255 = vmatprep.subr.mxu0 0.0
  %4256 = vmatpush1.msra.mxu0 0.0
  %4257 = vmatprep.subr.mxu0 0.0
  %4258 = vmatpush1.msra.mxu0 0.0
  %4259 = vmatprep.subr.mxu0 0.0
  %4260 = vmatpush1.msra.mxu0 0.0
  %4261 = vmatprep.subr.mxu0 0.0
  %4262 = vmatpush1.msra.mxu0 0.0
  %4263 = vmatprep.subr.mxu0 0.0
  %4264 = vmatpush1.msra.mxu0 0.0
  %4265 = vmatprep.subr.mxu0 0.0
  %4266 = vmatpush1.msra.mxu0 0.0
  %4267 = vmatprep.mubr.f32.mxu0 0.0
  %4268 = vmatmul.mubr.f32.gmra.mrb[0].mxu0 %v4156
  %v4269 = vpop.f32.mrb[0].mxu0
  %v4270 = vadd.f32 %v4147, %v4269
  %v4271 = vpop.f32.mrb[0].mxu0
  %v4272 = vadd.f32 %v4151, %v4271
  %4273 = vmatprep.mubr.f32.mxu0 0.0
  %4274 = vmatmul.mubr.f32.gmra.mrb[0].mxu0 %v4159
  %v4275 = vpop.f32.mrb[0].mxu0
  %v4276 = vadd.f32 %v4147, %v4275
  %v4277 = vpop.f32.mrb[0].mxu0
  %v4278 = vadd.f32 %v4151, %v4277
  %4279 = vmatprep.mubr.f32.mxu0 0.0
  %4280 = vmatmul.mubr.f32.gmra.mrb[0].mxu0 %v4162
  %v4281 = vpop.f32.mrb[0].mxu0
  %v4282 = vadd.f32 %v4147, %v4281
  %v4283 = vpop.f32.mrb[0].mxu0
  %v4284 = vadd.f32 %v4151, %v4283
  %4285 = vmatprep.mubr.f32.mxu0 0.0
  %4286 = vmatmul.mubr.f32.gmra.mrb[0].mxu0 %v4165
  %v4287 = vpop.f32.mrb[0].mxu0
  %v4288 = vadd.f32 %v4147, %v4287
  %v4289 = vpop.f32.mrb[0].mxu0
  %v4290 = vadd.f32 %v4151, %v4289
  %4291 = vmatprep.mubr.f32.mxu0 0.0
  %4292 = vmatmul.mubr.f32.gmra.mrb[0].mxu0 %v4168
  %v4293 = vpop.f32.mrb[0].mxu0
  %v4294 = vadd.f32 %v4147, %v4293
  %v4295 = vpop.f32.mrb[0].mxu0
  %v4296 = vadd.f32 %v4151, %v4295
  %4297 = vmatprep.mubr.f32.mxu0 0.0
  %4298 = vmatmul.mubr.f32.gmra.mrb[0].mxu0 %v4171
  %v4299 = vpop.f32.mrb[0].mxu0
  %v4300 = vadd.f32 %v4147, %v4299
  %v4301 = vpop.f32.mrb[0].mxu0
  %v4302 = vadd.f32 %v4151, %v4301
  %4303 = vmatprep.mubr.f32.mxu0 0.0
  %4304 = vmatmul.mubr.f32.gmra.mrb[0].mxu0 %v4174
  %v4305 = vpop.f32.mrb[0].mxu0
  %v4306 = vadd.f32 %v4147, %v4305
  %v4307 = vpop.f32.mrb[0].mxu0
  %v4308 = vadd.f32 %v4151, %v4307
  %4309 = vmatprep.mubr.f32.mxu0 0.0
  %4310 = vmatmul.mubr.f32.gmra.mrb[0].mxu0 %v4177
  %v4311 = vpop.f32.mrb[0].mxu0
  %v4312 = vadd.f32 %v4147, %v4311
  %v4313 = vpop.f32.mrb[0].mxu0
  %v4314 = vadd.f32 %v4151, %v4313
  %4315 = vmatprep.mubr.f32.mxu0 0.0
  %4316 = vmatmul.mubr.f32.gmra.mrb[0].mxu0 %v4180
  %v4317 = vpop.f32.mrb[0].mxu0
  %v4318 = vadd.f32 %v4147, %v4317
  %v4319 = vpop.f32.mrb[0].mxu0
  %v4320 = vadd.f32 %v4151, %v4319
  %4321 = vmatprep.mubr.f32.mxu0 0.0
  %4322 = vmatmul.mubr.f32.gmra.mrb[0].mxu0 %v4183
  %v4323 = vpop.f32.mrb[0].mxu0
  %v4324 = vadd.f32 %v4147, %v4323
  %v4325 = vpop.f32.mrb[0].mxu0
  %v4326 = vadd.f32 %v4151, %v4325
  %4327 = vmatprep.mubr.f32.mxu0 0.0
  %4328 = vmatmul.mubr.f32.gmra.mrb[0].mxu0 %v4186
  %v4329 = vpop.f32.mrb[0].mxu0
  %v4330 = vadd.f32 %v4147, %v4329
  %v4331 = vpop.f32.mrb[0].mxu0
  %v4332 = vadd.f32 %v4151, %v4331
  %4333 = vmatprep.mubr.f32.mxu0 0.0
  %4334 = vmatmul.mubr.f32.gmra.mrb[0].mxu0 %v4189
  %v4335 = vpop.f32.mrb[0].mxu0
  %v4336 = vadd.f32 %v4147, %v4335
  %v4337 = vpop.f32.mrb[0].mxu0
  %v4338 = vadd.f32 %v4151, %v4337
  %4339 = vmatprep.mubr.f32.mxu0 0.0
  %4340 = vmatmul.mubr.f32.gmra.mrb[0].mxu0 %v4192
  %v4341 = vpop.f32.mrb[0].mxu0
  %v4342 = vadd.f32 %v4147, %v4341
  %v4343 = vpop.f32.mrb[0].mxu0
  %v4344 = vadd.f32 %v4151, %v4343
  %4345 = vmatprep.mubr.f32.mxu0 0.0
  %4346 = vmatmul.mubr.f32.gmra.mrb[0].mxu0 %v4195
  %v4347 = vpop.f32.mrb[0].mxu0
  %v4348 = vadd.f32 %v4147, %v4347
  %v4349 = vpop.f32.mrb[0].mxu0
  %v4350 = vadd.f32 %v4151, %v4349
  %4351 = vmatprep.mubr.f32.mxu0 0.0
  %4352 = vmatmul.mubr.f32.gmra.mrb[0].mxu0 %v4198
  %v4353 = vpop.f32.mrb[0].mxu0
  %v4354 = vadd.f32 %v4147, %v4353
  %v4355 = vpop.f32.mrb[0].mxu0
  %v4356 = vadd.f32 %v4151, %v4355
  %4357 = vmatprep.mubr.f32.mxu0 0.0
  %4358 = vmatmul.mubr.f32.gmra.mrb[0].mxu0 %v4201
  %v4359 = vpop.f32.mrb[0].mxu0
  %v4360 = vadd.f32 %v4147, %v4359
  %v4361 = vpop.f32.mrb[0].mxu0
  %v4362 = vadd.f32 %v4151, %v4361
  %4363 = vdwg.mxu0
  %4364 = vst [vmem:[#allocation2] sm:$0xff] %v4270
  %4365 = vst [vmem:[#allocation2 + $0x8] sm:$0xff] %v4272
  %4366 = vst [vmem:[#allocation2 + $0x10] sm:$0xff] %v4276
  %4367 = vst [vmem:[#allocation2 + $0x18] sm:$0xff] %v4278
  %4368 = vst [vmem:[#allocation2 + $0x20] sm:$0xff] %v4282
  %4369 = vst [vmem:[#allocation2 + $0x28] sm:$0xff] %v4284
  %4370 = vst [vmem:[#allocation2 + $0x30] sm:$0xff] %v4288
  %4371 = vst [vmem:[#allocation2 + $0x38] sm:$0xff] %v4290
  %4372 = vst [vmem:[#allocation2 + $0x40] sm:$0xff] %v4294
  %4373 = vst [vmem:[#allocation2 + $0x48] sm:$0xff] %v4296
  %4374 = vst [vmem:[#allocation2 + $0x50] sm:$0xff] %v4300
  %4375 = vst [vmem:[#allocation2 + $0x58] sm:$0xff] %v4302
  %4376 = vst [vmem:[#allocation2 + $0x60] sm:$0xff] %v4306
  %4377 = vst [vmem:[#allocation2 + $0x68] sm:$0xff] %v4308
  %4378 = vst [vmem:[#allocation2 + $0x70] sm:$0xff] %v4312
  %4379 = vst [vmem:[#allocation2 + $0x78] sm:$0xff] %v4314
  %4380 = vst [vmem:[#allocation2 + $0x80] sm:$0xff] %v4318
  %4381 = vst [vmem:[#allocation2 + $0x88] sm:$0xff] %v4320
  %4382 = vst [vmem:[#allocation2 + $0x90] sm:$0xff] %v4324
  %4383 = vst [vmem:[#allocation2 + $0x98] sm:$0xff] %v4326
  %4384 = vst [vmem:[#allocation2 + $0xa0] sm:$0xff] %v4330
  %4385 = vst [vmem:[#allocation2 + $0xa8] sm:$0xff] %v4332
  %4386 = vst [vmem:[#allocation2 + $0xb0] sm:$0xff] %v4336
  %4387 = vst [vmem:[#allocation2 + $0xb8] sm:$0xff] %v4338
  %4388 = vst [vmem:[#allocation2 + $0xc0] sm:$0xff] %v4342
  %4389 = vst [vmem:[#allocation2 + $0xc8] sm:$0xff] %v4344
  %4390 = vst [vmem:[#allocation2 + $0xd0] sm:$0xff] %v4348
  %4391 = vst [vmem:[#allocation2 + $0xd8] sm:$0xff] %v4350
  %4392 = vst [vmem:[#allocation2 + $0xe0] sm:$0xff] %v4354
  %4393 = vst [vmem:[#allocation2 + $0xe8] sm:$0xff] %v4356
  %4394 = vst [vmem:[#allocation2 + $0xf0] sm:$0xff] %v4360
  %4395 = vst [vmem:[#allocation2 + $0xf8] sm:$0xff] %v4362
  %s4396 = scalar_lea.vmem %s3, 16
  %v4397 = vld [vmem:[%s4396] sm:$0xff]
  %s4398 = scalar_lea.vmem %s3, 24
  %v4399 = vld [vmem:[%s4398] sm:$0xff]
  %v4400 = vld [vmem:[#allocation2] sm:$0xff]
  %4401 = vmatprep.subr.mxu0 0.0
  %4402 = vmatpush1.msra.mxu0 %v4134
  %4403 = vmatprep.subr.mxu0 0.0
  %4404 = vmatpush1.msra.mxu0 %v4135
  %4405 = vmatprep.subr.mxu0 0.0
  %4406 = vmatpush1.msra.mxu0 %v4136
  %4407 = vmatprep.subr.mxu0 0.0
  %4408 = vmatpush1.msra.mxu0 %v4137
  %4409 = vmatprep.subr.mxu0 0.0
  %4410 = vmatpush1.msra.mxu0 0.0
  %4411 = vmatprep.subr.mxu0 0.0
  %4412 = vmatpush1.msra.mxu0 0.0
  %4413 = vmatprep.subr.mxu0 0.0
  %4414 = vmatpush1.msra.mxu0 0.0
  %4415 = vmatprep.subr.mxu0 0.0
  %4416 = vmatpush1.msra.mxu0 0.0
  %4417 = vmatprep.subr.mxu0 0.0
  %4418 = vmatpush1.msra.mxu0 0.0
  %4419 = vmatprep.subr.mxu0 0.0
  %4420 = vmatpush1.msra.mxu0 0.0
  %4421 = vmatprep.subr.mxu0 0.0
  %4422 = vmatpush1.msra.mxu0 0.0
  %4423 = vmatprep.subr.mxu0 0.0
  %4424 = vmatpush1.msra.mxu0 0.0
  %4425 = vmatprep.subr.mxu0 0.0
  %4426 = vmatpush1.msra.mxu0 0.0
  %4427 = vmatprep.subr.mxu0 0.0
  %4428 = vmatpush1.msra.mxu0 0.0
  %4429 = vmatprep.subr.mxu0 0.0
  %4430 = vmatpush1.msra.mxu0 0.0
  %4431 = vmatprep.subr.mxu0 0.0
  %4432 = vmatpush1.msra.mxu0 0.0
  %4433 = vmatprep.subr.mxu0 0.0
  %4434 = vmatpush1.msra.mxu0 0.0
  %4435 = vmatprep.subr.mxu0 0.0
  %4436 = vmatpush1.msra.mxu0 0.0
  %4437 = vmatprep.subr.mxu0 0.0
  %4438 = vmatpush1.msra.mxu0 0.0
  %4439 = vmatprep.subr.mxu0 0.0
  %4440 = vmatpush1.msra.mxu0 0.0
  %4441 = vmatprep.subr.mxu0 0.0
  %4442 = vmatpush1.msra.mxu0 0.0
  %4443 = vmatprep.subr.mxu0 0.0
  %4444 = vmatpush1.msra.mxu0 0.0
  %4445 = vmatprep.subr.mxu0 0.0
  %4446 = vmatpush1.msra.mxu0 0.0
  %4447 = vmatprep.subr.mxu0 0.0
  %4448 = vmatpush1.msra.mxu0 0.0
  %4449 = vmatprep.subr.mxu0 0.0
  %4450 = vmatpush1.msra.mxu0 0.0
  %4451 = vmatprep.subr.mxu0 0.0
  %4452 = vmatpush1.msra.mxu0 0.0
  %4453 = vmatprep.subr.mxu0 0.0
  %4454 = vmatpush1.msra.mxu0 0.0
  %4455 = vmatprep.subr.mxu0 0.0
  %4456 = vmatpush1.msra.mxu0 0.0
  %4457 = vmatprep.subr.mxu0 0.0
  %4458 = vmatpush1.msra.mxu0 0.0
  %4459 = vmatprep.subr.mxu0 0.0
  %4460 = vmatpush1.msra.mxu0 0.0
  %4461 = vmatprep.subr.mxu0 0.0
  %4462 = vmatpush1.msra.mxu0 0.0
  %4463 = vmatprep.subr.mxu0 0.0
  %4464 = vmatpush1.msra.mxu0 0.0
  %4465 = vmatprep.mubr.f32.mxu0 0.0
  %4466 = vmatmul.mubr.f32.gmra.mrb[0].mxu0 %v738
  %v4467 = vpop.f32.mrb[0].mxu0
  %v4468 = vadd.f32 0.0, %v4467
  %v4469 = vpop.f32.mrb[0].mxu0
  %4470 = vdwg.mxu0
  %v4471 = vadd.f32 %v4400, %v4468
  %v4472 = vtanh.pop %v4471
  %v4473 = vxor.u32 %v4471, 2147483648
  %v4474 = vmul.f32 %v4473, 1.442695
  %v4475 = vpow.pop %v4474
  %v4476 = vadd.f32 %v4475, 1.0
  %v4477 = vrcp.pop %v4476
  %v4478 = vmul.f32 1.0, %v4477
  %v4479 = vsel %vm462, %v4472, %v4478
  %4481 = vrot.lane.b32.xlu0 %v4397, 32
  %v4482 = vpop.permute.xlu0 %4481
  %v4484 = vmul.f32 %v4479, %v4482
  %4486 = vrot.lane.b32.xlu0 %v4479, 64
  %v4487 = vpop.permute.xlu0 %4486
  %v4489 = vmul.f32 %v4479, %v4487
  %4491 = vrot.lane.b32.xlu0 %v4489, 32
  %v4492 = vpop.permute.xlu0 %4491
  %v4494 = vadd.f32 %v4484, %v4492
  %v4495 = vtanh.pop %v4494
  %4497 = vrot.lane.b32.xlu0 %v4495, 64
  %v4498 = vpop.permute.xlu0 %4497
  %v4500 = vmul.f32 %v4479, %v4498
  %4502 = vrot.lane.b32.xlu0 %v4500, 32
  %v4503 = vpop.permute.xlu0 %4502
  %4505 = vst.msk [vmem:[%s12] sm:$0xff] %vm491, %v4503
  %v4506 = vld [vmem:[#allocation2 + $0xf8] sm:$0xff]
  %4507 = vmatprep.subr.mxu0 0.0
  %4508 = vmatpush1.msra.mxu0 %v4138
  %4509 = vmatprep.subr.mxu0 0.0
  %4510 = vmatpush1.msra.mxu0 %v4139
  %4511 = vmatprep.subr.mxu0 0.0
  %4512 = vmatpush1.msra.mxu0 %v4140
  %4513 = vmatprep.subr.mxu0 0.0
  %4514 = vmatpush1.msra.mxu0 %v4141
  %4515 = vmatprep.subr.mxu0 0.0
  %4516 = vmatpush1.msra.mxu0 0.0
  %4517 = vmatprep.subr.mxu0 0.0
  %4518 = vmatpush1.msra.mxu0 0.0
  %4519 = vmatprep.subr.mxu0 0.0
  %4520 = vmatpush1.msra.mxu0 0.0
  %4521 = vmatprep.subr.mxu0 0.0
  %4522 = vmatpush1.msra.mxu0 0.0
  %4523 = vmatprep.subr.mxu0 0.0
  %4524 = vmatpush1.msra.mxu0 0.0
  %4525 = vmatprep.subr.mxu0 0.0
  %4526 = vmatpush1.msra.mxu0 0.0
  %4527 = vmatprep.subr.mxu0 0.0
  %4528 = vmatpush1.msra.mxu0 0.0
  %4529 = vmatprep.subr.mxu0 0.0
  %4530 = vmatpush1.msra.mxu0 0.0
  %4531 = vmatprep.subr.mxu0 0.0
  %4532 = vmatpush1.msra.mxu0 0.0
  %4533 = vmatprep.subr.mxu0 0.0
  %4534 = vmatpush1.msra.mxu0 0.0
  %4535 = vmatprep.subr.mxu0 0.0
  %4536 = vmatpush1.msra.mxu0 0.0
  %4537 = vmatprep.subr.mxu0 0.0
  %4538 = vmatpush1.msra.mxu0 0.0
  %4539 = vmatprep.subr.mxu0 0.0
  %4540 = vmatpush1.msra.mxu0 0.0
  %4541 = vmatprep.subr.mxu0 0.0
  %4542 = vmatpush1.msra.mxu0 0.0
  %4543 = vmatprep.subr.mxu0 0.0
  %4544 = vmatpush1.msra.mxu0 0.0
  %4545 = vmatprep.subr.mxu0 0.0
  %4546 = vmatpush1.msra.mxu0 0.0
  %4547 = vmatprep.subr.mxu0 0.0
  %4548 = vmatpush1.msra.mxu0 0.0
  %4549 = vmatprep.subr.mxu0 0.0
  %4550 = vmatpush1.msra.mxu0 0.0
  %4551 = vmatprep.subr.mxu0 0.0
  %4552 = vmatpush1.msra.mxu0 0.0
  %4553 = vmatprep.subr.mxu0 0.0
  %4554 = vmatpush1.msra.mxu0 0.0
  %4555 = vmatprep.subr.mxu0 0.0
  %4556 = vmatpush1.msra.mxu0 0.0
  %4557 = vmatprep.subr.mxu0 0.0
  %4558 = vmatpush1.msra.mxu0 0.0
  %4559 = vmatprep.subr.mxu0 0.0
  %4560 = vmatpush1.msra.mxu0 0.0
  %4561 = vmatprep.subr.mxu0 0.0
  %4562 = vmatpush1.msra.mxu0 0.0
  %4563 = vmatprep.subr.mxu0 0.0
  %4564 = vmatpush1.msra.mxu0 0.0
  %4565 = vmatprep.subr.mxu0 0.0
  %4566 = vmatpush1.msra.mxu0 0.0
  %4567 = vmatprep.subr.mxu0 0.0
  %4568 = vmatpush1.msra.mxu0 0.0
  %4569 = vmatprep.subr.mxu0 0.0
  %4570 = vmatpush1.msra.mxu0 0.0
  %4571 = vmatprep.mubr.f32.mxu0 0.0
  %4572 = vmatmul.mubr.f32.gmra.mrb[0].mxu0 %v738
  %v4573 = vpop.f32.mrb[0].mxu0
  %v4574 = vadd.f32 0.0, %v4573
  %v4575 = vpop.f32.mrb[0].mxu0
  %4576 = vdwg.mxu0
  %v4577 = vadd.f32 %v4506, %v4574
  %v4578 = vtanh.pop %v4577
  %v4579 = vxor.u32 %v4577, 2147483648
  %v4580 = vmul.f32 %v4579, 1.442695
  %v4581 = vpow.pop %v4580
  %v4582 = vadd.f32 %v4581, 1.0
  %v4583 = vrcp.pop %v4582
  %v4584 = vmul.f32 1.0, %v4583
  %v4585 = vsel %vm462, %v4578, %v4584
  %4587 = vrot.lane.b32.xlu0 %v4399, 32
  %v4588 = vpop.permute.xlu0 %4587
  %v4590 = vmul.f32 %v4585, %v4588
  %4592 = vrot.lane.b32.xlu0 %v4585, 64
  %v4593 = vpop.permute.xlu0 %4592
  %v4595 = vmul.f32 %v4585, %v4593
  %4597 = vrot.lane.b32.xlu0 %v4595, 32
  %v4598 = vpop.permute.xlu0 %4597
  %v4600 = vadd.f32 %v4590, %v4598
  %v4601 = vtanh.pop %v4600
  %4603 = vrot.lane.b32.xlu0 %v4601, 64
  %v4604 = vpop.permute.xlu0 %4603
  %v4606 = vmul.f32 %v4585, %v4604
  %4608 = vrot.lane.b32.xlu0 %v4606, 64
  %v4609 = vpop.permute.xlu0 %4608
  %4611 = vst.msk [vmem:[%s12 + $0x78] sm:$0xff] %vm950, %v4609
  %v4612 = vld [vmem:[#allocation2 + $0x10] sm:$0xff]
  %v4613 = vsel %vm491, %v4503, 0
  %4615 = vmatprep.subr.mxu0 0.0
  %4616 = vmatpush1.msra.mxu0 %v4134
  %4617 = vmatprep.subr.mxu0 0.0
  %4618 = vmatpush1.msra.mxu0 %v4135
  %4619 = vmatprep.subr.mxu0 0.0
  %4620 = vmatpush1.msra.mxu0 %v4136
  %4621 = vmatprep.subr.mxu0 0.0
  %4622 = vmatpush1.msra.mxu0 %v4137
  %4623 = vmatprep.subr.mxu0 0.0
  %4624 = vmatpush1.msra.mxu0 0.0
  %4625 = vmatprep.subr.mxu0 0.0
  %4626 = vmatpush1.msra.mxu0 0.0
  %4627 = vmatprep.subr.mxu0 0.0
  %4628 = vmatpush1.msra.mxu0 0.0
  %4629 = vmatprep.subr.mxu0 0.0
  %4630 = vmatpush1.msra.mxu0 0.0
  %4631 = vmatprep.subr.mxu0 0.0
  %4632 = vmatpush1.msra.mxu0 0.0
  %4633 = vmatprep.subr.mxu0 0.0
  %4634 = vmatpush1.msra.mxu0 0.0
  %4635 = vmatprep.subr.mxu0 0.0
  %4636 = vmatpush1.msra.mxu0 0.0
  %4637 = vmatprep.subr.mxu0 0.0
  %4638 = vmatpush1.msra.mxu0 0.0
  %4639 = vmatprep.subr.mxu0 0.0
  %4640 = vmatpush1.msra.mxu0 0.0
  %4641 = vmatprep.subr.mxu0 0.0
  %4642 = vmatpush1.msra.mxu0 0.0
  %4643 = vmatprep.subr.mxu0 0.0
  %4644 = vmatpush1.msra.mxu0 0.0
  %4645 = vmatprep.subr.mxu0 0.0
  %4646 = vmatpush1.msra.mxu0 0.0
  %4647 = vmatprep.subr.mxu0 0.0
  %4648 = vmatpush1.msra.mxu0 0.0
  %4649 = vmatprep.subr.mxu0 0.0
  %4650 = vmatpush1.msra.mxu0 0.0
  %4651 = vmatprep.subr.mxu0 0.0
  %4652 = vmatpush1.msra.mxu0 0.0
  %4653 = vmatprep.subr.mxu0 0.0
  %4654 = vmatpush1.msra.mxu0 0.0
  %4655 = vmatprep.subr.mxu0 0.0
  %4656 = vmatpush1.msra.mxu0 0.0
  %4657 = vmatprep.subr.mxu0 0.0
  %4658 = vmatpush1.msra.mxu0 0.0
  %4659 = vmatprep.subr.mxu0 0.0
  %4660 = vmatpush1.msra.mxu0 0.0
  %4661 = vmatprep.subr.mxu0 0.0
  %4662 = vmatpush1.msra.mxu0 0.0
  %4663 = vmatprep.subr.mxu0 0.0
  %4664 = vmatpush1.msra.mxu0 0.0
  %4665 = vmatprep.subr.mxu0 0.0
  %4666 = vmatpush1.msra.mxu0 0.0
  %4667 = vmatprep.subr.mxu0 0.0
  %4668 = vmatpush1.msra.mxu0 0.0
  %4669 = vmatprep.subr.mxu0 0.0
  %4670 = vmatpush1.msra.mxu0 0.0
  %4671 = vmatprep.subr.mxu0 0.0
  %4672 = vmatpush1.msra.mxu0 0.0
  %4673 = vmatprep.subr.mxu0 0.0
  %4674 = vmatpush1.msra.mxu0 0.0
  %4675 = vmatprep.subr.mxu0 0.0
  %4676 = vmatpush1.msra.mxu0 0.0
  %4677 = vmatprep.subr.mxu0 0.0
  %4678 = vmatpush1.msra.mxu0 0.0
  %4679 = vmatprep.mubr.f32.mxu0 0.0
  %4680 = vmatmul.mubr.f32.gmra.mrb[0].mxu0 %v4613
  %v4681 = vpop.f32.mrb[0].mxu0
  %v4682 = vadd.f32 0.0, %v4681
  %v4683 = vpop.f32.mrb[0].mxu0
  %4684 = vdwg.mxu0
  %v4685 = vadd.f32 %v4612, %v4682
  %v4686 = vtanh.pop %v4685
  %v4687 = vxor.u32 %v4685, 2147483648
  %v4688 = vmul.f32 %v4687, 1.442695
  %v4689 = vpow.pop %v4688
  %v4690 = vadd.f32 %v4689, 1.0
  %v4691 = vrcp.pop %v4690
  %v4692 = vmul.f32 1.0, %v4691
  %v4693 = vsel %vm462, %v4686, %v4692
  %v4694 = vmul.f32 %v4693, %v4494
  %4696 = vrot.lane.b32.xlu0 %v4693, 64
  %v4697 = vpop.permute.xlu0 %4696
  %v4699 = vmul.f32 %v4693, %v4697
  %4701 = vrot.lane.b32.xlu0 %v4699, 32
  %v4702 = vpop.permute.xlu0 %4701
  %v4704 = vadd.f32 %v4694, %v4702
  %v4705 = vtanh.pop %v4704
  %4707 = vrot.lane.b32.xlu0 %v4705, 64
  %v4708 = vpop.permute.xlu0 %4707
  %v4710 = vmul.f32 %v4693, %v4708
  %4712 = vrot.lane.b32.xlu0 %v4710, 32
  %v4713 = vpop.permute.xlu0 %4712
  %4715 = vst.msk [vmem:[%s12 + $0x8] sm:$0xff] %vm491, %v4713
  %v4716 = vld [vmem:[#allocation2 + $0xe8] sm:$0xff]
  %4717 = vrot.lane.b32.xlu0 %v4606, 32
  %v4718 = vpop.permute.xlu0 %4717
  %v4719 = vsel %vm491, %v4718, 0
  %4721 = vmatprep.subr.mxu0 0.0
  %4722 = vmatpush1.msra.mxu0 %v4138
  %4723 = vmatprep.subr.mxu0 0.0
  %4724 = vmatpush1.msra.mxu0 %v4139
  %4725 = vmatprep.subr.mxu0 0.0
  %4726 = vmatpush1.msra.mxu0 %v4140
  %4727 = vmatprep.subr.mxu0 0.0
  %4728 = vmatpush1.msra.mxu0 %v4141
  %4729 = vmatprep.subr.mxu0 0.0
  %4730 = vmatpush1.msra.mxu0 0.0
  %4731 = vmatprep.subr.mxu0 0.0
  %4732 = vmatpush1.msra.mxu0 0.0
  %4733 = vmatprep.subr.mxu0 0.0
  %4734 = vmatpush1.msra.mxu0 0.0
  %4735 = vmatprep.subr.mxu0 0.0
  %4736 = vmatpush1.msra.mxu0 0.0
  %4737 = vmatprep.subr.mxu0 0.0
  %4738 = vmatpush1.msra.mxu0 0.0
  %4739 = vmatprep.subr.mxu0 0.0
  %4740 = vmatpush1.msra.mxu0 0.0
  %4741 = vmatprep.subr.mxu0 0.0
  %4742 = vmatpush1.msra.mxu0 0.0
  %4743 = vmatprep.subr.mxu0 0.0
  %4744 = vmatpush1.msra.mxu0 0.0
  %4745 = vmatprep.subr.mxu0 0.0
  %4746 = vmatpush1.msra.mxu0 0.0
  %4747 = vmatprep.subr.mxu0 0.0
  %4748 = vmatpush1.msra.mxu0 0.0
  %4749 = vmatprep.subr.mxu0 0.0
  %4750 = vmatpush1.msra.mxu0 0.0
  %4751 = vmatprep.subr.mxu0 0.0
  %4752 = vmatpush1.msra.mxu0 0.0
  %4753 = vmatprep.subr.mxu0 0.0
  %4754 = vmatpush1.msra.mxu0 0.0
  %4755 = vmatprep.subr.mxu0 0.0
  %4756 = vmatpush1.msra.mxu0 0.0
  %4757 = vmatprep.subr.mxu0 0.0
  %4758 = vmatpush1.msra.mxu0 0.0
  %4759 = vmatprep.subr.mxu0 0.0
  %4760 = vmatpush1.msra.mxu0 0.0
  %4761 = vmatprep.subr.mxu0 0.0
  %4762 = vmatpush1.msra.mxu0 0.0
  %4763 = vmatprep.subr.mxu0 0.0
  %4764 = vmatpush1.msra.mxu0 0.0
  %4765 = vmatprep.subr.mxu0 0.0
  %4766 = vmatpush1.msra.mxu0 0.0
  %4767 = vmatprep.subr.mxu0 0.0
  %4768 = vmatpush1.msra.mxu0 0.0
  %4769 = vmatprep.subr.mxu0 0.0
  %4770 = vmatpush1.msra.mxu0 0.0
  %4771 = vmatprep.subr.mxu0 0.0
  %4772 = vmatpush1.msra.mxu0 0.0
  %4773 = vmatprep.subr.mxu0 0.0
  %4774 = vmatpush1.msra.mxu0 0.0
  %4775 = vmatprep.subr.mxu0 0.0
  %4776 = vmatpush1.msra.mxu0 0.0
  %4777 = vmatprep.subr.mxu0 0.0
  %4778 = vmatpush1.msra.mxu0 0.0
  %4779 = vmatprep.subr.mxu0 0.0
  %4780 = vmatpush1.msra.mxu0 0.0
  %4781 = vmatprep.subr.mxu0 0.0
  %4782 = vmatpush1.msra.mxu0 0.0
  %4783 = vmatprep.subr.mxu0 0.0
  %4784 = vmatpush1.msra.mxu0 0.0
  %4785 = vmatprep.mubr.f32.mxu0 0.0
  %4786 = vmatmul.mubr.f32.gmra.mrb[0].mxu0 %v4719
  %v4787 = vpop.f32.mrb[0].mxu0
  %v4788 = vadd.f32 0.0, %v4787
  %v4789 = vpop.f32.mrb[0].mxu0
  %4790 = vdwg.mxu0
  %v4791 = vadd.f32 %v4716, %v4788
  %v4792 = vtanh.pop %v4791
  %v4793 = vxor.u32 %v4791, 2147483648
  %v4794 = vmul.f32 %v4793, 1.442695
  %v4795 = vpow.pop %v4794
  %v4796 = vadd.f32 %v4795, 1.0
  %v4797 = vrcp.pop %v4796
  %v4798 = vmul.f32 1.0, %v4797
  %v4799 = vsel %vm462, %v4792, %v4798
  %v4800 = vmul.f32 %v4799, %v4600
  %4802 = vrot.lane.b32.xlu0 %v4799, 64
  %v4803 = vpop.permute.xlu0 %4802
  %v4805 = vmul.f32 %v4799, %v4803
  %4807 = vrot.lane.b32.xlu0 %v4805, 32
  %v4808 = vpop.permute.xlu0 %4807
  %v4810 = vadd.f32 %v4800, %v4808
  %v4811 = vtanh.pop %v4810
  %4813 = vrot.lane.b32.xlu0 %v4811, 64
  %v4814 = vpop.permute.xlu0 %4813
  %v4816 = vmul.f32 %v4799, %v4814
  %4818 = vrot.lane.b32.xlu0 %v4816, 64
  %v4819 = vpop.permute.xlu0 %4818
  %4821 = vst.msk [vmem:[%s12 + $0x70] sm:$0xff] %vm950, %v4819
  %v4822 = vld [vmem:[#allocation2 + $0x20] sm:$0xff]
  %v4823 = vsel %vm491, %v4713, 0
  %4825 = vmatprep.subr.mxu0 0.0
  %4826 = vmatpush1.msra.mxu0 %v4134
  %4827 = vmatprep.subr.mxu0 0.0
  %4828 = vmatpush1.msra.mxu0 %v4135
  %4829 = vmatprep.subr.mxu0 0.0
  %4830 = vmatpush1.msra.mxu0 %v4136
  %4831 = vmatprep.subr.mxu0 0.0
  %4832 = vmatpush1.msra.mxu0 %v4137
  %4833 = vmatprep.subr.mxu0 0.0
  %4834 = vmatpush1.msra.mxu0 0.0
  %4835 = vmatprep.subr.mxu0 0.0
  %4836 = vmatpush1.msra.mxu0 0.0
  %4837 = vmatprep.subr.mxu0 0.0
  %4838 = vmatpush1.msra.mxu0 0.0
  %4839 = vmatprep.subr.mxu0 0.0
  %4840 = vmatpush1.msra.mxu0 0.0
  %4841 = vmatprep.subr.mxu0 0.0
  %4842 = vmatpush1.msra.mxu0 0.0
  %4843 = vmatprep.subr.mxu0 0.0
  %4844 = vmatpush1.msra.mxu0 0.0
  %4845 = vmatprep.subr.mxu0 0.0
  %4846 = vmatpush1.msra.mxu0 0.0
  %4847 = vmatprep.subr.mxu0 0.0
  %4848 = vmatpush1.msra.mxu0 0.0
  %4849 = vmatprep.subr.mxu0 0.0
  %4850 = vmatpush1.msra.mxu0 0.0
  %4851 = vmatprep.subr.mxu0 0.0
  %4852 = vmatpush1.msra.mxu0 0.0
  %4853 = vmatprep.subr.mxu0 0.0
  %4854 = vmatpush1.msra.mxu0 0.0
  %4855 = vmatprep.subr.mxu0 0.0
  %4856 = vmatpush1.msra.mxu0 0.0
  %4857 = vmatprep.subr.mxu0 0.0
  %4858 = vmatpush1.msra.mxu0 0.0
  %4859 = vmatprep.subr.mxu0 0.0
  %4860 = vmatpush1.msra.mxu0 0.0
  %4861 = vmatprep.subr.mxu0 0.0
  %4862 = vmatpush1.msra.mxu0 0.0
  %4863 = vmatprep.subr.mxu0 0.0
  %4864 = vmatpush1.msra.mxu0 0.0
  %4865 = vmatprep.subr.mxu0 0.0
  %4866 = vmatpush1.msra.mxu0 0.0
  %4867 = vmatprep.subr.mxu0 0.0
  %4868 = vmatpush1.msra.mxu0 0.0
  %4869 = vmatprep.subr.mxu0 0.0
  %4870 = vmatpush1.msra.mxu0 0.0
  %4871 = vmatprep.subr.mxu0 0.0
  %4872 = vmatpush1.msra.mxu0 0.0
  %4873 = vmatprep.subr.mxu0 0.0
  %4874 = vmatpush1.msra.mxu0 0.0
  %4875 = vmatprep.subr.mxu0 0.0
  %4876 = vmatpush1.msra.mxu0 0.0
  %4877 = vmatprep.subr.mxu0 0.0
  %4878 = vmatpush1.msra.mxu0 0.0
  %4879 = vmatprep.subr.mxu0 0.0
  %4880 = vmatpush1.msra.mxu0 0.0
  %4881 = vmatprep.subr.mxu0 0.0
  %4882 = vmatpush1.msra.mxu0 0.0
  %4883 = vmatprep.subr.mxu0 0.0
  %4884 = vmatpush1.msra.mxu0 0.0
  %4885 = vmatprep.subr.mxu0 0.0
  %4886 = vmatpush1.msra.mxu0 0.0
  %4887 = vmatprep.subr.mxu0 0.0
  %4888 = vmatpush1.msra.mxu0 0.0
  %4889 = vmatprep.mubr.f32.mxu0 0.0
  %4890 = vmatmul.mubr.f32.gmra.mrb[0].mxu0 %v4823
  %v4891 = vpop.f32.mrb[0].mxu0
  %v4892 = vadd.f32 0.0, %v4891
  %v4893 = vpop.f32.mrb[0].mxu0
  %4894 = vdwg.mxu0
  %v4895 = vadd.f32 %v4822, %v4892
  %v4896 = vtanh.pop %v4895
  %v4897 = vxor.u32 %v4895, 2147483648
  %v4898 = vmul.f32 %v4897, 1.442695
  %v4899 = vpow.pop %v4898
  %v4900 = vadd.f32 %v4899, 1.0
  %v4901 = vrcp.pop %v4900
  %v4902 = vmul.f32 1.0, %v4901
  %v4903 = vsel %vm462, %v4896, %v4902
  %v4904 = vmul.f32 %v4903, %v4704
  %4906 = vrot.lane.b32.xlu0 %v4903, 64
  %v4907 = vpop.permute.xlu0 %4906
  %v4909 = vmul.f32 %v4903, %v4907
  %4911 = vrot.lane.b32.xlu0 %v4909, 32
  %v4912 = vpop.permute.xlu0 %4911
  %v4914 = vadd.f32 %v4904, %v4912
  %v4915 = vtanh.pop %v4914
  %4917 = vrot.lane.b32.xlu0 %v4915, 64
  %v4918 = vpop.permute.xlu0 %4917
  %v4920 = vmul.f32 %v4903, %v4918
  %4922 = vrot.lane.b32.xlu0 %v4920, 32
  %v4923 = vpop.permute.xlu0 %4922
  %4925 = vst.msk [vmem:[%s12 + $0x10] sm:$0xff] %vm491, %v4923
  %v4926 = vld [vmem:[#allocation2 + $0xd8] sm:$0xff]
  %4927 = vrot.lane.b32.xlu0 %v4816, 32
  %v4928 = vpop.permute.xlu0 %4927
  %v4929 = vsel %vm491, %v4928, 0
  %4931 = vmatprep.subr.mxu0 0.0
  %4932 = vmatpush1.msra.mxu0 %v4138
  %4933 = vmatprep.subr.mxu0 0.0
  %4934 = vmatpush1.msra.mxu0 %v4139
  %4935 = vmatprep.subr.mxu0 0.0
  %4936 = vmatpush1.msra.mxu0 %v4140
  %4937 = vmatprep.subr.mxu0 0.0
  %4938 = vmatpush1.msra.mxu0 %v4141
  %4939 = vmatprep.subr.mxu0 0.0
  %4940 = vmatpush1.msra.mxu0 0.0
  %4941 = vmatprep.subr.mxu0 0.0
  %4942 = vmatpush1.msra.mxu0 0.0
  %4943 = vmatprep.subr.mxu0 0.0
  %4944 = vmatpush1.msra.mxu0 0.0
  %4945 = vmatprep.subr.mxu0 0.0
  %4946 = vmatpush1.msra.mxu0 0.0
  %4947 = vmatprep.subr.mxu0 0.0
  %4948 = vmatpush1.msra.mxu0 0.0
  %4949 = vmatprep.subr.mxu0 0.0
  %4950 = vmatpush1.msra.mxu0 0.0
  %4951 = vmatprep.subr.mxu0 0.0
  %4952 = vmatpush1.msra.mxu0 0.0
  %4953 = vmatprep.subr.mxu0 0.0
  %4954 = vmatpush1.msra.mxu0 0.0
  %4955 = vmatprep.subr.mxu0 0.0
  %4956 = vmatpush1.msra.mxu0 0.0
  %4957 = vmatprep.subr.mxu0 0.0
  %4958 = vmatpush1.msra.mxu0 0.0
  %4959 = vmatprep.subr.mxu0 0.0
  %4960 = vmatpush1.msra.mxu0 0.0
  %4961 = vmatprep.subr.mxu0 0.0
  %4962 = vmatpush1.msra.mxu0 0.0
  %4963 = vmatprep.subr.mxu0 0.0
  %4964 = vmatpush1.msra.mxu0 0.0
  %4965 = vmatprep.subr.mxu0 0.0
  %4966 = vmatpush1.msra.mxu0 0.0
  %4967 = vmatprep.subr.mxu0 0.0
  %4968 = vmatpush1.msra.mxu0 0.0
  %4969 = vmatprep.subr.mxu0 0.0
  %4970 = vmatpush1.msra.mxu0 0.0
  %4971 = vmatprep.subr.mxu0 0.0
  %4972 = vmatpush1.msra.mxu0 0.0
  %4973 = vmatprep.subr.mxu0 0.0
  %4974 = vmatpush1.msra.mxu0 0.0
  %4975 = vmatprep.subr.mxu0 0.0
  %4976 = vmatpush1.msra.mxu0 0.0
  %4977 = vmatprep.subr.mxu0 0.0
  %4978 = vmatpush1.msra.mxu0 0.0
  %4979 = vmatprep.subr.mxu0 0.0
  %4980 = vmatpush1.msra.mxu0 0.0
  %4981 = vmatprep.subr.mxu0 0.0
  %4982 = vmatpush1.msra.mxu0 0.0
  %4983 = vmatprep.subr.mxu0 0.0
  %4984 = vmatpush1.msra.mxu0 0.0
  %4985 = vmatprep.subr.mxu0 0.0
  %4986 = vmatpush1.msra.mxu0 0.0
  %4987 = vmatprep.subr.mxu0 0.0
  %4988 = vmatpush1.msra.mxu0 0.0
  %4989 = vmatprep.subr.mxu0 0.0
  %4990 = vmatpush1.msra.mxu0 0.0
  %4991 = vmatprep.subr.mxu0 0.0
  %4992 = vmatpush1.msra.mxu0 0.0
  %4993 = vmatprep.subr.mxu0 0.0
  %4994 = vmatpush1.msra.mxu0 0.0
  %4995 = vmatprep.mubr.f32.mxu0 0.0
  %4996 = vmatmul.mubr.f32.gmra.mrb[0].mxu0 %v4929
  %v4997 = vpop.f32.mrb[0].mxu0
  %v4998 = vadd.f32 0.0, %v4997
  %v4999 = vpop.f32.mrb[0].mxu0
  %5000 = vdwg.mxu0
  %v5001 = vadd.f32 %v4926, %v4998
  %v5002 = vtanh.pop %v5001
  %v5003 = vxor.u32 %v5001, 2147483648
  %v5004 = vmul.f32 %v5003, 1.442695
  %v5005 = vpow.pop %v5004
  %v5006 = vadd.f32 %v5005, 1.0
  %v5007 = vrcp.pop %v5006
  %v5008 = vmul.f32 1.0, %v5007
  %v5009 = vsel %vm462, %v5002, %v5008
  %v5010 = vmul.f32 %v5009, %v4810
  %5012 = vrot.lane.b32.xlu0 %v5009, 64
  %v5013 = vpop.permute.xlu0 %5012
  %v5015 = vmul.f32 %v5009, %v5013
  %5017 = vrot.lane.b32.xlu0 %v5015, 32
  %v5018 = vpop.permute.xlu0 %5017
  %v5020 = vadd.f32 %v5010, %v5018
  %v5021 = vtanh.pop %v5020
  %5023 = vrot.lane.b32.xlu0 %v5021, 64
  %v5024 = vpop.permute.xlu0 %5023
  %v5026 = vmul.f32 %v5009, %v5024
  %5028 = vrot.lane.b32.xlu0 %v5026, 64
  %v5029 = vpop.permute.xlu0 %5028
  %5031 = vst.msk [vmem:[%s12 + $0x68] sm:$0xff] %vm950, %v5029
  %v5032 = vld [vmem:[#allocation2 + $0x30] sm:$0xff]
  %v5033 = vsel %vm491, %v4923, 0
  %5035 = vmatprep.subr.mxu0 0.0
  %5036 = vmatpush1.msra.mxu0 %v4134
  %5037 = vmatprep.subr.mxu0 0.0
  %5038 = vmatpush1.msra.mxu0 %v4135
  %5039 = vmatprep.subr.mxu0 0.0
  %5040 = vmatpush1.msra.mxu0 %v4136
  %5041 = vmatprep.subr.mxu0 0.0
  %5042 = vmatpush1.msra.mxu0 %v4137
  %5043 = vmatprep.subr.mxu0 0.0
  %5044 = vmatpush1.msra.mxu0 0.0
  %5045 = vmatprep.subr.mxu0 0.0
  %5046 = vmatpush1.msra.mxu0 0.0
  %5047 = vmatprep.subr.mxu0 0.0
  %5048 = vmatpush1.msra.mxu0 0.0
  %5049 = vmatprep.subr.mxu0 0.0
  %5050 = vmatpush1.msra.mxu0 0.0
  %5051 = vmatprep.subr.mxu0 0.0
  %5052 = vmatpush1.msra.mxu0 0.0
  %5053 = vmatprep.subr.mxu0 0.0
  %5054 = vmatpush1.msra.mxu0 0.0
  %5055 = vmatprep.subr.mxu0 0.0
  %5056 = vmatpush1.msra.mxu0 0.0
  %5057 = vmatprep.subr.mxu0 0.0
  %5058 = vmatpush1.msra.mxu0 0.0
  %5059 = vmatprep.subr.mxu0 0.0
  %5060 = vmatpush1.msra.mxu0 0.0
  %5061 = vmatprep.subr.mxu0 0.0
  %5062 = vmatpush1.msra.mxu0 0.0
  %5063 = vmatprep.subr.mxu0 0.0
  %5064 = vmatpush1.msra.mxu0 0.0
  %5065 = vmatprep.subr.mxu0 0.0
  %5066 = vmatpush1.msra.mxu0 0.0
  %5067 = vmatprep.subr.mxu0 0.0
  %5068 = vmatpush1.msra.mxu0 0.0
  %5069 = vmatprep.subr.mxu0 0.0
  %5070 = vmatpush1.msra.mxu0 0.0
  %5071 = vmatprep.subr.mxu0 0.0
  %5072 = vmatpush1.msra.mxu0 0.0
  %5073 = vmatprep.subr.mxu0 0.0
  %5074 = vmatpush1.msra.mxu0 0.0
  %5075 = vmatprep.subr.mxu0 0.0
  %5076 = vmatpush1.msra.mxu0 0.0
  %5077 = vmatprep.subr.mxu0 0.0
  %5078 = vmatpush1.msra.mxu0 0.0
  %5079 = vmatprep.subr.mxu0 0.0
  %5080 = vmatpush1.msra.mxu0 0.0
  %5081 = vmatprep.subr.mxu0 0.0
  %5082 = vmatpush1.msra.mxu0 0.0
  %5083 = vmatprep.subr.mxu0 0.0
  %5084 = vmatpush1.msra.mxu0 0.0
  %5085 = vmatprep.subr.mxu0 0.0
  %5086 = vmatpush1.msra.mxu0 0.0
  %5087 = vmatprep.subr.mxu0 0.0
  %5088 = vmatpush1.msra.mxu0 0.0
  %5089 = vmatprep.subr.mxu0 0.0
  %5090 = vmatpush1.msra.mxu0 0.0
  %5091 = vmatprep.subr.mxu0 0.0
  %5092 = vmatpush1.msra.mxu0 0.0
  %5093 = vmatprep.subr.mxu0 0.0
  %5094 = vmatpush1.msra.mxu0 0.0
  %5095 = vmatprep.subr.mxu0 0.0
  %5096 = vmatpush1.msra.mxu0 0.0
  %5097 = vmatprep.subr.mxu0 0.0
  %5098 = vmatpush1.msra.mxu0 0.0
  %5099 = vmatprep.mubr.f32.mxu0 0.0
  %5100 = vmatmul.mubr.f32.gmra.mrb[0].mxu0 %v5033
  %v5101 = vpop.f32.mrb[0].mxu0
  %v5102 = vadd.f32 0.0, %v5101
  %v5103 = vpop.f32.mrb[0].mxu0
  %5104 = vdwg.mxu0
  %v5105 = vadd.f32 %v5032, %v5102
  %v5106 = vtanh.pop %v5105
  %v5107 = vxor.u32 %v5105, 2147483648
  %v5108 = vmul.f32 %v5107, 1.442695
  %v5109 = vpow.pop %v5108
  %v5110 = vadd.f32 %v5109, 1.0
  %v5111 = vrcp.pop %v5110
  %v5112 = vmul.f32 1.0, %v5111
  %v5113 = vsel %vm462, %v5106, %v5112
  %v5114 = vmul.f32 %v5113, %v4914
  %5116 = vrot.lane.b32.xlu0 %v5113, 64
  %v5117 = vpop.permute.xlu0 %5116
  %v5119 = vmul.f32 %v5113, %v5117
  %5121 = vrot.lane.b32.xlu0 %v5119, 32
  %v5122 = vpop.permute.xlu0 %5121
  %v5124 = vadd.f32 %v5114, %v5122
  %v5125 = vtanh.pop %v5124
  %5127 = vrot.lane.b32.xlu0 %v5125, 64
  %v5128 = vpop.permute.xlu0 %5127
  %v5130 = vmul.f32 %v5113, %v5128
  %5132 = vrot.lane.b32.xlu0 %v5130, 32
  %v5133 = vpop.permute.xlu0 %5132
  %5135 = vst.msk [vmem:[%s12 + $0x18] sm:$0xff] %vm491, %v5133
  %v5136 = vld [vmem:[#allocation2 + $0xc8] sm:$0xff]
  %5137 = vrot.lane.b32.xlu0 %v5026, 32
  %v5138 = vpop.permute.xlu0 %5137
  %v5139 = vsel %vm491, %v5138, 0
  %5141 = vmatprep.subr.mxu0 0.0
  %5142 = vmatpush1.msra.mxu0 %v4138
  %5143 = vmatprep.subr.mxu0 0.0
  %5144 = vmatpush1.msra.mxu0 %v4139
  %5145 = vmatprep.subr.mxu0 0.0
  %5146 = vmatpush1.msra.mxu0 %v4140
  %5147 = vmatprep.subr.mxu0 0.0
  %5148 = vmatpush1.msra.mxu0 %v4141
  %5149 = vmatprep.subr.mxu0 0.0
  %5150 = vmatpush1.msra.mxu0 0.0
  %5151 = vmatprep.subr.mxu0 0.0
  %5152 = vmatpush1.msra.mxu0 0.0
  %5153 = vmatprep.subr.mxu0 0.0
  %5154 = vmatpush1.msra.mxu0 0.0
  %5155 = vmatprep.subr.mxu0 0.0
  %5156 = vmatpush1.msra.mxu0 0.0
  %5157 = vmatprep.subr.mxu0 0.0
  %5158 = vmatpush1.msra.mxu0 0.0
  %5159 = vmatprep.subr.mxu0 0.0
  %5160 = vmatpush1.msra.mxu0 0.0
  %5161 = vmatprep.subr.mxu0 0.0
  %5162 = vmatpush1.msra.mxu0 0.0
  %5163 = vmatprep.subr.mxu0 0.0
  %5164 = vmatpush1.msra.mxu0 0.0
  %5165 = vmatprep.subr.mxu0 0.0
  %5166 = vmatpush1.msra.mxu0 0.0
  %5167 = vmatprep.subr.mxu0 0.0
  %5168 = vmatpush1.msra.mxu0 0.0
  %5169 = vmatprep.subr.mxu0 0.0
  %5170 = vmatpush1.msra.mxu0 0.0
  %5171 = vmatprep.subr.mxu0 0.0
  %5172 = vmatpush1.msra.mxu0 0.0
  %5173 = vmatprep.subr.mxu0 0.0
  %5174 = vmatpush1.msra.mxu0 0.0
  %5175 = vmatprep.subr.mxu0 0.0
  %5176 = vmatpush1.msra.mxu0 0.0
  %5177 = vmatprep.subr.mxu0 0.0
  %5178 = vmatpush1.msra.mxu0 0.0
  %5179 = vmatprep.subr.mxu0 0.0
  %5180 = vmatpush1.msra.mxu0 0.0
  %5181 = vmatprep.subr.mxu0 0.0
  %5182 = vmatpush1.msra.mxu0 0.0
  %5183 = vmatprep.subr.mxu0 0.0
  %5184 = vmatpush1.msra.mxu0 0.0
  %5185 = vmatprep.subr.mxu0 0.0
  %5186 = vmatpush1.msra.mxu0 0.0
  %5187 = vmatprep.subr.mxu0 0.0
  %5188 = vmatpush1.msra.mxu0 0.0
  %5189 = vmatprep.subr.mxu0 0.0
  %5190 = vmatpush1.msra.mxu0 0.0
  %5191 = vmatprep.subr.mxu0 0.0
  %5192 = vmatpush1.msra.mxu0 0.0
  %5193 = vmatprep.subr.mxu0 0.0
  %5194 = vmatpush1.msra.mxu0 0.0
  %5195 = vmatprep.subr.mxu0 0.0
  %5196 = vmatpush1.msra.mxu0 0.0
  %5197 = vmatprep.subr.mxu0 0.0
  %5198 = vmatpush1.msra.mxu0 0.0
  %5199 = vmatprep.subr.mxu0 0.0
  %5200 = vmatpush1.msra.mxu0 0.0
  %5201 = vmatprep.subr.mxu0 0.0
  %5202 = vmatpush1.msra.mxu0 0.0
  %5203 = vmatprep.subr.mxu0 0.0
  %5204 = vmatpush1.msra.mxu0 0.0
  %5205 = vmatprep.mubr.f32.mxu0 0.0
  %5206 = vmatmul.mubr.f32.gmra.mrb[0].mxu0 %v5139
  %v5207 = vpop.f32.mrb[0].mxu0
  %v5208 = vadd.f32 0.0, %v5207
  %v5209 = vpop.f32.mrb[0].mxu0
  %5210 = vdwg.mxu0
  %v5211 = vadd.f32 %v5136, %v5208
  %v5212 = vtanh.pop %v5211
  %v5213 = vxor.u32 %v5211, 2147483648
  %v5214 = vmul.f32 %v5213, 1.442695
  %v5215 = vpow.pop %v5214
  %v5216 = vadd.f32 %v5215, 1.0
  %v5217 = vrcp.pop %v5216
  %v5218 = vmul.f32 1.0, %v5217
  %v5219 = vsel %vm462, %v5212, %v5218
  %v5220 = vmul.f32 %v5219, %v5020
  %5222 = vrot.lane.b32.xlu0 %v5219, 64
  %v5223 = vpop.permute.xlu0 %5222
  %v5225 = vmul.f32 %v5219, %v5223
  %5227 = vrot.lane.b32.xlu0 %v5225, 32
  %v5228 = vpop.permute.xlu0 %5227
  %v5230 = vadd.f32 %v5220, %v5228
  %v5231 = vtanh.pop %v5230
  %5233 = vrot.lane.b32.xlu0 %v5231, 64
  %v5234 = vpop.permute.xlu0 %5233
  %v5236 = vmul.f32 %v5219, %v5234
  %5238 = vrot.lane.b32.xlu0 %v5236, 64
  %v5239 = vpop.permute.xlu0 %5238
  %5241 = vst.msk [vmem:[%s12 + $0x60] sm:$0xff] %vm950, %v5239
  %v5242 = vld [vmem:[#allocation2 + $0x40] sm:$0xff]
  %v5243 = vsel %vm491, %v5133, 0
  %5245 = vmatprep.subr.mxu0 0.0
  %5246 = vmatpush1.msra.mxu0 %v4134
  %5247 = vmatprep.subr.mxu0 0.0
  %5248 = vmatpush1.msra.mxu0 %v4135
  %5249 = vmatprep.subr.mxu0 0.0
  %5250 = vmatpush1.msra.mxu0 %v4136
  %5251 = vmatprep.subr.mxu0 0.0
  %5252 = vmatpush1.msra.mxu0 %v4137
  %5253 = vmatprep.subr.mxu0 0.0
  %5254 = vmatpush1.msra.mxu0 0.0
  %5255 = vmatprep.subr.mxu0 0.0
  %5256 = vmatpush1.msra.mxu0 0.0
  %5257 = vmatprep.subr.mxu0 0.0
  %5258 = vmatpush1.msra.mxu0 0.0
  %5259 = vmatprep.subr.mxu0 0.0
  %5260 = vmatpush1.msra.mxu0 0.0
  %5261 = vmatprep.subr.mxu0 0.0
  %5262 = vmatpush1.msra.mxu0 0.0
  %5263 = vmatprep.subr.mxu0 0.0
  %5264 = vmatpush1.msra.mxu0 0.0
  %5265 = vmatprep.subr.mxu0 0.0
  %5266 = vmatpush1.msra.mxu0 0.0
  %5267 = vmatprep.subr.mxu0 0.0
  %5268 = vmatpush1.msra.mxu0 0.0
  %5269 = vmatprep.subr.mxu0 0.0
  %5270 = vmatpush1.msra.mxu0 0.0
  %5271 = vmatprep.subr.mxu0 0.0
  %5272 = vmatpush1.msra.mxu0 0.0
  %5273 = vmatprep.subr.mxu0 0.0
  %5274 = vmatpush1.msra.mxu0 0.0
  %5275 = vmatprep.subr.mxu0 0.0
  %5276 = vmatpush1.msra.mxu0 0.0
  %5277 = vmatprep.subr.mxu0 0.0
  %5278 = vmatpush1.msra.mxu0 0.0
  %5279 = vmatprep.subr.mxu0 0.0
  %5280 = vmatpush1.msra.mxu0 0.0
  %5281 = vmatprep.subr.mxu0 0.0
  %5282 = vmatpush1.msra.mxu0 0.0
  %5283 = vmatprep.subr.mxu0 0.0
  %5284 = vmatpush1.msra.mxu0 0.0
  %5285 = vmatprep.subr.mxu0 0.0
  %5286 = vmatpush1.msra.mxu0 0.0
  %5287 = vmatprep.subr.mxu0 0.0
  %5288 = vmatpush1.msra.mxu0 0.0
  %5289 = vmatprep.subr.mxu0 0.0
  %5290 = vmatpush1.msra.mxu0 0.0
  %5291 = vmatprep.subr.mxu0 0.0
  %5292 = vmatpush1.msra.mxu0 0.0
  %5293 = vmatprep.subr.mxu0 0.0
  %5294 = vmatpush1.msra.mxu0 0.0
  %5295 = vmatprep.subr.mxu0 0.0
  %5296 = vmatpush1.msra.mxu0 0.0
  %5297 = vmatprep.subr.mxu0 0.0
  %5298 = vmatpush1.msra.mxu0 0.0
  %5299 = vmatprep.subr.mxu0 0.0
  %5300 = vmatpush1.msra.mxu0 0.0
  %5301 = vmatprep.subr.mxu0 0.0
  %5302 = vmatpush1.msra.mxu0 0.0
  %5303 = vmatprep.subr.mxu0 0.0
  %5304 = vmatpush1.msra.mxu0 0.0
  %5305 = vmatprep.subr.mxu0 0.0
  %5306 = vmatpush1.msra.mxu0 0.0
  %5307 = vmatprep.subr.mxu0 0.0
  %5308 = vmatpush1.msra.mxu0 0.0
  %5309 = vmatprep.mubr.f32.mxu0 0.0
  %5310 = vmatmul.mubr.f32.gmra.mrb[0].mxu0 %v5243
  %v5311 = vpop.f32.mrb[0].mxu0
  %v5312 = vadd.f32 0.0, %v5311
  %v5313 = vpop.f32.mrb[0].mxu0
  %5314 = vdwg.mxu0
  %v5315 = vadd.f32 %v5242, %v5312
  %v5316 = vtanh.pop %v5315
  %v5317 = vxor.u32 %v5315, 2147483648
  %v5318 = vmul.f32 %v5317, 1.442695
  %v5319 = vpow.pop %v5318
  %v5320 = vadd.f32 %v5319, 1.0
  %v5321 = vrcp.pop %v5320
  %v5322 = vmul.f32 1.0, %v5321
  %v5323 = vsel %vm462, %v5316, %v5322
  %v5324 = vmul.f32 %v5323, %v5124
  %5326 = vrot.lane.b32.xlu0 %v5323, 64
  %v5327 = vpop.permute.xlu0 %5326
  %v5329 = vmul.f32 %v5323, %v5327
  %5331 = vrot.lane.b32.xlu0 %v5329, 32
  %v5332 = vpop.permute.xlu0 %5331
  %v5334 = vadd.f32 %v5324, %v5332
  %v5335 = vtanh.pop %v5334
  %5337 = vrot.lane.b32.xlu0 %v5335, 64
  %v5338 = vpop.permute.xlu0 %5337
  %v5340 = vmul.f32 %v5323, %v5338
  %5342 = vrot.lane.b32.xlu0 %v5340, 32
  %v5343 = vpop.permute.xlu0 %5342
  %5345 = vst.msk [vmem:[%s12 + $0x20] sm:$0xff] %vm491, %v5343
  %v5346 = vld [vmem:[#allocation2 + $0xb8] sm:$0xff]
  %5347 = vrot.lane.b32.xlu0 %v5236, 32
  %v5348 = vpop.permute.xlu0 %5347
  %v5349 = vsel %vm491, %v5348, 0
  %5351 = vmatprep.subr.mxu0 0.0
  %5352 = vmatpush1.msra.mxu0 %v4138
  %5353 = vmatprep.subr.mxu0 0.0
  %5354 = vmatpush1.msra.mxu0 %v4139
  %5355 = vmatprep.subr.mxu0 0.0
  %5356 = vmatpush1.msra.mxu0 %v4140
  %5357 = vmatprep.subr.mxu0 0.0
  %5358 = vmatpush1.msra.mxu0 %v4141
  %5359 = vmatprep.subr.mxu0 0.0
  %5360 = vmatpush1.msra.mxu0 0.0
  %5361 = vmatprep.subr.mxu0 0.0
  %5362 = vmatpush1.msra.mxu0 0.0
  %5363 = vmatprep.subr.mxu0 0.0
  %5364 = vmatpush1.msra.mxu0 0.0
  %5365 = vmatprep.subr.mxu0 0.0
  %5366 = vmatpush1.msra.mxu0 0.0
  %5367 = vmatprep.subr.mxu0 0.0
  %5368 = vmatpush1.msra.mxu0 0.0
  %5369 = vmatprep.subr.mxu0 0.0
  %5370 = vmatpush1.msra.mxu0 0.0
  %5371 = vmatprep.subr.mxu0 0.0
  %5372 = vmatpush1.msra.mxu0 0.0
  %5373 = vmatprep.subr.mxu0 0.0
  %5374 = vmatpush1.msra.mxu0 0.0
  %5375 = vmatprep.subr.mxu0 0.0
  %5376 = vmatpush1.msra.mxu0 0.0
  %5377 = vmatprep.subr.mxu0 0.0
  %5378 = vmatpush1.msra.mxu0 0.0
  %5379 = vmatprep.subr.mxu0 0.0
  %5380 = vmatpush1.msra.mxu0 0.0
  %5381 = vmatprep.subr.mxu0 0.0
  %5382 = vmatpush1.msra.mxu0 0.0
  %5383 = vmatprep.subr.mxu0 0.0
  %5384 = vmatpush1.msra.mxu0 0.0
  %5385 = vmatprep.subr.mxu0 0.0
  %5386 = vmatpush1.msra.mxu0 0.0
  %5387 = vmatprep.subr.mxu0 0.0
  %5388 = vmatpush1.msra.mxu0 0.0
  %5389 = vmatprep.subr.mxu0 0.0
  %5390 = vmatpush1.msra.mxu0 0.0
  %5391 = vmatprep.subr.mxu0 0.0
  %5392 = vmatpush1.msra.mxu0 0.0
  %5393 = vmatprep.subr.mxu0 0.0
  %5394 = vmatpush1.msra.mxu0 0.0
  %5395 = vmatprep.subr.mxu0 0.0
  %5396 = vmatpush1.msra.mxu0 0.0
  %5397 = vmatprep.subr.mxu0 0.0
  %5398 = vmatpush1.msra.mxu0 0.0
  %5399 = vmatprep.subr.mxu0 0.0
  %5400 = vmatpush1.msra.mxu0 0.0
  %5401 = vmatprep.subr.mxu0 0.0
  %5402 = vmatpush1.msra.mxu0 0.0
  %5403 = vmatprep.subr.mxu0 0.0
  %5404 = vmatpush1.msra.mxu0 0.0
  %5405 = vmatprep.subr.mxu0 0.0
  %5406 = vmatpush1.msra.mxu0 0.0
  %5407 = vmatprep.subr.mxu0 0.0
  %5408 = vmatpush1.msra.mxu0 0.0
  %5409 = vmatprep.subr.mxu0 0.0
  %5410 = vmatpush1.msra.mxu0 0.0
  %5411 = vmatprep.subr.mxu0 0.0
  %5412 = vmatpush1.msra.mxu0 0.0
  %5413 = vmatprep.subr.mxu0 0.0
  %5414 = vmatpush1.msra.mxu0 0.0
  %5415 = vmatprep.mubr.f32.mxu0 0.0
  %5416 = vmatmul.mubr.f32.gmra.mrb[0].mxu0 %v5349
  %v5417 = vpop.f32.mrb[0].mxu0
  %v5418 = vadd.f32 0.0, %v5417
  %v5419 = vpop.f32.mrb[0].mxu0
  %5420 = vdwg.mxu0
  %v5421 = vadd.f32 %v5346, %v5418
  %v5422 = vtanh.pop %v5421
  %v5423 = vxor.u32 %v5421, 2147483648
  %v5424 = vmul.f32 %v5423, 1.442695
  %v5425 = vpow.pop %v5424
  %v5426 = vadd.f32 %v5425, 1.0
  %v5427 = vrcp.pop %v5426
  %v5428 = vmul.f32 1.0, %v5427
  %v5429 = vsel %vm462, %v5422, %v5428
  %v5430 = vmul.f32 %v5429, %v5230
  %5432 = vrot.lane.b32.xlu0 %v5429, 64
  %v5433 = vpop.permute.xlu0 %5432
  %v5435 = vmul.f32 %v5429, %v5433
  %5437 = vrot.lane.b32.xlu0 %v5435, 32
  %v5438 = vpop.permute.xlu0 %5437
  %v5440 = vadd.f32 %v5430, %v5438
  %v5441 = vtanh.pop %v5440
  %5443 = vrot.lane.b32.xlu0 %v5441, 64
  %v5444 = vpop.permute.xlu0 %5443
  %v5446 = vmul.f32 %v5429, %v5444
  %5448 = vrot.lane.b32.xlu0 %v5446, 64
  %v5449 = vpop.permute.xlu0 %5448
  %5451 = vst.msk [vmem:[%s12 + $0x58] sm:$0xff] %vm950, %v5449
  %v5452 = vld [vmem:[#allocation2 + $0x50] sm:$0xff]
  %v5453 = vsel %vm491, %v5343, 0
  %5455 = vmatprep.subr.mxu0 0.0
  %5456 = vmatpush1.msra.mxu0 %v4134
  %5457 = vmatprep.subr.mxu0 0.0
  %5458 = vmatpush1.msra.mxu0 %v4135
  %5459 = vmatprep.subr.mxu0 0.0
  %5460 = vmatpush1.msra.mxu0 %v4136
  %5461 = vmatprep.subr.mxu0 0.0
  %5462 = vmatpush1.msra.mxu0 %v4137
  %5463 = vmatprep.subr.mxu0 0.0
  %5464 = vmatpush1.msra.mxu0 0.0
  %5465 = vmatprep.subr.mxu0 0.0
  %5466 = vmatpush1.msra.mxu0 0.0
  %5467 = vmatprep.subr.mxu0 0.0
  %5468 = vmatpush1.msra.mxu0 0.0
  %5469 = vmatprep.subr.mxu0 0.0
  %5470 = vmatpush1.msra.mxu0 0.0
  %5471 = vmatprep.subr.mxu0 0.0
  %5472 = vmatpush1.msra.mxu0 0.0
  %5473 = vmatprep.subr.mxu0 0.0
  %5474 = vmatpush1.msra.mxu0 0.0
  %5475 = vmatprep.subr.mxu0 0.0
  %5476 = vmatpush1.msra.mxu0 0.0
  %5477 = vmatprep.subr.mxu0 0.0
  %5478 = vmatpush1.msra.mxu0 0.0
  %5479 = vmatprep.subr.mxu0 0.0
  %5480 = vmatpush1.msra.mxu0 0.0
  %5481 = vmatprep.subr.mxu0 0.0
  %5482 = vmatpush1.msra.mxu0 0.0
  %5483 = vmatprep.subr.mxu0 0.0
  %5484 = vmatpush1.msra.mxu0 0.0
  %5485 = vmatprep.subr.mxu0 0.0
  %5486 = vmatpush1.msra.mxu0 0.0
  %5487 = vmatprep.subr.mxu0 0.0
  %5488 = vmatpush1.msra.mxu0 0.0
  %5489 = vmatprep.subr.mxu0 0.0
  %5490 = vmatpush1.msra.mxu0 0.0
  %5491 = vmatprep.subr.mxu0 0.0
  %5492 = vmatpush1.msra.mxu0 0.0
  %5493 = vmatprep.subr.mxu0 0.0
  %5494 = vmatpush1.msra.mxu0 0.0
  %5495 = vmatprep.subr.mxu0 0.0
  %5496 = vmatpush1.msra.mxu0 0.0
  %5497 = vmatprep.subr.mxu0 0.0
  %5498 = vmatpush1.msra.mxu0 0.0
  %5499 = vmatprep.subr.mxu0 0.0
  %5500 = vmatpush1.msra.mxu0 0.0
  %5501 = vmatprep.subr.mxu0 0.0
  %5502 = vmatpush1.msra.mxu0 0.0
  %5503 = vmatprep.subr.mxu0 0.0
  %5504 = vmatpush1.msra.mxu0 0.0
  %5505 = vmatprep.subr.mxu0 0.0
  %5506 = vmatpush1.msra.mxu0 0.0
  %5507 = vmatprep.subr.mxu0 0.0
  %5508 = vmatpush1.msra.mxu0 0.0
  %5509 = vmatprep.subr.mxu0 0.0
  %5510 = vmatpush1.msra.mxu0 0.0
  %5511 = vmatprep.subr.mxu0 0.0
  %5512 = vmatpush1.msra.mxu0 0.0
  %5513 = vmatprep.subr.mxu0 0.0
  %5514 = vmatpush1.msra.mxu0 0.0
  %5515 = vmatprep.subr.mxu0 0.0
  %5516 = vmatpush1.msra.mxu0 0.0
  %5517 = vmatprep.subr.mxu0 0.0
  %5518 = vmatpush1.msra.mxu0 0.0
  %5519 = vmatprep.mubr.f32.mxu0 0.0
  %5520 = vmatmul.mubr.f32.gmra.mrb[0].mxu0 %v5453
  %v5521 = vpop.f32.mrb[0].mxu0
  %v5522 = vadd.f32 0.0, %v5521
  %v5523 = vpop.f32.mrb[0].mxu0
  %5524 = vdwg.mxu0
  %v5525 = vadd.f32 %v5452, %v5522
  %v5526 = vtanh.pop %v5525
  %v5527 = vxor.u32 %v5525, 2147483648
  %v5528 = vmul.f32 %v5527, 1.442695
  %v5529 = vpow.pop %v5528
  %v5530 = vadd.f32 %v5529, 1.0
  %v5531 = vrcp.pop %v5530
  %v5532 = vmul.f32 1.0, %v5531
  %v5533 = vsel %vm462, %v5526, %v5532
  %v5534 = vmul.f32 %v5533, %v5334
  %5536 = vrot.lane.b32.xlu0 %v5533, 64
  %v5537 = vpop.permute.xlu0 %5536
  %v5539 = vmul.f32 %v5533, %v5537
  %5541 = vrot.lane.b32.xlu0 %v5539, 32
  %v5542 = vpop.permute.xlu0 %5541
  %v5544 = vadd.f32 %v5534, %v5542
  %v5545 = vtanh.pop %v5544
  %5547 = vrot.lane.b32.xlu0 %v5545, 64
  %v5548 = vpop.permute.xlu0 %5547
  %v5550 = vmul.f32 %v5533, %v5548
  %5552 = vrot.lane.b32.xlu0 %v5550, 32
  %v5553 = vpop.permute.xlu0 %5552
  %5555 = vst.msk [vmem:[%s12 + $0x28] sm:$0xff] %vm491, %v5553
  %v5556 = vld [vmem:[#allocation2 + $0xa8] sm:$0xff]
  %5557 = vrot.lane.b32.xlu0 %v5446, 32
  %v5558 = vpop.permute.xlu0 %5557
  %v5559 = vsel %vm491, %v5558, 0
  %5561 = vmatprep.subr.mxu0 0.0
  %5562 = vmatpush1.msra.mxu0 %v4138
  %5563 = vmatprep.subr.mxu0 0.0
  %5564 = vmatpush1.msra.mxu0 %v4139
  %5565 = vmatprep.subr.mxu0 0.0
  %5566 = vmatpush1.msra.mxu0 %v4140
  %5567 = vmatprep.subr.mxu0 0.0
  %5568 = vmatpush1.msra.mxu0 %v4141
  %5569 = vmatprep.subr.mxu0 0.0
  %5570 = vmatpush1.msra.mxu0 0.0
  %5571 = vmatprep.subr.mxu0 0.0
  %5572 = vmatpush1.msra.mxu0 0.0
  %5573 = vmatprep.subr.mxu0 0.0
  %5574 = vmatpush1.msra.mxu0 0.0
  %5575 = vmatprep.subr.mxu0 0.0
  %5576 = vmatpush1.msra.mxu0 0.0
  %5577 = vmatprep.subr.mxu0 0.0
  %5578 = vmatpush1.msra.mxu0 0.0
  %5579 = vmatprep.subr.mxu0 0.0
  %5580 = vmatpush1.msra.mxu0 0.0
  %5581 = vmatprep.subr.mxu0 0.0
  %5582 = vmatpush1.msra.mxu0 0.0
  %5583 = vmatprep.subr.mxu0 0.0
  %5584 = vmatpush1.msra.mxu0 0.0
  %5585 = vmatprep.subr.mxu0 0.0
  %5586 = vmatpush1.msra.mxu0 0.0
  %5587 = vmatprep.subr.mxu0 0.0
  %5588 = vmatpush1.msra.mxu0 0.0
  %5589 = vmatprep.subr.mxu0 0.0
  %5590 = vmatpush1.msra.mxu0 0.0
  %5591 = vmatprep.subr.mxu0 0.0
  %5592 = vmatpush1.msra.mxu0 0.0
  %5593 = vmatprep.subr.mxu0 0.0
  %5594 = vmatpush1.msra.mxu0 0.0
  %5595 = vmatprep.subr.mxu0 0.0
  %5596 = vmatpush1.msra.mxu0 0.0
  %5597 = vmatprep.subr.mxu0 0.0
  %5598 = vmatpush1.msra.mxu0 0.0
  %5599 = vmatprep.subr.mxu0 0.0
  %5600 = vmatpush1.msra.mxu0 0.0
  %5601 = vmatprep.subr.mxu0 0.0
  %5602 = vmatpush1.msra.mxu0 0.0
  %5603 = vmatprep.subr.mxu0 0.0
  %5604 = vmatpush1.msra.mxu0 0.0
  %5605 = vmatprep.subr.mxu0 0.0
  %5606 = vmatpush1.msra.mxu0 0.0
  %5607 = vmatprep.subr.mxu0 0.0
  %5608 = vmatpush1.msra.mxu0 0.0
  %5609 = vmatprep.subr.mxu0 0.0
  %5610 = vmatpush1.msra.mxu0 0.0
  %5611 = vmatprep.subr.mxu0 0.0
  %5612 = vmatpush1.msra.mxu0 0.0
  %5613 = vmatprep.subr.mxu0 0.0
  %5614 = vmatpush1.msra.mxu0 0.0
  %5615 = vmatprep.subr.mxu0 0.0
  %5616 = vmatpush1.msra.mxu0 0.0
  %5617 = vmatprep.subr.mxu0 0.0
  %5618 = vmatpush1.msra.mxu0 0.0
  %5619 = vmatprep.subr.mxu0 0.0
  %5620 = vmatpush1.msra.mxu0 0.0
  %5621 = vmatprep.subr.mxu0 0.0
  %5622 = vmatpush1.msra.mxu0 0.0
  %5623 = vmatprep.subr.mxu0 0.0
  %5624 = vmatpush1.msra.mxu0 0.0
  %5625 = vmatprep.mubr.f32.mxu0 0.0
  %5626 = vmatmul.mubr.f32.gmra.mrb[0].mxu0 %v5559
  %v5627 = vpop.f32.mrb[0].mxu0
  %v5628 = vadd.f32 0.0, %v5627
  %v5629 = vpop.f32.mrb[0].mxu0
  %5630 = vdwg.mxu0
  %v5631 = vadd.f32 %v5556, %v5628
  %v5632 = vtanh.pop %v5631
  %v5633 = vxor.u32 %v5631, 2147483648
  %v5634 = vmul.f32 %v5633, 1.442695
  %v5635 = vpow.pop %v5634
  %v5636 = vadd.f32 %v5635, 1.0
  %v5637 = vrcp.pop %v5636
  %v5638 = vmul.f32 1.0, %v5637
  %v5639 = vsel %vm462, %v5632, %v5638
  %v5640 = vmul.f32 %v5639, %v5440
  %5642 = vrot.lane.b32.xlu0 %v5639, 64
  %v5643 = vpop.permute.xlu0 %5642
  %v5645 = vmul.f32 %v5639, %v5643
  %5647 = vrot.lane.b32.xlu0 %v5645, 32
  %v5648 = vpop.permute.xlu0 %5647
  %v5650 = vadd.f32 %v5640, %v5648
  %v5651 = vtanh.pop %v5650
  %5653 = vrot.lane.b32.xlu0 %v5651, 64
  %v5654 = vpop.permute.xlu0 %5653
  %v5656 = vmul.f32 %v5639, %v5654
  %5658 = vrot.lane.b32.xlu0 %v5656, 64
  %v5659 = vpop.permute.xlu0 %5658
  %5661 = vst.msk [vmem:[%s12 + $0x50] sm:$0xff] %vm950, %v5659
  %v5662 = vld [vmem:[#allocation2 + $0x60] sm:$0xff]
  %v5663 = vsel %vm491, %v5553, 0
  %5665 = vmatprep.subr.mxu0 0.0
  %5666 = vmatpush1.msra.mxu0 %v4134
  %5667 = vmatprep.subr.mxu0 0.0
  %5668 = vmatpush1.msra.mxu0 %v4135
  %5669 = vmatprep.subr.mxu0 0.0
  %5670 = vmatpush1.msra.mxu0 %v4136
  %5671 = vmatprep.subr.mxu0 0.0
  %5672 = vmatpush1.msra.mxu0 %v4137
  %5673 = vmatprep.subr.mxu0 0.0
  %5674 = vmatpush1.msra.mxu0 0.0
  %5675 = vmatprep.subr.mxu0 0.0
  %5676 = vmatpush1.msra.mxu0 0.0
  %5677 = vmatprep.subr.mxu0 0.0
  %5678 = vmatpush1.msra.mxu0 0.0
  %5679 = vmatprep.subr.mxu0 0.0
  %5680 = vmatpush1.msra.mxu0 0.0
  %5681 = vmatprep.subr.mxu0 0.0
  %5682 = vmatpush1.msra.mxu0 0.0
  %5683 = vmatprep.subr.mxu0 0.0
  %5684 = vmatpush1.msra.mxu0 0.0
  %5685 = vmatprep.subr.mxu0 0.0
  %5686 = vmatpush1.msra.mxu0 0.0
  %5687 = vmatprep.subr.mxu0 0.0
  %5688 = vmatpush1.msra.mxu0 0.0
  %5689 = vmatprep.subr.mxu0 0.0
  %5690 = vmatpush1.msra.mxu0 0.0
  %5691 = vmatprep.subr.mxu0 0.0
  %5692 = vmatpush1.msra.mxu0 0.0
  %5693 = vmatprep.subr.mxu0 0.0
  %5694 = vmatpush1.msra.mxu0 0.0
  %5695 = vmatprep.subr.mxu0 0.0
  %5696 = vmatpush1.msra.mxu0 0.0
  %5697 = vmatprep.subr.mxu0 0.0
  %5698 = vmatpush1.msra.mxu0 0.0
  %5699 = vmatprep.subr.mxu0 0.0
  %5700 = vmatpush1.msra.mxu0 0.0
  %5701 = vmatprep.subr.mxu0 0.0
  %5702 = vmatpush1.msra.mxu0 0.0
  %5703 = vmatprep.subr.mxu0 0.0
  %5704 = vmatpush1.msra.mxu0 0.0
  %5705 = vmatprep.subr.mxu0 0.0
  %5706 = vmatpush1.msra.mxu0 0.0
  %5707 = vmatprep.subr.mxu0 0.0
  %5708 = vmatpush1.msra.mxu0 0.0
  %5709 = vmatprep.subr.mxu0 0.0
  %5710 = vmatpush1.msra.mxu0 0.0
  %5711 = vmatprep.subr.mxu0 0.0
  %5712 = vmatpush1.msra.mxu0 0.0
  %5713 = vmatprep.subr.mxu0 0.0
  %5714 = vmatpush1.msra.mxu0 0.0
  %5715 = vmatprep.subr.mxu0 0.0
  %5716 = vmatpush1.msra.mxu0 0.0
  %5717 = vmatprep.subr.mxu0 0.0
  %5718 = vmatpush1.msra.mxu0 0.0
  %5719 = vmatprep.subr.mxu0 0.0
  %5720 = vmatpush1.msra.mxu0 0.0
  %5721 = vmatprep.subr.mxu0 0.0
  %5722 = vmatpush1.msra.mxu0 0.0
  %5723 = vmatprep.subr.mxu0 0.0
  %5724 = vmatpush1.msra.mxu0 0.0
  %5725 = vmatprep.subr.mxu0 0.0
  %5726 = vmatpush1.msra.mxu0 0.0
  %5727 = vmatprep.subr.mxu0 0.0
  %5728 = vmatpush1.msra.mxu0 0.0
  %5729 = vmatprep.mubr.f32.mxu0 0.0
  %5730 = vmatmul.mubr.f32.gmra.mrb[0].mxu0 %v5663
  %v5731 = vpop.f32.mrb[0].mxu0
  %v5732 = vadd.f32 0.0, %v5731
  %v5733 = vpop.f32.mrb[0].mxu0
  %5734 = vdwg.mxu0
  %v5735 = vadd.f32 %v5662, %v5732
  %v5736 = vtanh.pop %v5735
  %v5737 = vxor.u32 %v5735, 2147483648
  %v5738 = vmul.f32 %v5737, 1.442695
  %v5739 = vpow.pop %v5738
  %v5740 = vadd.f32 %v5739, 1.0
  %v5741 = vrcp.pop %v5740
  %v5742 = vmul.f32 1.0, %v5741
  %v5743 = vsel %vm462, %v5736, %v5742
  %v5744 = vmul.f32 %v5743, %v5544
  %5746 = vrot.lane.b32.xlu0 %v5743, 64
  %v5747 = vpop.permute.xlu0 %5746
  %v5749 = vmul.f32 %v5743, %v5747
  %5751 = vrot.lane.b32.xlu0 %v5749, 32
  %v5752 = vpop.permute.xlu0 %5751
  %v5754 = vadd.f32 %v5744, %v5752
  %v5755 = vtanh.pop %v5754
  %5757 = vrot.lane.b32.xlu0 %v5755, 64
  %v5758 = vpop.permute.xlu0 %5757
  %v5760 = vmul.f32 %v5743, %v5758
  %5762 = vrot.lane.b32.xlu0 %v5760, 32
  %v5763 = vpop.permute.xlu0 %5762
  %5765 = vst.msk [vmem:[%s12 + $0x30] sm:$0xff] %vm491, %v5763
  %v5766 = vld [vmem:[#allocation2 + $0x98] sm:$0xff]
  %5767 = vrot.lane.b32.xlu0 %v5656, 32
  %v5768 = vpop.permute.xlu0 %5767
  %v5769 = vsel %vm491, %v5768, 0
  %5771 = vmatprep.subr.mxu0 0.0
  %5772 = vmatpush1.msra.mxu0 %v4138
  %5773 = vmatprep.subr.mxu0 0.0
  %5774 = vmatpush1.msra.mxu0 %v4139
  %5775 = vmatprep.subr.mxu0 0.0
  %5776 = vmatpush1.msra.mxu0 %v4140
  %5777 = vmatprep.subr.mxu0 0.0
  %5778 = vmatpush1.msra.mxu0 %v4141
  %5779 = vmatprep.subr.mxu0 0.0
  %5780 = vmatpush1.msra.mxu0 0.0
  %5781 = vmatprep.subr.mxu0 0.0
  %5782 = vmatpush1.msra.mxu0 0.0
  %5783 = vmatprep.subr.mxu0 0.0
  %5784 = vmatpush1.msra.mxu0 0.0
  %5785 = vmatprep.subr.mxu0 0.0
  %5786 = vmatpush1.msra.mxu0 0.0
  %5787 = vmatprep.subr.mxu0 0.0
  %5788 = vmatpush1.msra.mxu0 0.0
  %5789 = vmatprep.subr.mxu0 0.0
  %5790 = vmatpush1.msra.mxu0 0.0
  %5791 = vmatprep.subr.mxu0 0.0
  %5792 = vmatpush1.msra.mxu0 0.0
  %5793 = vmatprep.subr.mxu0 0.0
  %5794 = vmatpush1.msra.mxu0 0.0
  %5795 = vmatprep.subr.mxu0 0.0
  %5796 = vmatpush1.msra.mxu0 0.0
  %5797 = vmatprep.subr.mxu0 0.0
  %5798 = vmatpush1.msra.mxu0 0.0
  %5799 = vmatprep.subr.mxu0 0.0
  %5800 = vmatpush1.msra.mxu0 0.0
  %5801 = vmatprep.subr.mxu0 0.0
  %5802 = vmatpush1.msra.mxu0 0.0
  %5803 = vmatprep.subr.mxu0 0.0
  %5804 = vmatpush1.msra.mxu0 0.0
  %5805 = vmatprep.subr.mxu0 0.0
  %5806 = vmatpush1.msra.mxu0 0.0
  %5807 = vmatprep.subr.mxu0 0.0
  %5808 = vmatpush1.msra.mxu0 0.0
  %5809 = vmatprep.subr.mxu0 0.0
  %5810 = vmatpush1.msra.mxu0 0.0
  %5811 = vmatprep.subr.mxu0 0.0
  %5812 = vmatpush1.msra.mxu0 0.0
  %5813 = vmatprep.subr.mxu0 0.0
  %5814 = vmatpush1.msra.mxu0 0.0
  %5815 = vmatprep.subr.mxu0 0.0
  %5816 = vmatpush1.msra.mxu0 0.0
  %5817 = vmatprep.subr.mxu0 0.0
  %5818 = vmatpush1.msra.mxu0 0.0
  %5819 = vmatprep.subr.mxu0 0.0
  %5820 = vmatpush1.msra.mxu0 0.0
  %5821 = vmatprep.subr.mxu0 0.0
  %5822 = vmatpush1.msra.mxu0 0.0
  %5823 = vmatprep.subr.mxu0 0.0
  %5824 = vmatpush1.msra.mxu0 0.0
  %5825 = vmatprep.subr.mxu0 0.0
  %5826 = vmatpush1.msra.mxu0 0.0
  %5827 = vmatprep.subr.mxu0 0.0
  %5828 = vmatpush1.msra.mxu0 0.0
  %5829 = vmatprep.subr.mxu0 0.0
  %5830 = vmatpush1.msra.mxu0 0.0
  %5831 = vmatprep.subr.mxu0 0.0
  %5832 = vmatpush1.msra.mxu0 0.0
  %5833 = vmatprep.subr.mxu0 0.0
  %5834 = vmatpush1.msra.mxu0 0.0
  %5835 = vmatprep.mubr.f32.mxu0 0.0
  %5836 = vmatmul.mubr.f32.gmra.mrb[0].mxu0 %v5769
  %v5837 = vpop.f32.mrb[0].mxu0
  %v5838 = vadd.f32 0.0, %v5837
  %v5839 = vpop.f32.mrb[0].mxu0
  %5840 = vdwg.mxu0
  %v5841 = vadd.f32 %v5766, %v5838
  %v5842 = vtanh.pop %v5841
  %v5843 = vxor.u32 %v5841, 2147483648
  %v5844 = vmul.f32 %v5843, 1.442695
  %v5845 = vpow.pop %v5844
  %v5846 = vadd.f32 %v5845, 1.0
  %v5847 = vrcp.pop %v5846
  %v5848 = vmul.f32 1.0, %v5847
  %v5849 = vsel %vm462, %v5842, %v5848
  %v5850 = vmul.f32 %v5849, %v5650
  %5852 = vrot.lane.b32.xlu0 %v5849, 64
  %v5853 = vpop.permute.xlu0 %5852
  %v5855 = vmul.f32 %v5849, %v5853
  %5857 = vrot.lane.b32.xlu0 %v5855, 32
  %v5858 = vpop.permute.xlu0 %5857
  %v5860 = vadd.f32 %v5850, %v5858
  %v5861 = vtanh.pop %v5860
  %5863 = vrot.lane.b32.xlu0 %v5861, 64
  %v5864 = vpop.permute.xlu0 %5863
  %v5866 = vmul.f32 %v5849, %v5864
  %5868 = vrot.lane.b32.xlu0 %v5866, 64
  %v5869 = vpop.permute.xlu0 %5868
  %5871 = vst.msk [vmem:[%s12 + $0x48] sm:$0xff] %vm950, %v5869
  %v5872 = vld [vmem:[#allocation2 + $0x70] sm:$0xff]
  %v5873 = vsel %vm491, %v5763, 0
  %5875 = vmatprep.subr.mxu0 0.0
  %5876 = vmatpush1.msra.mxu0 %v4134
  %5877 = vmatprep.subr.mxu0 0.0
  %5878 = vmatpush1.msra.mxu0 %v4135
  %5879 = vmatprep.subr.mxu0 0.0
  %5880 = vmatpush1.msra.mxu0 %v4136
  %5881 = vmatprep.subr.mxu0 0.0
  %5882 = vmatpush1.msra.mxu0 %v4137
  %5883 = vmatprep.subr.mxu0 0.0
  %5884 = vmatpush1.msra.mxu0 0.0
  %5885 = vmatprep.subr.mxu0 0.0
  %5886 = vmatpush1.msra.mxu0 0.0
  %5887 = vmatprep.subr.mxu0 0.0
  %5888 = vmatpush1.msra.mxu0 0.0
  %5889 = vmatprep.subr.mxu0 0.0
  %5890 = vmatpush1.msra.mxu0 0.0
  %5891 = vmatprep.subr.mxu0 0.0
  %5892 = vmatpush1.msra.mxu0 0.0
  %5893 = vmatprep.subr.mxu0 0.0
  %5894 = vmatpush1.msra.mxu0 0.0
  %5895 = vmatprep.subr.mxu0 0.0
  %5896 = vmatpush1.msra.mxu0 0.0
  %5897 = vmatprep.subr.mxu0 0.0
  %5898 = vmatpush1.msra.mxu0 0.0
  %5899 = vmatprep.subr.mxu0 0.0
  %5900 = vmatpush1.msra.mxu0 0.0
  %5901 = vmatprep.subr.mxu0 0.0
  %5902 = vmatpush1.msra.mxu0 0.0
  %5903 = vmatprep.subr.mxu0 0.0
  %5904 = vmatpush1.msra.mxu0 0.0
  %5905 = vmatprep.subr.mxu0 0.0
  %5906 = vmatpush1.msra.mxu0 0.0
  %5907 = vmatprep.subr.mxu0 0.0
  %5908 = vmatpush1.msra.mxu0 0.0
  %5909 = vmatprep.subr.mxu0 0.0
  %5910 = vmatpush1.msra.mxu0 0.0
  %5911 = vmatprep.subr.mxu0 0.0
  %5912 = vmatpush1.msra.mxu0 0.0
  %5913 = vmatprep.subr.mxu0 0.0
  %5914 = vmatpush1.msra.mxu0 0.0
  %5915 = vmatprep.subr.mxu0 0.0
  %5916 = vmatpush1.msra.mxu0 0.0
  %5917 = vmatprep.subr.mxu0 0.0
  %5918 = vmatpush1.msra.mxu0 0.0
  %5919 = vmatprep.subr.mxu0 0.0
  %5920 = vmatpush1.msra.mxu0 0.0
  %5921 = vmatprep.subr.mxu0 0.0
  %5922 = vmatpush1.msra.mxu0 0.0
  %5923 = vmatprep.subr.mxu0 0.0
  %5924 = vmatpush1.msra.mxu0 0.0
  %5925 = vmatprep.subr.mxu0 0.0
  %5926 = vmatpush1.msra.mxu0 0.0
  %5927 = vmatprep.subr.mxu0 0.0
  %5928 = vmatpush1.msra.mxu0 0.0
  %5929 = vmatprep.subr.mxu0 0.0
  %5930 = vmatpush1.msra.mxu0 0.0
  %5931 = vmatprep.subr.mxu0 0.0
  %5932 = vmatpush1.msra.mxu0 0.0
  %5933 = vmatprep.subr.mxu0 0.0
  %5934 = vmatpush1.msra.mxu0 0.0
  %5935 = vmatprep.subr.mxu0 0.0
  %5936 = vmatpush1.msra.mxu0 0.0
  %5937 = vmatprep.subr.mxu0 0.0
  %5938 = vmatpush1.msra.mxu0 0.0
  %5939 = vmatprep.mubr.f32.mxu0 0.0
  %5940 = vmatmul.mubr.f32.gmra.mrb[0].mxu0 %v5873
  %v5941 = vpop.f32.mrb[0].mxu0
  %v5942 = vadd.f32 0.0, %v5941
  %v5943 = vpop.f32.mrb[0].mxu0
  %5944 = vdwg.mxu0
  %v5945 = vadd.f32 %v5872, %v5942
  %v5946 = vtanh.pop %v5945
  %v5947 = vxor.u32 %v5945, 2147483648
  %v5948 = vmul.f32 %v5947, 1.442695
  %v5949 = vpow.pop %v5948
  %v5950 = vadd.f32 %v5949, 1.0
  %v5951 = vrcp.pop %v5950
  %v5952 = vmul.f32 1.0, %v5951
  %v5953 = vsel %vm462, %v5946, %v5952
  %v5954 = vmul.f32 %v5953, %v5754
  %5956 = vrot.lane.b32.xlu0 %v5953, 64
  %v5957 = vpop.permute.xlu0 %5956
  %v5959 = vmul.f32 %v5953, %v5957
  %5961 = vrot.lane.b32.xlu0 %v5959, 32
  %v5962 = vpop.permute.xlu0 %5961
  %v5964 = vadd.f32 %v5954, %v5962
  %v5965 = vtanh.pop %v5964
  %5967 = vrot.lane.b32.xlu0 %v5965, 64
  %v5968 = vpop.permute.xlu0 %5967
  %v5970 = vmul.f32 %v5953, %v5968
  %5972 = vrot.lane.b32.xlu0 %v5970, 32
  %v5973 = vpop.permute.xlu0 %5972
  %5975 = vst.msk [vmem:[%s12 + $0x38] sm:$0xff] %vm491, %v5973
  %v5976 = vld [vmem:[#allocation2 + $0x88] sm:$0xff]
  %5977 = vrot.lane.b32.xlu0 %v5866, 32
  %v5978 = vpop.permute.xlu0 %5977
  %v5979 = vsel %vm491, %v5978, 0
  %5981 = vmatprep.subr.mxu0 0.0
  %5982 = vmatpush1.msra.mxu0 %v4138
  %5983 = vmatprep.subr.mxu0 0.0
  %5984 = vmatpush1.msra.mxu0 %v4139
  %5985 = vmatprep.subr.mxu0 0.0
  %5986 = vmatpush1.msra.mxu0 %v4140
  %5987 = vmatprep.subr.mxu0 0.0
  %5988 = vmatpush1.msra.mxu0 %v4141
  %5989 = vmatprep.subr.mxu0 0.0
  %5990 = vmatpush1.msra.mxu0 0.0
  %5991 = vmatprep.subr.mxu0 0.0
  %5992 = vmatpush1.msra.mxu0 0.0
  %5993 = vmatprep.subr.mxu0 0.0
  %5994 = vmatpush1.msra.mxu0 0.0
  %5995 = vmatprep.subr.mxu0 0.0
  %5996 = vmatpush1.msra.mxu0 0.0
  %5997 = vmatprep.subr.mxu0 0.0
  %5998 = vmatpush1.msra.mxu0 0.0
  %5999 = vmatprep.subr.mxu0 0.0
  %6000 = vmatpush1.msra.mxu0 0.0
  %6001 = vmatprep.subr.mxu0 0.0
  %6002 = vmatpush1.msra.mxu0 0.0
  %6003 = vmatprep.subr.mxu0 0.0
  %6004 = vmatpush1.msra.mxu0 0.0
  %6005 = vmatprep.subr.mxu0 0.0
  %6006 = vmatpush1.msra.mxu0 0.0
  %6007 = vmatprep.subr.mxu0 0.0
  %6008 = vmatpush1.msra.mxu0 0.0
  %6009 = vmatprep.subr.mxu0 0.0
  %6010 = vmatpush1.msra.mxu0 0.0
  %6011 = vmatprep.subr.mxu0 0.0
  %6012 = vmatpush1.msra.mxu0 0.0
  %6013 = vmatprep.subr.mxu0 0.0
  %6014 = vmatpush1.msra.mxu0 0.0
  %6015 = vmatprep.subr.mxu0 0.0
  %6016 = vmatpush1.msra.mxu0 0.0
  %6017 = vmatprep.subr.mxu0 0.0
  %6018 = vmatpush1.msra.mxu0 0.0
  %6019 = vmatprep.subr.mxu0 0.0
  %6020 = vmatpush1.msra.mxu0 0.0
  %6021 = vmatprep.subr.mxu0 0.0
  %6022 = vmatpush1.msra.mxu0 0.0
  %6023 = vmatprep.subr.mxu0 0.0
  %6024 = vmatpush1.msra.mxu0 0.0
  %6025 = vmatprep.subr.mxu0 0.0
  %6026 = vmatpush1.msra.mxu0 0.0
  %6027 = vmatprep.subr.mxu0 0.0
  %6028 = vmatpush1.msra.mxu0 0.0
  %6029 = vmatprep.subr.mxu0 0.0
  %6030 = vmatpush1.msra.mxu0 0.0
  %6031 = vmatprep.subr.mxu0 0.0
  %6032 = vmatpush1.msra.mxu0 0.0
  %6033 = vmatprep.subr.mxu0 0.0
  %6034 = vmatpush1.msra.mxu0 0.0
  %6035 = vmatprep.subr.mxu0 0.0
  %6036 = vmatpush1.msra.mxu0 0.0
  %6037 = vmatprep.subr.mxu0 0.0
  %6038 = vmatpush1.msra.mxu0 0.0
  %6039 = vmatprep.subr.mxu0 0.0
  %6040 = vmatpush1.msra.mxu0 0.0
  %6041 = vmatprep.subr.mxu0 0.0
  %6042 = vmatpush1.msra.mxu0 0.0
  %6043 = vmatprep.subr.mxu0 0.0
  %6044 = vmatpush1.msra.mxu0 0.0
  %6045 = vmatprep.mubr.f32.mxu0 0.0
  %6046 = vmatmul.mubr.f32.gmra.mrb[0].mxu0 %v5979
  %v6047 = vpop.f32.mrb[0].mxu0
  %v6048 = vadd.f32 0.0, %v6047
  %v6049 = vpop.f32.mrb[0].mxu0
  %6050 = vdwg.mxu0
  %v6051 = vadd.f32 %v5976, %v6048
  %v6052 = vtanh.pop %v6051
  %v6053 = vxor.u32 %v6051, 2147483648
  %v6054 = vmul.f32 %v6053, 1.442695
  %v6055 = vpow.pop %v6054
  %v6056 = vadd.f32 %v6055, 1.0
  %v6057 = vrcp.pop %v6056
  %v6058 = vmul.f32 1.0, %v6057
  %v6059 = vsel %vm462, %v6052, %v6058
  %v6060 = vmul.f32 %v6059, %v5860
  %6062 = vrot.lane.b32.xlu0 %v6059, 64
  %v6063 = vpop.permute.xlu0 %6062
  %v6065 = vmul.f32 %v6059, %v6063
  %6067 = vrot.lane.b32.xlu0 %v6065, 32
  %v6068 = vpop.permute.xlu0 %6067
  %v6070 = vadd.f32 %v6060, %v6068
  %v6071 = vtanh.pop %v6070
  %6073 = vrot.lane.b32.xlu0 %v6071, 64
  %v6074 = vpop.permute.xlu0 %6073
  %v6076 = vmul.f32 %v6059, %v6074
  %6078 = vrot.lane.b32.xlu0 %v6076, 64
  %v6079 = vpop.permute.xlu0 %6078
  %6081 = vst.msk [vmem:[%s12 + $0x40] sm:$0xff] %vm950, %v6079
  %v6082 = vld [vmem:[#allocation2 + $0x80] sm:$0xff]
  %v6083 = vsel %vm491, %v5973, 0
  %6085 = vmatprep.subr.mxu0 0.0
  %6086 = vmatpush1.msra.mxu0 %v4134
  %6087 = vmatprep.subr.mxu0 0.0
  %6088 = vmatpush1.msra.mxu0 %v4135
  %6089 = vmatprep.subr.mxu0 0.0
  %6090 = vmatpush1.msra.mxu0 %v4136
  %6091 = vmatprep.subr.mxu0 0.0
  %6092 = vmatpush1.msra.mxu0 %v4137
  %6093 = vmatprep.subr.mxu0 0.0
  %6094 = vmatpush1.msra.mxu0 0.0
  %6095 = vmatprep.subr.mxu0 0.0
  %6096 = vmatpush1.msra.mxu0 0.0
  %6097 = vmatprep.subr.mxu0 0.0
  %6098 = vmatpush1.msra.mxu0 0.0
  %6099 = vmatprep.subr.mxu0 0.0
  %6100 = vmatpush1.msra.mxu0 0.0
  %6101 = vmatprep.subr.mxu0 0.0
  %6102 = vmatpush1.msra.mxu0 0.0
  %6103 = vmatprep.subr.mxu0 0.0
  %6104 = vmatpush1.msra.mxu0 0.0
  %6105 = vmatprep.subr.mxu0 0.0
  %6106 = vmatpush1.msra.mxu0 0.0
  %6107 = vmatprep.subr.mxu0 0.0
  %6108 = vmatpush1.msra.mxu0 0.0
  %6109 = vmatprep.subr.mxu0 0.0
  %6110 = vmatpush1.msra.mxu0 0.0
  %6111 = vmatprep.subr.mxu0 0.0
  %6112 = vmatpush1.msra.mxu0 0.0
  %6113 = vmatprep.subr.mxu0 0.0
  %6114 = vmatpush1.msra.mxu0 0.0
  %6115 = vmatprep.subr.mxu0 0.0
  %6116 = vmatpush1.msra.mxu0 0.0
  %6117 = vmatprep.subr.mxu0 0.0
  %6118 = vmatpush1.msra.mxu0 0.0
  %6119 = vmatprep.subr.mxu0 0.0
  %6120 = vmatpush1.msra.mxu0 0.0
  %6121 = vmatprep.subr.mxu0 0.0
  %6122 = vmatpush1.msra.mxu0 0.0
  %6123 = vmatprep.subr.mxu0 0.0
  %6124 = vmatpush1.msra.mxu0 0.0
  %6125 = vmatprep.subr.mxu0 0.0
  %6126 = vmatpush1.msra.mxu0 0.0
  %6127 = vmatprep.subr.mxu0 0.0
  %6128 = vmatpush1.msra.mxu0 0.0
  %6129 = vmatprep.subr.mxu0 0.0
  %6130 = vmatpush1.msra.mxu0 0.0
  %6131 = vmatprep.subr.mxu0 0.0
  %6132 = vmatpush1.msra.mxu0 0.0
  %6133 = vmatprep.subr.mxu0 0.0
  %6134 = vmatpush1.msra.mxu0 0.0
  %6135 = vmatprep.subr.mxu0 0.0
  %6136 = vmatpush1.msra.mxu0 0.0
  %6137 = vmatprep.subr.mxu0 0.0
  %6138 = vmatpush1.msra.mxu0 0.0
  %6139 = vmatprep.subr.mxu0 0.0
  %6140 = vmatpush1.msra.mxu0 0.0
  %6141 = vmatprep.subr.mxu0 0.0
  %6142 = vmatpush1.msra.mxu0 0.0
  %6143 = vmatprep.subr.mxu0 0.0
  %6144 = vmatpush1.msra.mxu0 0.0
  %6145 = vmatprep.subr.mxu0 0.0
  %6146 = vmatpush1.msra.mxu0 0.0
  %6147 = vmatprep.subr.mxu0 0.0
  %6148 = vmatpush1.msra.mxu0 0.0
  %6149 = vmatprep.mubr.f32.mxu0 0.0
  %6150 = vmatmul.mubr.f32.gmra.mrb[0].mxu0 %v6083
  %v6151 = vpop.f32.mrb[0].mxu0
  %v6152 = vadd.f32 0.0, %v6151
  %v6153 = vpop.f32.mrb[0].mxu0
  %6154 = vdwg.mxu0
  %v6155 = vadd.f32 %v6082, %v6152
  %v6156 = vtanh.pop %v6155
  %v6157 = vxor.u32 %v6155, 2147483648
  %v6158 = vmul.f32 %v6157, 1.442695
  %v6159 = vpow.pop %v6158
  %v6160 = vadd.f32 %v6159, 1.0
  %v6161 = vrcp.pop %v6160
  %v6162 = vmul.f32 1.0, %v6161
  %v6163 = vsel %vm462, %v6156, %v6162
  %v6164 = vmul.f32 %v6163, %v5964
  %6166 = vrot.lane.b32.xlu0 %v6163, 64
  %v6167 = vpop.permute.xlu0 %6166
  %v6169 = vmul.f32 %v6163, %v6167
  %6171 = vrot.lane.b32.xlu0 %v6169, 32
  %v6172 = vpop.permute.xlu0 %6171
  %v6174 = vadd.f32 %v6164, %v6172
  %v6175 = vtanh.pop %v6174
  %6177 = vrot.lane.b32.xlu0 %v6175, 64
  %v6178 = vpop.permute.xlu0 %6177
  %v6180 = vmul.f32 %v6163, %v6178
  %6182 = vrot.lane.b32.xlu0 %v6180, 32
  %v6183 = vpop.permute.xlu0 %6182
  %6185 = vst.msk [vmem:[%s12 + $0x40] sm:$0xff] %vm491, %v6183
  %v6186 = vld [vmem:[#allocation2 + $0x78] sm:$0xff]
  %6187 = vrot.lane.b32.xlu0 %v6076, 32
  %v6188 = vpop.permute.xlu0 %6187
  %v6189 = vsel %vm491, %v6188, 0
  %6191 = vmatprep.subr.mxu0 0.0
  %6192 = vmatpush1.msra.mxu0 %v4138
  %6193 = vmatprep.subr.mxu0 0.0
  %6194 = vmatpush1.msra.mxu0 %v4139
  %6195 = vmatprep.subr.mxu0 0.0
  %6196 = vmatpush1.msra.mxu0 %v4140
  %6197 = vmatprep.subr.mxu0 0.0
  %6198 = vmatpush1.msra.mxu0 %v4141
  %6199 = vmatprep.subr.mxu0 0.0
  %6200 = vmatpush1.msra.mxu0 0.0
  %6201 = vmatprep.subr.mxu0 0.0
  %6202 = vmatpush1.msra.mxu0 0.0
  %6203 = vmatprep.subr.mxu0 0.0
  %6204 = vmatpush1.msra.mxu0 0.0
  %6205 = vmatprep.subr.mxu0 0.0
  %6206 = vmatpush1.msra.mxu0 0.0
  %6207 = vmatprep.subr.mxu0 0.0
  %6208 = vmatpush1.msra.mxu0 0.0
  %6209 = vmatprep.subr.mxu0 0.0
  %6210 = vmatpush1.msra.mxu0 0.0
  %6211 = vmatprep.subr.mxu0 0.0
  %6212 = vmatpush1.msra.mxu0 0.0
  %6213 = vmatprep.subr.mxu0 0.0
  %6214 = vmatpush1.msra.mxu0 0.0
  %6215 = vmatprep.subr.mxu0 0.0
  %6216 = vmatpush1.msra.mxu0 0.0
  %6217 = vmatprep.subr.mxu0 0.0
  %6218 = vmatpush1.msra.mxu0 0.0
  %6219 = vmatprep.subr.mxu0 0.0
  %6220 = vmatpush1.msra.mxu0 0.0
  %6221 = vmatprep.subr.mxu0 0.0
  %6222 = vmatpush1.msra.mxu0 0.0
  %6223 = vmatprep.subr.mxu0 0.0
  %6224 = vmatpush1.msra.mxu0 0.0
  %6225 = vmatprep.subr.mxu0 0.0
  %6226 = vmatpush1.msra.mxu0 0.0
  %6227 = vmatprep.subr.mxu0 0.0
  %6228 = vmatpush1.msra.mxu0 0.0
  %6229 = vmatprep.subr.mxu0 0.0
  %6230 = vmatpush1.msra.mxu0 0.0
  %6231 = vmatprep.subr.mxu0 0.0
  %6232 = vmatpush1.msra.mxu0 0.0
  %6233 = vmatprep.subr.mxu0 0.0
  %6234 = vmatpush1.msra.mxu0 0.0
  %6235 = vmatprep.subr.mxu0 0.0
  %6236 = vmatpush1.msra.mxu0 0.0
  %6237 = vmatprep.subr.mxu0 0.0
  %6238 = vmatpush1.msra.mxu0 0.0
  %6239 = vmatprep.subr.mxu0 0.0
  %6240 = vmatpush1.msra.mxu0 0.0
  %6241 = vmatprep.subr.mxu0 0.0
  %6242 = vmatpush1.msra.mxu0 0.0
  %6243 = vmatprep.subr.mxu0 0.0
  %6244 = vmatpush1.msra.mxu0 0.0
  %6245 = vmatprep.subr.mxu0 0.0
  %6246 = vmatpush1.msra.mxu0 0.0
  %6247 = vmatprep.subr.mxu0 0.0
  %6248 = vmatpush1.msra.mxu0 0.0
  %6249 = vmatprep.subr.mxu0 0.0
  %6250 = vmatpush1.msra.mxu0 0.0
  %6251 = vmatprep.subr.mxu0 0.0
  %6252 = vmatpush1.msra.mxu0 0.0
  %6253 = vmatprep.subr.mxu0 0.0
  %6254 = vmatpush1.msra.mxu0 0.0
  %6255 = vmatprep.mubr.f32.mxu0 0.0
  %6256 = vmatmul.mubr.f32.gmra.mrb[0].mxu0 %v6189
  %v6257 = vpop.f32.mrb[0].mxu0
  %v6258 = vadd.f32 0.0, %v6257
  %v6259 = vpop.f32.mrb[0].mxu0
  %6260 = vdwg.mxu0
  %v6261 = vadd.f32 %v6186, %v6258
  %v6262 = vtanh.pop %v6261
  %v6263 = vxor.u32 %v6261, 2147483648
  %v6264 = vmul.f32 %v6263, 1.442695
  %v6265 = vpow.pop %v6264
  %v6266 = vadd.f32 %v6265, 1.0
  %v6267 = vrcp.pop %v6266
  %v6268 = vmul.f32 1.0, %v6267
  %v6269 = vsel %vm462, %v6262, %v6268
  %v6270 = vmul.f32 %v6269, %v6070
  %6272 = vrot.lane.b32.xlu0 %v6269, 64
  %v6273 = vpop.permute.xlu0 %6272
  %v6275 = vmul.f32 %v6269, %v6273
  %6277 = vrot.lane.b32.xlu0 %v6275, 32
  %v6278 = vpop.permute.xlu0 %6277
  %v6280 = vadd.f32 %v6270, %v6278
  %v6281 = vtanh.pop %v6280
  %6283 = vrot.lane.b32.xlu0 %v6281, 64
  %v6284 = vpop.permute.xlu0 %6283
  %v6286 = vmul.f32 %v6269, %v6284
  %6288 = vrot.lane.b32.xlu0 %v6286, 64
  %v6289 = vpop.permute.xlu0 %6288
  %6291 = vst.msk [vmem:[%s12 + $0x38] sm:$0xff] %vm950, %v6289
  %v6292 = vld [vmem:[#allocation2 + $0x90] sm:$0xff]
  %v6293 = vsel %vm491, %v6183, 0
  %6295 = vmatprep.subr.mxu0 0.0
  %6296 = vmatpush1.msra.mxu0 %v4134
  %6297 = vmatprep.subr.mxu0 0.0
  %6298 = vmatpush1.msra.mxu0 %v4135
  %6299 = vmatprep.subr.mxu0 0.0
  %6300 = vmatpush1.msra.mxu0 %v4136
  %6301 = vmatprep.subr.mxu0 0.0
  %6302 = vmatpush1.msra.mxu0 %v4137
  %6303 = vmatprep.subr.mxu0 0.0
  %6304 = vmatpush1.msra.mxu0 0.0
  %6305 = vmatprep.subr.mxu0 0.0
  %6306 = vmatpush1.msra.mxu0 0.0
  %6307 = vmatprep.subr.mxu0 0.0
  %6308 = vmatpush1.msra.mxu0 0.0
  %6309 = vmatprep.subr.mxu0 0.0
  %6310 = vmatpush1.msra.mxu0 0.0
  %6311 = vmatprep.subr.mxu0 0.0
  %6312 = vmatpush1.msra.mxu0 0.0
  %6313 = vmatprep.subr.mxu0 0.0
  %6314 = vmatpush1.msra.mxu0 0.0
  %6315 = vmatprep.subr.mxu0 0.0
  %6316 = vmatpush1.msra.mxu0 0.0
  %6317 = vmatprep.subr.mxu0 0.0
  %6318 = vmatpush1.msra.mxu0 0.0
  %6319 = vmatprep.subr.mxu0 0.0
  %6320 = vmatpush1.msra.mxu0 0.0
  %6321 = vmatprep.subr.mxu0 0.0
  %6322 = vmatpush1.msra.mxu0 0.0
  %6323 = vmatprep.subr.mxu0 0.0
  %6324 = vmatpush1.msra.mxu0 0.0
  %6325 = vmatprep.subr.mxu0 0.0
  %6326 = vmatpush1.msra.mxu0 0.0
  %6327 = vmatprep.subr.mxu0 0.0
  %6328 = vmatpush1.msra.mxu0 0.0
  %6329 = vmatprep.subr.mxu0 0.0
  %6330 = vmatpush1.msra.mxu0 0.0
  %6331 = vmatprep.subr.mxu0 0.0
  %6332 = vmatpush1.msra.mxu0 0.0
  %6333 = vmatprep.subr.mxu0 0.0
  %6334 = vmatpush1.msra.mxu0 0.0
  %6335 = vmatprep.subr.mxu0 0.0
  %6336 = vmatpush1.msra.mxu0 0.0
  %6337 = vmatprep.subr.mxu0 0.0
  %6338 = vmatpush1.msra.mxu0 0.0
  %6339 = vmatprep.subr.mxu0 0.0
  %6340 = vmatpush1.msra.mxu0 0.0
  %6341 = vmatprep.subr.mxu0 0.0
  %6342 = vmatpush1.msra.mxu0 0.0
  %6343 = vmatprep.subr.mxu0 0.0
  %6344 = vmatpush1.msra.mxu0 0.0
  %6345 = vmatprep.subr.mxu0 0.0
  %6346 = vmatpush1.msra.mxu0 0.0
  %6347 = vmatprep.subr.mxu0 0.0
  %6348 = vmatpush1.msra.mxu0 0.0
  %6349 = vmatprep.subr.mxu0 0.0
  %6350 = vmatpush1.msra.mxu0 0.0
  %6351 = vmatprep.subr.mxu0 0.0
  %6352 = vmatpush1.msra.mxu0 0.0
  %6353 = vmatprep.subr.mxu0 0.0
  %6354 = vmatpush1.msra.mxu0 0.0
  %6355 = vmatprep.subr.mxu0 0.0
  %6356 = vmatpush1.msra.mxu0 0.0
  %6357 = vmatprep.subr.mxu0 0.0
  %6358 = vmatpush1.msra.mxu0 0.0
  %6359 = vmatprep.mubr.f32.mxu0 0.0
  %6360 = vmatmul.mubr.f32.gmra.mrb[0].mxu0 %v6293
  %v6361 = vpop.f32.mrb[0].mxu0
  %v6362 = vadd.f32 0.0, %v6361
  %v6363 = vpop.f32.mrb[0].mxu0
  %6364 = vdwg.mxu0
  %v6365 = vadd.f32 %v6292, %v6362
  %v6366 = vtanh.pop %v6365
  %v6367 = vxor.u32 %v6365, 2147483648
  %v6368 = vmul.f32 %v6367, 1.442695
  %v6369 = vpow.pop %v6368
  %v6370 = vadd.f32 %v6369, 1.0
  %v6371 = vrcp.pop %v6370
  %v6372 = vmul.f32 1.0, %v6371
  %v6373 = vsel %vm462, %v6366, %v6372
  %v6374 = vmul.f32 %v6373, %v6174
  %6376 = vrot.lane.b32.xlu0 %v6373, 64
  %v6377 = vpop.permute.xlu0 %6376
  %v6379 = vmul.f32 %v6373, %v6377
  %6381 = vrot.lane.b32.xlu0 %v6379, 32
  %v6382 = vpop.permute.xlu0 %6381
  %v6384 = vadd.f32 %v6374, %v6382
  %v6385 = vtanh.pop %v6384
  %6387 = vrot.lane.b32.xlu0 %v6385, 64
  %v6388 = vpop.permute.xlu0 %6387
  %v6390 = vmul.f32 %v6373, %v6388
  %6392 = vrot.lane.b32.xlu0 %v6390, 32
  %v6393 = vpop.permute.xlu0 %6392
  %6395 = vst.msk [vmem:[%s12 + $0x48] sm:$0xff] %vm491, %v6393
  %v6396 = vld [vmem:[#allocation2 + $0x68] sm:$0xff]
  %6397 = vrot.lane.b32.xlu0 %v6286, 32
  %v6398 = vpop.permute.xlu0 %6397
  %v6399 = vsel %vm491, %v6398, 0
  %6401 = vmatprep.subr.mxu0 0.0
  %6402 = vmatpush1.msra.mxu0 %v4138
  %6403 = vmatprep.subr.mxu0 0.0
  %6404 = vmatpush1.msra.mxu0 %v4139
  %6405 = vmatprep.subr.mxu0 0.0
  %6406 = vmatpush1.msra.mxu0 %v4140
  %6407 = vmatprep.subr.mxu0 0.0
  %6408 = vmatpush1.msra.mxu0 %v4141
  %6409 = vmatprep.subr.mxu0 0.0
  %6410 = vmatpush1.msra.mxu0 0.0
  %6411 = vmatprep.subr.mxu0 0.0
  %6412 = vmatpush1.msra.mxu0 0.0
  %6413 = vmatprep.subr.mxu0 0.0
  %6414 = vmatpush1.msra.mxu0 0.0
  %6415 = vmatprep.subr.mxu0 0.0
  %6416 = vmatpush1.msra.mxu0 0.0
  %6417 = vmatprep.subr.mxu0 0.0
  %6418 = vmatpush1.msra.mxu0 0.0
  %6419 = vmatprep.subr.mxu0 0.0
  %6420 = vmatpush1.msra.mxu0 0.0
  %6421 = vmatprep.subr.mxu0 0.0
  %6422 = vmatpush1.msra.mxu0 0.0
  %6423 = vmatprep.subr.mxu0 0.0
  %6424 = vmatpush1.msra.mxu0 0.0
  %6425 = vmatprep.subr.mxu0 0.0
  %6426 = vmatpush1.msra.mxu0 0.0
  %6427 = vmatprep.subr.mxu0 0.0
  %6428 = vmatpush1.msra.mxu0 0.0
  %6429 = vmatprep.subr.mxu0 0.0
  %6430 = vmatpush1.msra.mxu0 0.0
  %6431 = vmatprep.subr.mxu0 0.0
  %6432 = vmatpush1.msra.mxu0 0.0
  %6433 = vmatprep.subr.mxu0 0.0
  %6434 = vmatpush1.msra.mxu0 0.0
  %6435 = vmatprep.subr.mxu0 0.0
  %6436 = vmatpush1.msra.mxu0 0.0
  %6437 = vmatprep.subr.mxu0 0.0
  %6438 = vmatpush1.msra.mxu0 0.0
  %6439 = vmatprep.subr.mxu0 0.0
  %6440 = vmatpush1.msra.mxu0 0.0
  %6441 = vmatprep.subr.mxu0 0.0
  %6442 = vmatpush1.msra.mxu0 0.0
  %6443 = vmatprep.subr.mxu0 0.0
  %6444 = vmatpush1.msra.mxu0 0.0
  %6445 = vmatprep.subr.mxu0 0.0
  %6446 = vmatpush1.msra.mxu0 0.0
  %6447 = vmatprep.subr.mxu0 0.0
  %6448 = vmatpush1.msra.mxu0 0.0
  %6449 = vmatprep.subr.mxu0 0.0
  %6450 = vmatpush1.msra.mxu0 0.0
  %6451 = vmatprep.subr.mxu0 0.0
  %6452 = vmatpush1.msra.mxu0 0.0
  %6453 = vmatprep.subr.mxu0 0.0
  %6454 = vmatpush1.msra.mxu0 0.0
  %6455 = vmatprep.subr.mxu0 0.0
  %6456 = vmatpush1.msra.mxu0 0.0
  %6457 = vmatprep.subr.mxu0 0.0
  %6458 = vmatpush1.msra.mxu0 0.0
  %6459 = vmatprep.subr.mxu0 0.0
  %6460 = vmatpush1.msra.mxu0 0.0
  %6461 = vmatprep.subr.mxu0 0.0
  %6462 = vmatpush1.msra.mxu0 0.0
  %6463 = vmatprep.subr.mxu0 0.0
  %6464 = vmatpush1.msra.mxu0 0.0
  %6465 = vmatprep.mubr.f32.mxu0 0.0
  %6466 = vmatmul.mubr.f32.gmra.mrb[0].mxu0 %v6399
  %v6467 = vpop.f32.mrb[0].mxu0
  %v6468 = vadd.f32 0.0, %v6467
  %v6469 = vpop.f32.mrb[0].mxu0
  %6470 = vdwg.mxu0
  %v6471 = vadd.f32 %v6396, %v6468
  %v6472 = vtanh.pop %v6471
  %v6473 = vxor.u32 %v6471, 2147483648
  %v6474 = vmul.f32 %v6473, 1.442695
  %v6475 = vpow.pop %v6474
  %v6476 = vadd.f32 %v6475, 1.0
  %v6477 = vrcp.pop %v6476
  %v6478 = vmul.f32 1.0, %v6477
  %v6479 = vsel %vm462, %v6472, %v6478
  %v6480 = vmul.f32 %v6479, %v6280
  %6482 = vrot.lane.b32.xlu0 %v6479, 64
  %v6483 = vpop.permute.xlu0 %6482
  %v6485 = vmul.f32 %v6479, %v6483
  %6487 = vrot.lane.b32.xlu0 %v6485, 32
  %v6488 = vpop.permute.xlu0 %6487
  %v6490 = vadd.f32 %v6480, %v6488
  %v6491 = vtanh.pop %v6490
  %6493 = vrot.lane.b32.xlu0 %v6491, 64
  %v6494 = vpop.permute.xlu0 %6493
  %v6496 = vmul.f32 %v6479, %v6494
  %6498 = vrot.lane.b32.xlu0 %v6496, 64
  %v6499 = vpop.permute.xlu0 %6498
  %6501 = vst.msk [vmem:[%s12 + $0x30] sm:$0xff] %vm950, %v6499
  %v6502 = vld [vmem:[#allocation2 + $0xa0] sm:$0xff]
  %v6503 = vsel %vm491, %v6393, 0
  %6505 = vmatprep.subr.mxu0 0.0
  %6506 = vmatpush1.msra.mxu0 %v4134
  %6507 = vmatprep.subr.mxu0 0.0
  %6508 = vmatpush1.msra.mxu0 %v4135
  %6509 = vmatprep.subr.mxu0 0.0
  %6510 = vmatpush1.msra.mxu0 %v4136
  %6511 = vmatprep.subr.mxu0 0.0
  %6512 = vmatpush1.msra.mxu0 %v4137
  %6513 = vmatprep.subr.mxu0 0.0
  %6514 = vmatpush1.msra.mxu0 0.0
  %6515 = vmatprep.subr.mxu0 0.0
  %6516 = vmatpush1.msra.mxu0 0.0
  %6517 = vmatprep.subr.mxu0 0.0
  %6518 = vmatpush1.msra.mxu0 0.0
  %6519 = vmatprep.subr.mxu0 0.0
  %6520 = vmatpush1.msra.mxu0 0.0
  %6521 = vmatprep.subr.mxu0 0.0
  %6522 = vmatpush1.msra.mxu0 0.0
  %6523 = vmatprep.subr.mxu0 0.0
  %6524 = vmatpush1.msra.mxu0 0.0
  %6525 = vmatprep.subr.mxu0 0.0
  %6526 = vmatpush1.msra.mxu0 0.0
  %6527 = vmatprep.subr.mxu0 0.0
  %6528 = vmatpush1.msra.mxu0 0.0
  %6529 = vmatprep.subr.mxu0 0.0
  %6530 = vmatpush1.msra.mxu0 0.0
  %6531 = vmatprep.subr.mxu0 0.0
  %6532 = vmatpush1.msra.mxu0 0.0
  %6533 = vmatprep.subr.mxu0 0.0
  %6534 = vmatpush1.msra.mxu0 0.0
  %6535 = vmatprep.subr.mxu0 0.0
  %6536 = vmatpush1.msra.mxu0 0.0
  %6537 = vmatprep.subr.mxu0 0.0
  %6538 = vmatpush1.msra.mxu0 0.0
  %6539 = vmatprep.subr.mxu0 0.0
  %6540 = vmatpush1.msra.mxu0 0.0
  %6541 = vmatprep.subr.mxu0 0.0
  %6542 = vmatpush1.msra.mxu0 0.0
  %6543 = vmatprep.subr.mxu0 0.0
  %6544 = vmatpush1.msra.mxu0 0.0
  %6545 = vmatprep.subr.mxu0 0.0
  %6546 = vmatpush1.msra.mxu0 0.0
  %6547 = vmatprep.subr.mxu0 0.0
  %6548 = vmatpush1.msra.mxu0 0.0
  %6549 = vmatprep.subr.mxu0 0.0
  %6550 = vmatpush1.msra.mxu0 0.0
  %6551 = vmatprep.subr.mxu0 0.0
  %6552 = vmatpush1.msra.mxu0 0.0
  %6553 = vmatprep.subr.mxu0 0.0
  %6554 = vmatpush1.msra.mxu0 0.0
  %6555 = vmatprep.subr.mxu0 0.0
  %6556 = vmatpush1.msra.mxu0 0.0
  %6557 = vmatprep.subr.mxu0 0.0
  %6558 = vmatpush1.msra.mxu0 0.0
  %6559 = vmatprep.subr.mxu0 0.0
  %6560 = vmatpush1.msra.mxu0 0.0
  %6561 = vmatprep.subr.mxu0 0.0
  %6562 = vmatpush1.msra.mxu0 0.0
  %6563 = vmatprep.subr.mxu0 0.0
  %6564 = vmatpush1.msra.mxu0 0.0
  %6565 = vmatprep.subr.mxu0 0.0
  %6566 = vmatpush1.msra.mxu0 0.0
  %6567 = vmatprep.subr.mxu0 0.0
  %6568 = vmatpush1.msra.mxu0 0.0
  %6569 = vmatprep.mubr.f32.mxu0 0.0
  %6570 = vmatmul.mubr.f32.gmra.mrb[0].mxu0 %v6503
  %v6571 = vpop.f32.mrb[0].mxu0
  %v6572 = vadd.f32 0.0, %v6571
  %v6573 = vpop.f32.mrb[0].mxu0
  %6574 = vdwg.mxu0
  %v6575 = vadd.f32 %v6502, %v6572
  %v6576 = vtanh.pop %v6575
  %v6577 = vxor.u32 %v6575, 2147483648
  %v6578 = vmul.f32 %v6577, 1.442695
  %v6579 = vpow.pop %v6578
  %v6580 = vadd.f32 %v6579, 1.0
  %v6581 = vrcp.pop %v6580
  %v6582 = vmul.f32 1.0, %v6581
  %v6583 = vsel %vm462, %v6576, %v6582
  %v6584 = vmul.f32 %v6583, %v6384
  %6586 = vrot.lane.b32.xlu0 %v6583, 64
  %v6587 = vpop.permute.xlu0 %6586
  %v6589 = vmul.f32 %v6583, %v6587
  %6591 = vrot.lane.b32.xlu0 %v6589, 32
  %v6592 = vpop.permute.xlu0 %6591
  %v6594 = vadd.f32 %v6584, %v6592
  %v6595 = vtanh.pop %v6594
  %6597 = vrot.lane.b32.xlu0 %v6595, 64
  %v6598 = vpop.permute.xlu0 %6597
  %v6600 = vmul.f32 %v6583, %v6598
  %6602 = vrot.lane.b32.xlu0 %v6600, 32
  %v6603 = vpop.permute.xlu0 %6602
  %6605 = vst.msk [vmem:[%s12 + $0x50] sm:$0xff] %vm491, %v6603
  %v6606 = vld [vmem:[#allocation2 + $0x58] sm:$0xff]
  %6607 = vrot.lane.b32.xlu0 %v6496, 32
  %v6608 = vpop.permute.xlu0 %6607
  %v6609 = vsel %vm491, %v6608, 0
  %6611 = vmatprep.subr.mxu0 0.0
  %6612 = vmatpush1.msra.mxu0 %v4138
  %6613 = vmatprep.subr.mxu0 0.0
  %6614 = vmatpush1.msra.mxu0 %v4139
  %6615 = vmatprep.subr.mxu0 0.0
  %6616 = vmatpush1.msra.mxu0 %v4140
  %6617 = vmatprep.subr.mxu0 0.0
  %6618 = vmatpush1.msra.mxu0 %v4141
  %6619 = vmatprep.subr.mxu0 0.0
  %6620 = vmatpush1.msra.mxu0 0.0
  %6621 = vmatprep.subr.mxu0 0.0
  %6622 = vmatpush1.msra.mxu0 0.0
  %6623 = vmatprep.subr.mxu0 0.0
  %6624 = vmatpush1.msra.mxu0 0.0
  %6625 = vmatprep.subr.mxu0 0.0
  %6626 = vmatpush1.msra.mxu0 0.0
  %6627 = vmatprep.subr.mxu0 0.0
  %6628 = vmatpush1.msra.mxu0 0.0
  %6629 = vmatprep.subr.mxu0 0.0
  %6630 = vmatpush1.msra.mxu0 0.0
  %6631 = vmatprep.subr.mxu0 0.0
  %6632 = vmatpush1.msra.mxu0 0.0
  %6633 = vmatprep.subr.mxu0 0.0
  %6634 = vmatpush1.msra.mxu0 0.0
  %6635 = vmatprep.subr.mxu0 0.0
  %6636 = vmatpush1.msra.mxu0 0.0
  %6637 = vmatprep.subr.mxu0 0.0
  %6638 = vmatpush1.msra.mxu0 0.0
  %6639 = vmatprep.subr.mxu0 0.0
  %6640 = vmatpush1.msra.mxu0 0.0
  %6641 = vmatprep.subr.mxu0 0.0
  %6642 = vmatpush1.msra.mxu0 0.0
  %6643 = vmatprep.subr.mxu0 0.0
  %6644 = vmatpush1.msra.mxu0 0.0
  %6645 = vmatprep.subr.mxu0 0.0
  %6646 = vmatpush1.msra.mxu0 0.0
  %6647 = vmatprep.subr.mxu0 0.0
  %6648 = vmatpush1.msra.mxu0 0.0
  %6649 = vmatprep.subr.mxu0 0.0
  %6650 = vmatpush1.msra.mxu0 0.0
  %6651 = vmatprep.subr.mxu0 0.0
  %6652 = vmatpush1.msra.mxu0 0.0
  %6653 = vmatprep.subr.mxu0 0.0
  %6654 = vmatpush1.msra.mxu0 0.0
  %6655 = vmatprep.subr.mxu0 0.0
  %6656 = vmatpush1.msra.mxu0 0.0
  %6657 = vmatprep.subr.mxu0 0.0
  %6658 = vmatpush1.msra.mxu0 0.0
  %6659 = vmatprep.subr.mxu0 0.0
  %6660 = vmatpush1.msra.mxu0 0.0
  %6661 = vmatprep.subr.mxu0 0.0
  %6662 = vmatpush1.msra.mxu0 0.0
  %6663 = vmatprep.subr.mxu0 0.0
  %6664 = vmatpush1.msra.mxu0 0.0
  %6665 = vmatprep.subr.mxu0 0.0
  %6666 = vmatpush1.msra.mxu0 0.0
  %6667 = vmatprep.subr.mxu0 0.0
  %6668 = vmatpush1.msra.mxu0 0.0
  %6669 = vmatprep.subr.mxu0 0.0
  %6670 = vmatpush1.msra.mxu0 0.0
  %6671 = vmatprep.subr.mxu0 0.0
  %6672 = vmatpush1.msra.mxu0 0.0
  %6673 = vmatprep.subr.mxu0 0.0
  %6674 = vmatpush1.msra.mxu0 0.0
  %6675 = vmatprep.mubr.f32.mxu0 0.0
  %6676 = vmatmul.mubr.f32.gmra.mrb[0].mxu0 %v6609
  %v6677 = vpop.f32.mrb[0].mxu0
  %v6678 = vadd.f32 0.0, %v6677
  %v6679 = vpop.f32.mrb[0].mxu0
  %6680 = vdwg.mxu0
  %v6681 = vadd.f32 %v6606, %v6678
  %v6682 = vtanh.pop %v6681
  %v6683 = vxor.u32 %v6681, 2147483648
  %v6684 = vmul.f32 %v6683, 1.442695
  %v6685 = vpow.pop %v6684
  %v6686 = vadd.f32 %v6685, 1.0
  %v6687 = vrcp.pop %v6686
  %v6688 = vmul.f32 1.0, %v6687
  %v6689 = vsel %vm462, %v6682, %v6688
  %v6690 = vmul.f32 %v6689, %v6490
  %6692 = vrot.lane.b32.xlu0 %v6689, 64
  %v6693 = vpop.permute.xlu0 %6692
  %v6695 = vmul.f32 %v6689, %v6693
  %6697 = vrot.lane.b32.xlu0 %v6695, 32
  %v6698 = vpop.permute.xlu0 %6697
  %v6700 = vadd.f32 %v6690, %v6698
  %v6701 = vtanh.pop %v6700
  %6703 = vrot.lane.b32.xlu0 %v6701, 64
  %v6704 = vpop.permute.xlu0 %6703
  %v6706 = vmul.f32 %v6689, %v6704
  %6708 = vrot.lane.b32.xlu0 %v6706, 64
  %v6709 = vpop.permute.xlu0 %6708
  %6711 = vst.msk [vmem:[%s12 + $0x28] sm:$0xff] %vm950, %v6709
  %v6712 = vld [vmem:[#allocation2 + $0xb0] sm:$0xff]
  %v6713 = vsel %vm491, %v6603, 0
  %6715 = vmatprep.subr.mxu0 0.0
  %6716 = vmatpush1.msra.mxu0 %v4134
  %6717 = vmatprep.subr.mxu0 0.0
  %6718 = vmatpush1.msra.mxu0 %v4135
  %6719 = vmatprep.subr.mxu0 0.0
  %6720 = vmatpush1.msra.mxu0 %v4136
  %6721 = vmatprep.subr.mxu0 0.0
  %6722 = vmatpush1.msra.mxu0 %v4137
  %6723 = vmatprep.subr.mxu0 0.0
  %6724 = vmatpush1.msra.mxu0 0.0
  %6725 = vmatprep.subr.mxu0 0.0
  %6726 = vmatpush1.msra.mxu0 0.0
  %6727 = vmatprep.subr.mxu0 0.0
  %6728 = vmatpush1.msra.mxu0 0.0
  %6729 = vmatprep.subr.mxu0 0.0
  %6730 = vmatpush1.msra.mxu0 0.0
  %6731 = vmatprep.subr.mxu0 0.0
  %6732 = vmatpush1.msra.mxu0 0.0
  %6733 = vmatprep.subr.mxu0 0.0
  %6734 = vmatpush1.msra.mxu0 0.0
  %6735 = vmatprep.subr.mxu0 0.0
  %6736 = vmatpush1.msra.mxu0 0.0
  %6737 = vmatprep.subr.mxu0 0.0
  %6738 = vmatpush1.msra.mxu0 0.0
  %6739 = vmatprep.subr.mxu0 0.0
  %6740 = vmatpush1.msra.mxu0 0.0
  %6741 = vmatprep.subr.mxu0 0.0
  %6742 = vmatpush1.msra.mxu0 0.0
  %6743 = vmatprep.subr.mxu0 0.0
  %6744 = vmatpush1.msra.mxu0 0.0
  %6745 = vmatprep.subr.mxu0 0.0
  %6746 = vmatpush1.msra.mxu0 0.0
  %6747 = vmatprep.subr.mxu0 0.0
  %6748 = vmatpush1.msra.mxu0 0.0
  %6749 = vmatprep.subr.mxu0 0.0
  %6750 = vmatpush1.msra.mxu0 0.0
  %6751 = vmatprep.subr.mxu0 0.0
  %6752 = vmatpush1.msra.mxu0 0.0
  %6753 = vmatprep.subr.mxu0 0.0
  %6754 = vmatpush1.msra.mxu0 0.0
  %6755 = vmatprep.subr.mxu0 0.0
  %6756 = vmatpush1.msra.mxu0 0.0
  %6757 = vmatprep.subr.mxu0 0.0
  %6758 = vmatpush1.msra.mxu0 0.0
  %6759 = vmatprep.subr.mxu0 0.0
  %6760 = vmatpush1.msra.mxu0 0.0
  %6761 = vmatprep.subr.mxu0 0.0
  %6762 = vmatpush1.msra.mxu0 0.0
  %6763 = vmatprep.subr.mxu0 0.0
  %6764 = vmatpush1.msra.mxu0 0.0
  %6765 = vmatprep.subr.mxu0 0.0
  %6766 = vmatpush1.msra.mxu0 0.0
  %6767 = vmatprep.subr.mxu0 0.0
  %6768 = vmatpush1.msra.mxu0 0.0
  %6769 = vmatprep.subr.mxu0 0.0
  %6770 = vmatpush1.msra.mxu0 0.0
  %6771 = vmatprep.subr.mxu0 0.0
  %6772 = vmatpush1.msra.mxu0 0.0
  %6773 = vmatprep.subr.mxu0 0.0
  %6774 = vmatpush1.msra.mxu0 0.0
  %6775 = vmatprep.subr.mxu0 0.0
  %6776 = vmatpush1.msra.mxu0 0.0
  %6777 = vmatprep.subr.mxu0 0.0
  %6778 = vmatpush1.msra.mxu0 0.0
  %6779 = vmatprep.mubr.f32.mxu0 0.0
  %6780 = vmatmul.mubr.f32.gmra.mrb[0].mxu0 %v6713
  %v6781 = vpop.f32.mrb[0].mxu0
  %v6782 = vadd.f32 0.0, %v6781
  %v6783 = vpop.f32.mrb[0].mxu0
  %6784 = vdwg.mxu0
  %v6785 = vadd.f32 %v6712, %v6782
  %v6786 = vtanh.pop %v6785
  %v6787 = vxor.u32 %v6785, 2147483648
  %v6788 = vmul.f32 %v6787, 1.442695
  %v6789 = vpow.pop %v6788
  %v6790 = vadd.f32 %v6789, 1.0
  %v6791 = vrcp.pop %v6790
  %v6792 = vmul.f32 1.0, %v6791
  %v6793 = vsel %vm462, %v6786, %v6792
  %v6794 = vmul.f32 %v6793, %v6594
  %6796 = vrot.lane.b32.xlu0 %v6793, 64
  %v6797 = vpop.permute.xlu0 %6796
  %v6799 = vmul.f32 %v6793, %v6797
  %6801 = vrot.lane.b32.xlu0 %v6799, 32
  %v6802 = vpop.permute.xlu0 %6801
  %v6804 = vadd.f32 %v6794, %v6802
  %v6805 = vtanh.pop %v6804
  %6807 = vrot.lane.b32.xlu0 %v6805, 64
  %v6808 = vpop.permute.xlu0 %6807
  %v6810 = vmul.f32 %v6793, %v6808
  %6812 = vrot.lane.b32.xlu0 %v6810, 32
  %v6813 = vpop.permute.xlu0 %6812
  %6815 = vst.msk [vmem:[%s12 + $0x58] sm:$0xff] %vm491, %v6813
  %v6816 = vld [vmem:[#allocation2 + $0x48] sm:$0xff]
  %6817 = vrot.lane.b32.xlu0 %v6706, 32
  %v6818 = vpop.permute.xlu0 %6817
  %v6819 = vsel %vm491, %v6818, 0
  %6821 = vmatprep.subr.mxu0 0.0
  %6822 = vmatpush1.msra.mxu0 %v4138
  %6823 = vmatprep.subr.mxu0 0.0
  %6824 = vmatpush1.msra.mxu0 %v4139
  %6825 = vmatprep.subr.mxu0 0.0
  %6826 = vmatpush1.msra.mxu0 %v4140
  %6827 = vmatprep.subr.mxu0 0.0
  %6828 = vmatpush1.msra.mxu0 %v4141
  %6829 = vmatprep.subr.mxu0 0.0
  %6830 = vmatpush1.msra.mxu0 0.0
  %6831 = vmatprep.subr.mxu0 0.0
  %6832 = vmatpush1.msra.mxu0 0.0
  %6833 = vmatprep.subr.mxu0 0.0
  %6834 = vmatpush1.msra.mxu0 0.0
  %6835 = vmatprep.subr.mxu0 0.0
  %6836 = vmatpush1.msra.mxu0 0.0
  %6837 = vmatprep.subr.mxu0 0.0
  %6838 = vmatpush1.msra.mxu0 0.0
  %6839 = vmatprep.subr.mxu0 0.0
  %6840 = vmatpush1.msra.mxu0 0.0
  %6841 = vmatprep.subr.mxu0 0.0
  %6842 = vmatpush1.msra.mxu0 0.0
  %6843 = vmatprep.subr.mxu0 0.0
  %6844 = vmatpush1.msra.mxu0 0.0
  %6845 = vmatprep.subr.mxu0 0.0
  %6846 = vmatpush1.msra.mxu0 0.0
  %6847 = vmatprep.subr.mxu0 0.0
  %6848 = vmatpush1.msra.mxu0 0.0
  %6849 = vmatprep.subr.mxu0 0.0
  %6850 = vmatpush1.msra.mxu0 0.0
  %6851 = vmatprep.subr.mxu0 0.0
  %6852 = vmatpush1.msra.mxu0 0.0
  %6853 = vmatprep.subr.mxu0 0.0
  %6854 = vmatpush1.msra.mxu0 0.0
  %6855 = vmatprep.subr.mxu0 0.0
  %6856 = vmatpush1.msra.mxu0 0.0
  %6857 = vmatprep.subr.mxu0 0.0
  %6858 = vmatpush1.msra.mxu0 0.0
  %6859 = vmatprep.subr.mxu0 0.0
  %6860 = vmatpush1.msra.mxu0 0.0
  %6861 = vmatprep.subr.mxu0 0.0
  %6862 = vmatpush1.msra.mxu0 0.0
  %6863 = vmatprep.subr.mxu0 0.0
  %6864 = vmatpush1.msra.mxu0 0.0
  %6865 = vmatprep.subr.mxu0 0.0
  %6866 = vmatpush1.msra.mxu0 0.0
  %6867 = vmatprep.subr.mxu0 0.0
  %6868 = vmatpush1.msra.mxu0 0.0
  %6869 = vmatprep.subr.mxu0 0.0
  %6870 = vmatpush1.msra.mxu0 0.0
  %6871 = vmatprep.subr.mxu0 0.0
  %6872 = vmatpush1.msra.mxu0 0.0
  %6873 = vmatprep.subr.mxu0 0.0
  %6874 = vmatpush1.msra.mxu0 0.0
  %6875 = vmatprep.subr.mxu0 0.0
  %6876 = vmatpush1.msra.mxu0 0.0
  %6877 = vmatprep.subr.mxu0 0.0
  %6878 = vmatpush1.msra.mxu0 0.0
  %6879 = vmatprep.subr.mxu0 0.0
  %6880 = vmatpush1.msra.mxu0 0.0
  %6881 = vmatprep.subr.mxu0 0.0
  %6882 = vmatpush1.msra.mxu0 0.0
  %6883 = vmatprep.subr.mxu0 0.0
  %6884 = vmatpush1.msra.mxu0 0.0
  %6885 = vmatprep.mubr.f32.mxu0 0.0
  %6886 = vmatmul.mubr.f32.gmra.mrb[0].mxu0 %v6819
  %v6887 = vpop.f32.mrb[0].mxu0
  %v6888 = vadd.f32 0.0, %v6887
  %v6889 = vpop.f32.mrb[0].mxu0
  %6890 = vdwg.mxu0
  %v6891 = vadd.f32 %v6816, %v6888
  %v6892 = vtanh.pop %v6891
  %v6893 = vxor.u32 %v6891, 2147483648
  %v6894 = vmul.f32 %v6893, 1.442695
  %v6895 = vpow.pop %v6894
  %v6896 = vadd.f32 %v6895, 1.0
  %v6897 = vrcp.pop %v6896
  %v6898 = vmul.f32 1.0, %v6897
  %v6899 = vsel %vm462, %v6892, %v6898
  %v6900 = vmul.f32 %v6899, %v6700
  %6902 = vrot.lane.b32.xlu0 %v6899, 64
  %v6903 = vpop.permute.xlu0 %6902
  %v6905 = vmul.f32 %v6899, %v6903
  %6907 = vrot.lane.b32.xlu0 %v6905, 32
  %v6908 = vpop.permute.xlu0 %6907
  %v6910 = vadd.f32 %v6900, %v6908
  %v6911 = vtanh.pop %v6910
  %6913 = vrot.lane.b32.xlu0 %v6911, 64
  %v6914 = vpop.permute.xlu0 %6913
  %v6916 = vmul.f32 %v6899, %v6914
  %6918 = vrot.lane.b32.xlu0 %v6916, 64
  %v6919 = vpop.permute.xlu0 %6918
  %6921 = vst.msk [vmem:[%s12 + $0x20] sm:$0xff] %vm950, %v6919
  %v6922 = vld [vmem:[#allocation2 + $0xc0] sm:$0xff]
  %v6923 = vsel %vm491, %v6813, 0
  %6925 = vmatprep.subr.mxu0 0.0
  %6926 = vmatpush1.msra.mxu0 %v4134
  %6927 = vmatprep.subr.mxu0 0.0
  %6928 = vmatpush1.msra.mxu0 %v4135
  %6929 = vmatprep.subr.mxu0 0.0
  %6930 = vmatpush1.msra.mxu0 %v4136
  %6931 = vmatprep.subr.mxu0 0.0
  %6932 = vmatpush1.msra.mxu0 %v4137
  %6933 = vmatprep.subr.mxu0 0.0
  %6934 = vmatpush1.msra.mxu0 0.0
  %6935 = vmatprep.subr.mxu0 0.0
  %6936 = vmatpush1.msra.mxu0 0.0
  %6937 = vmatprep.subr.mxu0 0.0
  %6938 = vmatpush1.msra.mxu0 0.0
  %6939 = vmatprep.subr.mxu0 0.0
  %6940 = vmatpush1.msra.mxu0 0.0
  %6941 = vmatprep.subr.mxu0 0.0
  %6942 = vmatpush1.msra.mxu0 0.0
  %6943 = vmatprep.subr.mxu0 0.0
  %6944 = vmatpush1.msra.mxu0 0.0
  %6945 = vmatprep.subr.mxu0 0.0
  %6946 = vmatpush1.msra.mxu0 0.0
  %6947 = vmatprep.subr.mxu0 0.0
  %6948 = vmatpush1.msra.mxu0 0.0
  %6949 = vmatprep.subr.mxu0 0.0
  %6950 = vmatpush1.msra.mxu0 0.0
  %6951 = vmatprep.subr.mxu0 0.0
  %6952 = vmatpush1.msra.mxu0 0.0
  %6953 = vmatprep.subr.mxu0 0.0
  %6954 = vmatpush1.msra.mxu0 0.0
  %6955 = vmatprep.subr.mxu0 0.0
  %6956 = vmatpush1.msra.mxu0 0.0
  %6957 = vmatprep.subr.mxu0 0.0
  %6958 = vmatpush1.msra.mxu0 0.0
  %6959 = vmatprep.subr.mxu0 0.0
  %6960 = vmatpush1.msra.mxu0 0.0
  %6961 = vmatprep.subr.mxu0 0.0
  %6962 = vmatpush1.msra.mxu0 0.0
  %6963 = vmatprep.subr.mxu0 0.0
  %6964 = vmatpush1.msra.mxu0 0.0
  %6965 = vmatprep.subr.mxu0 0.0
  %6966 = vmatpush1.msra.mxu0 0.0
  %6967 = vmatprep.subr.mxu0 0.0
  %6968 = vmatpush1.msra.mxu0 0.0
  %6969 = vmatprep.subr.mxu0 0.0
  %6970 = vmatpush1.msra.mxu0 0.0
  %6971 = vmatprep.subr.mxu0 0.0
  %6972 = vmatpush1.msra.mxu0 0.0
  %6973 = vmatprep.subr.mxu0 0.0
  %6974 = vmatpush1.msra.mxu0 0.0
  %6975 = vmatprep.subr.mxu0 0.0
  %6976 = vmatpush1.msra.mxu0 0.0
  %6977 = vmatprep.subr.mxu0 0.0
  %6978 = vmatpush1.msra.mxu0 0.0
  %6979 = vmatprep.subr.mxu0 0.0
  %6980 = vmatpush1.msra.mxu0 0.0
  %6981 = vmatprep.subr.mxu0 0.0
  %6982 = vmatpush1.msra.mxu0 0.0
  %6983 = vmatprep.subr.mxu0 0.0
  %6984 = vmatpush1.msra.mxu0 0.0
  %6985 = vmatprep.subr.mxu0 0.0
  %6986 = vmatpush1.msra.mxu0 0.0
  %6987 = vmatprep.subr.mxu0 0.0
  %6988 = vmatpush1.msra.mxu0 0.0
  %6989 = vmatprep.mubr.f32.mxu0 0.0
  %6990 = vmatmul.mubr.f32.gmra.mrb[0].mxu0 %v6923
  %v6991 = vpop.f32.mrb[0].mxu0
  %v6992 = vadd.f32 0.0, %v6991
  %v6993 = vpop.f32.mrb[0].mxu0
  %6994 = vdwg.mxu0
  %v6995 = vadd.f32 %v6922, %v6992
  %v6996 = vtanh.pop %v6995
  %v6997 = vxor.u32 %v6995, 2147483648
  %v6998 = vmul.f32 %v6997, 1.442695
  %v6999 = vpow.pop %v6998
  %v7000 = vadd.f32 %v6999, 1.0
  %v7001 = vrcp.pop %v7000
  %v7002 = vmul.f32 1.0, %v7001
  %v7003 = vsel %vm462, %v6996, %v7002
  %v7004 = vmul.f32 %v7003, %v6804
  %7006 = vrot.lane.b32.xlu0 %v7003, 64
  %v7007 = vpop.permute.xlu0 %7006
  %v7009 = vmul.f32 %v7003, %v7007
  %7011 = vrot.lane.b32.xlu0 %v7009, 32
  %v7012 = vpop.permute.xlu0 %7011
  %v7014 = vadd.f32 %v7004, %v7012
  %v7015 = vtanh.pop %v7014
  %7017 = vrot.lane.b32.xlu0 %v7015, 64
  %v7018 = vpop.permute.xlu0 %7017
  %v7020 = vmul.f32 %v7003, %v7018
  %7022 = vrot.lane.b32.xlu0 %v7020, 32
  %v7023 = vpop.permute.xlu0 %7022
  %7025 = vst.msk [vmem:[%s12 + $0x60] sm:$0xff] %vm491, %v7023
  %v7026 = vld [vmem:[#allocation2 + $0x38] sm:$0xff]
  %7027 = vrot.lane.b32.xlu0 %v6916, 32
  %v7028 = vpop.permute.xlu0 %7027
  %v7029 = vsel %vm491, %v7028, 0
  %7031 = vmatprep.subr.mxu0 0.0
  %7032 = vmatpush1.msra.mxu0 %v4138
  %7033 = vmatprep.subr.mxu0 0.0
  %7034 = vmatpush1.msra.mxu0 %v4139
  %7035 = vmatprep.subr.mxu0 0.0
  %7036 = vmatpush1.msra.mxu0 %v4140
  %7037 = vmatprep.subr.mxu0 0.0
  %7038 = vmatpush1.msra.mxu0 %v4141
  %7039 = vmatprep.subr.mxu0 0.0
  %7040 = vmatpush1.msra.mxu0 0.0
  %7041 = vmatprep.subr.mxu0 0.0
  %7042 = vmatpush1.msra.mxu0 0.0
  %7043 = vmatprep.subr.mxu0 0.0
  %7044 = vmatpush1.msra.mxu0 0.0
  %7045 = vmatprep.subr.mxu0 0.0
  %7046 = vmatpush1.msra.mxu0 0.0
  %7047 = vmatprep.subr.mxu0 0.0
  %7048 = vmatpush1.msra.mxu0 0.0
  %7049 = vmatprep.subr.mxu0 0.0
  %7050 = vmatpush1.msra.mxu0 0.0
  %7051 = vmatprep.subr.mxu0 0.0
  %7052 = vmatpush1.msra.mxu0 0.0
  %7053 = vmatprep.subr.mxu0 0.0
  %7054 = vmatpush1.msra.mxu0 0.0
  %7055 = vmatprep.subr.mxu0 0.0
  %7056 = vmatpush1.msra.mxu0 0.0
  %7057 = vmatprep.subr.mxu0 0.0
  %7058 = vmatpush1.msra.mxu0 0.0
  %7059 = vmatprep.subr.mxu0 0.0
  %7060 = vmatpush1.msra.mxu0 0.0
  %7061 = vmatprep.subr.mxu0 0.0
  %7062 = vmatpush1.msra.mxu0 0.0
  %7063 = vmatprep.subr.mxu0 0.0
  %7064 = vmatpush1.msra.mxu0 0.0
  %7065 = vmatprep.subr.mxu0 0.0
  %7066 = vmatpush1.msra.mxu0 0.0
  %7067 = vmatprep.subr.mxu0 0.0
  %7068 = vmatpush1.msra.mxu0 0.0
  %7069 = vmatprep.subr.mxu0 0.0
  %7070 = vmatpush1.msra.mxu0 0.0
  %7071 = vmatprep.subr.mxu0 0.0
  %7072 = vmatpush1.msra.mxu0 0.0
  %7073 = vmatprep.subr.mxu0 0.0
  %7074 = vmatpush1.msra.mxu0 0.0
  %7075 = vmatprep.subr.mxu0 0.0
  %7076 = vmatpush1.msra.mxu0 0.0
  %7077 = vmatprep.subr.mxu0 0.0
  %7078 = vmatpush1.msra.mxu0 0.0
  %7079 = vmatprep.subr.mxu0 0.0
  %7080 = vmatpush1.msra.mxu0 0.0
  %7081 = vmatprep.subr.mxu0 0.0
  %7082 = vmatpush1.msra.mxu0 0.0
  %7083 = vmatprep.subr.mxu0 0.0
  %7084 = vmatpush1.msra.mxu0 0.0
  %7085 = vmatprep.subr.mxu0 0.0
  %7086 = vmatpush1.msra.mxu0 0.0
  %7087 = vmatprep.subr.mxu0 0.0
  %7088 = vmatpush1.msra.mxu0 0.0
  %7089 = vmatprep.subr.mxu0 0.0
  %7090 = vmatpush1.msra.mxu0 0.0
  %7091 = vmatprep.subr.mxu0 0.0
  %7092 = vmatpush1.msra.mxu0 0.0
  %7093 = vmatprep.subr.mxu0 0.0
  %7094 = vmatpush1.msra.mxu0 0.0
  %7095 = vmatprep.mubr.f32.mxu0 0.0
  %7096 = vmatmul.mubr.f32.gmra.mrb[0].mxu0 %v7029
  %v7097 = vpop.f32.mrb[0].mxu0
  %v7098 = vadd.f32 0.0, %v7097
  %v7099 = vpop.f32.mrb[0].mxu0
  %7100 = vdwg.mxu0
  %v7101 = vadd.f32 %v7026, %v7098
  %v7102 = vtanh.pop %v7101
  %v7103 = vxor.u32 %v7101, 2147483648
  %v7104 = vmul.f32 %v7103, 1.442695
  %v7105 = vpow.pop %v7104
  %v7106 = vadd.f32 %v7105, 1.0
  %v7107 = vrcp.pop %v7106
  %v7108 = vmul.f32 1.0, %v7107
  %v7109 = vsel %vm462, %v7102, %v7108
  %v7110 = vmul.f32 %v7109, %v6910
  %7112 = vrot.lane.b32.xlu0 %v7109, 64
  %v7113 = vpop.permute.xlu0 %7112
  %v7115 = vmul.f32 %v7109, %v7113
  %7117 = vrot.lane.b32.xlu0 %v7115, 32
  %v7118 = vpop.permute.xlu0 %7117
  %v7120 = vadd.f32 %v7110, %v7118
  %v7121 = vtanh.pop %v7120
  %7123 = vrot.lane.b32.xlu0 %v7121, 64
  %v7124 = vpop.permute.xlu0 %7123
  %v7126 = vmul.f32 %v7109, %v7124
  %7128 = vrot.lane.b32.xlu0 %v7126, 64
  %v7129 = vpop.permute.xlu0 %7128
  %7131 = vst.msk [vmem:[%s12 + $0x18] sm:$0xff] %vm950, %v7129
  %v7132 = vld [vmem:[#allocation2 + $0xd0] sm:$0xff]
  %v7133 = vsel %vm491, %v7023, 0
  %7135 = vmatprep.subr.mxu0 0.0
  %7136 = vmatpush1.msra.mxu0 %v4134
  %7137 = vmatprep.subr.mxu0 0.0
  %7138 = vmatpush1.msra.mxu0 %v4135
  %7139 = vmatprep.subr.mxu0 0.0
  %7140 = vmatpush1.msra.mxu0 %v4136
  %7141 = vmatprep.subr.mxu0 0.0
  %7142 = vmatpush1.msra.mxu0 %v4137
  %7143 = vmatprep.subr.mxu0 0.0
  %7144 = vmatpush1.msra.mxu0 0.0
  %7145 = vmatprep.subr.mxu0 0.0
  %7146 = vmatpush1.msra.mxu0 0.0
  %7147 = vmatprep.subr.mxu0 0.0
  %7148 = vmatpush1.msra.mxu0 0.0
  %7149 = vmatprep.subr.mxu0 0.0
  %7150 = vmatpush1.msra.mxu0 0.0
  %7151 = vmatprep.subr.mxu0 0.0
  %7152 = vmatpush1.msra.mxu0 0.0
  %7153 = vmatprep.subr.mxu0 0.0
  %7154 = vmatpush1.msra.mxu0 0.0
  %7155 = vmatprep.subr.mxu0 0.0
  %7156 = vmatpush1.msra.mxu0 0.0
  %7157 = vmatprep.subr.mxu0 0.0
  %7158 = vmatpush1.msra.mxu0 0.0
  %7159 = vmatprep.subr.mxu0 0.0
  %7160 = vmatpush1.msra.mxu0 0.0
  %7161 = vmatprep.subr.mxu0 0.0
  %7162 = vmatpush1.msra.mxu0 0.0
  %7163 = vmatprep.subr.mxu0 0.0
  %7164 = vmatpush1.msra.mxu0 0.0
  %7165 = vmatprep.subr.mxu0 0.0
  %7166 = vmatpush1.msra.mxu0 0.0
  %7167 = vmatprep.subr.mxu0 0.0
  %7168 = vmatpush1.msra.mxu0 0.0
  %7169 = vmatprep.subr.mxu0 0.0
  %7170 = vmatpush1.msra.mxu0 0.0
  %7171 = vmatprep.subr.mxu0 0.0
  %7172 = vmatpush1.msra.mxu0 0.0
  %7173 = vmatprep.subr.mxu0 0.0
  %7174 = vmatpush1.msra.mxu0 0.0
  %7175 = vmatprep.subr.mxu0 0.0
  %7176 = vmatpush1.msra.mxu0 0.0
  %7177 = vmatprep.subr.mxu0 0.0
  %7178 = vmatpush1.msra.mxu0 0.0
  %7179 = vmatprep.subr.mxu0 0.0
  %7180 = vmatpush1.msra.mxu0 0.0
  %7181 = vmatprep.subr.mxu0 0.0
  %7182 = vmatpush1.msra.mxu0 0.0
  %7183 = vmatprep.subr.mxu0 0.0
  %7184 = vmatpush1.msra.mxu0 0.0
  %7185 = vmatprep.subr.mxu0 0.0
  %7186 = vmatpush1.msra.mxu0 0.0
  %7187 = vmatprep.subr.mxu0 0.0
  %7188 = vmatpush1.msra.mxu0 0.0
  %7189 = vmatprep.subr.mxu0 0.0
  %7190 = vmatpush1.msra.mxu0 0.0
  %7191 = vmatprep.subr.mxu0 0.0
  %7192 = vmatpush1.msra.mxu0 0.0
  %7193 = vmatprep.subr.mxu0 0.0
  %7194 = vmatpush1.msra.mxu0 0.0
  %7195 = vmatprep.subr.mxu0 0.0
  %7196 = vmatpush1.msra.mxu0 0.0
  %7197 = vmatprep.subr.mxu0 0.0
  %7198 = vmatpush1.msra.mxu0 0.0
  %7199 = vmatprep.mubr.f32.mxu0 0.0
  %7200 = vmatmul.mubr.f32.gmra.mrb[0].mxu0 %v7133
  %v7201 = vpop.f32.mrb[0].mxu0
  %v7202 = vadd.f32 0.0, %v7201
  %v7203 = vpop.f32.mrb[0].mxu0
  %7204 = vdwg.mxu0
  %v7205 = vadd.f32 %v7132, %v7202
  %v7206 = vtanh.pop %v7205
  %v7207 = vxor.u32 %v7205, 2147483648
  %v7208 = vmul.f32 %v7207, 1.442695
  %v7209 = vpow.pop %v7208
  %v7210 = vadd.f32 %v7209, 1.0
  %v7211 = vrcp.pop %v7210
  %v7212 = vmul.f32 1.0, %v7211
  %v7213 = vsel %vm462, %v7206, %v7212
  %v7214 = vmul.f32 %v7213, %v7014
  %7216 = vrot.lane.b32.xlu0 %v7213, 64
  %v7217 = vpop.permute.xlu0 %7216
  %v7219 = vmul.f32 %v7213, %v7217
  %7221 = vrot.lane.b32.xlu0 %v7219, 32
  %v7222 = vpop.permute.xlu0 %7221
  %v7224 = vadd.f32 %v7214, %v7222
  %v7225 = vtanh.pop %v7224
  %7227 = vrot.lane.b32.xlu0 %v7225, 64
  %v7228 = vpop.permute.xlu0 %7227
  %v7230 = vmul.f32 %v7213, %v7228
  %7232 = vrot.lane.b32.xlu0 %v7230, 32
  %v7233 = vpop.permute.xlu0 %7232
  %7235 = vst.msk [vmem:[%s12 + $0x68] sm:$0xff] %vm491, %v7233
  %v7236 = vld [vmem:[#allocation2 + $0x28] sm:$0xff]
  %7237 = vrot.lane.b32.xlu0 %v7126, 32
  %v7238 = vpop.permute.xlu0 %7237
  %v7239 = vsel %vm491, %v7238, 0
  %7241 = vmatprep.subr.mxu0 0.0
  %7242 = vmatpush1.msra.mxu0 %v4138
  %7243 = vmatprep.subr.mxu0 0.0
  %7244 = vmatpush1.msra.mxu0 %v4139
  %7245 = vmatprep.subr.mxu0 0.0
  %7246 = vmatpush1.msra.mxu0 %v4140
  %7247 = vmatprep.subr.mxu0 0.0
  %7248 = vmatpush1.msra.mxu0 %v4141
  %7249 = vmatprep.subr.mxu0 0.0
  %7250 = vmatpush1.msra.mxu0 0.0
  %7251 = vmatprep.subr.mxu0 0.0
  %7252 = vmatpush1.msra.mxu0 0.0
  %7253 = vmatprep.subr.mxu0 0.0
  %7254 = vmatpush1.msra.mxu0 0.0
  %7255 = vmatprep.subr.mxu0 0.0
  %7256 = vmatpush1.msra.mxu0 0.0
  %7257 = vmatprep.subr.mxu0 0.0
  %7258 = vmatpush1.msra.mxu0 0.0
  %7259 = vmatprep.subr.mxu0 0.0
  %7260 = vmatpush1.msra.mxu0 0.0
  %7261 = vmatprep.subr.mxu0 0.0
  %7262 = vmatpush1.msra.mxu0 0.0
  %7263 = vmatprep.subr.mxu0 0.0
  %7264 = vmatpush1.msra.mxu0 0.0
  %7265 = vmatprep.subr.mxu0 0.0
  %7266 = vmatpush1.msra.mxu0 0.0
  %7267 = vmatprep.subr.mxu0 0.0
  %7268 = vmatpush1.msra.mxu0 0.0
  %7269 = vmatprep.subr.mxu0 0.0
  %7270 = vmatpush1.msra.mxu0 0.0
  %7271 = vmatprep.subr.mxu0 0.0
  %7272 = vmatpush1.msra.mxu0 0.0
  %7273 = vmatprep.subr.mxu0 0.0
  %7274 = vmatpush1.msra.mxu0 0.0
  %7275 = vmatprep.subr.mxu0 0.0
  %7276 = vmatpush1.msra.mxu0 0.0
  %7277 = vmatprep.subr.mxu0 0.0
  %7278 = vmatpush1.msra.mxu0 0.0
  %7279 = vmatprep.subr.mxu0 0.0
  %7280 = vmatpush1.msra.mxu0 0.0
  %7281 = vmatprep.subr.mxu0 0.0
  %7282 = vmatpush1.msra.mxu0 0.0
  %7283 = vmatprep.subr.mxu0 0.0
  %7284 = vmatpush1.msra.mxu0 0.0
  %7285 = vmatprep.subr.mxu0 0.0
  %7286 = vmatpush1.msra.mxu0 0.0
  %7287 = vmatprep.subr.mxu0 0.0
  %7288 = vmatpush1.msra.mxu0 0.0
  %7289 = vmatprep.subr.mxu0 0.0
  %7290 = vmatpush1.msra.mxu0 0.0
  %7291 = vmatprep.subr.mxu0 0.0
  %7292 = vmatpush1.msra.mxu0 0.0
  %7293 = vmatprep.subr.mxu0 0.0
  %7294 = vmatpush1.msra.mxu0 0.0
  %7295 = vmatprep.subr.mxu0 0.0
  %7296 = vmatpush1.msra.mxu0 0.0
  %7297 = vmatprep.subr.mxu0 0.0
  %7298 = vmatpush1.msra.mxu0 0.0
  %7299 = vmatprep.subr.mxu0 0.0
  %7300 = vmatpush1.msra.mxu0 0.0
  %7301 = vmatprep.subr.mxu0 0.0
  %7302 = vmatpush1.msra.mxu0 0.0
  %7303 = vmatprep.subr.mxu0 0.0
  %7304 = vmatpush1.msra.mxu0 0.0
  %7305 = vmatprep.mubr.f32.mxu0 0.0
  %7306 = vmatmul.mubr.f32.gmra.mrb[0].mxu0 %v7239
  %v7307 = vpop.f32.mrb[0].mxu0
  %v7308 = vadd.f32 0.0, %v7307
  %v7309 = vpop.f32.mrb[0].mxu0
  %7310 = vdwg.mxu0
  %v7311 = vadd.f32 %v7236, %v7308
  %v7312 = vtanh.pop %v7311
  %v7313 = vxor.u32 %v7311, 2147483648
  %v7314 = vmul.f32 %v7313, 1.442695
  %v7315 = vpow.pop %v7314
  %v7316 = vadd.f32 %v7315, 1.0
  %v7317 = vrcp.pop %v7316
  %v7318 = vmul.f32 1.0, %v7317
  %v7319 = vsel %vm462, %v7312, %v7318
  %v7320 = vmul.f32 %v7319, %v7120
  %7322 = vrot.lane.b32.xlu0 %v7319, 64
  %v7323 = vpop.permute.xlu0 %7322
  %v7325 = vmul.f32 %v7319, %v7323
  %7327 = vrot.lane.b32.xlu0 %v7325, 32
  %v7328 = vpop.permute.xlu0 %7327
  %v7330 = vadd.f32 %v7320, %v7328
  %v7331 = vtanh.pop %v7330
  %7333 = vrot.lane.b32.xlu0 %v7331, 64
  %v7334 = vpop.permute.xlu0 %7333
  %v7336 = vmul.f32 %v7319, %v7334
  %7338 = vrot.lane.b32.xlu0 %v7336, 64
  %v7339 = vpop.permute.xlu0 %7338
  %7341 = vst.msk [vmem:[%s12 + $0x10] sm:$0xff] %vm950, %v7339
  %v7342 = vld [vmem:[#allocation2 + $0xe0] sm:$0xff]
  %v7343 = vsel %vm491, %v7233, 0
  %7345 = vmatprep.subr.mxu0 0.0
  %7346 = vmatpush1.msra.mxu0 %v4134
  %7347 = vmatprep.subr.mxu0 0.0
  %7348 = vmatpush1.msra.mxu0 %v4135
  %7349 = vmatprep.subr.mxu0 0.0
  %7350 = vmatpush1.msra.mxu0 %v4136
  %7351 = vmatprep.subr.mxu0 0.0
  %7352 = vmatpush1.msra.mxu0 %v4137
  %7353 = vmatprep.subr.mxu0 0.0
  %7354 = vmatpush1.msra.mxu0 0.0
  %7355 = vmatprep.subr.mxu0 0.0
  %7356 = vmatpush1.msra.mxu0 0.0
  %7357 = vmatprep.subr.mxu0 0.0
  %7358 = vmatpush1.msra.mxu0 0.0
  %7359 = vmatprep.subr.mxu0 0.0
  %7360 = vmatpush1.msra.mxu0 0.0
  %7361 = vmatprep.subr.mxu0 0.0
  %7362 = vmatpush1.msra.mxu0 0.0
  %7363 = vmatprep.subr.mxu0 0.0
  %7364 = vmatpush1.msra.mxu0 0.0
  %7365 = vmatprep.subr.mxu0 0.0
  %7366 = vmatpush1.msra.mxu0 0.0
  %7367 = vmatprep.subr.mxu0 0.0
  %7368 = vmatpush1.msra.mxu0 0.0
  %7369 = vmatprep.subr.mxu0 0.0
  %7370 = vmatpush1.msra.mxu0 0.0
  %7371 = vmatprep.subr.mxu0 0.0
  %7372 = vmatpush1.msra.mxu0 0.0
  %7373 = vmatprep.subr.mxu0 0.0
  %7374 = vmatpush1.msra.mxu0 0.0
  %7375 = vmatprep.subr.mxu0 0.0
  %7376 = vmatpush1.msra.mxu0 0.0
  %7377 = vmatprep.subr.mxu0 0.0
  %7378 = vmatpush1.msra.mxu0 0.0
  %7379 = vmatprep.subr.mxu0 0.0
  %7380 = vmatpush1.msra.mxu0 0.0
  %7381 = vmatprep.subr.mxu0 0.0
  %7382 = vmatpush1.msra.mxu0 0.0
  %7383 = vmatprep.subr.mxu0 0.0
  %7384 = vmatpush1.msra.mxu0 0.0
  %7385 = vmatprep.subr.mxu0 0.0
  %7386 = vmatpush1.msra.mxu0 0.0
  %7387 = vmatprep.subr.mxu0 0.0
  %7388 = vmatpush1.msra.mxu0 0.0
  %7389 = vmatprep.subr.mxu0 0.0
  %7390 = vmatpush1.msra.mxu0 0.0
  %7391 = vmatprep.subr.mxu0 0.0
  %7392 = vmatpush1.msra.mxu0 0.0
  %7393 = vmatprep.subr.mxu0 0.0
  %7394 = vmatpush1.msra.mxu0 0.0
  %7395 = vmatprep.subr.mxu0 0.0
  %7396 = vmatpush1.msra.mxu0 0.0
  %7397 = vmatprep.subr.mxu0 0.0
  %7398 = vmatpush1.msra.mxu0 0.0
  %7399 = vmatprep.subr.mxu0 0.0
  %7400 = vmatpush1.msra.mxu0 0.0
  %7401 = vmatprep.subr.mxu0 0.0
  %7402 = vmatpush1.msra.mxu0 0.0
  %7403 = vmatprep.subr.mxu0 0.0
  %7404 = vmatpush1.msra.mxu0 0.0
  %7405 = vmatprep.subr.mxu0 0.0
  %7406 = vmatpush1.msra.mxu0 0.0
  %7407 = vmatprep.subr.mxu0 0.0
  %7408 = vmatpush1.msra.mxu0 0.0
  %7409 = vmatprep.mubr.f32.mxu0 0.0
  %7410 = vmatmul.mubr.f32.gmra.mrb[0].mxu0 %v7343
  %v7411 = vpop.f32.mrb[0].mxu0
  %v7412 = vadd.f32 0.0, %v7411
  %v7413 = vpop.f32.mrb[0].mxu0
  %7414 = vdwg.mxu0
  %v7415 = vadd.f32 %v7342, %v7412
  %v7416 = vtanh.pop %v7415
  %v7417 = vxor.u32 %v7415, 2147483648
  %v7418 = vmul.f32 %v7417, 1.442695
  %v7419 = vpow.pop %v7418
  %v7420 = vadd.f32 %v7419, 1.0
  %v7421 = vrcp.pop %v7420
  %v7422 = vmul.f32 1.0, %v7421
  %v7423 = vsel %vm462, %v7416, %v7422
  %v7424 = vmul.f32 %v7423, %v7224
  %7426 = vrot.lane.b32.xlu0 %v7423, 64
  %v7427 = vpop.permute.xlu0 %7426
  %v7429 = vmul.f32 %v7423, %v7427
  %7431 = vrot.lane.b32.xlu0 %v7429, 32
  %v7432 = vpop.permute.xlu0 %7431
  %v7434 = vadd.f32 %v7424, %v7432
  %v7435 = vtanh.pop %v7434
  %7437 = vrot.lane.b32.xlu0 %v7435, 64
  %v7438 = vpop.permute.xlu0 %7437
  %v7440 = vmul.f32 %v7423, %v7438
  %7442 = vrot.lane.b32.xlu0 %v7440, 32
  %v7443 = vpop.permute.xlu0 %7442
  %7445 = vst.msk [vmem:[%s12 + $0x70] sm:$0xff] %vm491, %v7443
  %v7446 = vld [vmem:[#allocation2 + $0x18] sm:$0xff]
  %7447 = vrot.lane.b32.xlu0 %v7336, 32
  %v7448 = vpop.permute.xlu0 %7447
  %v7449 = vsel %vm491, %v7448, 0
  %7451 = vmatprep.subr.mxu0 0.0
  %7452 = vmatpush1.msra.mxu0 %v4138
  %7453 = vmatprep.subr.mxu0 0.0
  %7454 = vmatpush1.msra.mxu0 %v4139
  %7455 = vmatprep.subr.mxu0 0.0
  %7456 = vmatpush1.msra.mxu0 %v4140
  %7457 = vmatprep.subr.mxu0 0.0
  %7458 = vmatpush1.msra.mxu0 %v4141
  %7459 = vmatprep.subr.mxu0 0.0
  %7460 = vmatpush1.msra.mxu0 0.0
  %7461 = vmatprep.subr.mxu0 0.0
  %7462 = vmatpush1.msra.mxu0 0.0
  %7463 = vmatprep.subr.mxu0 0.0
  %7464 = vmatpush1.msra.mxu0 0.0
  %7465 = vmatprep.subr.mxu0 0.0
  %7466 = vmatpush1.msra.mxu0 0.0
  %7467 = vmatprep.subr.mxu0 0.0
  %7468 = vmatpush1.msra.mxu0 0.0
  %7469 = vmatprep.subr.mxu0 0.0
  %7470 = vmatpush1.msra.mxu0 0.0
  %7471 = vmatprep.subr.mxu0 0.0
  %7472 = vmatpush1.msra.mxu0 0.0
  %7473 = vmatprep.subr.mxu0 0.0
  %7474 = vmatpush1.msra.mxu0 0.0
  %7475 = vmatprep.subr.mxu0 0.0
  %7476 = vmatpush1.msra.mxu0 0.0
  %7477 = vmatprep.subr.mxu0 0.0
  %7478 = vmatpush1.msra.mxu0 0.0
  %7479 = vmatprep.subr.mxu0 0.0
  %7480 = vmatpush1.msra.mxu0 0.0
  %7481 = vmatprep.subr.mxu0 0.0
  %7482 = vmatpush1.msra.mxu0 0.0
  %7483 = vmatprep.subr.mxu0 0.0
  %7484 = vmatpush1.msra.mxu0 0.0
  %7485 = vmatprep.subr.mxu0 0.0
  %7486 = vmatpush1.msra.mxu0 0.0
  %7487 = vmatprep.subr.mxu0 0.0
  %7488 = vmatpush1.msra.mxu0 0.0
  %7489 = vmatprep.subr.mxu0 0.0
  %7490 = vmatpush1.msra.mxu0 0.0
  %7491 = vmatprep.subr.mxu0 0.0
  %7492 = vmatpush1.msra.mxu0 0.0
  %7493 = vmatprep.subr.mxu0 0.0
  %7494 = vmatpush1.msra.mxu0 0.0
  %7495 = vmatprep.subr.mxu0 0.0
  %7496 = vmatpush1.msra.mxu0 0.0
  %7497 = vmatprep.subr.mxu0 0.0
  %7498 = vmatpush1.msra.mxu0 0.0
  %7499 = vmatprep.subr.mxu0 0.0
  %7500 = vmatpush1.msra.mxu0 0.0
  %7501 = vmatprep.subr.mxu0 0.0
  %7502 = vmatpush1.msra.mxu0 0.0
  %7503 = vmatprep.subr.mxu0 0.0
  %7504 = vmatpush1.msra.mxu0 0.0
  %7505 = vmatprep.subr.mxu0 0.0
  %7506 = vmatpush1.msra.mxu0 0.0
  %7507 = vmatprep.subr.mxu0 0.0
  %7508 = vmatpush1.msra.mxu0 0.0
  %7509 = vmatprep.subr.mxu0 0.0
  %7510 = vmatpush1.msra.mxu0 0.0
  %7511 = vmatprep.subr.mxu0 0.0
  %7512 = vmatpush1.msra.mxu0 0.0
  %7513 = vmatprep.subr.mxu0 0.0
  %7514 = vmatpush1.msra.mxu0 0.0
  %7515 = vmatprep.mubr.f32.mxu0 0.0
  %7516 = vmatmul.mubr.f32.gmra.mrb[0].mxu0 %v7449
  %v7517 = vpop.f32.mrb[0].mxu0
  %v7518 = vadd.f32 0.0, %v7517
  %v7519 = vpop.f32.mrb[0].mxu0
  %7520 = vdwg.mxu0
  %v7521 = vadd.f32 %v7446, %v7518
  %v7522 = vtanh.pop %v7521
  %v7523 = vxor.u32 %v7521, 2147483648
  %v7524 = vmul.f32 %v7523, 1.442695
  %v7525 = vpow.pop %v7524
  %v7526 = vadd.f32 %v7525, 1.0
  %v7527 = vrcp.pop %v7526
  %v7528 = vmul.f32 1.0, %v7527
  %v7529 = vsel %vm462, %v7522, %v7528
  %v7530 = vmul.f32 %v7529, %v7330
  %7532 = vrot.lane.b32.xlu0 %v7529, 64
  %v7533 = vpop.permute.xlu0 %7532
  %v7535 = vmul.f32 %v7529, %v7533
  %7537 = vrot.lane.b32.xlu0 %v7535, 32
  %v7538 = vpop.permute.xlu0 %7537
  %v7540 = vadd.f32 %v7530, %v7538
  %v7541 = vtanh.pop %v7540
  %7543 = vrot.lane.b32.xlu0 %v7541, 64
  %v7544 = vpop.permute.xlu0 %7543
  %v7546 = vmul.f32 %v7529, %v7544
  %7548 = vrot.lane.b32.xlu0 %v7546, 64
  %v7549 = vpop.permute.xlu0 %7548
  %7551 = vst.msk [vmem:[%s12 + $0x8] sm:$0xff] %vm950, %v7549
  %v7552 = vld [vmem:[#allocation2 + $0xf0] sm:$0xff]
  %v7553 = vsel %vm491, %v7443, 0
  %7555 = vmatprep.subr.mxu0 0.0
  %7556 = vmatpush1.msra.mxu0 %v4134
  %7557 = vmatprep.subr.mxu0 0.0
  %7558 = vmatpush1.msra.mxu0 %v4135
  %7559 = vmatprep.subr.mxu0 0.0
  %7560 = vmatpush1.msra.mxu0 %v4136
  %7561 = vmatprep.subr.mxu0 0.0
  %7562 = vmatpush1.msra.mxu0 %v4137
  %7563 = vmatprep.subr.mxu0 0.0
  %7564 = vmatpush1.msra.mxu0 0.0
  %7565 = vmatprep.subr.mxu0 0.0
  %7566 = vmatpush1.msra.mxu0 0.0
  %7567 = vmatprep.subr.mxu0 0.0
  %7568 = vmatpush1.msra.mxu0 0.0
  %7569 = vmatprep.subr.mxu0 0.0
  %7570 = vmatpush1.msra.mxu0 0.0
  %7571 = vmatprep.subr.mxu0 0.0
  %7572 = vmatpush1.msra.mxu0 0.0
  %7573 = vmatprep.subr.mxu0 0.0
  %7574 = vmatpush1.msra.mxu0 0.0
  %7575 = vmatprep.subr.mxu0 0.0
  %7576 = vmatpush1.msra.mxu0 0.0
  %7577 = vmatprep.subr.mxu0 0.0
  %7578 = vmatpush1.msra.mxu0 0.0
  %7579 = vmatprep.subr.mxu0 0.0
  %7580 = vmatpush1.msra.mxu0 0.0
  %7581 = vmatprep.subr.mxu0 0.0
  %7582 = vmatpush1.msra.mxu0 0.0
  %7583 = vmatprep.subr.mxu0 0.0
  %7584 = vmatpush1.msra.mxu0 0.0
  %7585 = vmatprep.subr.mxu0 0.0
  %7586 = vmatpush1.msra.mxu0 0.0
  %7587 = vmatprep.subr.mxu0 0.0
  %7588 = vmatpush1.msra.mxu0 0.0
  %7589 = vmatprep.subr.mxu0 0.0
  %7590 = vmatpush1.msra.mxu0 0.0
  %7591 = vmatprep.subr.mxu0 0.0
  %7592 = vmatpush1.msra.mxu0 0.0
  %7593 = vmatprep.subr.mxu0 0.0
  %7594 = vmatpush1.msra.mxu0 0.0
  %7595 = vmatprep.subr.mxu0 0.0
  %7596 = vmatpush1.msra.mxu0 0.0
  %7597 = vmatprep.subr.mxu0 0.0
  %7598 = vmatpush1.msra.mxu0 0.0
  %7599 = vmatprep.subr.mxu0 0.0
  %7600 = vmatpush1.msra.mxu0 0.0
  %7601 = vmatprep.subr.mxu0 0.0
  %7602 = vmatpush1.msra.mxu0 0.0
  %7603 = vmatprep.subr.mxu0 0.0
  %7604 = vmatpush1.msra.mxu0 0.0
  %7605 = vmatprep.subr.mxu0 0.0
  %7606 = vmatpush1.msra.mxu0 0.0
  %7607 = vmatprep.subr.mxu0 0.0
  %7608 = vmatpush1.msra.mxu0 0.0
  %7609 = vmatprep.subr.mxu0 0.0
  %7610 = vmatpush1.msra.mxu0 0.0
  %7611 = vmatprep.subr.mxu0 0.0
  %7612 = vmatpush1.msra.mxu0 0.0
  %7613 = vmatprep.subr.mxu0 0.0
  %7614 = vmatpush1.msra.mxu0 0.0
  %7615 = vmatprep.subr.mxu0 0.0
  %7616 = vmatpush1.msra.mxu0 0.0
  %7617 = vmatprep.subr.mxu0 0.0
  %7618 = vmatpush1.msra.mxu0 0.0
  %7619 = vmatprep.mubr.f32.mxu0 0.0
  %7620 = vmatmul.mubr.f32.gmra.mrb[0].mxu0 %v7553
  %v7621 = vpop.f32.mrb[0].mxu0
  %v7622 = vadd.f32 0.0, %v7621
  %v7623 = vpop.f32.mrb[0].mxu0
  %7624 = vdwg.mxu0
  %v7625 = vadd.f32 %v7552, %v7622
  %v7626 = vtanh.pop %v7625
  %v7627 = vxor.u32 %v7625, 2147483648
  %v7628 = vmul.f32 %v7627, 1.442695
  %v7629 = vpow.pop %v7628
  %v7630 = vadd.f32 %v7629, 1.0
  %v7631 = vrcp.pop %v7630
  %v7632 = vmul.f32 1.0, %v7631
  %v7633 = vsel %vm462, %v7626, %v7632
  %v7634 = vmul.f32 %v7633, %v7434
  %7636 = vrot.lane.b32.xlu0 %v7633, 64
  %v7637 = vpop.permute.xlu0 %7636
  %v7639 = vmul.f32 %v7633, %v7637
  %7641 = vrot.lane.b32.xlu0 %v7639, 32
  %v7642 = vpop.permute.xlu0 %7641
  %v7644 = vadd.f32 %v7634, %v7642
  %v7645 = vtanh.pop %v7644
  %7647 = vrot.lane.b32.xlu0 %v7645, 64
  %v7648 = vpop.permute.xlu0 %7647
  %v7650 = vmul.f32 %v7633, %v7648
  %7652 = vrot.lane.b32.xlu0 %v7650, 32
  %v7653 = vpop.permute.xlu0 %7652
  %7655 = vst.msk [vmem:[%s12 + $0x78] sm:$0xff] %vm491, %v7653
  %v7656 = vld [vmem:[#allocation2 + $0x8] sm:$0xff]
  %7657 = vrot.lane.b32.xlu0 %v7546, 32
  %v7658 = vpop.permute.xlu0 %7657
  %v7659 = vsel %vm491, %v7658, 0
  %7661 = vmatprep.subr.mxu0 0.0
  %7662 = vmatpush1.msra.mxu0 %v4138
  %7663 = vmatprep.subr.mxu0 0.0
  %7664 = vmatpush1.msra.mxu0 %v4139
  %7665 = vmatprep.subr.mxu0 0.0
  %7666 = vmatpush1.msra.mxu0 %v4140
  %7667 = vmatprep.subr.mxu0 0.0
  %7668 = vmatpush1.msra.mxu0 %v4141
  %7669 = vmatprep.subr.mxu0 0.0
  %7670 = vmatpush1.msra.mxu0 0.0
  %7671 = vmatprep.subr.mxu0 0.0
  %7672 = vmatpush1.msra.mxu0 0.0
  %7673 = vmatprep.subr.mxu0 0.0
  %7674 = vmatpush1.msra.mxu0 0.0
  %7675 = vmatprep.subr.mxu0 0.0
  %7676 = vmatpush1.msra.mxu0 0.0
  %7677 = vmatprep.subr.mxu0 0.0
  %7678 = vmatpush1.msra.mxu0 0.0
  %7679 = vmatprep.subr.mxu0 0.0
  %7680 = vmatpush1.msra.mxu0 0.0
  %7681 = vmatprep.subr.mxu0 0.0
  %7682 = vmatpush1.msra.mxu0 0.0
  %7683 = vmatprep.subr.mxu0 0.0
  %7684 = vmatpush1.msra.mxu0 0.0
  %7685 = vmatprep.subr.mxu0 0.0
  %7686 = vmatpush1.msra.mxu0 0.0
  %7687 = vmatprep.subr.mxu0 0.0
  %7688 = vmatpush1.msra.mxu0 0.0
  %7689 = vmatprep.subr.mxu0 0.0
  %7690 = vmatpush1.msra.mxu0 0.0
  %7691 = vmatprep.subr.mxu0 0.0
  %7692 = vmatpush1.msra.mxu0 0.0
  %7693 = vmatprep.subr.mxu0 0.0
  %7694 = vmatpush1.msra.mxu0 0.0
  %7695 = vmatprep.subr.mxu0 0.0
  %7696 = vmatpush1.msra.mxu0 0.0
  %7697 = vmatprep.subr.mxu0 0.0
  %7698 = vmatpush1.msra.mxu0 0.0
  %7699 = vmatprep.subr.mxu0 0.0
  %7700 = vmatpush1.msra.mxu0 0.0
  %7701 = vmatprep.subr.mxu0 0.0
  %7702 = vmatpush1.msra.mxu0 0.0
  %7703 = vmatprep.subr.mxu0 0.0
  %7704 = vmatpush1.msra.mxu0 0.0
  %7705 = vmatprep.subr.mxu0 0.0
  %7706 = vmatpush1.msra.mxu0 0.0
  %7707 = vmatprep.subr.mxu0 0.0
  %7708 = vmatpush1.msra.mxu0 0.0
  %7709 = vmatprep.subr.mxu0 0.0
  %7710 = vmatpush1.msra.mxu0 0.0
  %7711 = vmatprep.subr.mxu0 0.0
  %7712 = vmatpush1.msra.mxu0 0.0
  %7713 = vmatprep.subr.mxu0 0.0
  %7714 = vmatpush1.msra.mxu0 0.0
  %7715 = vmatprep.subr.mxu0 0.0
  %7716 = vmatpush1.msra.mxu0 0.0
  %7717 = vmatprep.subr.mxu0 0.0
  %7718 = vmatpush1.msra.mxu0 0.0
  %7719 = vmatprep.subr.mxu0 0.0
  %7720 = vmatpush1.msra.mxu0 0.0
  %7721 = vmatprep.subr.mxu0 0.0
  %7722 = vmatpush1.msra.mxu0 0.0
  %7723 = vmatprep.subr.mxu0 0.0
  %7724 = vmatpush1.msra.mxu0 0.0
  %7725 = vmatprep.mubr.f32.mxu0 0.0
  %7726 = vmatmul.mubr.f32.gmra.mrb[0].mxu0 %v7659
  %v7727 = vpop.f32.mrb[0].mxu0
  %v7728 = vadd.f32 0.0, %v7727
  %v7729 = vpop.f32.mrb[0].mxu0
  %7730 = vdwg.mxu0
  %v7731 = vadd.f32 %v7656, %v7728
  %v7732 = vtanh.pop %v7731
  %v7733 = vxor.u32 %v7731, 2147483648
  %v7734 = vmul.f32 %v7733, 1.442695
  %v7735 = vpow.pop %v7734
  %v7736 = vadd.f32 %v7735, 1.0
  %v7737 = vrcp.pop %v7736
  %v7738 = vmul.f32 1.0, %v7737
  %v7739 = vsel %vm462, %v7732, %v7738
  %v7740 = vmul.f32 %v7739, %v7540
  %7742 = vrot.lane.b32.xlu0 %v7739, 64
  %v7743 = vpop.permute.xlu0 %7742
  %v7745 = vmul.f32 %v7739, %v7743
  %7747 = vrot.lane.b32.xlu0 %v7745, 32
  %v7748 = vpop.permute.xlu0 %7747
  %v7750 = vadd.f32 %v7740, %v7748
  %v7751 = vtanh.pop %v7750
  %7753 = vrot.lane.b32.xlu0 %v7751, 64
  %v7754 = vpop.permute.xlu0 %7753
  %v7756 = vmul.f32 %v7739, %v7754
  %7758 = vrot.lane.b32.xlu0 %v7756, 64
  %v7759 = vpop.permute.xlu0 %7758
  %7761 = vst.msk [vmem:[%s12] sm:$0xff] %vm950, %v7759
  // Predicated region
  $region50: #{cnn_lstm_forward.1} parent=0 // pred_check
    _
  $region51: #{cnn_lstm_forward.1} parent=0 // pred_check_branch
    %7763 = sbr.rel (0) target = $region53
  $region52: #{cnn_lstm_forward.1} parent=0 // pred_region
    _
  $region53: #{cnn_lstm_forward.1} parent=0 // pred_fallthru
    _
  // Predicated region
  $region54: #{cnn_lstm_forward.1} parent=0 // pred_check
    _
  $region55: #{cnn_lstm_forward.1} parent=0 // pred_check_branch
    %7765 = sbr.rel (0) target = $region57
  $region56: #{cnn_lstm_forward.1} parent=0 // pred_region
    _
  $region57: #{cnn_lstm_forward.1} parent=0 // pred_fallthru
    _

</llo_original>
